<compile_context>
chip_gen: v6e
topology: v6e:2x2x1
jax: 0.10.0
libtpu: 0.0.40
codegen_flags: <defaults>
</compile_context>

<pallas_src>
import functools

import numpy as np
import jax
import jax.numpy as jnp
from jax import lax
from jax.experimental import pallas as pl
from jax.experimental.pallas import tpu as pltpu


def cbam_head_kernel(x_ref, w1_ref, w2_ref, sc_ref, spb_ref,
                     wn_ref, bn_ref, wf_ref, bf_ref, o_ref,
                     ch_scr, sp_scr):
    xb = x_ref[...]                                   # [Bt, HW, C] bf16 (kept bf16)
    bt, hw, _ = xb.shape

    # ---- CBAM channel attention (AdaptiveMax/AvgPool + shared 1x1-conv MLP) ----
    # Stack the max- and avg-pooled vectors in scratch so both branches go
    # through the shared MLP as ONE matmul pair with M = 2*Bt.
    ch_scr[:bt, :] = jnp.max(xb.astype(jnp.float32), axis=1)     # [Bt, C]
    ch_avg = jnp.mean(xb.astype(jnp.float32), axis=1)            # [Bt, C] (reused below)
    ch_scr[bt:, :] = ch_avg

    h = jnp.dot(ch_scr[...].astype(jnp.bfloat16), w1_ref[...],
                preferred_element_type=jnp.float32)              # [2*Bt, cr]
    h = jnp.maximum(h, 0.0)
    se = jnp.dot(h.astype(jnp.bfloat16), w2_ref[...],
                 preferred_element_type=jnp.float32)             # [2*Bt, C]
    ca = jax.nn.sigmoid(se[:bt] + se[bt:])                       # [Bt, C]

    out = xb.astype(jnp.float32) * ca[:, None, :]                # [Bt, HW, C] f32

    # ---- CBAM spatial attention: 7x7 conv on [max_c, mean_c] expressed as a
    #      single dense [Bt, 2*HW] x [2*HW, HW] matmul (matrix built in wrapper).
    # TODO(synk): for large H*W replace the dense matrix with a 49-tap
    #   pltpu.roll stencil (dense cost is O(HW^2)).
    sp_scr[:, :hw] = jnp.max(out, axis=2)                        # [Bt, HW]
    sp_scr[:, hw:] = jnp.mean(out, axis=2)                       # [Bt, HW]
    sp = jnp.dot(sp_scr[...], sc_ref[...],
                 preferred_element_type=jnp.float32) + spb_ref[...]   # [Bt, HW]
    sig = jax.nn.sigmoid(sp)

    # ---- residual add + AdaptiveAvgPool2d((1,1)) fused:
    #      mean_HW(out*sig + x) = mean_HW(out*sig) + mean_HW(x) (= ch_avg) ----
    # TODO(synk): if a bundle dump at large bt shows the VPU/XLU reductions
    #   binding, move the two HW-mean reductions onto the idle MXU.
    pooled = jnp.mean(out * sig[:, :, None], axis=1) + ch_avg    # [Bt, C]

    # ---- PFC neck: Linear (eval-mode BatchNorm1d folded in) -> ReLU;
    #      Dropout(0.5) is identity in eval mode ----
    hn = jnp.dot(pooled.astype(jnp.bfloat16), wn_ref[...],
                 preferred_element_type=jnp.float32) + bn_ref[...]    # [Bt, neck]
    hn = jnp.maximum(hn, 0.0)

    # ---- ClsHead: Linear(neck -> padded num_classes), bf16 weights ----
    logits = jnp.dot(hn.astype(jnp.bfloat16), wf_ref[...],
                     preferred_element_type=jnp.float32) + bf_ref[...]
    o_ref[...] = logits[None].astype(o_ref.dtype)                # [1, Bt, NCpad]


def cbam_model_head(x_nchw, params, bt_max=16):
    B, C, H, W = x_nchw.shape
    HW = H * W

    # NCHW -> [B, HW, C]; C goes to the 128-lane axis.  Run this wrapper under
    # jit so the transpose / bf16 cast / pad fuse into one HBM pass over x.
    # TODO(synk): in the full model, have the backbone emit channels-last bf16
    #   features directly so even this pass disappears.
    x = jnp.transpose(x_nchw, (0, 2, 3, 1)).reshape(B, HW, C)

    # One grid step whenever B <= bt_max (no forced split):
    #  * v5e/v6e have a single TensorCore, so splitting only adds per-step
    #    overhead and shrinks matmul M.
    #  * v7x: a split duplicates the ~2.2 MB grid-invariant weight stream per
    #    core; it only pays once per-core x traffic amortizes it (B >~ 16),
    #    which is exactly when cdiv(B, bt_max) > 1.
    # On v5e/v6e (128 MiB VMEM) bt_max can be raised to 32 for large batches
    # (raise vmem_limit_bytes with it).
    steps = pl.cdiv(B, bt_max)
    bt = pl.cdiv(B, steps)
    b_pad = steps * bt
    if b_pad != B:
        x = jnp.pad(x, ((0, b_pad - B), (0, 0), (0, 0)))
    x = x.astype(jnp.bfloat16)                                 # halve x HBM traffic

    # bf16 parameter streams (bandwidth-bound head); fold eval-mode BN into
    # the neck Linear: wn' = wn*scale (per column), bias' = bn*scale + shift.
    w1 = params["w1"].astype(jnp.bfloat16)
    w2 = params["w2"].astype(jnp.bfloat16)
    wn = (params["wn"] * params["bns"]).astype(jnp.bfloat16)
    bn = params["bn"] * params["bns"] + params["bnb"]
    sc = params["sc"]                                          # small, keep f32
    spb = params["spb"]

    # Pad the classifier to 128 lanes so the output store is lane-dense;
    # stream its weights as bf16 too (bias add stays f32).
    nc = params["wf"].shape[1]
    nc_pad = 128 * pl.cdiv(nc, 128)
    wf = jnp.pad(params["wf"], ((0, 0), (0, nc_pad - nc))).astype(jnp.bfloat16)
    bf = jnp.pad(params["bf"], ((0, 0), (0, nc_pad - nc)))

    cr = w1.shape[1]
    neck = wn.shape[1]

    def const(shp):
        return pl.BlockSpec(shp, lambda g: (0,) * len(shp))

    out = pl.pallas_call(
        cbam_head_kernel,
        out_shape=jax.ShapeDtypeStruct((steps, bt, nc_pad), jnp.float32),
        grid_spec=pltpu.PrefetchScalarGridSpec(
            num_scalar_prefetch=0,
            grid=(steps,),
            in_specs=[
                pl.BlockSpec((bt, HW, C), lambda g: (g, 0, 0)),   # x tile (bf16)
                const((C, cr)), const((cr, C)),                   # channel-attn MLP (bf16)
                const((2 * HW, HW)), const((1, 1)),               # spatial conv + bias (f32)
                const((C, neck)), const((1, neck)),               # BN-folded neck (bf16 / f32)
                const((neck, nc_pad)), const((1, nc_pad)),        # cls head (bf16 / f32)
            ],
            out_specs=pl.BlockSpec((1, bt, nc_pad), lambda g: (g, 0, 0)),
            scratch_shapes=[
                pltpu.VMEM((2 * bt, C), jnp.float32),             # stacked [max; avg]
                pltpu.VMEM((bt, 2 * HW), jnp.float32),            # stacked [sp_max, sp_avg]
            ],
        ),
        compiler_params=pltpu.CompilerParams(
            dimension_semantics=("parallel",),
            # Budget at bt=16: 2 x 4 MB double-buffered bf16 x tiles + ~8 MB
            # f32 `out` live values + ~4 MB (double-buffered) bf16/f32 weights
            # + small scratch -> well under this 48 MiB scoped limit, which
            # also fits v7x's 64 MiB physical VMEM.
            vmem_limit_bytes=48 * 1024 * 1024,
        ),
    )(x, w1, w2, sc, spb, wn, bn, wf, bf)

    return out.reshape(b_pad, nc_pad)[:B, :nc]


def build_conv_matrices(w_spatial, H, W):
    # w_spatial: [2, k, k] (channel 0 = max map, channel 1 = mean map).
    # Returns a single [2*HW, HW] matrix S so that
    #   sp = [max_c, mean_c] @ S  ==  conv7x7(concat([max_c, mean_c])).
    k = w_spatial.shape[-1]
    p = k // 2
    HW = H * W
    S = np.zeros((2 * HW, HW), np.float32)
    for h in range(H):
        for w in range(W):
            for kh in range(k):
                for kw in range(k):
                    hh, ww = h + kh - p, w + kw - p
                    if 0 <= hh < H and 0 <= ww < W:
                        S[hh * W + ww, h * W + w] = w_spatial[0, kh, kw]
                        S[HW + hh * W + ww, h * W + w] = w_spatial[1, kh, kw]
    return jnp.asarray(S)


def init_params(key, C=2048, reduction=16, kernel_size=7, neck=256,
                num_classes=80, H=8, W=8):
    cr = C // reduction
    ks = jax.random.split(key, 8)

    def bf16_round(a):
        # Matmul weights are streamed to the kernel in bf16; keep the master
        # copy bf16-representable so the f32 reference sees identical values.
        return a.astype(jnp.bfloat16).astype(jnp.float32)

    w1 = bf16_round(jax.random.normal(ks[0], (C, cr), jnp.float32) * 0.02)   # se conv1 (transposed)
    w2 = bf16_round(jax.random.normal(ks[1], (cr, C), jnp.float32) * 0.02)   # se conv2 (transposed)
    sp_w = jax.random.normal(ks[2], (1, 2, kernel_size, kernel_size), jnp.float32) * 0.1
    sp_b = jax.random.normal(ks[3], (1,), jnp.float32) * 0.01
    wn = bf16_round(jax.random.normal(ks[4], (C, neck), jnp.float32) * 0.02)
    bn = jax.random.normal(ks[5], (neck,), jnp.float32) * 0.01
    wf = bf16_round(jax.random.normal(ks[6], (neck, num_classes), jnp.float32) * 0.02)
    bf = jax.random.normal(ks[7], (num_classes,), jnp.float32) * 0.01

    # BatchNorm1d (eval): gamma=1, beta=0, running_mean=0, running_var=1, eps=1e-5.
    # With real pretrained stats: bns = gamma / sqrt(var + eps),
    # bnb = beta - running_mean * bns.
    eps = 1e-5
    bns = jnp.full((neck,), 1.0 / np.sqrt(1.0 + eps), jnp.float32)
    bnb = jnp.zeros((neck,), jnp.float32)

    S = build_conv_matrices(np.asarray(sp_w)[0], H, W)
    return dict(
        w1=w1, w2=w2, sc=S, spb=sp_b.reshape(1, 1),
        wn=wn, bn=bn.reshape(1, neck), bns=bns.reshape(1, neck),
        bnb=bnb.reshape(1, neck), wf=wf, bf=bf.reshape(1, num_classes),
        sp_w=sp_w, sp_b=sp_b)


def reference(x_nchw, p):
    # Pure-JAX f32 reference of the same forward pass (eval mode).
    x = x_nchw
    mx = jnp.max(x, axis=(2, 3))
    av = jnp.mean(x, axis=(2, 3))
    se = lambda v: jax.nn.relu(v @ p["w1"]) @ p["w2"]
    ca = jax.nn.sigmoid(se(mx) + se(av))
    out = x * ca[:, :, None, None]
    sp_in = jnp.concatenate([jnp.max(out, axis=1, keepdims=True),
                             jnp.mean(out, axis=1, keepdims=True)], axis=1)
    k = p["sp_w"].shape[-1] // 2
    sp = lax.conv_general_dilated(sp_in, p["sp_w"], (1, 1),
                                  padding=[(k, k), (k, k)],
                                  dimension_numbers=("NCHW", "OIHW", "NCHW"))
    sp = sp + p["sp_b"][0]
    out = out * jax.nn.sigmoid(sp) + x
    pooled = jnp.mean(out, axis=(2, 3))
    h = pooled @ p["wn"] + p["bn"]
    h = h * p["bns"] + p["bnb"]
    h = jax.nn.relu(h)
    return h @ p["wf"] + p["bf"]


if __name__ == "__main__":
    key = jax.random.PRNGKey(0)
    kx, kp = jax.random.split(key)
    B, C, H, W = 2, 2048, 8, 8                     # layer4-sized features (small spatial)
    x = jax.random.normal(kx, (B, C, H, W), jnp.float32)
    # Features enter the kernel as bf16; keep the test input bf16-representable
    # so the f32 reference is directly comparable.
    x = x.astype(jnp.bfloat16).astype(jnp.float32)
    params = init_params(kp, C=C, H=H, W=W)

    # jit the whole head so the wrapper-side transpose/cast/pad fuse into a
    # single pass over x before the Pallas call.
    head = jax.jit(functools.partial(cbam_model_head, bt_max=16))
    out = head(x, params)
    out = jax.block_until_ready(out)

    ref = reference(x, params)
    # bf16 matmul operands inside the kernel vs f32 reference -> loose tolerance.
    np.testing.assert_allclose(np.asarray(out), np.asarray(ref),
                               rtol=1e-2, atol=1e-2)
    print("KERNEL_OK")
</pallas_src>

<mosaic_0001>
module attributes {stable_mosaic.version = 11 : i64} {
  func.func @cbam_head_kernel(%arg0: i32, %arg1: memref<2x64x2048xbf16, #tpu.memory_space<vmem>>, %arg2: memref<2048x128xbf16, #tpu.memory_space<vmem>>, %arg3: memref<128x2048xbf16, #tpu.memory_space<vmem>>, %arg4: memref<128x64xf32, #tpu.memory_space<vmem>>, %arg5: memref<1x1xf32, #tpu.memory_space<vmem>>, %arg6: memref<2048x256xbf16, #tpu.memory_space<vmem>>, %arg7: memref<1x256xf32, #tpu.memory_space<vmem>>, %arg8: memref<256x128xbf16, #tpu.memory_space<vmem>>, %arg9: memref<1x128xf32, #tpu.memory_space<vmem>>, %arg10: memref<1x2x128xf32, #tpu.memory_space<vmem>>, %arg11: memref<4x2048xf32, #tpu.memory_space<vmem>>, %arg12: memref<2x128xf32, #tpu.memory_space<vmem>>) attributes {dimension_semantics = [#tpu.dimension_semantics<parallel>], iteration_bounds = array<i64: 1>, scalar_prefetch = 0 : i64, scratch_operands = 2 : i64, tpu.core_type = #tpu.core_type<tc>, window_params = [{transform_indices = @transform_0, window_bounds = array<i64: 2, 64, 2048>}, {pipeline_mode = #tpu.pipeline_mode<synchronous>, transform_indices = @transform_1, window_bounds = array<i64: 2048, 128>}, {pipeline_mode = #tpu.pipeline_mode<synchronous>, transform_indices = @transform_2, window_bounds = array<i64: 128, 2048>}, {pipeline_mode = #tpu.pipeline_mode<synchronous>, transform_indices = @transform_3, window_bounds = array<i64: 128, 64>}, {pipeline_mode = #tpu.pipeline_mode<synchronous>, transform_indices = @transform_4, window_bounds = array<i64: 1, 1>}, {pipeline_mode = #tpu.pipeline_mode<synchronous>, transform_indices = @transform_5, window_bounds = array<i64: 2048, 256>}, {pipeline_mode = #tpu.pipeline_mode<synchronous>, transform_indices = @transform_6, window_bounds = array<i64: 1, 256>}, {pipeline_mode = #tpu.pipeline_mode<synchronous>, transform_indices = @transform_7, window_bounds = array<i64: 256, 128>}, {pipeline_mode = #tpu.pipeline_mode<synchronous>, transform_indices = @transform_8, window_bounds = array<i64: 1, 128>}, {transform_indices = @transform_9, window_bounds = array<i64: 1, 2, 128>}]} {
    %c0 = arith.constant 0 : index
    %c0_0 = arith.constant 0 : index
    %c0_1 = arith.constant 0 : index
    %0 = vector.load %arg1[%c0, %c0_0, %c0_1] : memref<2x64x2048xbf16, #tpu.memory_space<vmem>>, vector<2x64x2048xbf16>
    %1 = arith.extf %0 : vector<2x64x2048xbf16> to vector<2x64x2048xf32>
    %cst = arith.constant dense<0xFF800000> : vector<2x2048xf32>
    %2 = vector.multi_reduction <maximumf>, %1, %cst [1] : vector<2x64x2048xf32> to vector<2x2048xf32>
    %c0_2 = arith.constant 0 : index
    %c0_3 = arith.constant 0 : index
    %3 = vector.load %arg11[%c0_2, %c0_3] : memref<4x2048xf32, #tpu.memory_space<vmem>>, vector<2x2048xf32>
    tpu.vector_store %arg11[%c0_2, %c0_3], %2 {strides = array<i32>} : memref<4x2048xf32, #tpu.memory_space<vmem>>, vector<2x2048xf32>,
    %4 = arith.extf %0 : vector<2x64x2048xbf16> to vector<2x64x2048xf32>
    %cst_4 = arith.constant dense<0.000000e+00> : vector<2x2048xf32>
    %5 = vector.multi_reduction <add>, %4, %cst_4 [1] : vector<2x64x2048xf32> to vector<2x2048xf32>
    %cst_5 = arith.constant 6.400000e+01 : f32
    %6 = vector.broadcast %cst_5 : f32 to vector<2x2048xf32>
    %7 = arith.divf %5, %6 : vector<2x2048xf32>
    %c2 = arith.constant 2 : index
    %c0_6 = arith.constant 0 : index
    %8 = vector.load %arg11[%c2, %c0_6] : memref<4x2048xf32, #tpu.memory_space<vmem>>, vector<2x2048xf32>
    tpu.vector_store %arg11[%c2, %c0_6], %7 {strides = array<i32>} : memref<4x2048xf32, #tpu.memory_space<vmem>>, vector<2x2048xf32>,
    %c0_7 = arith.constant 0 : index
    %c0_8 = arith.constant 0 : index
    %9 = vector.load %arg11[%c0_7, %c0_8] : memref<4x2048xf32, #tpu.memory_space<vmem>>, vector<4x2048xf32>
    %10 = arith.truncf %9 : vector<4x2048xf32> to vector<4x2048xbf16>
    %c0_9 = arith.constant 0 : index
    %c0_10 = arith.constant 0 : index
    %11 = vector.load %arg2[%c0_9, %c0_10] : memref<2048x128xbf16, #tpu.memory_space<vmem>>, vector<2048x128xbf16>
    %cst_11 = arith.constant dense<0.000000e+00> : vector<4x128xf32>
    %12 = tpu.matmul %10, %11, %cst_11 {dimension_numbers = #tpu.dot_dimension_numbers<[1], [0], [0], [1], [0, 0, 1, 1], [], []>} : vector<4x2048xbf16>, vector<2048x128xbf16>, vector<4x128xf32> -> vector<4x128xf32>
    %cst_12 = arith.constant 0.000000e+00 : f32
    %13 = vector.broadcast %cst_12 : f32 to vector<4x128xf32>
    %14 = arith.maximumf %12, %13 : vector<4x128xf32>
    %15 = arith.truncf %14 : vector<4x128xf32> to vector<4x128xbf16>
    %c0_13 = arith.constant 0 : index
    %c0_14 = arith.constant 0 : index
    %16 = vector.load %arg3[%c0_13, %c0_14] : memref<128x2048xbf16, #tpu.memory_space<vmem>>, vector<128x2048xbf16>
    %cst_15 = arith.constant dense<0.000000e+00> : vector<4x2048xf32>
    %17 = tpu.matmul %15, %16, %cst_15 {dimension_numbers = #tpu.dot_dimension_numbers<[1], [0], [0], [1], [0, 0, 1, 1], [], []>} : vector<4x128xbf16>, vector<128x2048xbf16>, vector<4x2048xf32> -> vector<4x2048xf32>
    %18 = vector.extract_strided_slice %17 {offsets = [0, 0], sizes = [2, 2048], strides = [1, 1]} : vector<4x2048xf32> to vector<2x2048xf32>
    %19 = vector.extract_strided_slice %17 {offsets = [2, 0], sizes = [2, 2048], strides = [1, 1]} : vector<4x2048xf32> to vector<2x2048xf32>
    %20 = arith.addf %18, %19 : vector<2x2048xf32>
    %21 = arith.negf %20 : vector<2x2048xf32>
    %22 = math.exp %21 : vector<2x2048xf32>
    %cst_16 = arith.constant 1.000000e+00 : f32
    %23 = vector.broadcast %cst_16 : f32 to vector<2x2048xf32>
    %24 = arith.addf %23, %22 : vector<2x2048xf32>
    %25 = arith.divf %23, %24 : vector<2x2048xf32>
    %26 = arith.extf %0 : vector<2x64x2048xbf16> to vector<2x64x2048xf32>
    %27 = vector.shape_cast %25 : vector<2x2048xf32> to vector<2x1x2048xf32>
    %28 = vector.broadcast %27 : vector<2x1x2048xf32> to vector<2x64x2048xf32>
    %29 = arith.mulf %26, %28 : vector<2x64x2048xf32>
    %cst_17 = arith.constant dense<0xFF800000> : vector<2x64xf32>
    %30 = vector.multi_reduction <maximumf>, %29, %cst_17 [2] : vector<2x64x2048xf32> to vector<2x64xf32>
    %c0_18 = arith.constant 0 : index
    %c0_19 = arith.constant 0 : index
    %31 = vector.load %arg12[%c0_18, %c0_19] : memref<2x128xf32, #tpu.memory_space<vmem>>, vector<2x64xf32>
    tpu.vector_store %arg12[%c0_18, %c0_19], %30 {strides = array<i32>} : memref<2x128xf32, #tpu.memory_space<vmem>>, vector<2x64xf32>,
    %cst_20 = arith.constant dense<0.000000e+00> : vector<2x64xf32>
    %32 = vector.multi_reduction <add>, %29, %cst_20 [2] : vector<2x64x2048xf32> to vector<2x64xf32>
    %cst_21 = arith.constant 2.048000e+03 : f32
    %33 = vector.broadcast %cst_21 : f32 to vector<2x64xf32>
    %34 = arith.divf %32, %33 : vector<2x64xf32>
    %c0_22 = arith.constant 0 : index
    %c64 = arith.constant 64 : index
    %35 = vector.load %arg12[%c0_22, %c64] : memref<2x128xf32, #tpu.memory_space<vmem>>, vector<2x64xf32>
    tpu.vector_store %arg12[%c0_22, %c64], %34 {strides = array<i32>} : memref<2x128xf32, #tpu.memory_space<vmem>>, vector<2x64xf32>,
    %c0_23 = arith.constant 0 : index
    %c0_24 = arith.constant 0 : index
    %36 = vector.load %arg12[%c0_23, %c0_24] : memref<2x128xf32, #tpu.memory_space<vmem>>, vector<2x128xf32>
    %c0_25 = arith.constant 0 : index
    %c0_26 = arith.constant 0 : index
    %37 = vector.load %arg4[%c0_25, %c0_26] : memref<128x64xf32, #tpu.memory_space<vmem>>, vector<128x64xf32>
    %cst_27 = arith.constant dense<0.000000e+00> : vector<2x64xf32>
    %38 = tpu.matmul %36, %37, %cst_27 {dimension_numbers = #tpu.dot_dimension_numbers<[1], [0], [0], [1], [0, 0, 1, 1], [], []>} : vector<2x128xf32>, vector<128x64xf32>, vector<2x64xf32> -> vector<2x64xf32>
    %c0_28 = arith.constant 0 : index
    %c0_29 = arith.constant 0 : index
    %39 = vector.load %arg5[%c0_28, %c0_29] : memref<1x1xf32, #tpu.memory_space<vmem>>, vector<1x1xf32>
    %40 = vector.broadcast %39 : vector<1x1xf32> to vector<2x64xf32>
    %41 = arith.addf %38, %40 : vector<2x64xf32>
    %42 = arith.negf %41 : vector<2x64xf32>
    %43 = math.exp %42 : vector<2x64xf32>
    %cst_30 = arith.constant 1.000000e+00 : f32
    %44 = vector.broadcast %cst_30 : f32 to vector<2x64xf32>
    %45 = arith.addf %44, %43 : vector<2x64xf32>
    %46 = arith.divf %44, %45 : vector<2x64xf32>
    %47 = vector.shape_cast %46 : vector<2x64xf32> to vector<2x64x1xf32>
    %48 = vector.broadcast %47 : vector<2x64x1xf32> to vector<2x64x2048xf32>
    %49 = arith.mulf %29, %48 : vector<2x64x2048xf32>
    %cst_31 = arith.constant dense<0.000000e+00> : vector<2x2048xf32>
    %50 = vector.multi_reduction <add>, %49, %cst_31 [1] : vector<2x64x2048xf32> to vector<2x2048xf32>
    %cst_32 = arith.constant 6.400000e+01 : f32
    %51 = vector.broadcast %cst_32 : f32 to vector<2x2048xf32>
    %52 = arith.divf %50, %51 : vector<2x2048xf32>
    %53 = arith.addf %52, %7 : vector<2x2048xf32>
    %54 = arith.truncf %53 : vector<2x2048xf32> to vector<2x2048xbf16>
    %c0_33 = arith.constant 0 : index
    %c0_34 = arith.constant 0 : index
    %55 = vector.load %arg6[%c0_33, %c0_34] : memref<2048x256xbf16, #tpu.memory_space<vmem>>, vector<2048x256xbf16>
    %cst_35 = arith.constant dense<0.000000e+00> : vector<2x256xf32>
    %56 = tpu.matmul %54, %55, %cst_35 {dimension_numbers = #tpu.dot_dimension_numbers<[1], [0], [0], [1], [0, 0, 1, 1], [], []>} : vector<2x2048xbf16>, vector<2048x256xbf16>, vector<2x256xf32> -> vector<2x256xf32>
    %c0_36 = arith.constant 0 : index
    %c0_37 = arith.constant 0 : index
    %57 = vector.load %arg7[%c0_36, %c0_37] : memref<1x256xf32, #tpu.memory_space<vmem>>, vector<1x256xf32>
    %58 = vector.broadcast %57 : vector<1x256xf32> to vector<2x256xf32>
    %59 = arith.addf %56, %58 : vector<2x256xf32>
    %cst_38 = arith.constant 0.000000e+00 : f32
    %60 = vector.broadcast %cst_38 : f32 to vector<2x256xf32>
    %61 = arith.maximumf %59, %60 : vector<2x256xf32>
    %62 = arith.truncf %61 : vector<2x256xf32> to vector<2x256xbf16>
    %c0_39 = arith.constant 0 : index
    %c0_40 = arith.constant 0 : index
    %63 = vector.load %arg8[%c0_39, %c0_40] : memref<256x128xbf16, #tpu.memory_space<vmem>>, vector<256x128xbf16>
    %cst_41 = arith.constant dense<0.000000e+00> : vector<2x128xf32>
    %64 = tpu.matmul %62, %63, %cst_41 {dimension_numbers = #tpu.dot_dimension_numbers<[1], [0], [0], [1], [0, 0, 1, 1], [], []>} : vector<2x256xbf16>, vector<256x128xbf16>, vector<2x128xf32> -> vector<2x128xf32>
    %c0_42 = arith.constant 0 : index
    %c0_43 = arith.constant 0 : index
    %65 = vector.load %arg9[%c0_42, %c0_43] : memref<1x128xf32, #tpu.memory_space<vmem>>, vector<1x128xf32>
    %66 = vector.broadcast %65 : vector<1x128xf32> to vector<2x128xf32>
    %67 = arith.addf %64, %66 : vector<2x128xf32>
    %68 = vector.shape_cast %67 : vector<2x128xf32> to vector<1x2x128xf32>
    %c0_44 = arith.constant 0 : index
    %c0_45 = arith.constant 0 : index
    %c0_46 = arith.constant 0 : index
    %69 = vector.load %arg10[%c0_44, %c0_45, %c0_46] : memref<1x2x128xf32, #tpu.memory_space<vmem>>, vector<1x2x128xf32>
    tpu.vector_store %arg10[%c0_44, %c0_45, %c0_46], %68 {strides = array<i32>} : memref<1x2x128xf32, #tpu.memory_space<vmem>>, vector<1x2x128xf32>,
    return
  }
  func.func @transform_0(%arg0: i32) -> (i32, i32, i32) {
    %c0_i32 = arith.constant 0 : i32
    %c0_i32_0 = arith.constant 0 : i32
    %c0_i32_1 = arith.constant 0 : i32
    return %arg0, %c0_i32, %c0_i32_0 : i32, i32, i32
  }
  func.func @transform_1(%arg0: i32) -> (i32, i32) {
    %c0_i32 = arith.constant 0 : i32
    %c0_i32_0 = arith.constant 0 : i32
    %c0_i32_1 = arith.constant 0 : i32
    return %c0_i32, %c0_i32_0 : i32, i32
  }
  func.func @transform_2(%arg0: i32) -> (i32, i32) {
    %c0_i32 = arith.constant 0 : i32
    %c0_i32_0 = arith.constant 0 : i32
    %c0_i32_1 = arith.constant 0 : i32
    return %c0_i32, %c0_i32_0 : i32, i32
  }
  func.func @transform_3(%arg0: i32) -> (i32, i32) {
    %c0_i32 = arith.constant 0 : i32
    %c0_i32_0 = arith.constant 0 : i32
    %c0_i32_1 = arith.constant 0 : i32
    return %c0_i32, %c0_i32_0 : i32, i32
  }
  func.func @transform_4(%arg0: i32) -> (i32, i32) {
    %c0_i32 = arith.constant 0 : i32
    %c0_i32_0 = arith.constant 0 : i32
    %c0_i32_1 = arith.constant 0 : i32
    return %c0_i32, %c0_i32_0 : i32, i32
  }
  func.func @transform_5(%arg0: i32) -> (i32, i32) {
    %c0_i32 = arith.constant 0 : i32
    %c0_i32_0 = arith.constant 0 : i32
    %c0_i32_1 = arith.constant 0 : i32
    return %c0_i32, %c0_i32_0 : i32, i32
  }
  func.func @transform_6(%arg0: i32) -> (i32, i32) {
    %c0_i32 = arith.constant 0 : i32
    %c0_i32_0 = arith.constant 0 : i32
    %c0_i32_1 = arith.constant 0 : i32
    return %c0_i32, %c0_i32_0 : i32, i32
  }
  func.func @transform_7(%arg0: i32) -> (i32, i32) {
    %c0_i32 = arith.constant 0 : i32
    %c0_i32_0 = arith.constant 0 : i32
    %c0_i32_1 = arith.constant 0 : i32
    return %c0_i32, %c0_i32_0 : i32, i32
  }
  func.func @transform_8(%arg0: i32) -> (i32, i32) {
    %c0_i32 = arith.constant 0 : i32
    %c0_i32_0 = arith.constant 0 : i32
    %c0_i32_1 = arith.constant 0 : i32
    return %c0_i32, %c0_i32_0 : i32, i32
  }
  func.func @transform_9(%arg0: i32) -> (i32, i32, i32) {
    %c0_i32 = arith.constant 0 : i32
    %c0_i32_0 = arith.constant 0 : i32
    %c0_i32_1 = arith.constant 0 : i32
    return %arg0, %c0_i32, %c0_i32_0 : i32, i32, i32
  }
}

</mosaic_0001>

<llo_original>
// kernel: cbam_model_head.1
$region0: #{cbam_model_head.1}
  #allocation0 [shape = 'u32[]', space=smem, size = 0x4, offset = 0x4, fixed_abs, tag = 'smem constant byte address 0x4 - core index']
  #allocation1 [shape = 'u32[144,128]{1,0:T(1,128)}', space=vmem, size = 0x12000, scoped, tag = 'internal scratch']
  #allocation2 [shape = 'f32[4,2048]{1,0:T(4,128)}', space=vmem, size = 0x8000, scoped, tag = 'scratch operand']
  #allocation3 [shape = 'f32[2,128]{1,0:T(2,128)}', space=vmem, size = 0x400, scoped, tag = 'scratch operand']
  #allocation4 [shape = 'f32[1,1]{1,0:T(1,128)S(1)}', space=vmem, size = 0x200, scoped, tag = 'scoped memory for cbam_model_head.1']
  %s0 = inlined_call_operand.vmem [shape: bf16[2,64,2048], index: 0, kind: input, shape index: {}]
  %s1 = inlined_call_operand.vmem [shape: bf16[2048,128], index: 1, kind: input, shape index: {}]
  %s2 = inlined_call_operand.vmem [shape: bf16[128,2048], index: 2, kind: input, shape index: {}]
  %s3 = inlined_call_operand.vmem [shape: f32[128,64], index: 3, kind: input, shape index: {}]
  %s4 = inlined_call_operand.<no memory space> [shape: f32[1,1], index: 4, kind: input, shape index: {}]
  %s5 = inlined_call_operand.vmem [shape: bf16[2048,256], index: 5, kind: input, shape index: {}]
  %s6 = inlined_call_operand.vmem [shape: f32[1,256], index: 6, kind: input, shape index: {}]
  %s7 = inlined_call_operand.vmem [shape: bf16[256,128], index: 7, kind: input, shape index: {}]
  %s8 = inlined_call_operand.vmem [shape: f32[1,128], index: 8, kind: input, shape index: {}]
  %s9 = inlined_call_operand.hbm [shape: f32[1,2,128], index: 9, kind: output, shape index: {}]
  %s10 = sld [smem:[#allocation0]]
  $region46: #{cbam_model_head.1} parent=0
    _
  %s12 = ssub.s32 1, %s10
  %s13 = scalar_select 0, %s12, %s10
  %v14 = vstv %s4
  %15 = vst [vmem:[#allocation4] sm:$0x1] %v14
  $region1: #{cbam_model_head.1} parent=0
    #allocation5 [shape = 'u8[1024]{0}', space=vmem, size = 0x400, scoped, tag = 'output window, operand 0, single buffered']
    #allocation6 [shape = 's32[1]{0}', space=sflag, size = 0x4, scoped, tag = 'scoped memory for cbam_model_head.1']
    %16 = vsyncpa [#allocation6], 0
    // Predicated region
    $region2: #{cbam_model_head.1} parent=1 // pred_check
      _
    $region3: #{cbam_model_head.1} parent=1 // pred_check_branch
      %18 = sbr.rel (0) target = $region5
    $region4: #{cbam_model_head.1} parent=1 // pred_region
      _
    $region5: #{cbam_model_head.1} parent=1 // pred_fallthru
      _
    // Predicated region
    $region6: #{cbam_model_head.1} parent=1 // pred_check
      _
    $region7: #{cbam_model_head.1} parent=1 // pred_check_branch
      %20 = sbr.rel (0) target = $region9
    $region8: #{cbam_model_head.1} parent=1 // pred_region
      _
    $region9: #{cbam_model_head.1} parent=1 // pred_fallthru
      _
    // Predicated region
    $region10: #{cbam_model_head.1} parent=1 // pred_check
      _
    $region11: #{cbam_model_head.1} parent=1 // pred_check_branch
      %22 = sbr.rel (0) target = $region13
    $region12: #{cbam_model_head.1} parent=1 // pred_region
      _
    $region13: #{cbam_model_head.1} parent=1 // pred_fallthru
      _
    // Predicated region
    $region14: #{cbam_model_head.1} parent=1 // pred_check
      _
    $region15: #{cbam_model_head.1} parent=1 // pred_check_branch
      %24 = sbr.rel (0) target = $region17
    $region16: #{cbam_model_head.1} parent=1 // pred_region
      _
    $region17: #{cbam_model_head.1} parent=1 // pred_fallthru
      _
    // Predicated region
    $region18: #{cbam_model_head.1} parent=1 // pred_check
      _
    $region19: #{cbam_model_head.1} parent=1 // pred_check_branch
      %26 = sbr.rel (0) target = $region21
    $region20: #{cbam_model_head.1} parent=1 // pred_region
      _
    $region21: #{cbam_model_head.1} parent=1 // pred_fallthru
      _
    // Predicated region
    $region22: #{cbam_model_head.1} parent=1 // pred_check
      _
    $region23: #{cbam_model_head.1} parent=1 // pred_check_branch
      %28 = sbr.rel (0) target = $region25
    $region24: #{cbam_model_head.1} parent=1 // pred_region
      _
    $region25: #{cbam_model_head.1} parent=1 // pred_fallthru
      _
    // Predicated region
    $region26: #{cbam_model_head.1} parent=1 // pred_check
      _
    $region27: #{cbam_model_head.1} parent=1 // pred_check_branch
      %30 = sbr.rel (0) target = $region29
    $region28: #{cbam_model_head.1} parent=1 // pred_region
      _
    $region29: #{cbam_model_head.1} parent=1 // pred_fallthru
      _
    // Predicated region
    $region30: #{cbam_model_head.1} parent=1 // pred_check
      _
    $region31: #{cbam_model_head.1} parent=1 // pred_check_branch
      %32 = sbr.rel (0) target = $region33
    $region32: #{cbam_model_head.1} parent=1 // pred_region
      _
    $region33: #{cbam_model_head.1} parent=1 // pred_fallthru
      _
    // Predicated region
    $region34: #{cbam_model_head.1} parent=1 // pred_check
      _
    $region35: #{cbam_model_head.1} parent=1 // pred_check_branch
      %34 = sbr.rel (0) target = $region37
    $region36: #{cbam_model_head.1} parent=1 // pred_region
      _
    $region37: #{cbam_model_head.1} parent=1 // pred_fallthru
      _
    %v36 = vld [vmem:[%s0] sm:$0xff]
    %v37 = vld [vmem:[%s0 + $0x8] sm:$0xff]
    %v38 = vld [vmem:[%s0 + $0x10] sm:$0xff]
    %v39 = vld [vmem:[%s0 + $0x18] sm:$0xff]
    %v40 = vld [vmem:[%s0 + $0x20] sm:$0xff]
    %v41 = vld [vmem:[%s0 + $0x28] sm:$0xff]
    %v42 = vld [vmem:[%s0 + $0x30] sm:$0xff]
    %v43 = vld [vmem:[%s0 + $0x38] sm:$0xff]
    %v44 = vld [vmem:[%s0 + $0x40] sm:$0xff]
    %v45 = vld [vmem:[%s0 + $0x48] sm:$0xff]
    %v46 = vld [vmem:[%s0 + $0x50] sm:$0xff]
    %v47 = vld [vmem:[%s0 + $0x58] sm:$0xff]
    %v48 = vld [vmem:[%s0 + $0x60] sm:$0xff]
    %v49 = vld [vmem:[%s0 + $0x68] sm:$0xff]
    %v50 = vld [vmem:[%s0 + $0x70] sm:$0xff]
    %v51 = vld [vmem:[%s0 + $0x78] sm:$0xff]
    %v52 = vld [vmem:[%s0 + $0x80] sm:$0xff]
    %v53 = vld [vmem:[%s0 + $0x88] sm:$0xff]
    %v54 = vld [vmem:[%s0 + $0x90] sm:$0xff]
    %v55 = vld [vmem:[%s0 + $0x98] sm:$0xff]
    %v56 = vld [vmem:[%s0 + $0xa0] sm:$0xff]
    %v57 = vld [vmem:[%s0 + $0xa8] sm:$0xff]
    %v58 = vld [vmem:[%s0 + $0xb0] sm:$0xff]
    %v59 = vld [vmem:[%s0 + $0xb8] sm:$0xff]
    %v60 = vld [vmem:[%s0 + $0xc0] sm:$0xff]
    %v61 = vld [vmem:[%s0 + $0xc8] sm:$0xff]
    %v62 = vld [vmem:[%s0 + $0xd0] sm:$0xff]
    %v63 = vld [vmem:[%s0 + $0xd8] sm:$0xff]
    %v64 = vld [vmem:[%s0 + $0xe0] sm:$0xff]
    %v65 = vld [vmem:[%s0 + $0xe8] sm:$0xff]
    %v66 = vld [vmem:[%s0 + $0xf0] sm:$0xff]
    %v67 = vld [vmem:[%s0 + $0xf8] sm:$0xff]
    %v68 = vld [vmem:[%s0 + $0x100] sm:$0xff]
    %v69 = vld [vmem:[%s0 + $0x108] sm:$0xff]
    %v70 = vld [vmem:[%s0 + $0x110] sm:$0xff]
    %v71 = vld [vmem:[%s0 + $0x118] sm:$0xff]
    %v72 = vld [vmem:[%s0 + $0x120] sm:$0xff]
    %v73 = vld [vmem:[%s0 + $0x128] sm:$0xff]
    %v74 = vld [vmem:[%s0 + $0x130] sm:$0xff]
    %v75 = vld [vmem:[%s0 + $0x138] sm:$0xff]
    %v76 = vld [vmem:[%s0 + $0x140] sm:$0xff]
    %v77 = vld [vmem:[%s0 + $0x148] sm:$0xff]
    %v78 = vld [vmem:[%s0 + $0x150] sm:$0xff]
    %v79 = vld [vmem:[%s0 + $0x158] sm:$0xff]
    %v80 = vld [vmem:[%s0 + $0x160] sm:$0xff]
    %v81 = vld [vmem:[%s0 + $0x168] sm:$0xff]
    %v82 = vld [vmem:[%s0 + $0x170] sm:$0xff]
    %v83 = vld [vmem:[%s0 + $0x178] sm:$0xff]
    %v84 = vld [vmem:[%s0 + $0x180] sm:$0xff]
    %v85 = vld [vmem:[%s0 + $0x188] sm:$0xff]
    %v86 = vld [vmem:[%s0 + $0x190] sm:$0xff]
    %v87 = vld [vmem:[%s0 + $0x198] sm:$0xff]
    %v88 = vld [vmem:[%s0 + $0x1a0] sm:$0xff]
    %v89 = vld [vmem:[%s0 + $0x1a8] sm:$0xff]
    %v90 = vld [vmem:[%s0 + $0x1b0] sm:$0xff]
    %v91 = vld [vmem:[%s0 + $0x1b8] sm:$0xff]
    %v92 = vld [vmem:[%s0 + $0x1c0] sm:$0xff]
    %v93 = vld [vmem:[%s0 + $0x1c8] sm:$0xff]
    %v94 = vld [vmem:[%s0 + $0x1d0] sm:$0xff]
    %v95 = vld [vmem:[%s0 + $0x1d8] sm:$0xff]
    %v96 = vld [vmem:[%s0 + $0x1e0] sm:$0xff]
    %v97 = vld [vmem:[%s0 + $0x1e8] sm:$0xff]
    %v98 = vld [vmem:[%s0 + $0x1f0] sm:$0xff]
    %v99 = vld [vmem:[%s0 + $0x1f8] sm:$0xff]
    %v100 = vld [vmem:[%s0 + $0x200] sm:$0xff]
    %v101 = vld [vmem:[%s0 + $0x208] sm:$0xff]
    %v102 = vld [vmem:[%s0 + $0x210] sm:$0xff]
    %v103 = vld [vmem:[%s0 + $0x218] sm:$0xff]
    %v104 = vld [vmem:[%s0 + $0x220] sm:$0xff]
    %v105 = vld [vmem:[%s0 + $0x228] sm:$0xff]
    %v106 = vld [vmem:[%s0 + $0x230] sm:$0xff]
    %v107 = vld [vmem:[%s0 + $0x238] sm:$0xff]
    %v108 = vld [vmem:[%s0 + $0x240] sm:$0xff]
    %v109 = vld [vmem:[%s0 + $0x248] sm:$0xff]
    %v110 = vld [vmem:[%s0 + $0x250] sm:$0xff]
    %v111 = vld [vmem:[%s0 + $0x258] sm:$0xff]
    %v112 = vld [vmem:[%s0 + $0x260] sm:$0xff]
    %v113 = vld [vmem:[%s0 + $0x268] sm:$0xff]
    %v114 = vld [vmem:[%s0 + $0x270] sm:$0xff]
    %v115 = vld [vmem:[%s0 + $0x278] sm:$0xff]
    %v116 = vld [vmem:[%s0 + $0x280] sm:$0xff]
    %v117 = vld [vmem:[%s0 + $0x288] sm:$0xff]
    %v118 = vld [vmem:[%s0 + $0x290] sm:$0xff]
    %v119 = vld [vmem:[%s0 + $0x298] sm:$0xff]
    %v120 = vld [vmem:[%s0 + $0x2a0] sm:$0xff]
    %v121 = vld [vmem:[%s0 + $0x2a8] sm:$0xff]
    %v122 = vld [vmem:[%s0 + $0x2b0] sm:$0xff]
    %v123 = vld [vmem:[%s0 + $0x2b8] sm:$0xff]
    %v124 = vld [vmem:[%s0 + $0x2c0] sm:$0xff]
    %v125 = vld [vmem:[%s0 + $0x2c8] sm:$0xff]
    %v126 = vld [vmem:[%s0 + $0x2d0] sm:$0xff]
    %v127 = vld [vmem:[%s0 + $0x2d8] sm:$0xff]
    %v128 = vld [vmem:[%s0 + $0x2e0] sm:$0xff]
    %v129 = vld [vmem:[%s0 + $0x2e8] sm:$0xff]
    %v130 = vld [vmem:[%s0 + $0x2f0] sm:$0xff]
    %v131 = vld [vmem:[%s0 + $0x2f8] sm:$0xff]
    %v132 = vld [vmem:[%s0 + $0x300] sm:$0xff]
    %v133 = vld [vmem:[%s0 + $0x308] sm:$0xff]
    %v134 = vld [vmem:[%s0 + $0x310] sm:$0xff]
    %v135 = vld [vmem:[%s0 + $0x318] sm:$0xff]
    %v136 = vld [vmem:[%s0 + $0x320] sm:$0xff]
    %v137 = vld [vmem:[%s0 + $0x328] sm:$0xff]
    %v138 = vld [vmem:[%s0 + $0x330] sm:$0xff]
    %v139 = vld [vmem:[%s0 + $0x338] sm:$0xff]
    %v140 = vld [vmem:[%s0 + $0x340] sm:$0xff]
    %v141 = vld [vmem:[%s0 + $0x348] sm:$0xff]
    %v142 = vld [vmem:[%s0 + $0x350] sm:$0xff]
    %v143 = vld [vmem:[%s0 + $0x358] sm:$0xff]
    %v144 = vld [vmem:[%s0 + $0x360] sm:$0xff]
    %v145 = vld [vmem:[%s0 + $0x368] sm:$0xff]
    %v146 = vld [vmem:[%s0 + $0x370] sm:$0xff]
    %v147 = vld [vmem:[%s0 + $0x378] sm:$0xff]
    %v148 = vld [vmem:[%s0 + $0x380] sm:$0xff]
    %v149 = vld [vmem:[%s0 + $0x388] sm:$0xff]
    %v150 = vld [vmem:[%s0 + $0x390] sm:$0xff]
    %v151 = vld [vmem:[%s0 + $0x398] sm:$0xff]
    %v152 = vld [vmem:[%s0 + $0x3a0] sm:$0xff]
    %v153 = vld [vmem:[%s0 + $0x3a8] sm:$0xff]
    %v154 = vld [vmem:[%s0 + $0x3b0] sm:$0xff]
    %v155 = vld [vmem:[%s0 + $0x3b8] sm:$0xff]
    %v156 = vld [vmem:[%s0 + $0x3c0] sm:$0xff]
    %v157 = vld [vmem:[%s0 + $0x3c8] sm:$0xff]
    %v158 = vld [vmem:[%s0 + $0x3d0] sm:$0xff]
    %v159 = vld [vmem:[%s0 + $0x3d8] sm:$0xff]
    %v160 = vld [vmem:[%s0 + $0x3e0] sm:$0xff]
    %v161 = vld [vmem:[%s0 + $0x3e8] sm:$0xff]
    %v162 = vld [vmem:[%s0 + $0x3f0] sm:$0xff]
    %v163 = vld [vmem:[%s0 + $0x3f8] sm:$0xff]
    %v164 = vunpack.c.l.bf16 %v36
    %v165 = vunpack.c.h.bf16 %v36
    %v166 = vunpack.c.l.bf16 %v37
    %v167 = vunpack.c.h.bf16 %v37
    %v168 = vunpack.c.l.bf16 %v38
    %v169 = vunpack.c.h.bf16 %v38
    %v170 = vunpack.c.l.bf16 %v39
    %v171 = vunpack.c.h.bf16 %v39
    %v172 = vunpack.c.l.bf16 %v40
    %v173 = vunpack.c.h.bf16 %v40
    %v174 = vunpack.c.l.bf16 %v41
    %v175 = vunpack.c.h.bf16 %v41
    %v176 = vunpack.c.l.bf16 %v42
    %v177 = vunpack.c.h.bf16 %v42
    %v178 = vunpack.c.l.bf16 %v43
    %v179 = vunpack.c.h.bf16 %v43
    %v180 = vunpack.c.l.bf16 %v44
    %v181 = vunpack.c.h.bf16 %v44
    %v182 = vunpack.c.l.bf16 %v45
    %v183 = vunpack.c.h.bf16 %v45
    %v184 = vunpack.c.l.bf16 %v46
    %v185 = vunpack.c.h.bf16 %v46
    %v186 = vunpack.c.l.bf16 %v47
    %v187 = vunpack.c.h.bf16 %v47
    %v188 = vunpack.c.l.bf16 %v48
    %v189 = vunpack.c.h.bf16 %v48
    %v190 = vunpack.c.l.bf16 %v49
    %v191 = vunpack.c.h.bf16 %v49
    %v192 = vunpack.c.l.bf16 %v50
    %v193 = vunpack.c.h.bf16 %v50
    %v194 = vunpack.c.l.bf16 %v51
    %v195 = vunpack.c.h.bf16 %v51
    %v196 = vunpack.c.l.bf16 %v52
    %v197 = vunpack.c.h.bf16 %v52
    %v198 = vunpack.c.l.bf16 %v53
    %v199 = vunpack.c.h.bf16 %v53
    %v200 = vunpack.c.l.bf16 %v54
    %v201 = vunpack.c.h.bf16 %v54
    %v202 = vunpack.c.l.bf16 %v55
    %v203 = vunpack.c.h.bf16 %v55
    %v204 = vunpack.c.l.bf16 %v56
    %v205 = vunpack.c.h.bf16 %v56
    %v206 = vunpack.c.l.bf16 %v57
    %v207 = vunpack.c.h.bf16 %v57
    %v208 = vunpack.c.l.bf16 %v58
    %v209 = vunpack.c.h.bf16 %v58
    %v210 = vunpack.c.l.bf16 %v59
    %v211 = vunpack.c.h.bf16 %v59
    %v212 = vunpack.c.l.bf16 %v60
    %v213 = vunpack.c.h.bf16 %v60
    %v214 = vunpack.c.l.bf16 %v61
    %v215 = vunpack.c.h.bf16 %v61
    %v216 = vunpack.c.l.bf16 %v62
    %v217 = vunpack.c.h.bf16 %v62
    %v218 = vunpack.c.l.bf16 %v63
    %v219 = vunpack.c.h.bf16 %v63
    %v220 = vunpack.c.l.bf16 %v64
    %v221 = vunpack.c.h.bf16 %v64
    %v222 = vunpack.c.l.bf16 %v65
    %v223 = vunpack.c.h.bf16 %v65
    %v224 = vunpack.c.l.bf16 %v66
    %v225 = vunpack.c.h.bf16 %v66
    %v226 = vunpack.c.l.bf16 %v67
    %v227 = vunpack.c.h.bf16 %v67
    %v228 = vunpack.c.l.bf16 %v68
    %v229 = vunpack.c.h.bf16 %v68
    %v230 = vunpack.c.l.bf16 %v69
    %v231 = vunpack.c.h.bf16 %v69
    %v232 = vunpack.c.l.bf16 %v70
    %v233 = vunpack.c.h.bf16 %v70
    %v234 = vunpack.c.l.bf16 %v71
    %v235 = vunpack.c.h.bf16 %v71
    %v236 = vunpack.c.l.bf16 %v72
    %v237 = vunpack.c.h.bf16 %v72
    %v238 = vunpack.c.l.bf16 %v73
    %v239 = vunpack.c.h.bf16 %v73
    %v240 = vunpack.c.l.bf16 %v74
    %v241 = vunpack.c.h.bf16 %v74
    %v242 = vunpack.c.l.bf16 %v75
    %v243 = vunpack.c.h.bf16 %v75
    %v244 = vunpack.c.l.bf16 %v76
    %v245 = vunpack.c.h.bf16 %v76
    %v246 = vunpack.c.l.bf16 %v77
    %v247 = vunpack.c.h.bf16 %v77
    %v248 = vunpack.c.l.bf16 %v78
    %v249 = vunpack.c.h.bf16 %v78
    %v250 = vunpack.c.l.bf16 %v79
    %v251 = vunpack.c.h.bf16 %v79
    %v252 = vunpack.c.l.bf16 %v80
    %v253 = vunpack.c.h.bf16 %v80
    %v254 = vunpack.c.l.bf16 %v81
    %v255 = vunpack.c.h.bf16 %v81
    %v256 = vunpack.c.l.bf16 %v82
    %v257 = vunpack.c.h.bf16 %v82
    %v258 = vunpack.c.l.bf16 %v83
    %v259 = vunpack.c.h.bf16 %v83
    %v260 = vunpack.c.l.bf16 %v84
    %v261 = vunpack.c.h.bf16 %v84
    %v262 = vunpack.c.l.bf16 %v85
    %v263 = vunpack.c.h.bf16 %v85
    %v264 = vunpack.c.l.bf16 %v86
    %v265 = vunpack.c.h.bf16 %v86
    %v266 = vunpack.c.l.bf16 %v87
    %v267 = vunpack.c.h.bf16 %v87
    %v268 = vunpack.c.l.bf16 %v88
    %v269 = vunpack.c.h.bf16 %v88
    %v270 = vunpack.c.l.bf16 %v89
    %v271 = vunpack.c.h.bf16 %v89
    %v272 = vunpack.c.l.bf16 %v90
    %v273 = vunpack.c.h.bf16 %v90
    %v274 = vunpack.c.l.bf16 %v91
    %v275 = vunpack.c.h.bf16 %v91
    %v276 = vunpack.c.l.bf16 %v92
    %v277 = vunpack.c.h.bf16 %v92
    %v278 = vunpack.c.l.bf16 %v93
    %v279 = vunpack.c.h.bf16 %v93
    %v280 = vunpack.c.l.bf16 %v94
    %v281 = vunpack.c.h.bf16 %v94
    %v282 = vunpack.c.l.bf16 %v95
    %v283 = vunpack.c.h.bf16 %v95
    %v284 = vunpack.c.l.bf16 %v96
    %v285 = vunpack.c.h.bf16 %v96
    %v286 = vunpack.c.l.bf16 %v97
    %v287 = vunpack.c.h.bf16 %v97
    %v288 = vunpack.c.l.bf16 %v98
    %v289 = vunpack.c.h.bf16 %v98
    %v290 = vunpack.c.l.bf16 %v99
    %v291 = vunpack.c.h.bf16 %v99
    %v292 = vunpack.c.l.bf16 %v100
    %v293 = vunpack.c.h.bf16 %v100
    %v294 = vunpack.c.l.bf16 %v101
    %v295 = vunpack.c.h.bf16 %v101
    %v296 = vunpack.c.l.bf16 %v102
    %v297 = vunpack.c.h.bf16 %v102
    %v298 = vunpack.c.l.bf16 %v103
    %v299 = vunpack.c.h.bf16 %v103
    %v300 = vunpack.c.l.bf16 %v104
    %v301 = vunpack.c.h.bf16 %v104
    %v302 = vunpack.c.l.bf16 %v105
    %v303 = vunpack.c.h.bf16 %v105
    %v304 = vunpack.c.l.bf16 %v106
    %v305 = vunpack.c.h.bf16 %v106
    %v306 = vunpack.c.l.bf16 %v107
    %v307 = vunpack.c.h.bf16 %v107
    %v308 = vunpack.c.l.bf16 %v108
    %v309 = vunpack.c.h.bf16 %v108
    %v310 = vunpack.c.l.bf16 %v109
    %v311 = vunpack.c.h.bf16 %v109
    %v312 = vunpack.c.l.bf16 %v110
    %v313 = vunpack.c.h.bf16 %v110
    %v314 = vunpack.c.l.bf16 %v111
    %v315 = vunpack.c.h.bf16 %v111
    %v316 = vunpack.c.l.bf16 %v112
    %v317 = vunpack.c.h.bf16 %v112
    %v318 = vunpack.c.l.bf16 %v113
    %v319 = vunpack.c.h.bf16 %v113
    %v320 = vunpack.c.l.bf16 %v114
    %v321 = vunpack.c.h.bf16 %v114
    %v322 = vunpack.c.l.bf16 %v115
    %v323 = vunpack.c.h.bf16 %v115
    %v324 = vunpack.c.l.bf16 %v116
    %v325 = vunpack.c.h.bf16 %v116
    %v326 = vunpack.c.l.bf16 %v117
    %v327 = vunpack.c.h.bf16 %v117
    %v328 = vunpack.c.l.bf16 %v118
    %v329 = vunpack.c.h.bf16 %v118
    %v330 = vunpack.c.l.bf16 %v119
    %v331 = vunpack.c.h.bf16 %v119
    %v332 = vunpack.c.l.bf16 %v120
    %v333 = vunpack.c.h.bf16 %v120
    %v334 = vunpack.c.l.bf16 %v121
    %v335 = vunpack.c.h.bf16 %v121
    %v336 = vunpack.c.l.bf16 %v122
    %v337 = vunpack.c.h.bf16 %v122
    %v338 = vunpack.c.l.bf16 %v123
    %v339 = vunpack.c.h.bf16 %v123
    %v340 = vunpack.c.l.bf16 %v124
    %v341 = vunpack.c.h.bf16 %v124
    %v342 = vunpack.c.l.bf16 %v125
    %v343 = vunpack.c.h.bf16 %v125
    %v344 = vunpack.c.l.bf16 %v126
    %v345 = vunpack.c.h.bf16 %v126
    %v346 = vunpack.c.l.bf16 %v127
    %v347 = vunpack.c.h.bf16 %v127
    %v348 = vunpack.c.l.bf16 %v128
    %v349 = vunpack.c.h.bf16 %v128
    %v350 = vunpack.c.l.bf16 %v129
    %v351 = vunpack.c.h.bf16 %v129
    %v352 = vunpack.c.l.bf16 %v130
    %v353 = vunpack.c.h.bf16 %v130
    %v354 = vunpack.c.l.bf16 %v131
    %v355 = vunpack.c.h.bf16 %v131
    %v356 = vunpack.c.l.bf16 %v132
    %v357 = vunpack.c.h.bf16 %v132
    %v358 = vunpack.c.l.bf16 %v133
    %v359 = vunpack.c.h.bf16 %v133
    %v360 = vunpack.c.l.bf16 %v134
    %v361 = vunpack.c.h.bf16 %v134
    %v362 = vunpack.c.l.bf16 %v135
    %v363 = vunpack.c.h.bf16 %v135
    %v364 = vunpack.c.l.bf16 %v136
    %v365 = vunpack.c.h.bf16 %v136
    %v366 = vunpack.c.l.bf16 %v137
    %v367 = vunpack.c.h.bf16 %v137
    %v368 = vunpack.c.l.bf16 %v138
    %v369 = vunpack.c.h.bf16 %v138
    %v370 = vunpack.c.l.bf16 %v139
    %v371 = vunpack.c.h.bf16 %v139
    %v372 = vunpack.c.l.bf16 %v140
    %v373 = vunpack.c.h.bf16 %v140
    %v374 = vunpack.c.l.bf16 %v141
    %v375 = vunpack.c.h.bf16 %v141
    %v376 = vunpack.c.l.bf16 %v142
    %v377 = vunpack.c.h.bf16 %v142
    %v378 = vunpack.c.l.bf16 %v143
    %v379 = vunpack.c.h.bf16 %v143
    %v380 = vunpack.c.l.bf16 %v144
    %v381 = vunpack.c.h.bf16 %v144
    %v382 = vunpack.c.l.bf16 %v145
    %v383 = vunpack.c.h.bf16 %v145
    %v384 = vunpack.c.l.bf16 %v146
    %v385 = vunpack.c.h.bf16 %v146
    %v386 = vunpack.c.l.bf16 %v147
    %v387 = vunpack.c.h.bf16 %v147
    %v388 = vunpack.c.l.bf16 %v148
    %v389 = vunpack.c.h.bf16 %v148
    %v390 = vunpack.c.l.bf16 %v149
    %v391 = vunpack.c.h.bf16 %v149
    %v392 = vunpack.c.l.bf16 %v150
    %v393 = vunpack.c.h.bf16 %v150
    %v394 = vunpack.c.l.bf16 %v151
    %v395 = vunpack.c.h.bf16 %v151
    %v396 = vunpack.c.l.bf16 %v152
    %v397 = vunpack.c.h.bf16 %v152
    %v398 = vunpack.c.l.bf16 %v153
    %v399 = vunpack.c.h.bf16 %v153
    %v400 = vunpack.c.l.bf16 %v154
    %v401 = vunpack.c.h.bf16 %v154
    %v402 = vunpack.c.l.bf16 %v155
    %v403 = vunpack.c.h.bf16 %v155
    %v404 = vunpack.c.l.bf16 %v156
    %v405 = vunpack.c.h.bf16 %v156
    %v406 = vunpack.c.l.bf16 %v157
    %v407 = vunpack.c.h.bf16 %v157
    %v408 = vunpack.c.l.bf16 %v158
    %v409 = vunpack.c.h.bf16 %v158
    %v410 = vunpack.c.l.bf16 %v159
    %v411 = vunpack.c.h.bf16 %v159
    %v412 = vunpack.c.l.bf16 %v160
    %v413 = vunpack.c.h.bf16 %v160
    %v414 = vunpack.c.l.bf16 %v161
    %v415 = vunpack.c.h.bf16 %v161
    %v416 = vunpack.c.l.bf16 %v162
    %v417 = vunpack.c.h.bf16 %v162
    %v418 = vunpack.c.l.bf16 %v163
    %v419 = vunpack.c.h.bf16 %v163
    %v420 = vmax.f32 %v164, %v180
    %v421 = vmax.f32 %v420, %v196
    %v422 = vmax.f32 %v421, %v212
    %v423 = vmax.f32 %v422, %v228
    %v424 = vmax.f32 %v423, %v244
    %v425 = vmax.f32 %v424, %v260
    %v426 = vmax.f32 %v425, %v276
    %v427 = vrot.slane %v426, 4
    %v428 = vmax.f32 %v426, %v427
    %v429 = vrot.slane %v428, 2
    %v430 = vmax.f32 %v428, %v429
    %v431 = vrot.slane %v430, 1
    %v432 = vmax.f32 %v430, %v431
    %v433 = vmax.f32 %v165, %v181
    %v434 = vmax.f32 %v433, %v197
    %v435 = vmax.f32 %v434, %v213
    %v436 = vmax.f32 %v435, %v229
    %v437 = vmax.f32 %v436, %v245
    %v438 = vmax.f32 %v437, %v261
    %v439 = vmax.f32 %v438, %v277
    %v440 = vrot.slane %v439, 4
    %v441 = vmax.f32 %v439, %v440
    %v442 = vrot.slane %v441, 2
    %v443 = vmax.f32 %v441, %v442
    %v444 = vrot.slane %v443, 1
    %v445 = vmax.f32 %v443, %v444
    %v446 = vmax.f32 %v166, %v182
    %v447 = vmax.f32 %v446, %v198
    %v448 = vmax.f32 %v447, %v214
    %v449 = vmax.f32 %v448, %v230
    %v450 = vmax.f32 %v449, %v246
    %v451 = vmax.f32 %v450, %v262
    %v452 = vmax.f32 %v451, %v278
    %v453 = vrot.slane %v452, 4
    %v454 = vmax.f32 %v452, %v453
    %v455 = vrot.slane %v454, 2
    %v456 = vmax.f32 %v454, %v455
    %v457 = vrot.slane %v456, 1
    %v458 = vmax.f32 %v456, %v457
    %v459 = vmax.f32 %v167, %v183
    %v460 = vmax.f32 %v459, %v199
    %v461 = vmax.f32 %v460, %v215
    %v462 = vmax.f32 %v461, %v231
    %v463 = vmax.f32 %v462, %v247
    %v464 = vmax.f32 %v463, %v263
    %v465 = vmax.f32 %v464, %v279
    %v466 = vrot.slane %v465, 4
    %v467 = vmax.f32 %v465, %v466
    %v468 = vrot.slane %v467, 2
    %v469 = vmax.f32 %v467, %v468
    %v470 = vrot.slane %v469, 1
    %v471 = vmax.f32 %v469, %v470
    %v472 = vmax.f32 %v168, %v184
    %v473 = vmax.f32 %v472, %v200
    %v474 = vmax.f32 %v473, %v216
    %v475 = vmax.f32 %v474, %v232
    %v476 = vmax.f32 %v475, %v248
    %v477 = vmax.f32 %v476, %v264
    %v478 = vmax.f32 %v477, %v280
    %v479 = vrot.slane %v478, 4
    %v480 = vmax.f32 %v478, %v479
    %v481 = vrot.slane %v480, 2
    %v482 = vmax.f32 %v480, %v481
    %v483 = vrot.slane %v482, 1
    %v484 = vmax.f32 %v482, %v483
    %v485 = vmax.f32 %v169, %v185
    %v486 = vmax.f32 %v485, %v201
    %v487 = vmax.f32 %v486, %v217
    %v488 = vmax.f32 %v487, %v233
    %v489 = vmax.f32 %v488, %v249
    %v490 = vmax.f32 %v489, %v265
    %v491 = vmax.f32 %v490, %v281
    %v492 = vrot.slane %v491, 4
    %v493 = vmax.f32 %v491, %v492
    %v494 = vrot.slane %v493, 2
    %v495 = vmax.f32 %v493, %v494
    %v496 = vrot.slane %v495, 1
    %v497 = vmax.f32 %v495, %v496
    %v498 = vmax.f32 %v170, %v186
    %v499 = vmax.f32 %v498, %v202
    %v500 = vmax.f32 %v499, %v218
    %v501 = vmax.f32 %v500, %v234
    %v502 = vmax.f32 %v501, %v250
    %v503 = vmax.f32 %v502, %v266
    %v504 = vmax.f32 %v503, %v282
    %v505 = vrot.slane %v504, 4
    %v506 = vmax.f32 %v504, %v505
    %v507 = vrot.slane %v506, 2
    %v508 = vmax.f32 %v506, %v507
    %v509 = vrot.slane %v508, 1
    %v510 = vmax.f32 %v508, %v509
    %v511 = vmax.f32 %v171, %v187
    %v512 = vmax.f32 %v511, %v203
    %v513 = vmax.f32 %v512, %v219
    %v514 = vmax.f32 %v513, %v235
    %v515 = vmax.f32 %v514, %v251
    %v516 = vmax.f32 %v515, %v267
    %v517 = vmax.f32 %v516, %v283
    %v518 = vrot.slane %v517, 4
    %v519 = vmax.f32 %v517, %v518
    %v520 = vrot.slane %v519, 2
    %v521 = vmax.f32 %v519, %v520
    %v522 = vrot.slane %v521, 1
    %v523 = vmax.f32 %v521, %v522
    %v524 = vmax.f32 %v172, %v188
    %v525 = vmax.f32 %v524, %v204
    %v526 = vmax.f32 %v525, %v220
    %v527 = vmax.f32 %v526, %v236
    %v528 = vmax.f32 %v527, %v252
    %v529 = vmax.f32 %v528, %v268
    %v530 = vmax.f32 %v529, %v284
    %v531 = vrot.slane %v530, 4
    %v532 = vmax.f32 %v530, %v531
    %v533 = vrot.slane %v532, 2
    %v534 = vmax.f32 %v532, %v533
    %v535 = vrot.slane %v534, 1
    %v536 = vmax.f32 %v534, %v535
    %v537 = vmax.f32 %v173, %v189
    %v538 = vmax.f32 %v537, %v205
    %v539 = vmax.f32 %v538, %v221
    %v540 = vmax.f32 %v539, %v237
    %v541 = vmax.f32 %v540, %v253
    %v542 = vmax.f32 %v541, %v269
    %v543 = vmax.f32 %v542, %v285
    %v544 = vrot.slane %v543, 4
    %v545 = vmax.f32 %v543, %v544
    %v546 = vrot.slane %v545, 2
    %v547 = vmax.f32 %v545, %v546
    %v548 = vrot.slane %v547, 1
    %v549 = vmax.f32 %v547, %v548
    %v550 = vmax.f32 %v174, %v190
    %v551 = vmax.f32 %v550, %v206
    %v552 = vmax.f32 %v551, %v222
    %v553 = vmax.f32 %v552, %v238
    %v554 = vmax.f32 %v553, %v254
    %v555 = vmax.f32 %v554, %v270
    %v556 = vmax.f32 %v555, %v286
    %v557 = vrot.slane %v556, 4
    %v558 = vmax.f32 %v556, %v557
    %v559 = vrot.slane %v558, 2
    %v560 = vmax.f32 %v558, %v559
    %v561 = vrot.slane %v560, 1
    %v562 = vmax.f32 %v560, %v561
    %v563 = vmax.f32 %v175, %v191
    %v564 = vmax.f32 %v563, %v207
    %v565 = vmax.f32 %v564, %v223
    %v566 = vmax.f32 %v565, %v239
    %v567 = vmax.f32 %v566, %v255
    %v568 = vmax.f32 %v567, %v271
    %v569 = vmax.f32 %v568, %v287
    %v570 = vrot.slane %v569, 4
    %v571 = vmax.f32 %v569, %v570
    %v572 = vrot.slane %v571, 2
    %v573 = vmax.f32 %v571, %v572
    %v574 = vrot.slane %v573, 1
    %v575 = vmax.f32 %v573, %v574
    %v576 = vmax.f32 %v176, %v192
    %v577 = vmax.f32 %v576, %v208
    %v578 = vmax.f32 %v577, %v224
    %v579 = vmax.f32 %v578, %v240
    %v580 = vmax.f32 %v579, %v256
    %v581 = vmax.f32 %v580, %v272
    %v582 = vmax.f32 %v581, %v288
    %v583 = vrot.slane %v582, 4
    %v584 = vmax.f32 %v582, %v583
    %v585 = vrot.slane %v584, 2
    %v586 = vmax.f32 %v584, %v585
    %v587 = vrot.slane %v586, 1
    %v588 = vmax.f32 %v586, %v587
    %v589 = vmax.f32 %v177, %v193
    %v590 = vmax.f32 %v589, %v209
    %v591 = vmax.f32 %v590, %v225
    %v592 = vmax.f32 %v591, %v241
    %v593 = vmax.f32 %v592, %v257
    %v594 = vmax.f32 %v593, %v273
    %v595 = vmax.f32 %v594, %v289
    %v596 = vrot.slane %v595, 4
    %v597 = vmax.f32 %v595, %v596
    %v598 = vrot.slane %v597, 2
    %v599 = vmax.f32 %v597, %v598
    %v600 = vrot.slane %v599, 1
    %v601 = vmax.f32 %v599, %v600
    %v602 = vmax.f32 %v178, %v194
    %v603 = vmax.f32 %v602, %v210
    %v604 = vmax.f32 %v603, %v226
    %v605 = vmax.f32 %v604, %v242
    %v606 = vmax.f32 %v605, %v258
    %v607 = vmax.f32 %v606, %v274
    %v608 = vmax.f32 %v607, %v290
    %v609 = vrot.slane %v608, 4
    %v610 = vmax.f32 %v608, %v609
    %v611 = vrot.slane %v610, 2
    %v612 = vmax.f32 %v610, %v611
    %v613 = vrot.slane %v612, 1
    %v614 = vmax.f32 %v612, %v613
    %v615 = vmax.f32 %v179, %v195
    %v616 = vmax.f32 %v615, %v211
    %v617 = vmax.f32 %v616, %v227
    %v618 = vmax.f32 %v617, %v243
    %v619 = vmax.f32 %v618, %v259
    %v620 = vmax.f32 %v619, %v275
    %v621 = vmax.f32 %v620, %v291
    %v622 = vrot.slane %v621, 4
    %v623 = vmax.f32 %v621, %v622
    %v624 = vrot.slane %v623, 2
    %v625 = vmax.f32 %v623, %v624
    %v626 = vrot.slane %v625, 1
    %v627 = vmax.f32 %v625, %v626
    %v628 = vmax.f32 %v292, %v308
    %v629 = vmax.f32 %v628, %v324
    %v630 = vmax.f32 %v629, %v340
    %v631 = vmax.f32 %v630, %v356
    %v632 = vmax.f32 %v631, %v372
    %v633 = vmax.f32 %v632, %v388
    %v634 = vmax.f32 %v633, %v404
    %v635 = vrot.slane %v634, 4
    %v636 = vmax.f32 %v634, %v635
    %v637 = vrot.slane %v636, 2
    %v638 = vmax.f32 %v636, %v637
    %v639 = vrot.slane %v638, 1
    %v640 = vmax.f32 %v638, %v639
    %v641 = vmax.f32 %v293, %v309
    %v642 = vmax.f32 %v641, %v325
    %v643 = vmax.f32 %v642, %v341
    %v644 = vmax.f32 %v643, %v357
    %v645 = vmax.f32 %v644, %v373
    %v646 = vmax.f32 %v645, %v389
    %v647 = vmax.f32 %v646, %v405
    %v648 = vrot.slane %v647, 4
    %v649 = vmax.f32 %v647, %v648
    %v650 = vrot.slane %v649, 2
    %v651 = vmax.f32 %v649, %v650
    %v652 = vrot.slane %v651, 1
    %v653 = vmax.f32 %v651, %v652
    %v654 = vmax.f32 %v294, %v310
    %v655 = vmax.f32 %v654, %v326
    %v656 = vmax.f32 %v655, %v342
    %v657 = vmax.f32 %v656, %v358
    %v658 = vmax.f32 %v657, %v374
    %v659 = vmax.f32 %v658, %v390
    %v660 = vmax.f32 %v659, %v406
    %v661 = vrot.slane %v660, 4
    %v662 = vmax.f32 %v660, %v661
    %v663 = vrot.slane %v662, 2
    %v664 = vmax.f32 %v662, %v663
    %v665 = vrot.slane %v664, 1
    %v666 = vmax.f32 %v664, %v665
    %v667 = vmax.f32 %v295, %v311
    %v668 = vmax.f32 %v667, %v327
    %v669 = vmax.f32 %v668, %v343
    %v670 = vmax.f32 %v669, %v359
    %v671 = vmax.f32 %v670, %v375
    %v672 = vmax.f32 %v671, %v391
    %v673 = vmax.f32 %v672, %v407
    %v674 = vrot.slane %v673, 4
    %v675 = vmax.f32 %v673, %v674
    %v676 = vrot.slane %v675, 2
    %v677 = vmax.f32 %v675, %v676
    %v678 = vrot.slane %v677, 1
    %v679 = vmax.f32 %v677, %v678
    %v680 = vmax.f32 %v296, %v312
    %v681 = vmax.f32 %v680, %v328
    %v682 = vmax.f32 %v681, %v344
    %v683 = vmax.f32 %v682, %v360
    %v684 = vmax.f32 %v683, %v376
    %v685 = vmax.f32 %v684, %v392
    %v686 = vmax.f32 %v685, %v408
    %v687 = vrot.slane %v686, 4
    %v688 = vmax.f32 %v686, %v687
    %v689 = vrot.slane %v688, 2
    %v690 = vmax.f32 %v688, %v689
    %v691 = vrot.slane %v690, 1
    %v692 = vmax.f32 %v690, %v691
    %v693 = vmax.f32 %v297, %v313
    %v694 = vmax.f32 %v693, %v329
    %v695 = vmax.f32 %v694, %v345
    %v696 = vmax.f32 %v695, %v361
    %v697 = vmax.f32 %v696, %v377
    %v698 = vmax.f32 %v697, %v393
    %v699 = vmax.f32 %v698, %v409
    %v700 = vrot.slane %v699, 4
    %v701 = vmax.f32 %v699, %v700
    %v702 = vrot.slane %v701, 2
    %v703 = vmax.f32 %v701, %v702
    %v704 = vrot.slane %v703, 1
    %v705 = vmax.f32 %v703, %v704
    %v706 = vmax.f32 %v298, %v314
    %v707 = vmax.f32 %v706, %v330
    %v708 = vmax.f32 %v707, %v346
    %v709 = vmax.f32 %v708, %v362
    %v710 = vmax.f32 %v709, %v378
    %v711 = vmax.f32 %v710, %v394
    %v712 = vmax.f32 %v711, %v410
    %v713 = vrot.slane %v712, 4
    %v714 = vmax.f32 %v712, %v713
    %v715 = vrot.slane %v714, 2
    %v716 = vmax.f32 %v714, %v715
    %v717 = vrot.slane %v716, 1
    %v718 = vmax.f32 %v716, %v717
    %v719 = vmax.f32 %v299, %v315
    %v720 = vmax.f32 %v719, %v331
    %v721 = vmax.f32 %v720, %v347
    %v722 = vmax.f32 %v721, %v363
    %v723 = vmax.f32 %v722, %v379
    %v724 = vmax.f32 %v723, %v395
    %v725 = vmax.f32 %v724, %v411
    %v726 = vrot.slane %v725, 4
    %v727 = vmax.f32 %v725, %v726
    %v728 = vrot.slane %v727, 2
    %v729 = vmax.f32 %v727, %v728
    %v730 = vrot.slane %v729, 1
    %v731 = vmax.f32 %v729, %v730
    %v732 = vmax.f32 %v300, %v316
    %v733 = vmax.f32 %v732, %v332
    %v734 = vmax.f32 %v733, %v348
    %v735 = vmax.f32 %v734, %v364
    %v736 = vmax.f32 %v735, %v380
    %v737 = vmax.f32 %v736, %v396
    %v738 = vmax.f32 %v737, %v412
    %v739 = vrot.slane %v738, 4
    %v740 = vmax.f32 %v738, %v739
    %v741 = vrot.slane %v740, 2
    %v742 = vmax.f32 %v740, %v741
    %v743 = vrot.slane %v742, 1
    %v744 = vmax.f32 %v742, %v743
    %v745 = vmax.f32 %v301, %v317
    %v746 = vmax.f32 %v745, %v333
    %v747 = vmax.f32 %v746, %v349
    %v748 = vmax.f32 %v747, %v365
    %v749 = vmax.f32 %v748, %v381
    %v750 = vmax.f32 %v749, %v397
    %v751 = vmax.f32 %v750, %v413
    %v752 = vrot.slane %v751, 4
    %v753 = vmax.f32 %v751, %v752
    %v754 = vrot.slane %v753, 2
    %v755 = vmax.f32 %v753, %v754
    %v756 = vrot.slane %v755, 1
    %v757 = vmax.f32 %v755, %v756
    %v758 = vmax.f32 %v302, %v318
    %v759 = vmax.f32 %v758, %v334
    %v760 = vmax.f32 %v759, %v350
    %v761 = vmax.f32 %v760, %v366
    %v762 = vmax.f32 %v761, %v382
    %v763 = vmax.f32 %v762, %v398
    %v764 = vmax.f32 %v763, %v414
    %v765 = vrot.slane %v764, 4
    %v766 = vmax.f32 %v764, %v765
    %v767 = vrot.slane %v766, 2
    %v768 = vmax.f32 %v766, %v767
    %v769 = vrot.slane %v768, 1
    %v770 = vmax.f32 %v768, %v769
    %v771 = vmax.f32 %v303, %v319
    %v772 = vmax.f32 %v771, %v335
    %v773 = vmax.f32 %v772, %v351
    %v774 = vmax.f32 %v773, %v367
    %v775 = vmax.f32 %v774, %v383
    %v776 = vmax.f32 %v775, %v399
    %v777 = vmax.f32 %v776, %v415
    %v778 = vrot.slane %v777, 4
    %v779 = vmax.f32 %v777, %v778
    %v780 = vrot.slane %v779, 2
    %v781 = vmax.f32 %v779, %v780
    %v782 = vrot.slane %v781, 1
    %v783 = vmax.f32 %v781, %v782
    %v784 = vmax.f32 %v304, %v320
    %v785 = vmax.f32 %v784, %v336
    %v786 = vmax.f32 %v785, %v352
    %v787 = vmax.f32 %v786, %v368
    %v788 = vmax.f32 %v787, %v384
    %v789 = vmax.f32 %v788, %v400
    %v790 = vmax.f32 %v789, %v416
    %v791 = vrot.slane %v790, 4
    %v792 = vmax.f32 %v790, %v791
    %v793 = vrot.slane %v792, 2
    %v794 = vmax.f32 %v792, %v793
    %v795 = vrot.slane %v794, 1
    %v796 = vmax.f32 %v794, %v795
    %v797 = vmax.f32 %v305, %v321
    %v798 = vmax.f32 %v797, %v337
    %v799 = vmax.f32 %v798, %v353
    %v800 = vmax.f32 %v799, %v369
    %v801 = vmax.f32 %v800, %v385
    %v802 = vmax.f32 %v801, %v401
    %v803 = vmax.f32 %v802, %v417
    %v804 = vrot.slane %v803, 4
    %v805 = vmax.f32 %v803, %v804
    %v806 = vrot.slane %v805, 2
    %v807 = vmax.f32 %v805, %v806
    %v808 = vrot.slane %v807, 1
    %v809 = vmax.f32 %v807, %v808
    %v810 = vmax.f32 %v306, %v322
    %v811 = vmax.f32 %v810, %v338
    %v812 = vmax.f32 %v811, %v354
    %v813 = vmax.f32 %v812, %v370
    %v814 = vmax.f32 %v813, %v386
    %v815 = vmax.f32 %v814, %v402
    %v816 = vmax.f32 %v815, %v418
    %v817 = vrot.slane %v816, 4
    %v818 = vmax.f32 %v816, %v817
    %v819 = vrot.slane %v818, 2
    %v820 = vmax.f32 %v818, %v819
    %v821 = vrot.slane %v820, 1
    %v822 = vmax.f32 %v820, %v821
    %v823 = vmax.f32 %v307, %v323
    %v824 = vmax.f32 %v823, %v339
    %v825 = vmax.f32 %v824, %v355
    %v826 = vmax.f32 %v825, %v371
    %v827 = vmax.f32 %v826, %v387
    %v828 = vmax.f32 %v827, %v403
    %v829 = vmax.f32 %v828, %v419
    %v830 = vrot.slane %v829, 4
    %v831 = vmax.f32 %v829, %v830
    %v832 = vrot.slane %v831, 2
    %v833 = vmax.f32 %v831, %v832
    %v834 = vrot.slane %v833, 1
    %v835 = vmax.f32 %v833, %v834
    %v868 = vcombine.low %v432, %v445
    %v869 = vcombine.low %v458, %v471
    %v870 = vcombine.low %v484, %v497
    %v871 = vcombine.low %v510, %v523
    %v872 = vcombine.low %v536, %v549
    %v873 = vcombine.low %v562, %v575
    %v874 = vcombine.low %v588, %v601
    %v875 = vcombine.low %v614, %v627
    %v876 = vcombine.low %v640, %v653
    %v877 = vcombine.low %v666, %v679
    %v878 = vcombine.low %v692, %v705
    %v879 = vcombine.low %v718, %v731
    %v880 = vcombine.low %v744, %v757
    %v881 = vcombine.low %v770, %v783
    %v882 = vcombine.low %v796, %v809
    %v883 = vcombine.low %v822, %v835
    %v884 = vrot.slane %v876, 7
    %vm885 = vcmask 1041409
    %v886 = vsel %vm885, %v884, %v868
    %vm887 = vcmask 1045509
    %v888 = vsel %vm887, %v884, %v886
    %v889 = vrot.slane %v877, 7
    %v890 = vsel %vm885, %v889, %v869
    %v891 = vsel %vm887, %v889, %v890
    %v892 = vrot.slane %v878, 7
    %v893 = vsel %vm885, %v892, %v870
    %v894 = vsel %vm887, %v892, %v893
    %v895 = vrot.slane %v879, 7
    %v896 = vsel %vm885, %v895, %v871
    %v897 = vsel %vm887, %v895, %v896
    %v898 = vrot.slane %v880, 7
    %v899 = vsel %vm885, %v898, %v872
    %v900 = vsel %vm887, %v898, %v899
    %v901 = vrot.slane %v881, 7
    %v902 = vsel %vm885, %v901, %v873
    %v903 = vsel %vm887, %v901, %v902
    %v904 = vrot.slane %v882, 7
    %v905 = vsel %vm885, %v904, %v874
    %v906 = vsel %vm887, %v904, %v905
    %v907 = vrot.slane %v883, 7
    %v908 = vsel %vm885, %v907, %v875
    %v909 = vsel %vm887, %v907, %v908
    %918 = vst [vmem:[#allocation2] sm:$0x33] %v888
    %919 = vst [vmem:[#allocation2 + $0x8] sm:$0x33] %v891
    %920 = vst [vmem:[#allocation2 + $0x10] sm:$0x33] %v894
    %921 = vst [vmem:[#allocation2 + $0x18] sm:$0x33] %v897
    %922 = vst [vmem:[#allocation2 + $0x20] sm:$0x33] %v900
    %923 = vst [vmem:[#allocation2 + $0x28] sm:$0x33] %v903
    %924 = vst [vmem:[#allocation2 + $0x30] sm:$0x33] %v906
    %925 = vst [vmem:[#allocation2 + $0x38] sm:$0x33] %v909
    %v926 = vadd.f32 %v164, %v180
    %v927 = vadd.f32 %v926, %v196
    %v928 = vadd.f32 %v927, %v212
    %v929 = vadd.f32 %v928, %v228
    %v930 = vadd.f32 %v929, %v244
    %v931 = vadd.f32 %v930, %v260
    %v932 = vadd.f32 %v931, %v276
    %v933 = vrot.slane %v932, 4
    %v934 = vadd.f32 %v932, %v933
    %v935 = vrot.slane %v934, 2
    %v936 = vadd.f32 %v934, %v935
    %v937 = vrot.slane %v936, 1
    %v938 = vadd.f32 %v936, %v937
    %v939 = vadd.f32 %v165, %v181
    %v940 = vadd.f32 %v939, %v197
    %v941 = vadd.f32 %v940, %v213
    %v942 = vadd.f32 %v941, %v229
    %v943 = vadd.f32 %v942, %v245
    %v944 = vadd.f32 %v943, %v261
    %v945 = vadd.f32 %v944, %v277
    %v946 = vrot.slane %v945, 4
    %v947 = vadd.f32 %v945, %v946
    %v948 = vrot.slane %v947, 2
    %v949 = vadd.f32 %v947, %v948
    %v950 = vrot.slane %v949, 1
    %v951 = vadd.f32 %v949, %v950
    %v952 = vadd.f32 %v166, %v182
    %v953 = vadd.f32 %v952, %v198
    %v954 = vadd.f32 %v953, %v214
    %v955 = vadd.f32 %v954, %v230
    %v956 = vadd.f32 %v955, %v246
    %v957 = vadd.f32 %v956, %v262
    %v958 = vadd.f32 %v957, %v278
    %v959 = vrot.slane %v958, 4
    %v960 = vadd.f32 %v958, %v959
    %v961 = vrot.slane %v960, 2
    %v962 = vadd.f32 %v960, %v961
    %v963 = vrot.slane %v962, 1
    %v964 = vadd.f32 %v962, %v963
    %v965 = vadd.f32 %v167, %v183
    %v966 = vadd.f32 %v965, %v199
    %v967 = vadd.f32 %v966, %v215
    %v968 = vadd.f32 %v967, %v231
    %v969 = vadd.f32 %v968, %v247
    %v970 = vadd.f32 %v969, %v263
    %v971 = vadd.f32 %v970, %v279
    %v972 = vrot.slane %v971, 4
    %v973 = vadd.f32 %v971, %v972
    %v974 = vrot.slane %v973, 2
    %v975 = vadd.f32 %v973, %v974
    %v976 = vrot.slane %v975, 1
    %v977 = vadd.f32 %v975, %v976
    %v978 = vadd.f32 %v168, %v184
    %v979 = vadd.f32 %v978, %v200
    %v980 = vadd.f32 %v979, %v216
    %v981 = vadd.f32 %v980, %v232
    %v982 = vadd.f32 %v981, %v248
    %v983 = vadd.f32 %v982, %v264
    %v984 = vadd.f32 %v983, %v280
    %v985 = vrot.slane %v984, 4
    %v986 = vadd.f32 %v984, %v985
    %v987 = vrot.slane %v986, 2
    %v988 = vadd.f32 %v986, %v987
    %v989 = vrot.slane %v988, 1
    %v990 = vadd.f32 %v988, %v989
    %v991 = vadd.f32 %v169, %v185
    %v992 = vadd.f32 %v991, %v201
    %v993 = vadd.f32 %v992, %v217
    %v994 = vadd.f32 %v993, %v233
    %v995 = vadd.f32 %v994, %v249
    %v996 = vadd.f32 %v995, %v265
    %v997 = vadd.f32 %v996, %v281
    %v998 = vrot.slane %v997, 4
    %v999 = vadd.f32 %v997, %v998
    %v1000 = vrot.slane %v999, 2
    %v1001 = vadd.f32 %v999, %v1000
    %v1002 = vrot.slane %v1001, 1
    %v1003 = vadd.f32 %v1001, %v1002
    %v1004 = vadd.f32 %v170, %v186
    %v1005 = vadd.f32 %v1004, %v202
    %v1006 = vadd.f32 %v1005, %v218
    %v1007 = vadd.f32 %v1006, %v234
    %v1008 = vadd.f32 %v1007, %v250
    %v1009 = vadd.f32 %v1008, %v266
    %v1010 = vadd.f32 %v1009, %v282
    %v1011 = vrot.slane %v1010, 4
    %v1012 = vadd.f32 %v1010, %v1011
    %v1013 = vrot.slane %v1012, 2
    %v1014 = vadd.f32 %v1012, %v1013
    %v1015 = vrot.slane %v1014, 1
    %v1016 = vadd.f32 %v1014, %v1015
    %v1017 = vadd.f32 %v171, %v187
    %v1018 = vadd.f32 %v1017, %v203
    %v1019 = vadd.f32 %v1018, %v219
    %v1020 = vadd.f32 %v1019, %v235
    %v1021 = vadd.f32 %v1020, %v251
    %v1022 = vadd.f32 %v1021, %v267
    %v1023 = vadd.f32 %v1022, %v283
    %v1024 = vrot.slane %v1023, 4
    %v1025 = vadd.f32 %v1023, %v1024
    %v1026 = vrot.slane %v1025, 2
    %v1027 = vadd.f32 %v1025, %v1026
    %v1028 = vrot.slane %v1027, 1
    %v1029 = vadd.f32 %v1027, %v1028
    %v1030 = vadd.f32 %v172, %v188
    %v1031 = vadd.f32 %v1030, %v204
    %v1032 = vadd.f32 %v1031, %v220
    %v1033 = vadd.f32 %v1032, %v236
    %v1034 = vadd.f32 %v1033, %v252
    %v1035 = vadd.f32 %v1034, %v268
    %v1036 = vadd.f32 %v1035, %v284
    %v1037 = vrot.slane %v1036, 4
    %v1038 = vadd.f32 %v1036, %v1037
    %v1039 = vrot.slane %v1038, 2
    %v1040 = vadd.f32 %v1038, %v1039
    %v1041 = vrot.slane %v1040, 1
    %v1042 = vadd.f32 %v1040, %v1041
    %v1043 = vadd.f32 %v173, %v189
    %v1044 = vadd.f32 %v1043, %v205
    %v1045 = vadd.f32 %v1044, %v221
    %v1046 = vadd.f32 %v1045, %v237
    %v1047 = vadd.f32 %v1046, %v253
    %v1048 = vadd.f32 %v1047, %v269
    %v1049 = vadd.f32 %v1048, %v285
    %v1050 = vrot.slane %v1049, 4
    %v1051 = vadd.f32 %v1049, %v1050
    %v1052 = vrot.slane %v1051, 2
    %v1053 = vadd.f32 %v1051, %v1052
    %v1054 = vrot.slane %v1053, 1
    %v1055 = vadd.f32 %v1053, %v1054
    %v1056 = vadd.f32 %v174, %v190
    %v1057 = vadd.f32 %v1056, %v206
    %v1058 = vadd.f32 %v1057, %v222
    %v1059 = vadd.f32 %v1058, %v238
    %v1060 = vadd.f32 %v1059, %v254
    %v1061 = vadd.f32 %v1060, %v270
    %v1062 = vadd.f32 %v1061, %v286
    %v1063 = vrot.slane %v1062, 4
    %v1064 = vadd.f32 %v1062, %v1063
    %v1065 = vrot.slane %v1064, 2
    %v1066 = vadd.f32 %v1064, %v1065
    %v1067 = vrot.slane %v1066, 1
    %v1068 = vadd.f32 %v1066, %v1067
    %v1069 = vadd.f32 %v175, %v191
    %v1070 = vadd.f32 %v1069, %v207
    %v1071 = vadd.f32 %v1070, %v223
    %v1072 = vadd.f32 %v1071, %v239
    %v1073 = vadd.f32 %v1072, %v255
    %v1074 = vadd.f32 %v1073, %v271
    %v1075 = vadd.f32 %v1074, %v287
    %v1076 = vrot.slane %v1075, 4
    %v1077 = vadd.f32 %v1075, %v1076
    %v1078 = vrot.slane %v1077, 2
    %v1079 = vadd.f32 %v1077, %v1078
    %v1080 = vrot.slane %v1079, 1
    %v1081 = vadd.f32 %v1079, %v1080
    %v1082 = vadd.f32 %v176, %v192
    %v1083 = vadd.f32 %v1082, %v208
    %v1084 = vadd.f32 %v1083, %v224
    %v1085 = vadd.f32 %v1084, %v240
    %v1086 = vadd.f32 %v1085, %v256
    %v1087 = vadd.f32 %v1086, %v272
    %v1088 = vadd.f32 %v1087, %v288
    %v1089 = vrot.slane %v1088, 4
    %v1090 = vadd.f32 %v1088, %v1089
    %v1091 = vrot.slane %v1090, 2
    %v1092 = vadd.f32 %v1090, %v1091
    %v1093 = vrot.slane %v1092, 1
    %v1094 = vadd.f32 %v1092, %v1093
    %v1095 = vadd.f32 %v177, %v193
    %v1096 = vadd.f32 %v1095, %v209
    %v1097 = vadd.f32 %v1096, %v225
    %v1098 = vadd.f32 %v1097, %v241
    %v1099 = vadd.f32 %v1098, %v257
    %v1100 = vadd.f32 %v1099, %v273
    %v1101 = vadd.f32 %v1100, %v289
    %v1102 = vrot.slane %v1101, 4
    %v1103 = vadd.f32 %v1101, %v1102
    %v1104 = vrot.slane %v1103, 2
    %v1105 = vadd.f32 %v1103, %v1104
    %v1106 = vrot.slane %v1105, 1
    %v1107 = vadd.f32 %v1105, %v1106
    %v1108 = vadd.f32 %v178, %v194
    %v1109 = vadd.f32 %v1108, %v210
    %v1110 = vadd.f32 %v1109, %v226
    %v1111 = vadd.f32 %v1110, %v242
    %v1112 = vadd.f32 %v1111, %v258
    %v1113 = vadd.f32 %v1112, %v274
    %v1114 = vadd.f32 %v1113, %v290
    %v1115 = vrot.slane %v1114, 4
    %v1116 = vadd.f32 %v1114, %v1115
    %v1117 = vrot.slane %v1116, 2
    %v1118 = vadd.f32 %v1116, %v1117
    %v1119 = vrot.slane %v1118, 1
    %v1120 = vadd.f32 %v1118, %v1119
    %v1121 = vadd.f32 %v179, %v195
    %v1122 = vadd.f32 %v1121, %v211
    %v1123 = vadd.f32 %v1122, %v227
    %v1124 = vadd.f32 %v1123, %v243
    %v1125 = vadd.f32 %v1124, %v259
    %v1126 = vadd.f32 %v1125, %v275
    %v1127 = vadd.f32 %v1126, %v291
    %v1128 = vrot.slane %v1127, 4
    %v1129 = vadd.f32 %v1127, %v1128
    %v1130 = vrot.slane %v1129, 2
    %v1131 = vadd.f32 %v1129, %v1130
    %v1132 = vrot.slane %v1131, 1
    %v1133 = vadd.f32 %v1131, %v1132
    %v1134 = vadd.f32 %v292, %v308
    %v1135 = vadd.f32 %v1134, %v324
    %v1136 = vadd.f32 %v1135, %v340
    %v1137 = vadd.f32 %v1136, %v356
    %v1138 = vadd.f32 %v1137, %v372
    %v1139 = vadd.f32 %v1138, %v388
    %v1140 = vadd.f32 %v1139, %v404
    %v1141 = vrot.slane %v1140, 4
    %v1142 = vadd.f32 %v1140, %v1141
    %v1143 = vrot.slane %v1142, 2
    %v1144 = vadd.f32 %v1142, %v1143
    %v1145 = vrot.slane %v1144, 1
    %v1146 = vadd.f32 %v1144, %v1145
    %v1147 = vadd.f32 %v293, %v309
    %v1148 = vadd.f32 %v1147, %v325
    %v1149 = vadd.f32 %v1148, %v341
    %v1150 = vadd.f32 %v1149, %v357
    %v1151 = vadd.f32 %v1150, %v373
    %v1152 = vadd.f32 %v1151, %v389
    %v1153 = vadd.f32 %v1152, %v405
    %v1154 = vrot.slane %v1153, 4
    %v1155 = vadd.f32 %v1153, %v1154
    %v1156 = vrot.slane %v1155, 2
    %v1157 = vadd.f32 %v1155, %v1156
    %v1158 = vrot.slane %v1157, 1
    %v1159 = vadd.f32 %v1157, %v1158
    %v1160 = vadd.f32 %v294, %v310
    %v1161 = vadd.f32 %v1160, %v326
    %v1162 = vadd.f32 %v1161, %v342
    %v1163 = vadd.f32 %v1162, %v358
    %v1164 = vadd.f32 %v1163, %v374
    %v1165 = vadd.f32 %v1164, %v390
    %v1166 = vadd.f32 %v1165, %v406
    %v1167 = vrot.slane %v1166, 4
    %v1168 = vadd.f32 %v1166, %v1167
    %v1169 = vrot.slane %v1168, 2
    %v1170 = vadd.f32 %v1168, %v1169
    %v1171 = vrot.slane %v1170, 1
    %v1172 = vadd.f32 %v1170, %v1171
    %v1173 = vadd.f32 %v295, %v311
    %v1174 = vadd.f32 %v1173, %v327
    %v1175 = vadd.f32 %v1174, %v343
    %v1176 = vadd.f32 %v1175, %v359
    %v1177 = vadd.f32 %v1176, %v375
    %v1178 = vadd.f32 %v1177, %v391
    %v1179 = vadd.f32 %v1178, %v407
    %v1180 = vrot.slane %v1179, 4
    %v1181 = vadd.f32 %v1179, %v1180
    %v1182 = vrot.slane %v1181, 2
    %v1183 = vadd.f32 %v1181, %v1182
    %v1184 = vrot.slane %v1183, 1
    %v1185 = vadd.f32 %v1183, %v1184
    %v1186 = vadd.f32 %v296, %v312
    %v1187 = vadd.f32 %v1186, %v328
    %v1188 = vadd.f32 %v1187, %v344
    %v1189 = vadd.f32 %v1188, %v360
    %v1190 = vadd.f32 %v1189, %v376
    %v1191 = vadd.f32 %v1190, %v392
    %v1192 = vadd.f32 %v1191, %v408
    %v1193 = vrot.slane %v1192, 4
    %v1194 = vadd.f32 %v1192, %v1193
    %v1195 = vrot.slane %v1194, 2
    %v1196 = vadd.f32 %v1194, %v1195
    %v1197 = vrot.slane %v1196, 1
    %v1198 = vadd.f32 %v1196, %v1197
    %v1199 = vadd.f32 %v297, %v313
    %v1200 = vadd.f32 %v1199, %v329
    %v1201 = vadd.f32 %v1200, %v345
    %v1202 = vadd.f32 %v1201, %v361
    %v1203 = vadd.f32 %v1202, %v377
    %v1204 = vadd.f32 %v1203, %v393
    %v1205 = vadd.f32 %v1204, %v409
    %v1206 = vrot.slane %v1205, 4
    %v1207 = vadd.f32 %v1205, %v1206
    %v1208 = vrot.slane %v1207, 2
    %v1209 = vadd.f32 %v1207, %v1208
    %v1210 = vrot.slane %v1209, 1
    %v1211 = vadd.f32 %v1209, %v1210
    %v1212 = vadd.f32 %v298, %v314
    %v1213 = vadd.f32 %v1212, %v330
    %v1214 = vadd.f32 %v1213, %v346
    %v1215 = vadd.f32 %v1214, %v362
    %v1216 = vadd.f32 %v1215, %v378
    %v1217 = vadd.f32 %v1216, %v394
    %v1218 = vadd.f32 %v1217, %v410
    %v1219 = vrot.slane %v1218, 4
    %v1220 = vadd.f32 %v1218, %v1219
    %v1221 = vrot.slane %v1220, 2
    %v1222 = vadd.f32 %v1220, %v1221
    %v1223 = vrot.slane %v1222, 1
    %v1224 = vadd.f32 %v1222, %v1223
    %v1225 = vadd.f32 %v299, %v315
    %v1226 = vadd.f32 %v1225, %v331
    %v1227 = vadd.f32 %v1226, %v347
    %v1228 = vadd.f32 %v1227, %v363
    %v1229 = vadd.f32 %v1228, %v379
    %v1230 = vadd.f32 %v1229, %v395
    %v1231 = vadd.f32 %v1230, %v411
    %v1232 = vrot.slane %v1231, 4
    %v1233 = vadd.f32 %v1231, %v1232
    %v1234 = vrot.slane %v1233, 2
    %v1235 = vadd.f32 %v1233, %v1234
    %v1236 = vrot.slane %v1235, 1
    %v1237 = vadd.f32 %v1235, %v1236
    %v1238 = vadd.f32 %v300, %v316
    %v1239 = vadd.f32 %v1238, %v332
    %v1240 = vadd.f32 %v1239, %v348
    %v1241 = vadd.f32 %v1240, %v364
    %v1242 = vadd.f32 %v1241, %v380
    %v1243 = vadd.f32 %v1242, %v396
    %v1244 = vadd.f32 %v1243, %v412
    %v1245 = vrot.slane %v1244, 4
    %v1246 = vadd.f32 %v1244, %v1245
    %v1247 = vrot.slane %v1246, 2
    %v1248 = vadd.f32 %v1246, %v1247
    %v1249 = vrot.slane %v1248, 1
    %v1250 = vadd.f32 %v1248, %v1249
    %v1251 = vadd.f32 %v301, %v317
    %v1252 = vadd.f32 %v1251, %v333
    %v1253 = vadd.f32 %v1252, %v349
    %v1254 = vadd.f32 %v1253, %v365
    %v1255 = vadd.f32 %v1254, %v381
    %v1256 = vadd.f32 %v1255, %v397
    %v1257 = vadd.f32 %v1256, %v413
    %v1258 = vrot.slane %v1257, 4
    %v1259 = vadd.f32 %v1257, %v1258
    %v1260 = vrot.slane %v1259, 2
    %v1261 = vadd.f32 %v1259, %v1260
    %v1262 = vrot.slane %v1261, 1
    %v1263 = vadd.f32 %v1261, %v1262
    %v1264 = vadd.f32 %v302, %v318
    %v1265 = vadd.f32 %v1264, %v334
    %v1266 = vadd.f32 %v1265, %v350
    %v1267 = vadd.f32 %v1266, %v366
    %v1268 = vadd.f32 %v1267, %v382
    %v1269 = vadd.f32 %v1268, %v398
    %v1270 = vadd.f32 %v1269, %v414
    %v1271 = vrot.slane %v1270, 4
    %v1272 = vadd.f32 %v1270, %v1271
    %v1273 = vrot.slane %v1272, 2
    %v1274 = vadd.f32 %v1272, %v1273
    %v1275 = vrot.slane %v1274, 1
    %v1276 = vadd.f32 %v1274, %v1275
    %v1277 = vadd.f32 %v303, %v319
    %v1278 = vadd.f32 %v1277, %v335
    %v1279 = vadd.f32 %v1278, %v351
    %v1280 = vadd.f32 %v1279, %v367
    %v1281 = vadd.f32 %v1280, %v383
    %v1282 = vadd.f32 %v1281, %v399
    %v1283 = vadd.f32 %v1282, %v415
    %v1284 = vrot.slane %v1283, 4
    %v1285 = vadd.f32 %v1283, %v1284
    %v1286 = vrot.slane %v1285, 2
    %v1287 = vadd.f32 %v1285, %v1286
    %v1288 = vrot.slane %v1287, 1
    %v1289 = vadd.f32 %v1287, %v1288
    %v1290 = vadd.f32 %v304, %v320
    %v1291 = vadd.f32 %v1290, %v336
    %v1292 = vadd.f32 %v1291, %v352
    %v1293 = vadd.f32 %v1292, %v368
    %v1294 = vadd.f32 %v1293, %v384
    %v1295 = vadd.f32 %v1294, %v400
    %v1296 = vadd.f32 %v1295, %v416
    %v1297 = vrot.slane %v1296, 4
    %v1298 = vadd.f32 %v1296, %v1297
    %v1299 = vrot.slane %v1298, 2
    %v1300 = vadd.f32 %v1298, %v1299
    %v1301 = vrot.slane %v1300, 1
    %v1302 = vadd.f32 %v1300, %v1301
    %v1303 = vadd.f32 %v305, %v321
    %v1304 = vadd.f32 %v1303, %v337
    %v1305 = vadd.f32 %v1304, %v353
    %v1306 = vadd.f32 %v1305, %v369
    %v1307 = vadd.f32 %v1306, %v385
    %v1308 = vadd.f32 %v1307, %v401
    %v1309 = vadd.f32 %v1308, %v417
    %v1310 = vrot.slane %v1309, 4
    %v1311 = vadd.f32 %v1309, %v1310
    %v1312 = vrot.slane %v1311, 2
    %v1313 = vadd.f32 %v1311, %v1312
    %v1314 = vrot.slane %v1313, 1
    %v1315 = vadd.f32 %v1313, %v1314
    %v1316 = vadd.f32 %v306, %v322
    %v1317 = vadd.f32 %v1316, %v338
    %v1318 = vadd.f32 %v1317, %v354
    %v1319 = vadd.f32 %v1318, %v370
    %v1320 = vadd.f32 %v1319, %v386
    %v1321 = vadd.f32 %v1320, %v402
    %v1322 = vadd.f32 %v1321, %v418
    %v1323 = vrot.slane %v1322, 4
    %v1324 = vadd.f32 %v1322, %v1323
    %v1325 = vrot.slane %v1324, 2
    %v1326 = vadd.f32 %v1324, %v1325
    %v1327 = vrot.slane %v1326, 1
    %v1328 = vadd.f32 %v1326, %v1327
    %v1329 = vadd.f32 %v307, %v323
    %v1330 = vadd.f32 %v1329, %v339
    %v1331 = vadd.f32 %v1330, %v355
    %v1332 = vadd.f32 %v1331, %v371
    %v1333 = vadd.f32 %v1332, %v387
    %v1334 = vadd.f32 %v1333, %v403
    %v1335 = vadd.f32 %v1334, %v419
    %v1336 = vrot.slane %v1335, 4
    %v1337 = vadd.f32 %v1335, %v1336
    %v1338 = vrot.slane %v1337, 2
    %v1339 = vadd.f32 %v1337, %v1338
    %v1340 = vrot.slane %v1339, 1
    %v1341 = vadd.f32 %v1339, %v1340
    %v1342 = vrcp.pop 64.0
    %v1343 = vmul.f32 %v938, %v1342
    %v1344 = vmul.f32 %v951, %v1342
    %v1345 = vmul.f32 %v964, %v1342
    %v1346 = vmul.f32 %v977, %v1342
    %v1347 = vmul.f32 %v990, %v1342
    %v1348 = vmul.f32 %v1003, %v1342
    %v1349 = vmul.f32 %v1016, %v1342
    %v1350 = vmul.f32 %v1029, %v1342
    %v1351 = vmul.f32 %v1042, %v1342
    %v1352 = vmul.f32 %v1055, %v1342
    %v1353 = vmul.f32 %v1068, %v1342
    %v1354 = vmul.f32 %v1081, %v1342
    %v1355 = vmul.f32 %v1094, %v1342
    %v1356 = vmul.f32 %v1107, %v1342
    %v1357 = vmul.f32 %v1120, %v1342
    %v1358 = vmul.f32 %v1133, %v1342
    %v1359 = vmul.f32 %v1146, %v1342
    %v1360 = vmul.f32 %v1159, %v1342
    %v1361 = vmul.f32 %v1172, %v1342
    %v1362 = vmul.f32 %v1185, %v1342
    %v1363 = vmul.f32 %v1198, %v1342
    %v1364 = vmul.f32 %v1211, %v1342
    %v1365 = vmul.f32 %v1224, %v1342
    %v1366 = vmul.f32 %v1237, %v1342
    %v1367 = vmul.f32 %v1250, %v1342
    %v1368 = vmul.f32 %v1263, %v1342
    %v1369 = vmul.f32 %v1276, %v1342
    %v1370 = vmul.f32 %v1289, %v1342
    %v1371 = vmul.f32 %v1302, %v1342
    %v1372 = vmul.f32 %v1315, %v1342
    %v1373 = vmul.f32 %v1328, %v1342
    %v1374 = vmul.f32 %v1341, %v1342
    %v1407 = vcombine.low %v1343, %v1344
    %v1408 = vcombine.low %v1345, %v1346
    %v1409 = vcombine.low %v1347, %v1348
    %v1410 = vcombine.low %v1349, %v1350
    %v1411 = vcombine.low %v1351, %v1352
    %v1412 = vcombine.low %v1353, %v1354
    %v1413 = vcombine.low %v1355, %v1356
    %v1414 = vcombine.low %v1357, %v1358
    %v1415 = vcombine.low %v1359, %v1360
    %v1416 = vcombine.low %v1361, %v1362
    %v1417 = vcombine.low %v1363, %v1364
    %v1418 = vcombine.low %v1365, %v1366
    %v1419 = vcombine.low %v1367, %v1368
    %v1420 = vcombine.low %v1369, %v1370
    %v1421 = vcombine.low %v1371, %v1372
    %v1422 = vcombine.low %v1373, %v1374
    %v1423 = vrot.slane %v1407, 6
    %v1424 = vrot.slane %v1415, 5
    %vm1425 = vcmask 1043459
    %v1426 = vsel %vm1425, %v1424, %v1423
    %vm1427 = vcmask 1047559
    %v1428 = vsel %vm1427, %v1424, %v1426
    %v1429 = vrot.slane %v1408, 6
    %v1430 = vrot.slane %v1416, 5
    %v1431 = vsel %vm1425, %v1430, %v1429
    %v1432 = vsel %vm1427, %v1430, %v1431
    %v1433 = vrot.slane %v1409, 6
    %v1434 = vrot.slane %v1417, 5
    %v1435 = vsel %vm1425, %v1434, %v1433
    %v1436 = vsel %vm1427, %v1434, %v1435
    %v1437 = vrot.slane %v1410, 6
    %v1438 = vrot.slane %v1418, 5
    %v1439 = vsel %vm1425, %v1438, %v1437
    %v1440 = vsel %vm1427, %v1438, %v1439
    %v1441 = vrot.slane %v1411, 6
    %v1442 = vrot.slane %v1419, 5
    %v1443 = vsel %vm1425, %v1442, %v1441
    %v1444 = vsel %vm1427, %v1442, %v1443
    %v1445 = vrot.slane %v1412, 6
    %v1446 = vrot.slane %v1420, 5
    %v1447 = vsel %vm1425, %v1446, %v1445
    %v1448 = vsel %vm1427, %v1446, %v1447
    %v1449 = vrot.slane %v1413, 6
    %v1450 = vrot.slane %v1421, 5
    %v1451 = vsel %vm1425, %v1450, %v1449
    %v1452 = vsel %vm1427, %v1450, %v1451
    %v1453 = vrot.slane %v1414, 6
    %v1454 = vrot.slane %v1422, 5
    %v1455 = vsel %vm1425, %v1454, %v1453
    %v1456 = vsel %vm1427, %v1454, %v1455
    %1465 = vst [vmem:[#allocation2] sm:$0xcc] %v1428
    %1466 = vst [vmem:[#allocation2 + $0x8] sm:$0xcc] %v1432
    %1467 = vst [vmem:[#allocation2 + $0x10] sm:$0xcc] %v1436
    %1468 = vst [vmem:[#allocation2 + $0x18] sm:$0xcc] %v1440
    %1469 = vst [vmem:[#allocation2 + $0x20] sm:$0xcc] %v1444
    %1470 = vst [vmem:[#allocation2 + $0x28] sm:$0xcc] %v1448
    %1471 = vst [vmem:[#allocation2 + $0x30] sm:$0xcc] %v1452
    %1472 = vst [vmem:[#allocation2 + $0x38] sm:$0xcc] %v1456
    %v1473 = vld [vmem:[#allocation2] sm:$0xff]
    %v1474 = vld [vmem:[#allocation2 + $0x8] sm:$0xff]
    %v1475 = vld [vmem:[#allocation2 + $0x10] sm:$0xff]
    %v1476 = vld [vmem:[#allocation2 + $0x18] sm:$0xff]
    %v1477 = vld [vmem:[#allocation2 + $0x20] sm:$0xff]
    %v1478 = vld [vmem:[#allocation2 + $0x28] sm:$0xff]
    %v1479 = vld [vmem:[#allocation2 + $0x30] sm:$0xff]
    %v1480 = vld [vmem:[#allocation2 + $0x38] sm:$0xff]
    %v1489 = vcombine.high %v1473, %v1473
    %v1490 = vcombine.high %v1474, %v1474
    %v1491 = vcombine.high %v1475, %v1475
    %v1492 = vcombine.high %v1476, %v1476
    %v1493 = vcombine.high %v1477, %v1477
    %v1494 = vcombine.high %v1478, %v1478
    %v1495 = vcombine.high %v1479, %v1479
    %v1496 = vcombine.high %v1480, %v1480
    %v1505 = vpack.c.bf16 %v1473, %v1473
    %v1506 = vpack.c.bf16 %v1489, %v1489
    %v1507 = vpack.c.bf16 %v1474, %v1474
    %v1508 = vpack.c.bf16 %v1490, %v1490
    %v1509 = vpack.c.bf16 %v1475, %v1475
    %v1510 = vpack.c.bf16 %v1491, %v1491
    %v1511 = vpack.c.bf16 %v1476, %v1476
    %v1512 = vpack.c.bf16 %v1492, %v1492
    %v1513 = vpack.c.bf16 %v1477, %v1477
    %v1514 = vpack.c.bf16 %v1493, %v1493
    %v1515 = vpack.c.bf16 %v1478, %v1478
    %v1516 = vpack.c.bf16 %v1494, %v1494
    %v1517 = vpack.c.bf16 %v1479, %v1479
    %v1518 = vpack.c.bf16 %v1495, %v1495
    %v1519 = vpack.c.bf16 %v1480, %v1480
    %v1520 = vpack.c.bf16 %v1496, %v1496
    %v1521 = vld [vmem:[%s1] sm:$0xf]
    %v1522 = vld [vmem:[%s1 + $0x4] sm:$0xf]
    %v1523 = vld [vmem:[%s1 + $0x8] sm:$0xf]
    %v1524 = vld [vmem:[%s1 + $0xc] sm:$0xf]
    %v1525 = vld [vmem:[%s1 + $0x10] sm:$0xf]
    %v1526 = vld [vmem:[%s1 + $0x14] sm:$0xf]
    %v1527 = vld [vmem:[%s1 + $0x18] sm:$0xf]
    %v1528 = vld [vmem:[%s1 + $0x1c] sm:$0xf]
    %v1529 = vld [vmem:[%s1 + $0x20] sm:$0xf]
    %v1530 = vld [vmem:[%s1 + $0x24] sm:$0xf]
    %v1531 = vld [vmem:[%s1 + $0x28] sm:$0xf]
    %v1532 = vld [vmem:[%s1 + $0x2c] sm:$0xf]
    %v1533 = vld [vmem:[%s1 + $0x30] sm:$0xf]
    %v1534 = vld [vmem:[%s1 + $0x34] sm:$0xf]
    %v1535 = vld [vmem:[%s1 + $0x38] sm:$0xf]
    %v1536 = vld [vmem:[%s1 + $0x3c] sm:$0xf]
    %v1537 = vld [vmem:[%s1 + $0x40] sm:$0xf]
    %v1538 = vld [vmem:[%s1 + $0x44] sm:$0xf]
    %v1539 = vld [vmem:[%s1 + $0x48] sm:$0xf]
    %v1540 = vld [vmem:[%s1 + $0x4c] sm:$0xf]
    %v1541 = vld [vmem:[%s1 + $0x50] sm:$0xf]
    %v1542 = vld [vmem:[%s1 + $0x54] sm:$0xf]
    %v1543 = vld [vmem:[%s1 + $0x58] sm:$0xf]
    %v1544 = vld [vmem:[%s1 + $0x5c] sm:$0xf]
    %v1545 = vld [vmem:[%s1 + $0x60] sm:$0xf]
    %v1546 = vld [vmem:[%s1 + $0x64] sm:$0xf]
    %v1547 = vld [vmem:[%s1 + $0x68] sm:$0xf]
    %v1548 = vld [vmem:[%s1 + $0x6c] sm:$0xf]
    %v1549 = vld [vmem:[%s1 + $0x70] sm:$0xf]
    %v1550 = vld [vmem:[%s1 + $0x74] sm:$0xf]
    %v1551 = vld [vmem:[%s1 + $0x78] sm:$0xf]
    %v1552 = vld [vmem:[%s1 + $0x7c] sm:$0xf]
    %v1553 = vld [vmem:[%s1 + $0x80] sm:$0xf]
    %v1554 = vld [vmem:[%s1 + $0x84] sm:$0xf]
    %v1555 = vld [vmem:[%s1 + $0x88] sm:$0xf]
    %v1556 = vld [vmem:[%s1 + $0x8c] sm:$0xf]
    %v1557 = vld [vmem:[%s1 + $0x90] sm:$0xf]
    %v1558 = vld [vmem:[%s1 + $0x94] sm:$0xf]
    %v1559 = vld [vmem:[%s1 + $0x98] sm:$0xf]
    %v1560 = vld [vmem:[%s1 + $0x9c] sm:$0xf]
    %v1561 = vld [vmem:[%s1 + $0xa0] sm:$0xf]
    %v1562 = vld [vmem:[%s1 + $0xa4] sm:$0xf]
    %v1563 = vld [vmem:[%s1 + $0xa8] sm:$0xf]
    %v1564 = vld [vmem:[%s1 + $0xac] sm:$0xf]
    %v1565 = vld [vmem:[%s1 + $0xb0] sm:$0xf]
    %v1566 = vld [vmem:[%s1 + $0xb4] sm:$0xf]
    %v1567 = vld [vmem:[%s1 + $0xb8] sm:$0xf]
    %v1568 = vld [vmem:[%s1 + $0xbc] sm:$0xf]
    %v1569 = vld [vmem:[%s1 + $0xc0] sm:$0xf]
    %v1570 = vld [vmem:[%s1 + $0xc4] sm:$0xf]
    %v1571 = vld [vmem:[%s1 + $0xc8] sm:$0xf]
    %v1572 = vld [vmem:[%s1 + $0xcc] sm:$0xf]
    %v1573 = vld [vmem:[%s1 + $0xd0] sm:$0xf]
    %v1574 = vld [vmem:[%s1 + $0xd4] sm:$0xf]
    %v1575 = vld [vmem:[%s1 + $0xd8] sm:$0xf]
    %v1576 = vld [vmem:[%s1 + $0xdc] sm:$0xf]
    %v1577 = vld [vmem:[%s1 + $0xe0] sm:$0xf]
    %v1578 = vld [vmem:[%s1 + $0xe4] sm:$0xf]
    %v1579 = vld [vmem:[%s1 + $0xe8] sm:$0xf]
    %v1580 = vld [vmem:[%s1 + $0xec] sm:$0xf]
    %v1581 = vld [vmem:[%s1 + $0xf0] sm:$0xf]
    %v1582 = vld [vmem:[%s1 + $0xf4] sm:$0xf]
    %v1583 = vld [vmem:[%s1 + $0xf8] sm:$0xf]
    %v1584 = vld [vmem:[%s1 + $0xfc] sm:$0xf]
    %v1585 = vld [vmem:[%s1 + $0x100] sm:$0xf]
    %v1586 = vld [vmem:[%s1 + $0x104] sm:$0xf]
    %v1587 = vld [vmem:[%s1 + $0x108] sm:$0xf]
    %v1588 = vld [vmem:[%s1 + $0x10c] sm:$0xf]
    %v1589 = vld [vmem:[%s1 + $0x110] sm:$0xf]
    %v1590 = vld [vmem:[%s1 + $0x114] sm:$0xf]
    %v1591 = vld [vmem:[%s1 + $0x118] sm:$0xf]
    %v1592 = vld [vmem:[%s1 + $0x11c] sm:$0xf]
    %v1593 = vld [vmem:[%s1 + $0x120] sm:$0xf]
    %v1594 = vld [vmem:[%s1 + $0x124] sm:$0xf]
    %v1595 = vld [vmem:[%s1 + $0x128] sm:$0xf]
    %v1596 = vld [vmem:[%s1 + $0x12c] sm:$0xf]
    %v1597 = vld [vmem:[%s1 + $0x130] sm:$0xf]
    %v1598 = vld [vmem:[%s1 + $0x134] sm:$0xf]
    %v1599 = vld [vmem:[%s1 + $0x138] sm:$0xf]
    %v1600 = vld [vmem:[%s1 + $0x13c] sm:$0xf]
    %v1601 = vld [vmem:[%s1 + $0x140] sm:$0xf]
    %v1602 = vld [vmem:[%s1 + $0x144] sm:$0xf]
    %v1603 = vld [vmem:[%s1 + $0x148] sm:$0xf]
    %v1604 = vld [vmem:[%s1 + $0x14c] sm:$0xf]
    %v1605 = vld [vmem:[%s1 + $0x150] sm:$0xf]
    %v1606 = vld [vmem:[%s1 + $0x154] sm:$0xf]
    %v1607 = vld [vmem:[%s1 + $0x158] sm:$0xf]
    %v1608 = vld [vmem:[%s1 + $0x15c] sm:$0xf]
    %v1609 = vld [vmem:[%s1 + $0x160] sm:$0xf]
    %v1610 = vld [vmem:[%s1 + $0x164] sm:$0xf]
    %v1611 = vld [vmem:[%s1 + $0x168] sm:$0xf]
    %v1612 = vld [vmem:[%s1 + $0x16c] sm:$0xf]
    %v1613 = vld [vmem:[%s1 + $0x170] sm:$0xf]
    %v1614 = vld [vmem:[%s1 + $0x174] sm:$0xf]
    %v1615 = vld [vmem:[%s1 + $0x178] sm:$0xf]
    %v1616 = vld [vmem:[%s1 + $0x17c] sm:$0xf]
    %v1617 = vld [vmem:[%s1 + $0x180] sm:$0xf]
    %v1618 = vld [vmem:[%s1 + $0x184] sm:$0xf]
    %v1619 = vld [vmem:[%s1 + $0x188] sm:$0xf]
    %v1620 = vld [vmem:[%s1 + $0x18c] sm:$0xf]
    %v1621 = vld [vmem:[%s1 + $0x190] sm:$0xf]
    %v1622 = vld [vmem:[%s1 + $0x194] sm:$0xf]
    %v1623 = vld [vmem:[%s1 + $0x198] sm:$0xf]
    %v1624 = vld [vmem:[%s1 + $0x19c] sm:$0xf]
    %v1625 = vld [vmem:[%s1 + $0x1a0] sm:$0xf]
    %v1626 = vld [vmem:[%s1 + $0x1a4] sm:$0xf]
    %v1627 = vld [vmem:[%s1 + $0x1a8] sm:$0xf]
    %v1628 = vld [vmem:[%s1 + $0x1ac] sm:$0xf]
    %v1629 = vld [vmem:[%s1 + $0x1b0] sm:$0xf]
    %v1630 = vld [vmem:[%s1 + $0x1b4] sm:$0xf]
    %v1631 = vld [vmem:[%s1 + $0x1b8] sm:$0xf]
    %v1632 = vld [vmem:[%s1 + $0x1bc] sm:$0xf]
    %v1633 = vld [vmem:[%s1 + $0x1c0] sm:$0xf]
    %v1634 = vld [vmem:[%s1 + $0x1c4] sm:$0xf]
    %v1635 = vld [vmem:[%s1 + $0x1c8] sm:$0xf]
    %v1636 = vld [vmem:[%s1 + $0x1cc] sm:$0xf]
    %v1637 = vld [vmem:[%s1 + $0x1d0] sm:$0xf]
    %v1638 = vld [vmem:[%s1 + $0x1d4] sm:$0xf]
    %v1639 = vld [vmem:[%s1 + $0x1d8] sm:$0xf]
    %v1640 = vld [vmem:[%s1 + $0x1dc] sm:$0xf]
    %v1641 = vld [vmem:[%s1 + $0x1e0] sm:$0xf]
    %v1642 = vld [vmem:[%s1 + $0x1e4] sm:$0xf]
    %v1643 = vld [vmem:[%s1 + $0x1e8] sm:$0xf]
    %v1644 = vld [vmem:[%s1 + $0x1ec] sm:$0xf]
    %v1645 = vld [vmem:[%s1 + $0x1f0] sm:$0xf]
    %v1646 = vld [vmem:[%s1 + $0x1f4] sm:$0xf]
    %v1647 = vld [vmem:[%s1 + $0x1f8] sm:$0xf]
    %v1648 = vld [vmem:[%s1 + $0x1fc] sm:$0xf]
    %v1649 = vld [vmem:[%s1 + $0x200] sm:$0xf]
    %v1650 = vld [vmem:[%s1 + $0x204] sm:$0xf]
    %v1651 = vld [vmem:[%s1 + $0x208] sm:$0xf]
    %v1652 = vld [vmem:[%s1 + $0x20c] sm:$0xf]
    %v1653 = vld [vmem:[%s1 + $0x210] sm:$0xf]
    %v1654 = vld [vmem:[%s1 + $0x214] sm:$0xf]
    %v1655 = vld [vmem:[%s1 + $0x218] sm:$0xf]
    %v1656 = vld [vmem:[%s1 + $0x21c] sm:$0xf]
    %v1657 = vld [vmem:[%s1 + $0x220] sm:$0xf]
    %v1658 = vld [vmem:[%s1 + $0x224] sm:$0xf]
    %v1659 = vld [vmem:[%s1 + $0x228] sm:$0xf]
    %v1660 = vld [vmem:[%s1 + $0x22c] sm:$0xf]
    %v1661 = vld [vmem:[%s1 + $0x230] sm:$0xf]
    %v1662 = vld [vmem:[%s1 + $0x234] sm:$0xf]
    %v1663 = vld [vmem:[%s1 + $0x238] sm:$0xf]
    %v1664 = vld [vmem:[%s1 + $0x23c] sm:$0xf]
    %v1665 = vld [vmem:[%s1 + $0x240] sm:$0xf]
    %v1666 = vld [vmem:[%s1 + $0x244] sm:$0xf]
    %v1667 = vld [vmem:[%s1 + $0x248] sm:$0xf]
    %v1668 = vld [vmem:[%s1 + $0x24c] sm:$0xf]
    %v1669 = vld [vmem:[%s1 + $0x250] sm:$0xf]
    %v1670 = vld [vmem:[%s1 + $0x254] sm:$0xf]
    %v1671 = vld [vmem:[%s1 + $0x258] sm:$0xf]
    %v1672 = vld [vmem:[%s1 + $0x25c] sm:$0xf]
    %v1673 = vld [vmem:[%s1 + $0x260] sm:$0xf]
    %v1674 = vld [vmem:[%s1 + $0x264] sm:$0xf]
    %v1675 = vld [vmem:[%s1 + $0x268] sm:$0xf]
    %v1676 = vld [vmem:[%s1 + $0x26c] sm:$0xf]
    %v1677 = vld [vmem:[%s1 + $0x270] sm:$0xf]
    %v1678 = vld [vmem:[%s1 + $0x274] sm:$0xf]
    %v1679 = vld [vmem:[%s1 + $0x278] sm:$0xf]
    %v1680 = vld [vmem:[%s1 + $0x27c] sm:$0xf]
    %v1681 = vld [vmem:[%s1 + $0x280] sm:$0xf]
    %v1682 = vld [vmem:[%s1 + $0x284] sm:$0xf]
    %v1683 = vld [vmem:[%s1 + $0x288] sm:$0xf]
    %v1684 = vld [vmem:[%s1 + $0x28c] sm:$0xf]
    %v1685 = vld [vmem:[%s1 + $0x290] sm:$0xf]
    %v1686 = vld [vmem:[%s1 + $0x294] sm:$0xf]
    %v1687 = vld [vmem:[%s1 + $0x298] sm:$0xf]
    %v1688 = vld [vmem:[%s1 + $0x29c] sm:$0xf]
    %v1689 = vld [vmem:[%s1 + $0x2a0] sm:$0xf]
    %v1690 = vld [vmem:[%s1 + $0x2a4] sm:$0xf]
    %v1691 = vld [vmem:[%s1 + $0x2a8] sm:$0xf]
    %v1692 = vld [vmem:[%s1 + $0x2ac] sm:$0xf]
    %v1693 = vld [vmem:[%s1 + $0x2b0] sm:$0xf]
    %v1694 = vld [vmem:[%s1 + $0x2b4] sm:$0xf]
    %v1695 = vld [vmem:[%s1 + $0x2b8] sm:$0xf]
    %v1696 = vld [vmem:[%s1 + $0x2bc] sm:$0xf]
    %v1697 = vld [vmem:[%s1 + $0x2c0] sm:$0xf]
    %v1698 = vld [vmem:[%s1 + $0x2c4] sm:$0xf]
    %v1699 = vld [vmem:[%s1 + $0x2c8] sm:$0xf]
    %v1700 = vld [vmem:[%s1 + $0x2cc] sm:$0xf]
    %v1701 = vld [vmem:[%s1 + $0x2d0] sm:$0xf]
    %v1702 = vld [vmem:[%s1 + $0x2d4] sm:$0xf]
    %v1703 = vld [vmem:[%s1 + $0x2d8] sm:$0xf]
    %v1704 = vld [vmem:[%s1 + $0x2dc] sm:$0xf]
    %v1705 = vld [vmem:[%s1 + $0x2e0] sm:$0xf]
    %v1706 = vld [vmem:[%s1 + $0x2e4] sm:$0xf]
    %v1707 = vld [vmem:[%s1 + $0x2e8] sm:$0xf]
    %v1708 = vld [vmem:[%s1 + $0x2ec] sm:$0xf]
    %v1709 = vld [vmem:[%s1 + $0x2f0] sm:$0xf]
    %v1710 = vld [vmem:[%s1 + $0x2f4] sm:$0xf]
    %v1711 = vld [vmem:[%s1 + $0x2f8] sm:$0xf]
    %v1712 = vld [vmem:[%s1 + $0x2fc] sm:$0xf]
    %v1713 = vld [vmem:[%s1 + $0x300] sm:$0xf]
    %v1714 = vld [vmem:[%s1 + $0x304] sm:$0xf]
    %v1715 = vld [vmem:[%s1 + $0x308] sm:$0xf]
    %v1716 = vld [vmem:[%s1 + $0x30c] sm:$0xf]
    %v1717 = vld [vmem:[%s1 + $0x310] sm:$0xf]
    %v1718 = vld [vmem:[%s1 + $0x314] sm:$0xf]
    %v1719 = vld [vmem:[%s1 + $0x318] sm:$0xf]
    %v1720 = vld [vmem:[%s1 + $0x31c] sm:$0xf]
    %v1721 = vld [vmem:[%s1 + $0x320] sm:$0xf]
    %v1722 = vld [vmem:[%s1 + $0x324] sm:$0xf]
    %v1723 = vld [vmem:[%s1 + $0x328] sm:$0xf]
    %v1724 = vld [vmem:[%s1 + $0x32c] sm:$0xf]
    %v1725 = vld [vmem:[%s1 + $0x330] sm:$0xf]
    %v1726 = vld [vmem:[%s1 + $0x334] sm:$0xf]
    %v1727 = vld [vmem:[%s1 + $0x338] sm:$0xf]
    %v1728 = vld [vmem:[%s1 + $0x33c] sm:$0xf]
    %v1729 = vld [vmem:[%s1 + $0x340] sm:$0xf]
    %v1730 = vld [vmem:[%s1 + $0x344] sm:$0xf]
    %v1731 = vld [vmem:[%s1 + $0x348] sm:$0xf]
    %v1732 = vld [vmem:[%s1 + $0x34c] sm:$0xf]
    %v1733 = vld [vmem:[%s1 + $0x350] sm:$0xf]
    %v1734 = vld [vmem:[%s1 + $0x354] sm:$0xf]
    %v1735 = vld [vmem:[%s1 + $0x358] sm:$0xf]
    %v1736 = vld [vmem:[%s1 + $0x35c] sm:$0xf]
    %v1737 = vld [vmem:[%s1 + $0x360] sm:$0xf]
    %v1738 = vld [vmem:[%s1 + $0x364] sm:$0xf]
    %v1739 = vld [vmem:[%s1 + $0x368] sm:$0xf]
    %v1740 = vld [vmem:[%s1 + $0x36c] sm:$0xf]
    %v1741 = vld [vmem:[%s1 + $0x370] sm:$0xf]
    %v1742 = vld [vmem:[%s1 + $0x374] sm:$0xf]
    %v1743 = vld [vmem:[%s1 + $0x378] sm:$0xf]
    %v1744 = vld [vmem:[%s1 + $0x37c] sm:$0xf]
    %v1745 = vld [vmem:[%s1 + $0x380] sm:$0xf]
    %v1746 = vld [vmem:[%s1 + $0x384] sm:$0xf]
    %v1747 = vld [vmem:[%s1 + $0x388] sm:$0xf]
    %v1748 = vld [vmem:[%s1 + $0x38c] sm:$0xf]
    %v1749 = vld [vmem:[%s1 + $0x390] sm:$0xf]
    %v1750 = vld [vmem:[%s1 + $0x394] sm:$0xf]
    %v1751 = vld [vmem:[%s1 + $0x398] sm:$0xf]
    %v1752 = vld [vmem:[%s1 + $0x39c] sm:$0xf]
    %v1753 = vld [vmem:[%s1 + $0x3a0] sm:$0xf]
    %v1754 = vld [vmem:[%s1 + $0x3a4] sm:$0xf]
    %v1755 = vld [vmem:[%s1 + $0x3a8] sm:$0xf]
    %v1756 = vld [vmem:[%s1 + $0x3ac] sm:$0xf]
    %v1757 = vld [vmem:[%s1 + $0x3b0] sm:$0xf]
    %v1758 = vld [vmem:[%s1 + $0x3b4] sm:$0xf]
    %v1759 = vld [vmem:[%s1 + $0x3b8] sm:$0xf]
    %v1760 = vld [vmem:[%s1 + $0x3bc] sm:$0xf]
    %v1761 = vld [vmem:[%s1 + $0x3c0] sm:$0xf]
    %v1762 = vld [vmem:[%s1 + $0x3c4] sm:$0xf]
    %v1763 = vld [vmem:[%s1 + $0x3c8] sm:$0xf]
    %v1764 = vld [vmem:[%s1 + $0x3cc] sm:$0xf]
    %v1765 = vld [vmem:[%s1 + $0x3d0] sm:$0xf]
    %v1766 = vld [vmem:[%s1 + $0x3d4] sm:$0xf]
    %v1767 = vld [vmem:[%s1 + $0x3d8] sm:$0xf]
    %v1768 = vld [vmem:[%s1 + $0x3dc] sm:$0xf]
    %v1769 = vld [vmem:[%s1 + $0x3e0] sm:$0xf]
    %v1770 = vld [vmem:[%s1 + $0x3e4] sm:$0xf]
    %v1771 = vld [vmem:[%s1 + $0x3e8] sm:$0xf]
    %v1772 = vld [vmem:[%s1 + $0x3ec] sm:$0xf]
    %v1773 = vld [vmem:[%s1 + $0x3f0] sm:$0xf]
    %v1774 = vld [vmem:[%s1 + $0x3f4] sm:$0xf]
    %v1775 = vld [vmem:[%s1 + $0x3f8] sm:$0xf]
    %v1776 = vld [vmem:[%s1 + $0x3fc] sm:$0xf]
    %v2033 = vunpack.c.l.b16 %v1521
    %v2034 = vunpack.c.l.b16 %v1522
    %v2035 = vunpack.c.l.b16 %v1523
    %v2036 = vunpack.c.l.b16 %v1524
    %v2037 = vunpack.c.l.b16 %v1525
    %v2038 = vunpack.c.l.b16 %v1526
    %v2039 = vunpack.c.l.b16 %v1527
    %v2040 = vunpack.c.l.b16 %v1528
    %v2041 = vunpack.c.l.b16 %v1529
    %v2042 = vunpack.c.l.b16 %v1530
    %v2043 = vunpack.c.l.b16 %v1531
    %v2044 = vunpack.c.l.b16 %v1532
    %v2045 = vunpack.c.l.b16 %v1533
    %v2046 = vunpack.c.l.b16 %v1534
    %v2047 = vunpack.c.l.b16 %v1535
    %v2048 = vunpack.c.l.b16 %v1536
    %v2049 = vunpack.c.l.b16 %v1537
    %v2050 = vunpack.c.l.b16 %v1538
    %v2051 = vunpack.c.l.b16 %v1539
    %v2052 = vunpack.c.l.b16 %v1540
    %v2053 = vunpack.c.l.b16 %v1541
    %v2054 = vunpack.c.l.b16 %v1542
    %v2055 = vunpack.c.l.b16 %v1543
    %v2056 = vunpack.c.l.b16 %v1544
    %v2057 = vunpack.c.l.b16 %v1545
    %v2058 = vunpack.c.l.b16 %v1546
    %v2059 = vunpack.c.l.b16 %v1547
    %v2060 = vunpack.c.l.b16 %v1548
    %v2061 = vunpack.c.l.b16 %v1549
    %v2062 = vunpack.c.l.b16 %v1550
    %v2063 = vunpack.c.l.b16 %v1551
    %v2064 = vunpack.c.l.b16 %v1552
    %v2065 = vunpack.c.l.b16 %v1553
    %v2066 = vunpack.c.l.b16 %v1554
    %v2067 = vunpack.c.l.b16 %v1555
    %v2068 = vunpack.c.l.b16 %v1556
    %v2069 = vunpack.c.l.b16 %v1557
    %v2070 = vunpack.c.l.b16 %v1558
    %v2071 = vunpack.c.l.b16 %v1559
    %v2072 = vunpack.c.l.b16 %v1560
    %v2073 = vunpack.c.l.b16 %v1561
    %v2074 = vunpack.c.l.b16 %v1562
    %v2075 = vunpack.c.l.b16 %v1563
    %v2076 = vunpack.c.l.b16 %v1564
    %v2077 = vunpack.c.l.b16 %v1565
    %v2078 = vunpack.c.l.b16 %v1566
    %v2079 = vunpack.c.l.b16 %v1567
    %v2080 = vunpack.c.l.b16 %v1568
    %v2081 = vunpack.c.l.b16 %v1569
    %v2082 = vunpack.c.l.b16 %v1570
    %v2083 = vunpack.c.l.b16 %v1571
    %v2084 = vunpack.c.l.b16 %v1572
    %v2085 = vunpack.c.l.b16 %v1573
    %v2086 = vunpack.c.l.b16 %v1574
    %v2087 = vunpack.c.l.b16 %v1575
    %v2088 = vunpack.c.l.b16 %v1576
    %v2089 = vunpack.c.l.b16 %v1577
    %v2090 = vunpack.c.l.b16 %v1578
    %v2091 = vunpack.c.l.b16 %v1579
    %v2092 = vunpack.c.l.b16 %v1580
    %v2093 = vunpack.c.l.b16 %v1581
    %v2094 = vunpack.c.l.b16 %v1582
    %v2095 = vunpack.c.l.b16 %v1583
    %v2096 = vunpack.c.l.b16 %v1584
    %v2097 = vunpack.c.l.b16 %v1585
    %v2098 = vunpack.c.l.b16 %v1586
    %v2099 = vunpack.c.l.b16 %v1587
    %v2100 = vunpack.c.l.b16 %v1588
    %v2101 = vunpack.c.l.b16 %v1589
    %v2102 = vunpack.c.l.b16 %v1590
    %v2103 = vunpack.c.l.b16 %v1591
    %v2104 = vunpack.c.l.b16 %v1592
    %v2105 = vunpack.c.l.b16 %v1593
    %v2106 = vunpack.c.l.b16 %v1594
    %v2107 = vunpack.c.l.b16 %v1595
    %v2108 = vunpack.c.l.b16 %v1596
    %v2109 = vunpack.c.l.b16 %v1597
    %v2110 = vunpack.c.l.b16 %v1598
    %v2111 = vunpack.c.l.b16 %v1599
    %v2112 = vunpack.c.l.b16 %v1600
    %v2113 = vunpack.c.l.b16 %v1601
    %v2114 = vunpack.c.l.b16 %v1602
    %v2115 = vunpack.c.l.b16 %v1603
    %v2116 = vunpack.c.l.b16 %v1604
    %v2117 = vunpack.c.l.b16 %v1605
    %v2118 = vunpack.c.l.b16 %v1606
    %v2119 = vunpack.c.l.b16 %v1607
    %v2120 = vunpack.c.l.b16 %v1608
    %v2121 = vunpack.c.l.b16 %v1609
    %v2122 = vunpack.c.l.b16 %v1610
    %v2123 = vunpack.c.l.b16 %v1611
    %v2124 = vunpack.c.l.b16 %v1612
    %v2125 = vunpack.c.l.b16 %v1613
    %v2126 = vunpack.c.l.b16 %v1614
    %v2127 = vunpack.c.l.b16 %v1615
    %v2128 = vunpack.c.l.b16 %v1616
    %v2129 = vunpack.c.l.b16 %v1617
    %v2130 = vunpack.c.l.b16 %v1618
    %v2131 = vunpack.c.l.b16 %v1619
    %v2132 = vunpack.c.l.b16 %v1620
    %v2133 = vunpack.c.l.b16 %v1621
    %v2134 = vunpack.c.l.b16 %v1622
    %v2135 = vunpack.c.l.b16 %v1623
    %v2136 = vunpack.c.l.b16 %v1624
    %v2137 = vunpack.c.l.b16 %v1625
    %v2138 = vunpack.c.l.b16 %v1626
    %v2139 = vunpack.c.l.b16 %v1627
    %v2140 = vunpack.c.l.b16 %v1628
    %v2141 = vunpack.c.l.b16 %v1629
    %v2142 = vunpack.c.l.b16 %v1630
    %v2143 = vunpack.c.l.b16 %v1631
    %v2144 = vunpack.c.l.b16 %v1632
    %v2145 = vunpack.c.l.b16 %v1633
    %v2146 = vunpack.c.l.b16 %v1634
    %v2147 = vunpack.c.l.b16 %v1635
    %v2148 = vunpack.c.l.b16 %v1636
    %v2149 = vunpack.c.l.b16 %v1637
    %v2150 = vunpack.c.l.b16 %v1638
    %v2151 = vunpack.c.l.b16 %v1639
    %v2152 = vunpack.c.l.b16 %v1640
    %v2153 = vunpack.c.l.b16 %v1641
    %v2154 = vunpack.c.l.b16 %v1642
    %v2155 = vunpack.c.l.b16 %v1643
    %v2156 = vunpack.c.l.b16 %v1644
    %v2157 = vunpack.c.l.b16 %v1645
    %v2158 = vunpack.c.l.b16 %v1646
    %v2159 = vunpack.c.l.b16 %v1647
    %v2160 = vunpack.c.l.b16 %v1648
    %v2161 = vunpack.c.l.b16 %v1649
    %v2162 = vunpack.c.l.b16 %v1650
    %v2163 = vunpack.c.l.b16 %v1651
    %v2164 = vunpack.c.l.b16 %v1652
    %v2165 = vunpack.c.l.b16 %v1653
    %v2166 = vunpack.c.l.b16 %v1654
    %v2167 = vunpack.c.l.b16 %v1655
    %v2168 = vunpack.c.l.b16 %v1656
    %v2169 = vunpack.c.l.b16 %v1657
    %v2170 = vunpack.c.l.b16 %v1658
    %v2171 = vunpack.c.l.b16 %v1659
    %v2172 = vunpack.c.l.b16 %v1660
    %v2173 = vunpack.c.l.b16 %v1661
    %v2174 = vunpack.c.l.b16 %v1662
    %v2175 = vunpack.c.l.b16 %v1663
    %v2176 = vunpack.c.l.b16 %v1664
    %v2177 = vunpack.c.l.b16 %v1665
    %v2178 = vunpack.c.l.b16 %v1666
    %v2179 = vunpack.c.l.b16 %v1667
    %v2180 = vunpack.c.l.b16 %v1668
    %v2181 = vunpack.c.l.b16 %v1669
    %v2182 = vunpack.c.l.b16 %v1670
    %v2183 = vunpack.c.l.b16 %v1671
    %v2184 = vunpack.c.l.b16 %v1672
    %v2185 = vunpack.c.l.b16 %v1673
    %v2186 = vunpack.c.l.b16 %v1674
    %v2187 = vunpack.c.l.b16 %v1675
    %v2188 = vunpack.c.l.b16 %v1676
    %v2189 = vunpack.c.l.b16 %v1677
    %v2190 = vunpack.c.l.b16 %v1678
    %v2191 = vunpack.c.l.b16 %v1679
    %v2192 = vunpack.c.l.b16 %v1680
    %v2193 = vunpack.c.l.b16 %v1681
    %v2194 = vunpack.c.l.b16 %v1682
    %v2195 = vunpack.c.l.b16 %v1683
    %v2196 = vunpack.c.l.b16 %v1684
    %v2197 = vunpack.c.l.b16 %v1685
    %v2198 = vunpack.c.l.b16 %v1686
    %v2199 = vunpack.c.l.b16 %v1687
    %v2200 = vunpack.c.l.b16 %v1688
    %v2201 = vunpack.c.l.b16 %v1689
    %v2202 = vunpack.c.l.b16 %v1690
    %v2203 = vunpack.c.l.b16 %v1691
    %v2204 = vunpack.c.l.b16 %v1692
    %v2205 = vunpack.c.l.b16 %v1693
    %v2206 = vunpack.c.l.b16 %v1694
    %v2207 = vunpack.c.l.b16 %v1695
    %v2208 = vunpack.c.l.b16 %v1696
    %v2209 = vunpack.c.l.b16 %v1697
    %v2210 = vunpack.c.l.b16 %v1698
    %v2211 = vunpack.c.l.b16 %v1699
    %v2212 = vunpack.c.l.b16 %v1700
    %v2213 = vunpack.c.l.b16 %v1701
    %v2214 = vunpack.c.l.b16 %v1702
    %v2215 = vunpack.c.l.b16 %v1703
    %v2216 = vunpack.c.l.b16 %v1704
    %v2217 = vunpack.c.l.b16 %v1705
    %v2218 = vunpack.c.l.b16 %v1706
    %v2219 = vunpack.c.l.b16 %v1707
    %v2220 = vunpack.c.l.b16 %v1708
    %v2221 = vunpack.c.l.b16 %v1709
    %v2222 = vunpack.c.l.b16 %v1710
    %v2223 = vunpack.c.l.b16 %v1711
    %v2224 = vunpack.c.l.b16 %v1712
    %v2225 = vunpack.c.l.b16 %v1713
    %v2226 = vunpack.c.l.b16 %v1714
    %v2227 = vunpack.c.l.b16 %v1715
    %v2228 = vunpack.c.l.b16 %v1716
    %v2229 = vunpack.c.l.b16 %v1717
    %v2230 = vunpack.c.l.b16 %v1718
    %v2231 = vunpack.c.l.b16 %v1719
    %v2232 = vunpack.c.l.b16 %v1720
    %v2233 = vunpack.c.l.b16 %v1721
    %v2234 = vunpack.c.l.b16 %v1722
    %v2235 = vunpack.c.l.b16 %v1723
    %v2236 = vunpack.c.l.b16 %v1724
    %v2237 = vunpack.c.l.b16 %v1725
    %v2238 = vunpack.c.l.b16 %v1726
    %v2239 = vunpack.c.l.b16 %v1727
    %v2240 = vunpack.c.l.b16 %v1728
    %v2241 = vunpack.c.l.b16 %v1729
    %v2242 = vunpack.c.l.b16 %v1730
    %v2243 = vunpack.c.l.b16 %v1731
    %v2244 = vunpack.c.l.b16 %v1732
    %v2245 = vunpack.c.l.b16 %v1733
    %v2246 = vunpack.c.l.b16 %v1734
    %v2247 = vunpack.c.l.b16 %v1735
    %v2248 = vunpack.c.l.b16 %v1736
    %v2249 = vunpack.c.l.b16 %v1737
    %v2250 = vunpack.c.l.b16 %v1738
    %v2251 = vunpack.c.l.b16 %v1739
    %v2252 = vunpack.c.l.b16 %v1740
    %v2253 = vunpack.c.l.b16 %v1741
    %v2254 = vunpack.c.l.b16 %v1742
    %v2255 = vunpack.c.l.b16 %v1743
    %v2256 = vunpack.c.l.b16 %v1744
    %v2257 = vunpack.c.l.b16 %v1745
    %v2258 = vunpack.c.l.b16 %v1746
    %v2259 = vunpack.c.l.b16 %v1747
    %v2260 = vunpack.c.l.b16 %v1748
    %v2261 = vunpack.c.l.b16 %v1749
    %v2262 = vunpack.c.l.b16 %v1750
    %v2263 = vunpack.c.l.b16 %v1751
    %v2264 = vunpack.c.l.b16 %v1752
    %v2265 = vunpack.c.l.b16 %v1753
    %v2266 = vunpack.c.l.b16 %v1754
    %v2267 = vunpack.c.l.b16 %v1755
    %v2268 = vunpack.c.l.b16 %v1756
    %v2269 = vunpack.c.l.b16 %v1757
    %v2270 = vunpack.c.l.b16 %v1758
    %v2271 = vunpack.c.l.b16 %v1759
    %v2272 = vunpack.c.l.b16 %v1760
    %v2273 = vunpack.c.l.b16 %v1761
    %v2274 = vunpack.c.l.b16 %v1762
    %v2275 = vunpack.c.l.b16 %v1763
    %v2276 = vunpack.c.l.b16 %v1764
    %v2277 = vunpack.c.l.b16 %v1765
    %v2278 = vunpack.c.l.b16 %v1766
    %v2279 = vunpack.c.l.b16 %v1767
    %v2280 = vunpack.c.l.b16 %v1768
    %v2281 = vunpack.c.l.b16 %v1769
    %v2282 = vunpack.c.l.b16 %v1770
    %v2283 = vunpack.c.l.b16 %v1771
    %v2284 = vunpack.c.l.b16 %v1772
    %v2285 = vunpack.c.l.b16 %v1773
    %v2286 = vunpack.c.l.b16 %v1774
    %v2287 = vunpack.c.l.b16 %v1775
    %v2288 = vunpack.c.l.b16 %v1776
    %v2289 = vpack.c.b16 %v2034, %v2033
    %v2290 = vpack.c.b16 %v2036, %v2035
    %v2291 = vpack.c.b16 %v2038, %v2037
    %v2292 = vpack.c.b16 %v2040, %v2039
    %v2293 = vpack.c.b16 %v2042, %v2041
    %v2294 = vpack.c.b16 %v2044, %v2043
    %v2295 = vpack.c.b16 %v2046, %v2045
    %v2296 = vpack.c.b16 %v2048, %v2047
    %v2297 = vpack.c.b16 %v2050, %v2049
    %v2298 = vpack.c.b16 %v2052, %v2051
    %v2299 = vpack.c.b16 %v2054, %v2053
    %v2300 = vpack.c.b16 %v2056, %v2055
    %v2301 = vpack.c.b16 %v2058, %v2057
    %v2302 = vpack.c.b16 %v2060, %v2059
    %v2303 = vpack.c.b16 %v2062, %v2061
    %v2304 = vpack.c.b16 %v2064, %v2063
    %v2305 = vpack.c.b16 %v2066, %v2065
    %v2306 = vpack.c.b16 %v2068, %v2067
    %v2307 = vpack.c.b16 %v2070, %v2069
    %v2308 = vpack.c.b16 %v2072, %v2071
    %v2309 = vpack.c.b16 %v2074, %v2073
    %v2310 = vpack.c.b16 %v2076, %v2075
    %v2311 = vpack.c.b16 %v2078, %v2077
    %v2312 = vpack.c.b16 %v2080, %v2079
    %v2313 = vpack.c.b16 %v2082, %v2081
    %v2314 = vpack.c.b16 %v2084, %v2083
    %v2315 = vpack.c.b16 %v2086, %v2085
    %v2316 = vpack.c.b16 %v2088, %v2087
    %v2317 = vpack.c.b16 %v2090, %v2089
    %v2318 = vpack.c.b16 %v2092, %v2091
    %v2319 = vpack.c.b16 %v2094, %v2093
    %v2320 = vpack.c.b16 %v2096, %v2095
    %v2321 = vpack.c.b16 %v2098, %v2097
    %v2322 = vpack.c.b16 %v2100, %v2099
    %v2323 = vpack.c.b16 %v2102, %v2101
    %v2324 = vpack.c.b16 %v2104, %v2103
    %v2325 = vpack.c.b16 %v2106, %v2105
    %v2326 = vpack.c.b16 %v2108, %v2107
    %v2327 = vpack.c.b16 %v2110, %v2109
    %v2328 = vpack.c.b16 %v2112, %v2111
    %v2329 = vpack.c.b16 %v2114, %v2113
    %v2330 = vpack.c.b16 %v2116, %v2115
    %v2331 = vpack.c.b16 %v2118, %v2117
    %v2332 = vpack.c.b16 %v2120, %v2119
    %v2333 = vpack.c.b16 %v2122, %v2121
    %v2334 = vpack.c.b16 %v2124, %v2123
    %v2335 = vpack.c.b16 %v2126, %v2125
    %v2336 = vpack.c.b16 %v2128, %v2127
    %v2337 = vpack.c.b16 %v2130, %v2129
    %v2338 = vpack.c.b16 %v2132, %v2131
    %v2339 = vpack.c.b16 %v2134, %v2133
    %v2340 = vpack.c.b16 %v2136, %v2135
    %v2341 = vpack.c.b16 %v2138, %v2137
    %v2342 = vpack.c.b16 %v2140, %v2139
    %v2343 = vpack.c.b16 %v2142, %v2141
    %v2344 = vpack.c.b16 %v2144, %v2143
    %v2345 = vpack.c.b16 %v2146, %v2145
    %v2346 = vpack.c.b16 %v2148, %v2147
    %v2347 = vpack.c.b16 %v2150, %v2149
    %v2348 = vpack.c.b16 %v2152, %v2151
    %v2349 = vpack.c.b16 %v2154, %v2153
    %v2350 = vpack.c.b16 %v2156, %v2155
    %v2351 = vpack.c.b16 %v2158, %v2157
    %v2352 = vpack.c.b16 %v2160, %v2159
    %v2353 = vpack.c.b16 %v2162, %v2161
    %v2354 = vpack.c.b16 %v2164, %v2163
    %v2355 = vpack.c.b16 %v2166, %v2165
    %v2356 = vpack.c.b16 %v2168, %v2167
    %v2357 = vpack.c.b16 %v2170, %v2169
    %v2358 = vpack.c.b16 %v2172, %v2171
    %v2359 = vpack.c.b16 %v2174, %v2173
    %v2360 = vpack.c.b16 %v2176, %v2175
    %v2361 = vpack.c.b16 %v2178, %v2177
    %v2362 = vpack.c.b16 %v2180, %v2179
    %v2363 = vpack.c.b16 %v2182, %v2181
    %v2364 = vpack.c.b16 %v2184, %v2183
    %v2365 = vpack.c.b16 %v2186, %v2185
    %v2366 = vpack.c.b16 %v2188, %v2187
    %v2367 = vpack.c.b16 %v2190, %v2189
    %v2368 = vpack.c.b16 %v2192, %v2191
    %v2369 = vpack.c.b16 %v2194, %v2193
    %v2370 = vpack.c.b16 %v2196, %v2195
    %v2371 = vpack.c.b16 %v2198, %v2197
    %v2372 = vpack.c.b16 %v2200, %v2199
    %v2373 = vpack.c.b16 %v2202, %v2201
    %v2374 = vpack.c.b16 %v2204, %v2203
    %v2375 = vpack.c.b16 %v2206, %v2205
    %v2376 = vpack.c.b16 %v2208, %v2207
    %v2377 = vpack.c.b16 %v2210, %v2209
    %v2378 = vpack.c.b16 %v2212, %v2211
    %v2379 = vpack.c.b16 %v2214, %v2213
    %v2380 = vpack.c.b16 %v2216, %v2215
    %v2381 = vpack.c.b16 %v2218, %v2217
    %v2382 = vpack.c.b16 %v2220, %v2219
    %v2383 = vpack.c.b16 %v2222, %v2221
    %v2384 = vpack.c.b16 %v2224, %v2223
    %v2385 = vpack.c.b16 %v2226, %v2225
    %v2386 = vpack.c.b16 %v2228, %v2227
    %v2387 = vpack.c.b16 %v2230, %v2229
    %v2388 = vpack.c.b16 %v2232, %v2231
    %v2389 = vpack.c.b16 %v2234, %v2233
    %v2390 = vpack.c.b16 %v2236, %v2235
    %v2391 = vpack.c.b16 %v2238, %v2237
    %v2392 = vpack.c.b16 %v2240, %v2239
    %v2393 = vpack.c.b16 %v2242, %v2241
    %v2394 = vpack.c.b16 %v2244, %v2243
    %v2395 = vpack.c.b16 %v2246, %v2245
    %v2396 = vpack.c.b16 %v2248, %v2247
    %v2397 = vpack.c.b16 %v2250, %v2249
    %v2398 = vpack.c.b16 %v2252, %v2251
    %v2399 = vpack.c.b16 %v2254, %v2253
    %v2400 = vpack.c.b16 %v2256, %v2255
    %v2401 = vpack.c.b16 %v2258, %v2257
    %v2402 = vpack.c.b16 %v2260, %v2259
    %v2403 = vpack.c.b16 %v2262, %v2261
    %v2404 = vpack.c.b16 %v2264, %v2263
    %v2405 = vpack.c.b16 %v2266, %v2265
    %v2406 = vpack.c.b16 %v2268, %v2267
    %v2407 = vpack.c.b16 %v2270, %v2269
    %v2408 = vpack.c.b16 %v2272, %v2271
    %v2409 = vpack.c.b16 %v2274, %v2273
    %v2410 = vpack.c.b16 %v2276, %v2275
    %v2411 = vpack.c.b16 %v2278, %v2277
    %v2412 = vpack.c.b16 %v2280, %v2279
    %v2413 = vpack.c.b16 %v2282, %v2281
    %v2414 = vpack.c.b16 %v2284, %v2283
    %v2415 = vpack.c.b16 %v2286, %v2285
    %v2416 = vpack.c.b16 %v2288, %v2287
    %2545 = vmatprep.subr.bf16.mxu0 0
    %2546 = vmatpush1.bf16.msra.mxu0 %v2296
    %2547 = vmatprep.subr.bf16.mxu0 0
    %2548 = vmatpush1.bf16.msra.mxu0 %v2295
    %2549 = vmatprep.subr.bf16.mxu0 0
    %2550 = vmatpush1.bf16.msra.mxu0 %v2294
    %2551 = vmatprep.subr.bf16.mxu0 0
    %2552 = vmatpush1.bf16.msra.mxu0 %v2293
    %2553 = vmatprep.subr.bf16.mxu0 0
    %2554 = vmatpush1.bf16.msra.mxu0 %v2292
    %2555 = vmatprep.subr.bf16.mxu0 0
    %2556 = vmatpush1.bf16.msra.mxu0 %v2291
    %2557 = vmatprep.subr.bf16.mxu0 0
    %2558 = vmatpush1.bf16.msra.mxu0 %v2290
    %2559 = vmatprep.subr.bf16.mxu0 0
    %2560 = vmatpush1.bf16.msra.mxu0 %v2289
    %2561 = vmatprep.subr.bf16.mxu0 0
    %2562 = vmatpush2.bf16.msra.mxu0 %v2304
    %2563 = vmatprep.subr.bf16.mxu0 0
    %2564 = vmatpush2.bf16.msra.mxu0 %v2303
    %2565 = vmatprep.subr.bf16.mxu0 0
    %2566 = vmatpush2.bf16.msra.mxu0 %v2302
    %2567 = vmatprep.subr.bf16.mxu0 0
    %2568 = vmatpush2.bf16.msra.mxu0 %v2301
    %2569 = vmatprep.subr.bf16.mxu0 0
    %2570 = vmatpush2.bf16.msra.mxu0 %v2300
    %2571 = vmatprep.subr.bf16.mxu0 0
    %2572 = vmatpush2.bf16.msra.mxu0 %v2299
    %2573 = vmatprep.subr.bf16.mxu0 0
    %2574 = vmatpush2.bf16.msra.mxu0 %v2298
    %2575 = vmatprep.subr.bf16.mxu0 0
    %2576 = vmatpush2.bf16.msra.mxu0 %v2297
    %2577 = vmatprep.mubr.bf16.mxu0 %v1506
    %2578 = vmatmul.mubr.bf16.gmra.mxu0 %v1505
    %v2579 = vpop.f32.mrf.mxu0
    %v2580 = vadd.f32 0.0, %v2579
    %v2581 = vpop.f32.mrf.mxu0
    %v2582 = vpop.f32.mrf.mxu0
    %v2583 = vpop.f32.mrf.mxu0
    %2584 = vdwg.mxu0
    %2585 = vmatprep.subr.bf16.mxu0 0
    %2586 = vmatpush1.bf16.msra.mxu0 %v2312
    %2587 = vmatprep.subr.bf16.mxu0 0
    %2588 = vmatpush1.bf16.msra.mxu0 %v2311
    %2589 = vmatprep.subr.bf16.mxu0 0
    %2590 = vmatpush1.bf16.msra.mxu0 %v2310
    %2591 = vmatprep.subr.bf16.mxu0 0
    %2592 = vmatpush1.bf16.msra.mxu0 %v2309
    %2593 = vmatprep.subr.bf16.mxu0 0
    %2594 = vmatpush1.bf16.msra.mxu0 %v2308
    %2595 = vmatprep.subr.bf16.mxu0 0
    %2596 = vmatpush1.bf16.msra.mxu0 %v2307
    %2597 = vmatprep.subr.bf16.mxu0 0
    %2598 = vmatpush1.bf16.msra.mxu0 %v2306
    %2599 = vmatprep.subr.bf16.mxu0 0
    %2600 = vmatpush1.bf16.msra.mxu0 %v2305
    %2601 = vmatprep.subr.bf16.mxu0 0
    %2602 = vmatpush2.bf16.msra.mxu0 %v2320
    %2603 = vmatprep.subr.bf16.mxu0 0
    %2604 = vmatpush2.bf16.msra.mxu0 %v2319
    %2605 = vmatprep.subr.bf16.mxu0 0
    %2606 = vmatpush2.bf16.msra.mxu0 %v2318
    %2607 = vmatprep.subr.bf16.mxu0 0
    %2608 = vmatpush2.bf16.msra.mxu0 %v2317
    %2609 = vmatprep.subr.bf16.mxu0 0
    %2610 = vmatpush2.bf16.msra.mxu0 %v2316
    %2611 = vmatprep.subr.bf16.mxu0 0
    %2612 = vmatpush2.bf16.msra.mxu0 %v2315
    %2613 = vmatprep.subr.bf16.mxu0 0
    %2614 = vmatpush2.bf16.msra.mxu0 %v2314
    %2615 = vmatprep.subr.bf16.mxu0 0
    %2616 = vmatpush2.bf16.msra.mxu0 %v2313
    %2617 = vmatprep.mubr.bf16.mxu0 %v1508
    %2618 = vmatmul.mubr.bf16.gmra.mxu0 %v1507
    %v2619 = vpop.f32.mrf.mxu0
    %v2620 = vadd.f32 %v2580, %v2619
    %v2621 = vpop.f32.mrf.mxu0
    %v2622 = vpop.f32.mrf.mxu0
    %v2623 = vpop.f32.mrf.mxu0
    %2624 = vdwg.mxu0
    %2625 = vmatprep.subr.bf16.mxu0 0
    %2626 = vmatpush1.bf16.msra.mxu0 %v2328
    %2627 = vmatprep.subr.bf16.mxu0 0
    %2628 = vmatpush1.bf16.msra.mxu0 %v2327
    %2629 = vmatprep.subr.bf16.mxu0 0
    %2630 = vmatpush1.bf16.msra.mxu0 %v2326
    %2631 = vmatprep.subr.bf16.mxu0 0
    %2632 = vmatpush1.bf16.msra.mxu0 %v2325
    %2633 = vmatprep.subr.bf16.mxu0 0
    %2634 = vmatpush1.bf16.msra.mxu0 %v2324
    %2635 = vmatprep.subr.bf16.mxu0 0
    %2636 = vmatpush1.bf16.msra.mxu0 %v2323
    %2637 = vmatprep.subr.bf16.mxu0 0
    %2638 = vmatpush1.bf16.msra.mxu0 %v2322
    %2639 = vmatprep.subr.bf16.mxu0 0
    %2640 = vmatpush1.bf16.msra.mxu0 %v2321
    %2641 = vmatprep.subr.bf16.mxu0 0
    %2642 = vmatpush2.bf16.msra.mxu0 %v2336
    %2643 = vmatprep.subr.bf16.mxu0 0
    %2644 = vmatpush2.bf16.msra.mxu0 %v2335
    %2645 = vmatprep.subr.bf16.mxu0 0
    %2646 = vmatpush2.bf16.msra.mxu0 %v2334
    %2647 = vmatprep.subr.bf16.mxu0 0
    %2648 = vmatpush2.bf16.msra.mxu0 %v2333
    %2649 = vmatprep.subr.bf16.mxu0 0
    %2650 = vmatpush2.bf16.msra.mxu0 %v2332
    %2651 = vmatprep.subr.bf16.mxu0 0
    %2652 = vmatpush2.bf16.msra.mxu0 %v2331
    %2653 = vmatprep.subr.bf16.mxu0 0
    %2654 = vmatpush2.bf16.msra.mxu0 %v2330
    %2655 = vmatprep.subr.bf16.mxu0 0
    %2656 = vmatpush2.bf16.msra.mxu0 %v2329
    %2657 = vmatprep.mubr.bf16.mxu0 %v1510
    %2658 = vmatmul.mubr.bf16.gmra.mxu0 %v1509
    %v2659 = vpop.f32.mrf.mxu0
    %v2660 = vadd.f32 %v2620, %v2659
    %v2661 = vpop.f32.mrf.mxu0
    %v2662 = vpop.f32.mrf.mxu0
    %v2663 = vpop.f32.mrf.mxu0
    %2664 = vdwg.mxu0
    %2665 = vmatprep.subr.bf16.mxu0 0
    %2666 = vmatpush1.bf16.msra.mxu0 %v2344
    %2667 = vmatprep.subr.bf16.mxu0 0
    %2668 = vmatpush1.bf16.msra.mxu0 %v2343
    %2669 = vmatprep.subr.bf16.mxu0 0
    %2670 = vmatpush1.bf16.msra.mxu0 %v2342
    %2671 = vmatprep.subr.bf16.mxu0 0
    %2672 = vmatpush1.bf16.msra.mxu0 %v2341
    %2673 = vmatprep.subr.bf16.mxu0 0
    %2674 = vmatpush1.bf16.msra.mxu0 %v2340
    %2675 = vmatprep.subr.bf16.mxu0 0
    %2676 = vmatpush1.bf16.msra.mxu0 %v2339
    %2677 = vmatprep.subr.bf16.mxu0 0
    %2678 = vmatpush1.bf16.msra.mxu0 %v2338
    %2679 = vmatprep.subr.bf16.mxu0 0
    %2680 = vmatpush1.bf16.msra.mxu0 %v2337
    %2681 = vmatprep.subr.bf16.mxu0 0
    %2682 = vmatpush2.bf16.msra.mxu0 %v2352
    %2683 = vmatprep.subr.bf16.mxu0 0
    %2684 = vmatpush2.bf16.msra.mxu0 %v2351
    %2685 = vmatprep.subr.bf16.mxu0 0
    %2686 = vmatpush2.bf16.msra.mxu0 %v2350
    %2687 = vmatprep.subr.bf16.mxu0 0
    %2688 = vmatpush2.bf16.msra.mxu0 %v2349
    %2689 = vmatprep.subr.bf16.mxu0 0
    %2690 = vmatpush2.bf16.msra.mxu0 %v2348
    %2691 = vmatprep.subr.bf16.mxu0 0
    %2692 = vmatpush2.bf16.msra.mxu0 %v2347
    %2693 = vmatprep.subr.bf16.mxu0 0
    %2694 = vmatpush2.bf16.msra.mxu0 %v2346
    %2695 = vmatprep.subr.bf16.mxu0 0
    %2696 = vmatpush2.bf16.msra.mxu0 %v2345
    %2697 = vmatprep.mubr.bf16.mxu0 %v1512
    %2698 = vmatmul.mubr.bf16.gmra.mxu0 %v1511
    %v2699 = vpop.f32.mrf.mxu0
    %v2700 = vadd.f32 %v2660, %v2699
    %v2701 = vpop.f32.mrf.mxu0
    %v2702 = vpop.f32.mrf.mxu0
    %v2703 = vpop.f32.mrf.mxu0
    %2704 = vdwg.mxu0
    %2705 = vmatprep.subr.bf16.mxu0 0
    %2706 = vmatpush1.bf16.msra.mxu0 %v2360
    %2707 = vmatprep.subr.bf16.mxu0 0
    %2708 = vmatpush1.bf16.msra.mxu0 %v2359
    %2709 = vmatprep.subr.bf16.mxu0 0
    %2710 = vmatpush1.bf16.msra.mxu0 %v2358
    %2711 = vmatprep.subr.bf16.mxu0 0
    %2712 = vmatpush1.bf16.msra.mxu0 %v2357
    %2713 = vmatprep.subr.bf16.mxu0 0
    %2714 = vmatpush1.bf16.msra.mxu0 %v2356
    %2715 = vmatprep.subr.bf16.mxu0 0
    %2716 = vmatpush1.bf16.msra.mxu0 %v2355
    %2717 = vmatprep.subr.bf16.mxu0 0
    %2718 = vmatpush1.bf16.msra.mxu0 %v2354
    %2719 = vmatprep.subr.bf16.mxu0 0
    %2720 = vmatpush1.bf16.msra.mxu0 %v2353
    %2721 = vmatprep.subr.bf16.mxu0 0
    %2722 = vmatpush2.bf16.msra.mxu0 %v2368
    %2723 = vmatprep.subr.bf16.mxu0 0
    %2724 = vmatpush2.bf16.msra.mxu0 %v2367
    %2725 = vmatprep.subr.bf16.mxu0 0
    %2726 = vmatpush2.bf16.msra.mxu0 %v2366
    %2727 = vmatprep.subr.bf16.mxu0 0
    %2728 = vmatpush2.bf16.msra.mxu0 %v2365
    %2729 = vmatprep.subr.bf16.mxu0 0
    %2730 = vmatpush2.bf16.msra.mxu0 %v2364
    %2731 = vmatprep.subr.bf16.mxu0 0
    %2732 = vmatpush2.bf16.msra.mxu0 %v2363
    %2733 = vmatprep.subr.bf16.mxu0 0
    %2734 = vmatpush2.bf16.msra.mxu0 %v2362
    %2735 = vmatprep.subr.bf16.mxu0 0
    %2736 = vmatpush2.bf16.msra.mxu0 %v2361
    %2737 = vmatprep.mubr.bf16.mxu0 %v1514
    %2738 = vmatmul.mubr.bf16.gmra.mxu0 %v1513
    %v2739 = vpop.f32.mrf.mxu0
    %v2740 = vadd.f32 %v2700, %v2739
    %v2741 = vpop.f32.mrf.mxu0
    %v2742 = vpop.f32.mrf.mxu0
    %v2743 = vpop.f32.mrf.mxu0
    %2744 = vdwg.mxu0
    %2745 = vmatprep.subr.bf16.mxu0 0
    %2746 = vmatpush1.bf16.msra.mxu0 %v2376
    %2747 = vmatprep.subr.bf16.mxu0 0
    %2748 = vmatpush1.bf16.msra.mxu0 %v2375
    %2749 = vmatprep.subr.bf16.mxu0 0
    %2750 = vmatpush1.bf16.msra.mxu0 %v2374
    %2751 = vmatprep.subr.bf16.mxu0 0
    %2752 = vmatpush1.bf16.msra.mxu0 %v2373
    %2753 = vmatprep.subr.bf16.mxu0 0
    %2754 = vmatpush1.bf16.msra.mxu0 %v2372
    %2755 = vmatprep.subr.bf16.mxu0 0
    %2756 = vmatpush1.bf16.msra.mxu0 %v2371
    %2757 = vmatprep.subr.bf16.mxu0 0
    %2758 = vmatpush1.bf16.msra.mxu0 %v2370
    %2759 = vmatprep.subr.bf16.mxu0 0
    %2760 = vmatpush1.bf16.msra.mxu0 %v2369
    %2761 = vmatprep.subr.bf16.mxu0 0
    %2762 = vmatpush2.bf16.msra.mxu0 %v2384
    %2763 = vmatprep.subr.bf16.mxu0 0
    %2764 = vmatpush2.bf16.msra.mxu0 %v2383
    %2765 = vmatprep.subr.bf16.mxu0 0
    %2766 = vmatpush2.bf16.msra.mxu0 %v2382
    %2767 = vmatprep.subr.bf16.mxu0 0
    %2768 = vmatpush2.bf16.msra.mxu0 %v2381
    %2769 = vmatprep.subr.bf16.mxu0 0
    %2770 = vmatpush2.bf16.msra.mxu0 %v2380
    %2771 = vmatprep.subr.bf16.mxu0 0
    %2772 = vmatpush2.bf16.msra.mxu0 %v2379
    %2773 = vmatprep.subr.bf16.mxu0 0
    %2774 = vmatpush2.bf16.msra.mxu0 %v2378
    %2775 = vmatprep.subr.bf16.mxu0 0
    %2776 = vmatpush2.bf16.msra.mxu0 %v2377
    %2777 = vmatprep.mubr.bf16.mxu0 %v1516
    %2778 = vmatmul.mubr.bf16.gmra.mxu0 %v1515
    %v2779 = vpop.f32.mrf.mxu0
    %v2780 = vadd.f32 %v2740, %v2779
    %v2781 = vpop.f32.mrf.mxu0
    %v2782 = vpop.f32.mrf.mxu0
    %v2783 = vpop.f32.mrf.mxu0
    %2784 = vdwg.mxu0
    %2785 = vmatprep.subr.bf16.mxu0 0
    %2786 = vmatpush1.bf16.msra.mxu0 %v2392
    %2787 = vmatprep.subr.bf16.mxu0 0
    %2788 = vmatpush1.bf16.msra.mxu0 %v2391
    %2789 = vmatprep.subr.bf16.mxu0 0
    %2790 = vmatpush1.bf16.msra.mxu0 %v2390
    %2791 = vmatprep.subr.bf16.mxu0 0
    %2792 = vmatpush1.bf16.msra.mxu0 %v2389
    %2793 = vmatprep.subr.bf16.mxu0 0
    %2794 = vmatpush1.bf16.msra.mxu0 %v2388
    %2795 = vmatprep.subr.bf16.mxu0 0
    %2796 = vmatpush1.bf16.msra.mxu0 %v2387
    %2797 = vmatprep.subr.bf16.mxu0 0
    %2798 = vmatpush1.bf16.msra.mxu0 %v2386
    %2799 = vmatprep.subr.bf16.mxu0 0
    %2800 = vmatpush1.bf16.msra.mxu0 %v2385
    %2801 = vmatprep.subr.bf16.mxu0 0
    %2802 = vmatpush2.bf16.msra.mxu0 %v2400
    %2803 = vmatprep.subr.bf16.mxu0 0
    %2804 = vmatpush2.bf16.msra.mxu0 %v2399
    %2805 = vmatprep.subr.bf16.mxu0 0
    %2806 = vmatpush2.bf16.msra.mxu0 %v2398
    %2807 = vmatprep.subr.bf16.mxu0 0
    %2808 = vmatpush2.bf16.msra.mxu0 %v2397
    %2809 = vmatprep.subr.bf16.mxu0 0
    %2810 = vmatpush2.bf16.msra.mxu0 %v2396
    %2811 = vmatprep.subr.bf16.mxu0 0
    %2812 = vmatpush2.bf16.msra.mxu0 %v2395
    %2813 = vmatprep.subr.bf16.mxu0 0
    %2814 = vmatpush2.bf16.msra.mxu0 %v2394
    %2815 = vmatprep.subr.bf16.mxu0 0
    %2816 = vmatpush2.bf16.msra.mxu0 %v2393
    %2817 = vmatprep.mubr.bf16.mxu0 %v1518
    %2818 = vmatmul.mubr.bf16.gmra.mxu0 %v1517
    %v2819 = vpop.f32.mrf.mxu0
    %v2820 = vadd.f32 %v2780, %v2819
    %v2821 = vpop.f32.mrf.mxu0
    %v2822 = vpop.f32.mrf.mxu0
    %v2823 = vpop.f32.mrf.mxu0
    %2824 = vdwg.mxu0
    %2825 = vmatprep.subr.bf16.mxu0 0
    %2826 = vmatpush1.bf16.msra.mxu0 %v2408
    %2827 = vmatprep.subr.bf16.mxu0 0
    %2828 = vmatpush1.bf16.msra.mxu0 %v2407
    %2829 = vmatprep.subr.bf16.mxu0 0
    %2830 = vmatpush1.bf16.msra.mxu0 %v2406
    %2831 = vmatprep.subr.bf16.mxu0 0
    %2832 = vmatpush1.bf16.msra.mxu0 %v2405
    %2833 = vmatprep.subr.bf16.mxu0 0
    %2834 = vmatpush1.bf16.msra.mxu0 %v2404
    %2835 = vmatprep.subr.bf16.mxu0 0
    %2836 = vmatpush1.bf16.msra.mxu0 %v2403
    %2837 = vmatprep.subr.bf16.mxu0 0
    %2838 = vmatpush1.bf16.msra.mxu0 %v2402
    %2839 = vmatprep.subr.bf16.mxu0 0
    %2840 = vmatpush1.bf16.msra.mxu0 %v2401
    %2841 = vmatprep.subr.bf16.mxu0 0
    %2842 = vmatpush2.bf16.msra.mxu0 %v2416
    %2843 = vmatprep.subr.bf16.mxu0 0
    %2844 = vmatpush2.bf16.msra.mxu0 %v2415
    %2845 = vmatprep.subr.bf16.mxu0 0
    %2846 = vmatpush2.bf16.msra.mxu0 %v2414
    %2847 = vmatprep.subr.bf16.mxu0 0
    %2848 = vmatpush2.bf16.msra.mxu0 %v2413
    %2849 = vmatprep.subr.bf16.mxu0 0
    %2850 = vmatpush2.bf16.msra.mxu0 %v2412
    %2851 = vmatprep.subr.bf16.mxu0 0
    %2852 = vmatpush2.bf16.msra.mxu0 %v2411
    %2853 = vmatprep.subr.bf16.mxu0 0
    %2854 = vmatpush2.bf16.msra.mxu0 %v2410
    %2855 = vmatprep.subr.bf16.mxu0 0
    %2856 = vmatpush2.bf16.msra.mxu0 %v2409
    %2857 = vmatprep.mubr.bf16.mxu0 %v1520
    %2858 = vmatmul.mubr.bf16.gmra.mxu0 %v1519
    %v2859 = vpop.f32.mrf.mxu0
    %v2860 = vadd.f32 %v2820, %v2859
    %v2861 = vpop.f32.mrf.mxu0
    %v2862 = vpop.f32.mrf.mxu0
    %v2863 = vpop.f32.mrf.mxu0
    %2864 = vdwg.mxu0
    %v2865 = vmax.f32 %v2860, 0.0
    %v2866 = vpack.c.bf16 %v2865, %v2865
    %v2867 = vld [vmem:[%s2] sm:$0xff]
    %v2868 = vld [vmem:[%s2 + $0x8] sm:$0xff]
    %v2869 = vld [vmem:[%s2 + $0x10] sm:$0xff]
    %v2870 = vld [vmem:[%s2 + $0x18] sm:$0xff]
    %v2871 = vld [vmem:[%s2 + $0x20] sm:$0xff]
    %v2872 = vld [vmem:[%s2 + $0x28] sm:$0xff]
    %v2873 = vld [vmem:[%s2 + $0x30] sm:$0xff]
    %v2874 = vld [vmem:[%s2 + $0x38] sm:$0xff]
    %v2875 = vld [vmem:[%s2 + $0x40] sm:$0xff]
    %v2876 = vld [vmem:[%s2 + $0x48] sm:$0xff]
    %v2877 = vld [vmem:[%s2 + $0x50] sm:$0xff]
    %v2878 = vld [vmem:[%s2 + $0x58] sm:$0xff]
    %v2879 = vld [vmem:[%s2 + $0x60] sm:$0xff]
    %v2880 = vld [vmem:[%s2 + $0x68] sm:$0xff]
    %v2881 = vld [vmem:[%s2 + $0x70] sm:$0xff]
    %v2882 = vld [vmem:[%s2 + $0x78] sm:$0xff]
    %v2883 = vld [vmem:[%s2 + $0x80] sm:$0xff]
    %v2884 = vld [vmem:[%s2 + $0x88] sm:$0xff]
    %v2885 = vld [vmem:[%s2 + $0x90] sm:$0xff]
    %v2886 = vld [vmem:[%s2 + $0x98] sm:$0xff]
    %v2887 = vld [vmem:[%s2 + $0xa0] sm:$0xff]
    %v2888 = vld [vmem:[%s2 + $0xa8] sm:$0xff]
    %v2889 = vld [vmem:[%s2 + $0xb0] sm:$0xff]
    %v2890 = vld [vmem:[%s2 + $0xb8] sm:$0xff]
    %v2891 = vld [vmem:[%s2 + $0xc0] sm:$0xff]
    %v2892 = vld [vmem:[%s2 + $0xc8] sm:$0xff]
    %v2893 = vld [vmem:[%s2 + $0xd0] sm:$0xff]
    %v2894 = vld [vmem:[%s2 + $0xd8] sm:$0xff]
    %v2895 = vld [vmem:[%s2 + $0xe0] sm:$0xff]
    %v2896 = vld [vmem:[%s2 + $0xe8] sm:$0xff]
    %v2897 = vld [vmem:[%s2 + $0xf0] sm:$0xff]
    %v2898 = vld [vmem:[%s2 + $0xf8] sm:$0xff]
    %v2899 = vld [vmem:[%s2 + $0x100] sm:$0xff]
    %v2900 = vld [vmem:[%s2 + $0x108] sm:$0xff]
    %v2901 = vld [vmem:[%s2 + $0x110] sm:$0xff]
    %v2902 = vld [vmem:[%s2 + $0x118] sm:$0xff]
    %v2903 = vld [vmem:[%s2 + $0x120] sm:$0xff]
    %v2904 = vld [vmem:[%s2 + $0x128] sm:$0xff]
    %v2905 = vld [vmem:[%s2 + $0x130] sm:$0xff]
    %v2906 = vld [vmem:[%s2 + $0x138] sm:$0xff]
    %v2907 = vld [vmem:[%s2 + $0x140] sm:$0xff]
    %v2908 = vld [vmem:[%s2 + $0x148] sm:$0xff]
    %v2909 = vld [vmem:[%s2 + $0x150] sm:$0xff]
    %v2910 = vld [vmem:[%s2 + $0x158] sm:$0xff]
    %v2911 = vld [vmem:[%s2 + $0x160] sm:$0xff]
    %v2912 = vld [vmem:[%s2 + $0x168] sm:$0xff]
    %v2913 = vld [vmem:[%s2 + $0x170] sm:$0xff]
    %v2914 = vld [vmem:[%s2 + $0x178] sm:$0xff]
    %v2915 = vld [vmem:[%s2 + $0x180] sm:$0xff]
    %v2916 = vld [vmem:[%s2 + $0x188] sm:$0xff]
    %v2917 = vld [vmem:[%s2 + $0x190] sm:$0xff]
    %v2918 = vld [vmem:[%s2 + $0x198] sm:$0xff]
    %v2919 = vld [vmem:[%s2 + $0x1a0] sm:$0xff]
    %v2920 = vld [vmem:[%s2 + $0x1a8] sm:$0xff]
    %v2921 = vld [vmem:[%s2 + $0x1b0] sm:$0xff]
    %v2922 = vld [vmem:[%s2 + $0x1b8] sm:$0xff]
    %v2923 = vld [vmem:[%s2 + $0x1c0] sm:$0xff]
    %v2924 = vld [vmem:[%s2 + $0x1c8] sm:$0xff]
    %v2925 = vld [vmem:[%s2 + $0x1d0] sm:$0xff]
    %v2926 = vld [vmem:[%s2 + $0x1d8] sm:$0xff]
    %v2927 = vld [vmem:[%s2 + $0x1e0] sm:$0xff]
    %v2928 = vld [vmem:[%s2 + $0x1e8] sm:$0xff]
    %v2929 = vld [vmem:[%s2 + $0x1f0] sm:$0xff]
    %v2930 = vld [vmem:[%s2 + $0x1f8] sm:$0xff]
    %v2931 = vld [vmem:[%s2 + $0x200] sm:$0xff]
    %v2932 = vld [vmem:[%s2 + $0x208] sm:$0xff]
    %v2933 = vld [vmem:[%s2 + $0x210] sm:$0xff]
    %v2934 = vld [vmem:[%s2 + $0x218] sm:$0xff]
    %v2935 = vld [vmem:[%s2 + $0x220] sm:$0xff]
    %v2936 = vld [vmem:[%s2 + $0x228] sm:$0xff]
    %v2937 = vld [vmem:[%s2 + $0x230] sm:$0xff]
    %v2938 = vld [vmem:[%s2 + $0x238] sm:$0xff]
    %v2939 = vld [vmem:[%s2 + $0x240] sm:$0xff]
    %v2940 = vld [vmem:[%s2 + $0x248] sm:$0xff]
    %v2941 = vld [vmem:[%s2 + $0x250] sm:$0xff]
    %v2942 = vld [vmem:[%s2 + $0x258] sm:$0xff]
    %v2943 = vld [vmem:[%s2 + $0x260] sm:$0xff]
    %v2944 = vld [vmem:[%s2 + $0x268] sm:$0xff]
    %v2945 = vld [vmem:[%s2 + $0x270] sm:$0xff]
    %v2946 = vld [vmem:[%s2 + $0x278] sm:$0xff]
    %v2947 = vld [vmem:[%s2 + $0x280] sm:$0xff]
    %v2948 = vld [vmem:[%s2 + $0x288] sm:$0xff]
    %v2949 = vld [vmem:[%s2 + $0x290] sm:$0xff]
    %v2950 = vld [vmem:[%s2 + $0x298] sm:$0xff]
    %v2951 = vld [vmem:[%s2 + $0x2a0] sm:$0xff]
    %v2952 = vld [vmem:[%s2 + $0x2a8] sm:$0xff]
    %v2953 = vld [vmem:[%s2 + $0x2b0] sm:$0xff]
    %v2954 = vld [vmem:[%s2 + $0x2b8] sm:$0xff]
    %v2955 = vld [vmem:[%s2 + $0x2c0] sm:$0xff]
    %v2956 = vld [vmem:[%s2 + $0x2c8] sm:$0xff]
    %v2957 = vld [vmem:[%s2 + $0x2d0] sm:$0xff]
    %v2958 = vld [vmem:[%s2 + $0x2d8] sm:$0xff]
    %v2959 = vld [vmem:[%s2 + $0x2e0] sm:$0xff]
    %v2960 = vld [vmem:[%s2 + $0x2e8] sm:$0xff]
    %v2961 = vld [vmem:[%s2 + $0x2f0] sm:$0xff]
    %v2962 = vld [vmem:[%s2 + $0x2f8] sm:$0xff]
    %v2963 = vld [vmem:[%s2 + $0x300] sm:$0xff]
    %v2964 = vld [vmem:[%s2 + $0x308] sm:$0xff]
    %v2965 = vld [vmem:[%s2 + $0x310] sm:$0xff]
    %v2966 = vld [vmem:[%s2 + $0x318] sm:$0xff]
    %v2967 = vld [vmem:[%s2 + $0x320] sm:$0xff]
    %v2968 = vld [vmem:[%s2 + $0x328] sm:$0xff]
    %v2969 = vld [vmem:[%s2 + $0x330] sm:$0xff]
    %v2970 = vld [vmem:[%s2 + $0x338] sm:$0xff]
    %v2971 = vld [vmem:[%s2 + $0x340] sm:$0xff]
    %v2972 = vld [vmem:[%s2 + $0x348] sm:$0xff]
    %v2973 = vld [vmem:[%s2 + $0x350] sm:$0xff]
    %v2974 = vld [vmem:[%s2 + $0x358] sm:$0xff]
    %v2975 = vld [vmem:[%s2 + $0x360] sm:$0xff]
    %v2976 = vld [vmem:[%s2 + $0x368] sm:$0xff]
    %v2977 = vld [vmem:[%s2 + $0x370] sm:$0xff]
    %v2978 = vld [vmem:[%s2 + $0x378] sm:$0xff]
    %v2979 = vld [vmem:[%s2 + $0x380] sm:$0xff]
    %v2980 = vld [vmem:[%s2 + $0x388] sm:$0xff]
    %v2981 = vld [vmem:[%s2 + $0x390] sm:$0xff]
    %v2982 = vld [vmem:[%s2 + $0x398] sm:$0xff]
    %v2983 = vld [vmem:[%s2 + $0x3a0] sm:$0xff]
    %v2984 = vld [vmem:[%s2 + $0x3a8] sm:$0xff]
    %v2985 = vld [vmem:[%s2 + $0x3b0] sm:$0xff]
    %v2986 = vld [vmem:[%s2 + $0x3b8] sm:$0xff]
    %v2987 = vld [vmem:[%s2 + $0x3c0] sm:$0xff]
    %v2988 = vld [vmem:[%s2 + $0x3c8] sm:$0xff]
    %v2989 = vld [vmem:[%s2 + $0x3d0] sm:$0xff]
    %v2990 = vld [vmem:[%s2 + $0x3d8] sm:$0xff]
    %v2991 = vld [vmem:[%s2 + $0x3e0] sm:$0xff]
    %v2992 = vld [vmem:[%s2 + $0x3e8] sm:$0xff]
    %v2993 = vld [vmem:[%s2 + $0x3f0] sm:$0xff]
    %v2994 = vld [vmem:[%s2 + $0x3f8] sm:$0xff]
    %v3123 = vunpack.c.l.b16 %v2867
    %v3124 = vunpack.c.h.b16 %v2867
    %v3125 = vunpack.c.l.b16 %v2868
    %v3126 = vunpack.c.h.b16 %v2868
    %v3127 = vunpack.c.l.b16 %v2869
    %v3128 = vunpack.c.h.b16 %v2869
    %v3129 = vunpack.c.l.b16 %v2870
    %v3130 = vunpack.c.h.b16 %v2870
    %v3131 = vunpack.c.l.b16 %v2871
    %v3132 = vunpack.c.h.b16 %v2871
    %v3133 = vunpack.c.l.b16 %v2872
    %v3134 = vunpack.c.h.b16 %v2872
    %v3135 = vunpack.c.l.b16 %v2873
    %v3136 = vunpack.c.h.b16 %v2873
    %v3137 = vunpack.c.l.b16 %v2874
    %v3138 = vunpack.c.h.b16 %v2874
    %v3139 = vunpack.c.l.b16 %v2875
    %v3140 = vunpack.c.h.b16 %v2875
    %v3141 = vunpack.c.l.b16 %v2876
    %v3142 = vunpack.c.h.b16 %v2876
    %v3143 = vunpack.c.l.b16 %v2877
    %v3144 = vunpack.c.h.b16 %v2877
    %v3145 = vunpack.c.l.b16 %v2878
    %v3146 = vunpack.c.h.b16 %v2878
    %v3147 = vunpack.c.l.b16 %v2879
    %v3148 = vunpack.c.h.b16 %v2879
    %v3149 = vunpack.c.l.b16 %v2880
    %v3150 = vunpack.c.h.b16 %v2880
    %v3151 = vunpack.c.l.b16 %v2881
    %v3152 = vunpack.c.h.b16 %v2881
    %v3153 = vunpack.c.l.b16 %v2882
    %v3154 = vunpack.c.h.b16 %v2882
    %v3155 = vunpack.c.l.b16 %v2883
    %v3156 = vunpack.c.h.b16 %v2883
    %v3157 = vunpack.c.l.b16 %v2884
    %v3158 = vunpack.c.h.b16 %v2884
    %v3159 = vunpack.c.l.b16 %v2885
    %v3160 = vunpack.c.h.b16 %v2885
    %v3161 = vunpack.c.l.b16 %v2886
    %v3162 = vunpack.c.h.b16 %v2886
    %v3163 = vunpack.c.l.b16 %v2887
    %v3164 = vunpack.c.h.b16 %v2887
    %v3165 = vunpack.c.l.b16 %v2888
    %v3166 = vunpack.c.h.b16 %v2888
    %v3167 = vunpack.c.l.b16 %v2889
    %v3168 = vunpack.c.h.b16 %v2889
    %v3169 = vunpack.c.l.b16 %v2890
    %v3170 = vunpack.c.h.b16 %v2890
    %v3171 = vunpack.c.l.b16 %v2891
    %v3172 = vunpack.c.h.b16 %v2891
    %v3173 = vunpack.c.l.b16 %v2892
    %v3174 = vunpack.c.h.b16 %v2892
    %v3175 = vunpack.c.l.b16 %v2893
    %v3176 = vunpack.c.h.b16 %v2893
    %v3177 = vunpack.c.l.b16 %v2894
    %v3178 = vunpack.c.h.b16 %v2894
    %v3179 = vunpack.c.l.b16 %v2895
    %v3180 = vunpack.c.h.b16 %v2895
    %v3181 = vunpack.c.l.b16 %v2896
    %v3182 = vunpack.c.h.b16 %v2896
    %v3183 = vunpack.c.l.b16 %v2897
    %v3184 = vunpack.c.h.b16 %v2897
    %v3185 = vunpack.c.l.b16 %v2898
    %v3186 = vunpack.c.h.b16 %v2898
    %v3187 = vunpack.c.l.b16 %v2899
    %v3188 = vunpack.c.h.b16 %v2899
    %v3189 = vunpack.c.l.b16 %v2900
    %v3190 = vunpack.c.h.b16 %v2900
    %v3191 = vunpack.c.l.b16 %v2901
    %v3192 = vunpack.c.h.b16 %v2901
    %v3193 = vunpack.c.l.b16 %v2902
    %v3194 = vunpack.c.h.b16 %v2902
    %v3195 = vunpack.c.l.b16 %v2903
    %v3196 = vunpack.c.h.b16 %v2903
    %v3197 = vunpack.c.l.b16 %v2904
    %v3198 = vunpack.c.h.b16 %v2904
    %v3199 = vunpack.c.l.b16 %v2905
    %v3200 = vunpack.c.h.b16 %v2905
    %v3201 = vunpack.c.l.b16 %v2906
    %v3202 = vunpack.c.h.b16 %v2906
    %v3203 = vunpack.c.l.b16 %v2907
    %v3204 = vunpack.c.h.b16 %v2907
    %v3205 = vunpack.c.l.b16 %v2908
    %v3206 = vunpack.c.h.b16 %v2908
    %v3207 = vunpack.c.l.b16 %v2909
    %v3208 = vunpack.c.h.b16 %v2909
    %v3209 = vunpack.c.l.b16 %v2910
    %v3210 = vunpack.c.h.b16 %v2910
    %v3211 = vunpack.c.l.b16 %v2911
    %v3212 = vunpack.c.h.b16 %v2911
    %v3213 = vunpack.c.l.b16 %v2912
    %v3214 = vunpack.c.h.b16 %v2912
    %v3215 = vunpack.c.l.b16 %v2913
    %v3216 = vunpack.c.h.b16 %v2913
    %v3217 = vunpack.c.l.b16 %v2914
    %v3218 = vunpack.c.h.b16 %v2914
    %v3219 = vunpack.c.l.b16 %v2915
    %v3220 = vunpack.c.h.b16 %v2915
    %v3221 = vunpack.c.l.b16 %v2916
    %v3222 = vunpack.c.h.b16 %v2916
    %v3223 = vunpack.c.l.b16 %v2917
    %v3224 = vunpack.c.h.b16 %v2917
    %v3225 = vunpack.c.l.b16 %v2918
    %v3226 = vunpack.c.h.b16 %v2918
    %v3227 = vunpack.c.l.b16 %v2919
    %v3228 = vunpack.c.h.b16 %v2919
    %v3229 = vunpack.c.l.b16 %v2920
    %v3230 = vunpack.c.h.b16 %v2920
    %v3231 = vunpack.c.l.b16 %v2921
    %v3232 = vunpack.c.h.b16 %v2921
    %v3233 = vunpack.c.l.b16 %v2922
    %v3234 = vunpack.c.h.b16 %v2922
    %v3235 = vunpack.c.l.b16 %v2923
    %v3236 = vunpack.c.h.b16 %v2923
    %v3237 = vunpack.c.l.b16 %v2924
    %v3238 = vunpack.c.h.b16 %v2924
    %v3239 = vunpack.c.l.b16 %v2925
    %v3240 = vunpack.c.h.b16 %v2925
    %v3241 = vunpack.c.l.b16 %v2926
    %v3242 = vunpack.c.h.b16 %v2926
    %v3243 = vunpack.c.l.b16 %v2927
    %v3244 = vunpack.c.h.b16 %v2927
    %v3245 = vunpack.c.l.b16 %v2928
    %v3246 = vunpack.c.h.b16 %v2928
    %v3247 = vunpack.c.l.b16 %v2929
    %v3248 = vunpack.c.h.b16 %v2929
    %v3249 = vunpack.c.l.b16 %v2930
    %v3250 = vunpack.c.h.b16 %v2930
    %v3251 = vunpack.c.l.b16 %v2931
    %v3252 = vunpack.c.h.b16 %v2931
    %v3253 = vunpack.c.l.b16 %v2932
    %v3254 = vunpack.c.h.b16 %v2932
    %v3255 = vunpack.c.l.b16 %v2933
    %v3256 = vunpack.c.h.b16 %v2933
    %v3257 = vunpack.c.l.b16 %v2934
    %v3258 = vunpack.c.h.b16 %v2934
    %v3259 = vunpack.c.l.b16 %v2935
    %v3260 = vunpack.c.h.b16 %v2935
    %v3261 = vunpack.c.l.b16 %v2936
    %v3262 = vunpack.c.h.b16 %v2936
    %v3263 = vunpack.c.l.b16 %v2937
    %v3264 = vunpack.c.h.b16 %v2937
    %v3265 = vunpack.c.l.b16 %v2938
    %v3266 = vunpack.c.h.b16 %v2938
    %v3267 = vunpack.c.l.b16 %v2939
    %v3268 = vunpack.c.h.b16 %v2939
    %v3269 = vunpack.c.l.b16 %v2940
    %v3270 = vunpack.c.h.b16 %v2940
    %v3271 = vunpack.c.l.b16 %v2941
    %v3272 = vunpack.c.h.b16 %v2941
    %v3273 = vunpack.c.l.b16 %v2942
    %v3274 = vunpack.c.h.b16 %v2942
    %v3275 = vunpack.c.l.b16 %v2943
    %v3276 = vunpack.c.h.b16 %v2943
    %v3277 = vunpack.c.l.b16 %v2944
    %v3278 = vunpack.c.h.b16 %v2944
    %v3279 = vunpack.c.l.b16 %v2945
    %v3280 = vunpack.c.h.b16 %v2945
    %v3281 = vunpack.c.l.b16 %v2946
    %v3282 = vunpack.c.h.b16 %v2946
    %v3283 = vunpack.c.l.b16 %v2947
    %v3284 = vunpack.c.h.b16 %v2947
    %v3285 = vunpack.c.l.b16 %v2948
    %v3286 = vunpack.c.h.b16 %v2948
    %v3287 = vunpack.c.l.b16 %v2949
    %v3288 = vunpack.c.h.b16 %v2949
    %v3289 = vunpack.c.l.b16 %v2950
    %v3290 = vunpack.c.h.b16 %v2950
    %v3291 = vunpack.c.l.b16 %v2951
    %v3292 = vunpack.c.h.b16 %v2951
    %v3293 = vunpack.c.l.b16 %v2952
    %v3294 = vunpack.c.h.b16 %v2952
    %v3295 = vunpack.c.l.b16 %v2953
    %v3296 = vunpack.c.h.b16 %v2953
    %v3297 = vunpack.c.l.b16 %v2954
    %v3298 = vunpack.c.h.b16 %v2954
    %v3299 = vunpack.c.l.b16 %v2955
    %v3300 = vunpack.c.h.b16 %v2955
    %v3301 = vunpack.c.l.b16 %v2956
    %v3302 = vunpack.c.h.b16 %v2956
    %v3303 = vunpack.c.l.b16 %v2957
    %v3304 = vunpack.c.h.b16 %v2957
    %v3305 = vunpack.c.l.b16 %v2958
    %v3306 = vunpack.c.h.b16 %v2958
    %v3307 = vunpack.c.l.b16 %v2959
    %v3308 = vunpack.c.h.b16 %v2959
    %v3309 = vunpack.c.l.b16 %v2960
    %v3310 = vunpack.c.h.b16 %v2960
    %v3311 = vunpack.c.l.b16 %v2961
    %v3312 = vunpack.c.h.b16 %v2961
    %v3313 = vunpack.c.l.b16 %v2962
    %v3314 = vunpack.c.h.b16 %v2962
    %v3315 = vunpack.c.l.b16 %v2963
    %v3316 = vunpack.c.h.b16 %v2963
    %v3317 = vunpack.c.l.b16 %v2964
    %v3318 = vunpack.c.h.b16 %v2964
    %v3319 = vunpack.c.l.b16 %v2965
    %v3320 = vunpack.c.h.b16 %v2965
    %v3321 = vunpack.c.l.b16 %v2966
    %v3322 = vunpack.c.h.b16 %v2966
    %v3323 = vunpack.c.l.b16 %v2967
    %v3324 = vunpack.c.h.b16 %v2967
    %v3325 = vunpack.c.l.b16 %v2968
    %v3326 = vunpack.c.h.b16 %v2968
    %v3327 = vunpack.c.l.b16 %v2969
    %v3328 = vunpack.c.h.b16 %v2969
    %v3329 = vunpack.c.l.b16 %v2970
    %v3330 = vunpack.c.h.b16 %v2970
    %v3331 = vunpack.c.l.b16 %v2971
    %v3332 = vunpack.c.h.b16 %v2971
    %v3333 = vunpack.c.l.b16 %v2972
    %v3334 = vunpack.c.h.b16 %v2972
    %v3335 = vunpack.c.l.b16 %v2973
    %v3336 = vunpack.c.h.b16 %v2973
    %v3337 = vunpack.c.l.b16 %v2974
    %v3338 = vunpack.c.h.b16 %v2974
    %v3339 = vunpack.c.l.b16 %v2975
    %v3340 = vunpack.c.h.b16 %v2975
    %v3341 = vunpack.c.l.b16 %v2976
    %v3342 = vunpack.c.h.b16 %v2976
    %v3343 = vunpack.c.l.b16 %v2977
    %v3344 = vunpack.c.h.b16 %v2977
    %v3345 = vunpack.c.l.b16 %v2978
    %v3346 = vunpack.c.h.b16 %v2978
    %v3347 = vunpack.c.l.b16 %v2979
    %v3348 = vunpack.c.h.b16 %v2979
    %v3349 = vunpack.c.l.b16 %v2980
    %v3350 = vunpack.c.h.b16 %v2980
    %v3351 = vunpack.c.l.b16 %v2981
    %v3352 = vunpack.c.h.b16 %v2981
    %v3353 = vunpack.c.l.b16 %v2982
    %v3354 = vunpack.c.h.b16 %v2982
    %v3355 = vunpack.c.l.b16 %v2983
    %v3356 = vunpack.c.h.b16 %v2983
    %v3357 = vunpack.c.l.b16 %v2984
    %v3358 = vunpack.c.h.b16 %v2984
    %v3359 = vunpack.c.l.b16 %v2985
    %v3360 = vunpack.c.h.b16 %v2985
    %v3361 = vunpack.c.l.b16 %v2986
    %v3362 = vunpack.c.h.b16 %v2986
    %v3363 = vunpack.c.l.b16 %v2987
    %v3364 = vunpack.c.h.b16 %v2987
    %v3365 = vunpack.c.l.b16 %v2988
    %v3366 = vunpack.c.h.b16 %v2988
    %v3367 = vunpack.c.l.b16 %v2989
    %v3368 = vunpack.c.h.b16 %v2989
    %v3369 = vunpack.c.l.b16 %v2990
    %v3370 = vunpack.c.h.b16 %v2990
    %v3371 = vunpack.c.l.b16 %v2991
    %v3372 = vunpack.c.h.b16 %v2991
    %v3373 = vunpack.c.l.b16 %v2992
    %v3374 = vunpack.c.h.b16 %v2992
    %v3375 = vunpack.c.l.b16 %v2993
    %v3376 = vunpack.c.h.b16 %v2993
    %v3377 = vunpack.c.l.b16 %v2994
    %v3378 = vunpack.c.h.b16 %v2994
    %v3379 = vpack.c.b16 %v3139, %v3123
    %v3380 = vpack.c.b16 %v3140, %v3124
    %v3381 = vpack.c.b16 %v3141, %v3125
    %v3382 = vpack.c.b16 %v3142, %v3126
    %v3383 = vpack.c.b16 %v3143, %v3127
    %v3384 = vpack.c.b16 %v3144, %v3128
    %v3385 = vpack.c.b16 %v3145, %v3129
    %v3386 = vpack.c.b16 %v3146, %v3130
    %v3387 = vpack.c.b16 %v3147, %v3131
    %v3388 = vpack.c.b16 %v3148, %v3132
    %v3389 = vpack.c.b16 %v3149, %v3133
    %v3390 = vpack.c.b16 %v3150, %v3134
    %v3391 = vpack.c.b16 %v3151, %v3135
    %v3392 = vpack.c.b16 %v3152, %v3136
    %v3393 = vpack.c.b16 %v3153, %v3137
    %v3394 = vpack.c.b16 %v3154, %v3138
    %v3395 = vpack.c.b16 %v3171, %v3155
    %v3396 = vpack.c.b16 %v3172, %v3156
    %v3397 = vpack.c.b16 %v3173, %v3157
    %v3398 = vpack.c.b16 %v3174, %v3158
    %v3399 = vpack.c.b16 %v3175, %v3159
    %v3400 = vpack.c.b16 %v3176, %v3160
    %v3401 = vpack.c.b16 %v3177, %v3161
    %v3402 = vpack.c.b16 %v3178, %v3162
    %v3403 = vpack.c.b16 %v3179, %v3163
    %v3404 = vpack.c.b16 %v3180, %v3164
    %v3405 = vpack.c.b16 %v3181, %v3165
    %v3406 = vpack.c.b16 %v3182, %v3166
    %v3407 = vpack.c.b16 %v3183, %v3167
    %v3408 = vpack.c.b16 %v3184, %v3168
    %v3409 = vpack.c.b16 %v3185, %v3169
    %v3410 = vpack.c.b16 %v3186, %v3170
    %v3411 = vpack.c.b16 %v3203, %v3187
    %v3412 = vpack.c.b16 %v3204, %v3188
    %v3413 = vpack.c.b16 %v3205, %v3189
    %v3414 = vpack.c.b16 %v3206, %v3190
    %v3415 = vpack.c.b16 %v3207, %v3191
    %v3416 = vpack.c.b16 %v3208, %v3192
    %v3417 = vpack.c.b16 %v3209, %v3193
    %v3418 = vpack.c.b16 %v3210, %v3194
    %v3419 = vpack.c.b16 %v3211, %v3195
    %v3420 = vpack.c.b16 %v3212, %v3196
    %v3421 = vpack.c.b16 %v3213, %v3197
    %v3422 = vpack.c.b16 %v3214, %v3198
    %v3423 = vpack.c.b16 %v3215, %v3199
    %v3424 = vpack.c.b16 %v3216, %v3200
    %v3425 = vpack.c.b16 %v3217, %v3201
    %v3426 = vpack.c.b16 %v3218, %v3202
    %v3427 = vpack.c.b16 %v3235, %v3219
    %v3428 = vpack.c.b16 %v3236, %v3220
    %v3429 = vpack.c.b16 %v3237, %v3221
    %v3430 = vpack.c.b16 %v3238, %v3222
    %v3431 = vpack.c.b16 %v3239, %v3223
    %v3432 = vpack.c.b16 %v3240, %v3224
    %v3433 = vpack.c.b16 %v3241, %v3225
    %v3434 = vpack.c.b16 %v3242, %v3226
    %v3435 = vpack.c.b16 %v3243, %v3227
    %v3436 = vpack.c.b16 %v3244, %v3228
    %v3437 = vpack.c.b16 %v3245, %v3229
    %v3438 = vpack.c.b16 %v3246, %v3230
    %v3439 = vpack.c.b16 %v3247, %v3231
    %v3440 = vpack.c.b16 %v3248, %v3232
    %v3441 = vpack.c.b16 %v3249, %v3233
    %v3442 = vpack.c.b16 %v3250, %v3234
    %v3443 = vpack.c.b16 %v3267, %v3251
    %v3444 = vpack.c.b16 %v3268, %v3252
    %v3445 = vpack.c.b16 %v3269, %v3253
    %v3446 = vpack.c.b16 %v3270, %v3254
    %v3447 = vpack.c.b16 %v3271, %v3255
    %v3448 = vpack.c.b16 %v3272, %v3256
    %v3449 = vpack.c.b16 %v3273, %v3257
    %v3450 = vpack.c.b16 %v3274, %v3258
    %v3451 = vpack.c.b16 %v3275, %v3259
    %v3452 = vpack.c.b16 %v3276, %v3260
    %v3453 = vpack.c.b16 %v3277, %v3261
    %v3454 = vpack.c.b16 %v3278, %v3262
    %v3455 = vpack.c.b16 %v3279, %v3263
    %v3456 = vpack.c.b16 %v3280, %v3264
    %v3457 = vpack.c.b16 %v3281, %v3265
    %v3458 = vpack.c.b16 %v3282, %v3266
    %v3459 = vpack.c.b16 %v3299, %v3283
    %v3460 = vpack.c.b16 %v3300, %v3284
    %v3461 = vpack.c.b16 %v3301, %v3285
    %v3462 = vpack.c.b16 %v3302, %v3286
    %v3463 = vpack.c.b16 %v3303, %v3287
    %v3464 = vpack.c.b16 %v3304, %v3288
    %v3465 = vpack.c.b16 %v3305, %v3289
    %v3466 = vpack.c.b16 %v3306, %v3290
    %v3467 = vpack.c.b16 %v3307, %v3291
    %v3468 = vpack.c.b16 %v3308, %v3292
    %v3469 = vpack.c.b16 %v3309, %v3293
    %v3470 = vpack.c.b16 %v3310, %v3294
    %v3471 = vpack.c.b16 %v3311, %v3295
    %v3472 = vpack.c.b16 %v3312, %v3296
    %v3473 = vpack.c.b16 %v3313, %v3297
    %v3474 = vpack.c.b16 %v3314, %v3298
    %v3475 = vpack.c.b16 %v3331, %v3315
    %v3476 = vpack.c.b16 %v3332, %v3316
    %v3477 = vpack.c.b16 %v3333, %v3317
    %v3478 = vpack.c.b16 %v3334, %v3318
    %v3479 = vpack.c.b16 %v3335, %v3319
    %v3480 = vpack.c.b16 %v3336, %v3320
    %v3481 = vpack.c.b16 %v3337, %v3321
    %v3482 = vpack.c.b16 %v3338, %v3322
    %v3483 = vpack.c.b16 %v3339, %v3323
    %v3484 = vpack.c.b16 %v3340, %v3324
    %v3485 = vpack.c.b16 %v3341, %v3325
    %v3486 = vpack.c.b16 %v3342, %v3326
    %v3487 = vpack.c.b16 %v3343, %v3327
    %v3488 = vpack.c.b16 %v3344, %v3328
    %v3489 = vpack.c.b16 %v3345, %v3329
    %v3490 = vpack.c.b16 %v3346, %v3330
    %v3491 = vpack.c.b16 %v3363, %v3347
    %v3492 = vpack.c.b16 %v3364, %v3348
    %v3493 = vpack.c.b16 %v3365, %v3349
    %v3494 = vpack.c.b16 %v3366, %v3350
    %v3495 = vpack.c.b16 %v3367, %v3351
    %v3496 = vpack.c.b16 %v3368, %v3352
    %v3497 = vpack.c.b16 %v3369, %v3353
    %v3498 = vpack.c.b16 %v3370, %v3354
    %v3499 = vpack.c.b16 %v3371, %v3355
    %v3500 = vpack.c.b16 %v3372, %v3356
    %v3501 = vpack.c.b16 %v3373, %v3357
    %v3502 = vpack.c.b16 %v3374, %v3358
    %v3503 = vpack.c.b16 %v3375, %v3359
    %v3504 = vpack.c.b16 %v3376, %v3360
    %v3505 = vpack.c.b16 %v3377, %v3361
    %v3506 = vpack.c.b16 %v3378, %v3362
    %3635 = vmatprep.subr.bf16.mxu0 %v3492
    %3636 = vmatpush1.bf16.msra.mxu0 %v3491
    %3637 = vmatprep.subr.bf16.mxu0 %v3476
    %3638 = vmatpush1.bf16.msra.mxu0 %v3475
    %3639 = vmatprep.subr.bf16.mxu0 %v3460
    %3640 = vmatpush1.bf16.msra.mxu0 %v3459
    %3641 = vmatprep.subr.bf16.mxu0 %v3444
    %3642 = vmatpush1.bf16.msra.mxu0 %v3443
    %3643 = vmatprep.subr.bf16.mxu0 %v3428
    %3644 = vmatpush1.bf16.msra.mxu0 %v3427
    %3645 = vmatprep.subr.bf16.mxu0 %v3412
    %3646 = vmatpush1.bf16.msra.mxu0 %v3411
    %3647 = vmatprep.subr.bf16.mxu0 %v3396
    %3648 = vmatpush1.bf16.msra.mxu0 %v3395
    %3649 = vmatprep.subr.bf16.mxu0 %v3380
    %3650 = vmatpush1.bf16.msra.mxu0 %v3379
    %3651 = vmatprep.subr.bf16.mxu0 0
    %3652 = vmatpush2.bf16.msra.mxu0 0
    %3653 = vmatprep.subr.bf16.mxu0 0
    %3654 = vmatpush2.bf16.msra.mxu0 0
    %3655 = vmatprep.subr.bf16.mxu0 0
    %3656 = vmatpush2.bf16.msra.mxu0 0
    %3657 = vmatprep.subr.bf16.mxu0 0
    %3658 = vmatpush2.bf16.msra.mxu0 0
    %3659 = vmatprep.subr.bf16.mxu0 0
    %3660 = vmatpush2.bf16.msra.mxu0 0
    %3661 = vmatprep.subr.bf16.mxu0 0
    %3662 = vmatpush2.bf16.msra.mxu0 0
    %3663 = vmatprep.subr.bf16.mxu0 0
    %3664 = vmatpush2.bf16.msra.mxu0 0
    %3665 = vmatprep.subr.bf16.mxu0 0
    %3666 = vmatpush2.bf16.msra.mxu0 0
    %3667 = vmatprep.mubr.bf16.mxu0 0
    %3668 = vmatmul.mubr.bf16.gmra.mxu0 %v2866
    %v3669 = vpop.f32.mrf.mxu0
    %v3670 = vadd.f32 0.0, %v3669
    %v3671 = vpop.f32.mrf.mxu0
    %v3672 = vadd.f32 0.0, %v3671
    %v3673 = vpop.f32.mrf.mxu0
    %v3674 = vpop.f32.mrf.mxu0
    %3675 = vdwg.mxu0
    %3676 = vmatprep.subr.bf16.mxu0 %v3494
    %3677 = vmatpush1.bf16.msra.mxu0 %v3493
    %3678 = vmatprep.subr.bf16.mxu0 %v3478
    %3679 = vmatpush1.bf16.msra.mxu0 %v3477
    %3680 = vmatprep.subr.bf16.mxu0 %v3462
    %3681 = vmatpush1.bf16.msra.mxu0 %v3461
    %3682 = vmatprep.subr.bf16.mxu0 %v3446
    %3683 = vmatpush1.bf16.msra.mxu0 %v3445
    %3684 = vmatprep.subr.bf16.mxu0 %v3430
    %3685 = vmatpush1.bf16.msra.mxu0 %v3429
    %3686 = vmatprep.subr.bf16.mxu0 %v3414
    %3687 = vmatpush1.bf16.msra.mxu0 %v3413
    %3688 = vmatprep.subr.bf16.mxu0 %v3398
    %3689 = vmatpush1.bf16.msra.mxu0 %v3397
    %3690 = vmatprep.subr.bf16.mxu0 %v3382
    %3691 = vmatpush1.bf16.msra.mxu0 %v3381
    %3692 = vmatprep.subr.bf16.mxu0 0
    %3693 = vmatpush2.bf16.msra.mxu0 0
    %3694 = vmatprep.subr.bf16.mxu0 0
    %3695 = vmatpush2.bf16.msra.mxu0 0
    %3696 = vmatprep.subr.bf16.mxu0 0
    %3697 = vmatpush2.bf16.msra.mxu0 0
    %3698 = vmatprep.subr.bf16.mxu0 0
    %3699 = vmatpush2.bf16.msra.mxu0 0
    %3700 = vmatprep.subr.bf16.mxu0 0
    %3701 = vmatpush2.bf16.msra.mxu0 0
    %3702 = vmatprep.subr.bf16.mxu0 0
    %3703 = vmatpush2.bf16.msra.mxu0 0
    %3704 = vmatprep.subr.bf16.mxu0 0
    %3705 = vmatpush2.bf16.msra.mxu0 0
    %3706 = vmatprep.subr.bf16.mxu0 0
    %3707 = vmatpush2.bf16.msra.mxu0 0
    %3708 = vmatprep.mubr.bf16.mxu0 0
    %3709 = vmatmul.mubr.bf16.gmra.mxu0 %v2866
    %v3710 = vpop.f32.mrf.mxu0
    %v3711 = vadd.f32 0.0, %v3710
    %v3712 = vpop.f32.mrf.mxu0
    %v3713 = vadd.f32 0.0, %v3712
    %v3714 = vpop.f32.mrf.mxu0
    %v3715 = vpop.f32.mrf.mxu0
    %3716 = vdwg.mxu0
    %3717 = vmatprep.subr.bf16.mxu0 %v3496
    %3718 = vmatpush1.bf16.msra.mxu0 %v3495
    %3719 = vmatprep.subr.bf16.mxu0 %v3480
    %3720 = vmatpush1.bf16.msra.mxu0 %v3479
    %3721 = vmatprep.subr.bf16.mxu0 %v3464
    %3722 = vmatpush1.bf16.msra.mxu0 %v3463
    %3723 = vmatprep.subr.bf16.mxu0 %v3448
    %3724 = vmatpush1.bf16.msra.mxu0 %v3447
    %3725 = vmatprep.subr.bf16.mxu0 %v3432
    %3726 = vmatpush1.bf16.msra.mxu0 %v3431
    %3727 = vmatprep.subr.bf16.mxu0 %v3416
    %3728 = vmatpush1.bf16.msra.mxu0 %v3415
    %3729 = vmatprep.subr.bf16.mxu0 %v3400
    %3730 = vmatpush1.bf16.msra.mxu0 %v3399
    %3731 = vmatprep.subr.bf16.mxu0 %v3384
    %3732 = vmatpush1.bf16.msra.mxu0 %v3383
    %3733 = vmatprep.subr.bf16.mxu0 0
    %3734 = vmatpush2.bf16.msra.mxu0 0
    %3735 = vmatprep.subr.bf16.mxu0 0
    %3736 = vmatpush2.bf16.msra.mxu0 0
    %3737 = vmatprep.subr.bf16.mxu0 0
    %3738 = vmatpush2.bf16.msra.mxu0 0
    %3739 = vmatprep.subr.bf16.mxu0 0
    %3740 = vmatpush2.bf16.msra.mxu0 0
    %3741 = vmatprep.subr.bf16.mxu0 0
    %3742 = vmatpush2.bf16.msra.mxu0 0
    %3743 = vmatprep.subr.bf16.mxu0 0
    %3744 = vmatpush2.bf16.msra.mxu0 0
    %3745 = vmatprep.subr.bf16.mxu0 0
    %3746 = vmatpush2.bf16.msra.mxu0 0
    %3747 = vmatprep.subr.bf16.mxu0 0
    %3748 = vmatpush2.bf16.msra.mxu0 0
    %3749 = vmatprep.mubr.bf16.mxu0 0
    %3750 = vmatmul.mubr.bf16.gmra.mxu0 %v2866
    %v3751 = vpop.f32.mrf.mxu0
    %v3752 = vadd.f32 0.0, %v3751
    %v3753 = vpop.f32.mrf.mxu0
    %v3754 = vadd.f32 0.0, %v3753
    %v3755 = vpop.f32.mrf.mxu0
    %v3756 = vpop.f32.mrf.mxu0
    %3757 = vdwg.mxu0
    %3758 = vmatprep.subr.bf16.mxu0 %v3498
    %3759 = vmatpush1.bf16.msra.mxu0 %v3497
    %3760 = vmatprep.subr.bf16.mxu0 %v3482
    %3761 = vmatpush1.bf16.msra.mxu0 %v3481
    %3762 = vmatprep.subr.bf16.mxu0 %v3466
    %3763 = vmatpush1.bf16.msra.mxu0 %v3465
    %3764 = vmatprep.subr.bf16.mxu0 %v3450
    %3765 = vmatpush1.bf16.msra.mxu0 %v3449
    %3766 = vmatprep.subr.bf16.mxu0 %v3434
    %3767 = vmatpush1.bf16.msra.mxu0 %v3433
    %3768 = vmatprep.subr.bf16.mxu0 %v3418
    %3769 = vmatpush1.bf16.msra.mxu0 %v3417
    %3770 = vmatprep.subr.bf16.mxu0 %v3402
    %3771 = vmatpush1.bf16.msra.mxu0 %v3401
    %3772 = vmatprep.subr.bf16.mxu0 %v3386
    %3773 = vmatpush1.bf16.msra.mxu0 %v3385
    %3774 = vmatprep.subr.bf16.mxu0 0
    %3775 = vmatpush2.bf16.msra.mxu0 0
    %3776 = vmatprep.subr.bf16.mxu0 0
    %3777 = vmatpush2.bf16.msra.mxu0 0
    %3778 = vmatprep.subr.bf16.mxu0 0
    %3779 = vmatpush2.bf16.msra.mxu0 0
    %3780 = vmatprep.subr.bf16.mxu0 0
    %3781 = vmatpush2.bf16.msra.mxu0 0
    %3782 = vmatprep.subr.bf16.mxu0 0
    %3783 = vmatpush2.bf16.msra.mxu0 0
    %3784 = vmatprep.subr.bf16.mxu0 0
    %3785 = vmatpush2.bf16.msra.mxu0 0
    %3786 = vmatprep.subr.bf16.mxu0 0
    %3787 = vmatpush2.bf16.msra.mxu0 0
    %3788 = vmatprep.subr.bf16.mxu0 0
    %3789 = vmatpush2.bf16.msra.mxu0 0
    %3790 = vmatprep.mubr.bf16.mxu0 0
    %3791 = vmatmul.mubr.bf16.gmra.mxu0 %v2866
    %v3792 = vpop.f32.mrf.mxu0
    %v3793 = vadd.f32 0.0, %v3792
    %v3794 = vpop.f32.mrf.mxu0
    %v3795 = vadd.f32 0.0, %v3794
    %v3796 = vpop.f32.mrf.mxu0
    %v3797 = vpop.f32.mrf.mxu0
    %3798 = vdwg.mxu0
    %3799 = vmatprep.subr.bf16.mxu0 %v3500
    %3800 = vmatpush1.bf16.msra.mxu0 %v3499
    %3801 = vmatprep.subr.bf16.mxu0 %v3484
    %3802 = vmatpush1.bf16.msra.mxu0 %v3483
    %3803 = vmatprep.subr.bf16.mxu0 %v3468
    %3804 = vmatpush1.bf16.msra.mxu0 %v3467
    %3805 = vmatprep.subr.bf16.mxu0 %v3452
    %3806 = vmatpush1.bf16.msra.mxu0 %v3451
    %3807 = vmatprep.subr.bf16.mxu0 %v3436
    %3808 = vmatpush1.bf16.msra.mxu0 %v3435
    %3809 = vmatprep.subr.bf16.mxu0 %v3420
    %3810 = vmatpush1.bf16.msra.mxu0 %v3419
    %3811 = vmatprep.subr.bf16.mxu0 %v3404
    %3812 = vmatpush1.bf16.msra.mxu0 %v3403
    %3813 = vmatprep.subr.bf16.mxu0 %v3388
    %3814 = vmatpush1.bf16.msra.mxu0 %v3387
    %3815 = vmatprep.subr.bf16.mxu0 0
    %3816 = vmatpush2.bf16.msra.mxu0 0
    %3817 = vmatprep.subr.bf16.mxu0 0
    %3818 = vmatpush2.bf16.msra.mxu0 0
    %3819 = vmatprep.subr.bf16.mxu0 0
    %3820 = vmatpush2.bf16.msra.mxu0 0
    %3821 = vmatprep.subr.bf16.mxu0 0
    %3822 = vmatpush2.bf16.msra.mxu0 0
    %3823 = vmatprep.subr.bf16.mxu0 0
    %3824 = vmatpush2.bf16.msra.mxu0 0
    %3825 = vmatprep.subr.bf16.mxu0 0
    %3826 = vmatpush2.bf16.msra.mxu0 0
    %3827 = vmatprep.subr.bf16.mxu0 0
    %3828 = vmatpush2.bf16.msra.mxu0 0
    %3829 = vmatprep.subr.bf16.mxu0 0
    %3830 = vmatpush2.bf16.msra.mxu0 0
    %3831 = vmatprep.mubr.bf16.mxu0 0
    %3832 = vmatmul.mubr.bf16.gmra.mxu0 %v2866
    %v3833 = vpop.f32.mrf.mxu0
    %v3834 = vadd.f32 0.0, %v3833
    %v3835 = vpop.f32.mrf.mxu0
    %v3836 = vadd.f32 0.0, %v3835
    %v3837 = vpop.f32.mrf.mxu0
    %v3838 = vpop.f32.mrf.mxu0
    %3839 = vdwg.mxu0
    %3840 = vmatprep.subr.bf16.mxu0 %v3502
    %3841 = vmatpush1.bf16.msra.mxu0 %v3501
    %3842 = vmatprep.subr.bf16.mxu0 %v3486
    %3843 = vmatpush1.bf16.msra.mxu0 %v3485
    %3844 = vmatprep.subr.bf16.mxu0 %v3470
    %3845 = vmatpush1.bf16.msra.mxu0 %v3469
    %3846 = vmatprep.subr.bf16.mxu0 %v3454
    %3847 = vmatpush1.bf16.msra.mxu0 %v3453
    %3848 = vmatprep.subr.bf16.mxu0 %v3438
    %3849 = vmatpush1.bf16.msra.mxu0 %v3437
    %3850 = vmatprep.subr.bf16.mxu0 %v3422
    %3851 = vmatpush1.bf16.msra.mxu0 %v3421
    %3852 = vmatprep.subr.bf16.mxu0 %v3406
    %3853 = vmatpush1.bf16.msra.mxu0 %v3405
    %3854 = vmatprep.subr.bf16.mxu0 %v3390
    %3855 = vmatpush1.bf16.msra.mxu0 %v3389
    %3856 = vmatprep.subr.bf16.mxu0 0
    %3857 = vmatpush2.bf16.msra.mxu0 0
    %3858 = vmatprep.subr.bf16.mxu0 0
    %3859 = vmatpush2.bf16.msra.mxu0 0
    %3860 = vmatprep.subr.bf16.mxu0 0
    %3861 = vmatpush2.bf16.msra.mxu0 0
    %3862 = vmatprep.subr.bf16.mxu0 0
    %3863 = vmatpush2.bf16.msra.mxu0 0
    %3864 = vmatprep.subr.bf16.mxu0 0
    %3865 = vmatpush2.bf16.msra.mxu0 0
    %3866 = vmatprep.subr.bf16.mxu0 0
    %3867 = vmatpush2.bf16.msra.mxu0 0
    %3868 = vmatprep.subr.bf16.mxu0 0
    %3869 = vmatpush2.bf16.msra.mxu0 0
    %3870 = vmatprep.subr.bf16.mxu0 0
    %3871 = vmatpush2.bf16.msra.mxu0 0
    %3872 = vmatprep.mubr.bf16.mxu0 0
    %3873 = vmatmul.mubr.bf16.gmra.mxu0 %v2866
    %v3874 = vpop.f32.mrf.mxu0
    %v3875 = vadd.f32 0.0, %v3874
    %v3876 = vpop.f32.mrf.mxu0
    %v3877 = vadd.f32 0.0, %v3876
    %v3878 = vpop.f32.mrf.mxu0
    %v3879 = vpop.f32.mrf.mxu0
    %3880 = vdwg.mxu0
    %3881 = vmatprep.subr.bf16.mxu0 %v3504
    %3882 = vmatpush1.bf16.msra.mxu0 %v3503
    %3883 = vmatprep.subr.bf16.mxu0 %v3488
    %3884 = vmatpush1.bf16.msra.mxu0 %v3487
    %3885 = vmatprep.subr.bf16.mxu0 %v3472
    %3886 = vmatpush1.bf16.msra.mxu0 %v3471
    %3887 = vmatprep.subr.bf16.mxu0 %v3456
    %3888 = vmatpush1.bf16.msra.mxu0 %v3455
    %3889 = vmatprep.subr.bf16.mxu0 %v3440
    %3890 = vmatpush1.bf16.msra.mxu0 %v3439
    %3891 = vmatprep.subr.bf16.mxu0 %v3424
    %3892 = vmatpush1.bf16.msra.mxu0 %v3423
    %3893 = vmatprep.subr.bf16.mxu0 %v3408
    %3894 = vmatpush1.bf16.msra.mxu0 %v3407
    %3895 = vmatprep.subr.bf16.mxu0 %v3392
    %3896 = vmatpush1.bf16.msra.mxu0 %v3391
    %3897 = vmatprep.subr.bf16.mxu0 0
    %3898 = vmatpush2.bf16.msra.mxu0 0
    %3899 = vmatprep.subr.bf16.mxu0 0
    %3900 = vmatpush2.bf16.msra.mxu0 0
    %3901 = vmatprep.subr.bf16.mxu0 0
    %3902 = vmatpush2.bf16.msra.mxu0 0
    %3903 = vmatprep.subr.bf16.mxu0 0
    %3904 = vmatpush2.bf16.msra.mxu0 0
    %3905 = vmatprep.subr.bf16.mxu0 0
    %3906 = vmatpush2.bf16.msra.mxu0 0
    %3907 = vmatprep.subr.bf16.mxu0 0
    %3908 = vmatpush2.bf16.msra.mxu0 0
    %3909 = vmatprep.subr.bf16.mxu0 0
    %3910 = vmatpush2.bf16.msra.mxu0 0
    %3911 = vmatprep.subr.bf16.mxu0 0
    %3912 = vmatpush2.bf16.msra.mxu0 0
    %3913 = vmatprep.mubr.bf16.mxu0 0
    %3914 = vmatmul.mubr.bf16.gmra.mxu0 %v2866
    %v3915 = vpop.f32.mrf.mxu0
    %v3916 = vadd.f32 0.0, %v3915
    %v3917 = vpop.f32.mrf.mxu0
    %v3918 = vadd.f32 0.0, %v3917
    %v3919 = vpop.f32.mrf.mxu0
    %v3920 = vpop.f32.mrf.mxu0
    %3921 = vdwg.mxu0
    %3922 = vmatprep.subr.bf16.mxu0 %v3506
    %3923 = vmatpush1.bf16.msra.mxu0 %v3505
    %3924 = vmatprep.subr.bf16.mxu0 %v3490
    %3925 = vmatpush1.bf16.msra.mxu0 %v3489
    %3926 = vmatprep.subr.bf16.mxu0 %v3474
    %3927 = vmatpush1.bf16.msra.mxu0 %v3473
    %3928 = vmatprep.subr.bf16.mxu0 %v3458
    %3929 = vmatpush1.bf16.msra.mxu0 %v3457
    %3930 = vmatprep.subr.bf16.mxu0 %v3442
    %3931 = vmatpush1.bf16.msra.mxu0 %v3441
    %3932 = vmatprep.subr.bf16.mxu0 %v3426
    %3933 = vmatpush1.bf16.msra.mxu0 %v3425
    %3934 = vmatprep.subr.bf16.mxu0 %v3410
    %3935 = vmatpush1.bf16.msra.mxu0 %v3409
    %3936 = vmatprep.subr.bf16.mxu0 %v3394
    %3937 = vmatpush1.bf16.msra.mxu0 %v3393
    %3938 = vmatprep.subr.bf16.mxu0 0
    %3939 = vmatpush2.bf16.msra.mxu0 0
    %3940 = vmatprep.subr.bf16.mxu0 0
    %3941 = vmatpush2.bf16.msra.mxu0 0
    %3942 = vmatprep.subr.bf16.mxu0 0
    %3943 = vmatpush2.bf16.msra.mxu0 0
    %3944 = vmatprep.subr.bf16.mxu0 0
    %3945 = vmatpush2.bf16.msra.mxu0 0
    %3946 = vmatprep.subr.bf16.mxu0 0
    %3947 = vmatpush2.bf16.msra.mxu0 0
    %3948 = vmatprep.subr.bf16.mxu0 0
    %3949 = vmatpush2.bf16.msra.mxu0 0
    %3950 = vmatprep.subr.bf16.mxu0 0
    %3951 = vmatpush2.bf16.msra.mxu0 0
    %3952 = vmatprep.subr.bf16.mxu0 0
    %3953 = vmatpush2.bf16.msra.mxu0 0
    %3954 = vmatprep.mubr.bf16.mxu0 0
    %3955 = vmatmul.mubr.bf16.gmra.mxu0 %v2866
    %v3956 = vpop.f32.mrf.mxu0
    %v3957 = vadd.f32 0.0, %v3956
    %v3958 = vpop.f32.mrf.mxu0
    %v3959 = vadd.f32 0.0, %v3958
    %v3960 = vpop.f32.mrf.mxu0
    %v3961 = vpop.f32.mrf.mxu0
    %3962 = vdwg.mxu0
    %v3979 = vrot.slane %v3670, 2
    %v3980 = vrot.slane %v3672, 2
    %v3981 = vrot.slane %v3711, 2
    %v3982 = vrot.slane %v3713, 2
    %v3983 = vrot.slane %v3752, 2
    %v3984 = vrot.slane %v3754, 2
    %v3985 = vrot.slane %v3793, 2
    %v3986 = vrot.slane %v3795, 2
    %v3987 = vrot.slane %v3834, 2
    %v3988 = vrot.slane %v3836, 2
    %v3989 = vrot.slane %v3875, 2
    %v3990 = vrot.slane %v3877, 2
    %v3991 = vrot.slane %v3916, 2
    %v3992 = vrot.slane %v3918, 2
    %v3993 = vrot.slane %v3957, 2
    %v3994 = vrot.slane %v3959, 2
    %v4011 = vadd.f32 %v3670, %v3979
    %v4012 = vadd.f32 %v3672, %v3980
    %v4013 = vadd.f32 %v3711, %v3981
    %v4014 = vadd.f32 %v3713, %v3982
    %v4015 = vadd.f32 %v3752, %v3983
    %v4016 = vadd.f32 %v3754, %v3984
    %v4017 = vadd.f32 %v3793, %v3985
    %v4018 = vadd.f32 %v3795, %v3986
    %v4019 = vadd.f32 %v3834, %v3987
    %v4020 = vadd.f32 %v3836, %v3988
    %v4021 = vadd.f32 %v3875, %v3989
    %v4022 = vadd.f32 %v3877, %v3990
    %v4023 = vadd.f32 %v3916, %v3991
    %v4024 = vadd.f32 %v3918, %v3992
    %v4025 = vadd.f32 %v3957, %v3993
    %v4026 = vadd.f32 %v3959, %v3994
    %v4027 = vxor.u32 %v4011, 2147483648
    %v4028 = vxor.u32 %v4012, 2147483648
    %v4029 = vxor.u32 %v4013, 2147483648
    %v4030 = vxor.u32 %v4014, 2147483648
    %v4031 = vxor.u32 %v4015, 2147483648
    %v4032 = vxor.u32 %v4016, 2147483648
    %v4033 = vxor.u32 %v4017, 2147483648
    %v4034 = vxor.u32 %v4018, 2147483648
    %v4035 = vxor.u32 %v4019, 2147483648
    %v4036 = vxor.u32 %v4020, 2147483648
    %v4037 = vxor.u32 %v4021, 2147483648
    %v4038 = vxor.u32 %v4022, 2147483648
    %v4039 = vxor.u32 %v4023, 2147483648
    %v4040 = vxor.u32 %v4024, 2147483648
    %v4041 = vxor.u32 %v4025, 2147483648
    %v4042 = vxor.u32 %v4026, 2147483648
    %v4043 = vmul.f32 %v4027, 1.442695
    %v4044 = vpow.pop %v4043
    %v4045 = vmul.f32 %v4028, 1.442695
    %v4046 = vpow.pop %v4045
    %v4047 = vmul.f32 %v4029, 1.442695
    %v4048 = vpow.pop %v4047
    %v4049 = vmul.f32 %v4030, 1.442695
    %v4050 = vpow.pop %v4049
    %v4051 = vmul.f32 %v4031, 1.442695
    %v4052 = vpow.pop %v4051
    %v4053 = vmul.f32 %v4032, 1.442695
    %v4054 = vpow.pop %v4053
    %v4055 = vmul.f32 %v4033, 1.442695
    %v4056 = vpow.pop %v4055
    %v4057 = vmul.f32 %v4034, 1.442695
    %v4058 = vpow.pop %v4057
    %v4059 = vmul.f32 %v4035, 1.442695
    %v4060 = vpow.pop %v4059
    %v4061 = vmul.f32 %v4036, 1.442695
    %v4062 = vpow.pop %v4061
    %v4063 = vmul.f32 %v4037, 1.442695
    %v4064 = vpow.pop %v4063
    %v4065 = vmul.f32 %v4038, 1.442695
    %v4066 = vpow.pop %v4065
    %v4067 = vmul.f32 %v4039, 1.442695
    %v4068 = vpow.pop %v4067
    %v4069 = vmul.f32 %v4040, 1.442695
    %v4070 = vpow.pop %v4069
    %v4071 = vmul.f32 %v4041, 1.442695
    %v4072 = vpow.pop %v4071
    %v4073 = vmul.f32 %v4042, 1.442695
    %v4074 = vpow.pop %v4073
    %v4075 = vadd.f32 %v4044, 1.0
    %v4076 = vadd.f32 %v4046, 1.0
    %v4077 = vadd.f32 %v4048, 1.0
    %v4078 = vadd.f32 %v4050, 1.0
    %v4079 = vadd.f32 %v4052, 1.0
    %v4080 = vadd.f32 %v4054, 1.0
    %v4081 = vadd.f32 %v4056, 1.0
    %v4082 = vadd.f32 %v4058, 1.0
    %v4083 = vadd.f32 %v4060, 1.0
    %v4084 = vadd.f32 %v4062, 1.0
    %v4085 = vadd.f32 %v4064, 1.0
    %v4086 = vadd.f32 %v4066, 1.0
    %v4087 = vadd.f32 %v4068, 1.0
    %v4088 = vadd.f32 %v4070, 1.0
    %v4089 = vadd.f32 %v4072, 1.0
    %v4090 = vadd.f32 %v4074, 1.0
    %v4091 = vrcp.pop %v4075
    %v4092 = vmul.f32 1.0, %v4091
    %v4093 = vrcp.pop %v4076
    %v4094 = vmul.f32 1.0, %v4093
    %v4095 = vrcp.pop %v4077
    %v4096 = vmul.f32 1.0, %v4095
    %v4097 = vrcp.pop %v4078
    %v4098 = vmul.f32 1.0, %v4097
    %v4099 = vrcp.pop %v4079
    %v4100 = vmul.f32 1.0, %v4099
    %v4101 = vrcp.pop %v4080
    %v4102 = vmul.f32 1.0, %v4101
    %v4103 = vrcp.pop %v4081
    %v4104 = vmul.f32 1.0, %v4103
    %v4105 = vrcp.pop %v4082
    %v4106 = vmul.f32 1.0, %v4105
    %v4107 = vrcp.pop %v4083
    %v4108 = vmul.f32 1.0, %v4107
    %v4109 = vrcp.pop %v4084
    %v4110 = vmul.f32 1.0, %v4109
    %v4111 = vrcp.pop %v4085
    %v4112 = vmul.f32 1.0, %v4111
    %v4113 = vrcp.pop %v4086
    %v4114 = vmul.f32 1.0, %v4113
    %v4115 = vrcp.pop %v4087
    %v4116 = vmul.f32 1.0, %v4115
    %v4117 = vrcp.pop %v4088
    %v4118 = vmul.f32 1.0, %v4117
    %v4119 = vrcp.pop %v4089
    %v4120 = vmul.f32 1.0, %v4119
    %v4121 = vrcp.pop %v4090
    %v4122 = vmul.f32 1.0, %v4121
    %v4139 = vcombine.low %v4092, %v4094
    %v4140 = vcombine.low %v4096, %v4098
    %v4141 = vcombine.low %v4100, %v4102
    %v4142 = vcombine.low %v4104, %v4106
    %v4144 = vunpack.c.l.s4 1966171168
    %v4145 = vunpack.c.0.s8 %v4144
    %v4146 = vlaneseq
    %v4147 = vshrl.u32 %v4146, 7
    %v4148 = vsub.s32 %v4145, %v4147
    %v4149 = vrot.slane %v4139, %v4148
    %v4151 = vunpack.c.l.s4 1966171168
    %v4152 = vunpack.c.0.s8 %v4151
    %v4153 = vlaneseq
    %v4154 = vshrl.u32 %v4153, 7
    %v4155 = vsub.s32 %v4152, %v4154
    %v4156 = vrot.slane %v4140, %v4155
    %v4158 = vunpack.c.l.s4 1966171168
    %v4159 = vunpack.c.0.s8 %v4158
    %v4160 = vlaneseq
    %v4161 = vshrl.u32 %v4160, 7
    %v4162 = vsub.s32 %v4159, %v4161
    %v4163 = vrot.slane %v4141, %v4162
    %v4165 = vunpack.c.l.s4 1966171168
    %v4166 = vunpack.c.0.s8 %v4165
    %v4167 = vlaneseq
    %v4168 = vshrl.u32 %v4167, 7
    %v4169 = vsub.s32 %v4166, %v4168
    %v4170 = vrot.slane %v4142, %v4169
    %v4171 = vcombine.low %v4149, %v4156
    %v4172 = vcombine.high %v4149, %v4156
    %v4173 = vcombine.low %v4163, %v4170
    %v4174 = vcombine.high %v4163, %v4170
    %v4176 = vunpack.c.l.s4 1966171168
    %v4177 = vunpack.c.0.s8 %v4176
    %v4178 = vlaneseq
    %v4179 = vshrl.u32 %v4178, 7
    %v4180 = vsub.s32 %v4177, %v4179
    %v4181 = vrot.slane %v4171, %v4180
    %v4183 = vunpack.c.l.s4 1966171168
    %v4184 = vunpack.c.0.s8 %v4183
    %v4185 = vlaneseq
    %v4186 = vshrl.u32 %v4185, 7
    %v4187 = vsub.s32 %v4184, %v4186
    %v4188 = vrot.slane %v4172, %v4187
    %v4190 = vunpack.c.l.s4 1966171168
    %v4191 = vunpack.c.0.s8 %v4190
    %v4192 = vlaneseq
    %v4193 = vshrl.u32 %v4192, 7
    %v4194 = vsub.s32 %v4191, %v4193
    %v4195 = vrot.slane %v4173, %v4194
    %v4197 = vunpack.c.l.s4 1966171168
    %v4198 = vunpack.c.0.s8 %v4197
    %v4199 = vlaneseq
    %v4200 = vshrl.u32 %v4199, 7
    %v4201 = vsub.s32 %v4198, %v4200
    %v4202 = vrot.slane %v4174, %v4201
    %v4203 = vcombine.low %v4181, %v4195
    %v4204 = vcombine.low %v4188, %v4202
    %v4205 = vcombine.low %v4108, %v4110
    %v4206 = vcombine.low %v4112, %v4114
    %v4207 = vcombine.low %v4116, %v4118
    %v4208 = vcombine.low %v4120, %v4122
    %v4210 = vunpack.c.l.s4 1966171168
    %v4211 = vunpack.c.0.s8 %v4210
    %v4212 = vlaneseq
    %v4213 = vshrl.u32 %v4212, 7
    %v4214 = vsub.s32 %v4211, %v4213
    %v4215 = vrot.slane %v4205, %v4214
    %v4217 = vunpack.c.l.s4 1966171168
    %v4218 = vunpack.c.0.s8 %v4217
    %v4219 = vlaneseq
    %v4220 = vshrl.u32 %v4219, 7
    %v4221 = vsub.s32 %v4218, %v4220
    %v4222 = vrot.slane %v4206, %v4221
    %v4224 = vunpack.c.l.s4 1966171168
    %v4225 = vunpack.c.0.s8 %v4224
    %v4226 = vlaneseq
    %v4227 = vshrl.u32 %v4226, 7
    %v4228 = vsub.s32 %v4225, %v4227
    %v4229 = vrot.slane %v4207, %v4228
    %v4231 = vunpack.c.l.s4 1966171168
    %v4232 = vunpack.c.0.s8 %v4231
    %v4233 = vlaneseq
    %v4234 = vshrl.u32 %v4233, 7
    %v4235 = vsub.s32 %v4232, %v4234
    %v4236 = vrot.slane %v4208, %v4235
    %v4237 = vcombine.low %v4215, %v4222
    %v4238 = vcombine.high %v4215, %v4222
    %v4239 = vcombine.low %v4229, %v4236
    %v4240 = vcombine.high %v4229, %v4236
    %v4242 = vunpack.c.l.s4 1966171168
    %v4243 = vunpack.c.0.s8 %v4242
    %v4244 = vlaneseq
    %v4245 = vshrl.u32 %v4244, 7
    %v4246 = vsub.s32 %v4243, %v4245
    %v4247 = vrot.slane %v4237, %v4246
    %v4249 = vunpack.c.l.s4 1966171168
    %v4250 = vunpack.c.0.s8 %v4249
    %v4251 = vlaneseq
    %v4252 = vshrl.u32 %v4251, 7
    %v4253 = vsub.s32 %v4250, %v4252
    %v4254 = vrot.slane %v4238, %v4253
    %v4256 = vunpack.c.l.s4 1966171168
    %v4257 = vunpack.c.0.s8 %v4256
    %v4258 = vlaneseq
    %v4259 = vshrl.u32 %v4258, 7
    %v4260 = vsub.s32 %v4257, %v4259
    %v4261 = vrot.slane %v4239, %v4260
    %v4263 = vunpack.c.l.s4 1966171168
    %v4264 = vunpack.c.0.s8 %v4263
    %v4265 = vlaneseq
    %v4266 = vshrl.u32 %v4265, 7
    %v4267 = vsub.s32 %v4264, %v4266
    %v4268 = vrot.slane %v4240, %v4267
    %v4269 = vcombine.low %v4247, %v4261
    %v4270 = vcombine.low %v4254, %v4268
    %v4271 = vlaneseq
    %v4272 = vshrl.u32 %v4271, 7
    %v4273 = vsub.s32 0, %v4272
    %v4274 = vrot.slane %v4203, %v4273
    %v4275 = vlaneseq
    %v4276 = vshrl.u32 %v4275, 7
    %v4277 = vsub.s32 1, %v4276
    %v4278 = vrot.slane %v4203, %v4277
    %v4279 = vlaneseq
    %v4280 = vshrl.u32 %v4279, 7
    %v4281 = vsub.s32 2, %v4280
    %v4282 = vrot.slane %v4203, %v4281
    %v4283 = vlaneseq
    %v4284 = vshrl.u32 %v4283, 7
    %v4285 = vsub.s32 3, %v4284
    %v4286 = vrot.slane %v4203, %v4285
    %v4287 = vlaneseq
    %v4288 = vshrl.u32 %v4287, 7
    %v4289 = vsub.s32 4, %v4288
    %v4290 = vrot.slane %v4203, %v4289
    %v4291 = vlaneseq
    %v4292 = vshrl.u32 %v4291, 7
    %v4293 = vsub.s32 5, %v4292
    %v4294 = vrot.slane %v4203, %v4293
    %v4295 = vlaneseq
    %v4296 = vshrl.u32 %v4295, 7
    %v4297 = vsub.s32 6, %v4296
    %v4298 = vrot.slane %v4203, %v4297
    %v4299 = vlaneseq
    %v4300 = vshrl.u32 %v4299, 7
    %v4301 = vsub.s32 7, %v4300
    %v4302 = vrot.slane %v4203, %v4301
    %v4303 = vlaneseq
    %v4304 = vshrl.u32 %v4303, 7
    %v4305 = vsub.s32 0, %v4304
    %v4306 = vrot.slane %v4269, %v4305
    %v4307 = vlaneseq
    %v4308 = vshrl.u32 %v4307, 7
    %v4309 = vsub.s32 1, %v4308
    %v4310 = vrot.slane %v4269, %v4309
    %v4311 = vlaneseq
    %v4312 = vshrl.u32 %v4311, 7
    %v4313 = vsub.s32 2, %v4312
    %v4314 = vrot.slane %v4269, %v4313
    %v4315 = vlaneseq
    %v4316 = vshrl.u32 %v4315, 7
    %v4317 = vsub.s32 3, %v4316
    %v4318 = vrot.slane %v4269, %v4317
    %v4319 = vlaneseq
    %v4320 = vshrl.u32 %v4319, 7
    %v4321 = vsub.s32 4, %v4320
    %v4322 = vrot.slane %v4269, %v4321
    %v4323 = vlaneseq
    %v4324 = vshrl.u32 %v4323, 7
    %v4325 = vsub.s32 5, %v4324
    %v4326 = vrot.slane %v4269, %v4325
    %v4327 = vlaneseq
    %v4328 = vshrl.u32 %v4327, 7
    %v4329 = vsub.s32 6, %v4328
    %v4330 = vrot.slane %v4269, %v4329
    %v4331 = vlaneseq
    %v4332 = vshrl.u32 %v4331, 7
    %v4333 = vsub.s32 7, %v4332
    %v4334 = vrot.slane %v4269, %v4333
    %v4335 = vlaneseq
    %v4336 = vshrl.u32 %v4335, 7
    %v4337 = vsub.s32 0, %v4336
    %v4338 = vrot.slane %v4204, %v4337
    %v4339 = vlaneseq
    %v4340 = vshrl.u32 %v4339, 7
    %v4341 = vsub.s32 1, %v4340
    %v4342 = vrot.slane %v4204, %v4341
    %v4343 = vlaneseq
    %v4344 = vshrl.u32 %v4343, 7
    %v4345 = vsub.s32 2, %v4344
    %v4346 = vrot.slane %v4204, %v4345
    %v4347 = vlaneseq
    %v4348 = vshrl.u32 %v4347, 7
    %v4349 = vsub.s32 3, %v4348
    %v4350 = vrot.slane %v4204, %v4349
    %v4351 = vlaneseq
    %v4352 = vshrl.u32 %v4351, 7
    %v4353 = vsub.s32 4, %v4352
    %v4354 = vrot.slane %v4204, %v4353
    %v4355 = vlaneseq
    %v4356 = vshrl.u32 %v4355, 7
    %v4357 = vsub.s32 5, %v4356
    %v4358 = vrot.slane %v4204, %v4357
    %v4359 = vlaneseq
    %v4360 = vshrl.u32 %v4359, 7
    %v4361 = vsub.s32 6, %v4360
    %v4362 = vrot.slane %v4204, %v4361
    %v4363 = vlaneseq
    %v4364 = vshrl.u32 %v4363, 7
    %v4365 = vsub.s32 7, %v4364
    %v4366 = vrot.slane %v4204, %v4365
    %v4367 = vlaneseq
    %v4368 = vshrl.u32 %v4367, 7
    %v4369 = vsub.s32 0, %v4368
    %v4370 = vrot.slane %v4270, %v4369
    %v4371 = vlaneseq
    %v4372 = vshrl.u32 %v4371, 7
    %v4373 = vsub.s32 1, %v4372
    %v4374 = vrot.slane %v4270, %v4373
    %v4375 = vlaneseq
    %v4376 = vshrl.u32 %v4375, 7
    %v4377 = vsub.s32 2, %v4376
    %v4378 = vrot.slane %v4270, %v4377
    %v4379 = vlaneseq
    %v4380 = vshrl.u32 %v4379, 7
    %v4381 = vsub.s32 3, %v4380
    %v4382 = vrot.slane %v4270, %v4381
    %v4383 = vlaneseq
    %v4384 = vshrl.u32 %v4383, 7
    %v4385 = vsub.s32 4, %v4384
    %v4386 = vrot.slane %v4270, %v4385
    %v4387 = vlaneseq
    %v4388 = vshrl.u32 %v4387, 7
    %v4389 = vsub.s32 5, %v4388
    %v4390 = vrot.slane %v4270, %v4389
    %v4391 = vlaneseq
    %v4392 = vshrl.u32 %v4391, 7
    %v4393 = vsub.s32 6, %v4392
    %v4394 = vrot.slane %v4270, %v4393
    %v4395 = vlaneseq
    %v4396 = vshrl.u32 %v4395, 7
    %v4397 = vsub.s32 7, %v4396
    %v4398 = vrot.slane %v4270, %v4397
    %v4431 = vmul.f32 %v164, %v4274
    %v4432 = vmul.f32 %v165, %v4278
    %v4433 = vmul.f32 %v166, %v4282
    %v4434 = vmul.f32 %v167, %v4286
    %v4435 = vmul.f32 %v168, %v4290
    %v4436 = vmul.f32 %v169, %v4294
    %v4437 = vmul.f32 %v170, %v4298
    %v4438 = vmul.f32 %v171, %v4302
    %v4439 = vmul.f32 %v172, %v4306
    %v4440 = vmul.f32 %v173, %v4310
    %v4441 = vmul.f32 %v174, %v4314
    %v4442 = vmul.f32 %v175, %v4318
    %v4443 = vmul.f32 %v176, %v4322
    %v4444 = vmul.f32 %v177, %v4326
    %v4445 = vmul.f32 %v178, %v4330
    %v4446 = vmul.f32 %v179, %v4334
    %v4447 = vmul.f32 %v180, %v4274
    %v4448 = vmul.f32 %v181, %v4278
    %v4449 = vmul.f32 %v182, %v4282
    %v4450 = vmul.f32 %v183, %v4286
    %v4451 = vmul.f32 %v184, %v4290
    %v4452 = vmul.f32 %v185, %v4294
    %v4453 = vmul.f32 %v186, %v4298
    %v4454 = vmul.f32 %v187, %v4302
    %v4455 = vmul.f32 %v188, %v4306
    %v4456 = vmul.f32 %v189, %v4310
    %v4457 = vmul.f32 %v190, %v4314
    %v4458 = vmul.f32 %v191, %v4318
    %v4459 = vmul.f32 %v192, %v4322
    %v4460 = vmul.f32 %v193, %v4326
    %v4461 = vmul.f32 %v194, %v4330
    %v4462 = vmul.f32 %v195, %v4334
    %v4463 = vmul.f32 %v196, %v4274
    %v4464 = vmul.f32 %v197, %v4278
    %v4465 = vmul.f32 %v198, %v4282
    %v4466 = vmul.f32 %v199, %v4286
    %v4467 = vmul.f32 %v200, %v4290
    %v4468 = vmul.f32 %v201, %v4294
    %v4469 = vmul.f32 %v202, %v4298
    %v4470 = vmul.f32 %v203, %v4302
    %v4471 = vmul.f32 %v204, %v4306
    %v4472 = vmul.f32 %v205, %v4310
    %v4473 = vmul.f32 %v206, %v4314
    %v4474 = vmul.f32 %v207, %v4318
    %v4475 = vmul.f32 %v208, %v4322
    %v4476 = vmul.f32 %v209, %v4326
    %v4477 = vmul.f32 %v210, %v4330
    %v4478 = vmul.f32 %v211, %v4334
    %v4479 = vmul.f32 %v212, %v4274
    %v4480 = vmul.f32 %v213, %v4278
    %v4481 = vmul.f32 %v214, %v4282
    %v4482 = vmul.f32 %v215, %v4286
    %v4483 = vmul.f32 %v216, %v4290
    %v4484 = vmul.f32 %v217, %v4294
    %v4485 = vmul.f32 %v218, %v4298
    %v4486 = vmul.f32 %v219, %v4302
    %v4487 = vmul.f32 %v220, %v4306
    %v4488 = vmul.f32 %v221, %v4310
    %v4489 = vmul.f32 %v222, %v4314
    %v4490 = vmul.f32 %v223, %v4318
    %v4491 = vmul.f32 %v224, %v4322
    %v4492 = vmul.f32 %v225, %v4326
    %v4493 = vmul.f32 %v226, %v4330
    %v4494 = vmul.f32 %v227, %v4334
    %v4495 = vmul.f32 %v228, %v4274
    %v4496 = vmul.f32 %v229, %v4278
    %v4497 = vmul.f32 %v230, %v4282
    %v4498 = vmul.f32 %v231, %v4286
    %v4499 = vmul.f32 %v232, %v4290
    %v4500 = vmul.f32 %v233, %v4294
    %v4501 = vmul.f32 %v234, %v4298
    %v4502 = vmul.f32 %v235, %v4302
    %v4503 = vmul.f32 %v236, %v4306
    %v4504 = vmul.f32 %v237, %v4310
    %v4505 = vmul.f32 %v238, %v4314
    %v4506 = vmul.f32 %v239, %v4318
    %v4507 = vmul.f32 %v240, %v4322
    %v4508 = vmul.f32 %v241, %v4326
    %v4509 = vmul.f32 %v242, %v4330
    %v4510 = vmul.f32 %v243, %v4334
    %v4511 = vmul.f32 %v244, %v4274
    %v4512 = vmul.f32 %v245, %v4278
    %v4513 = vmul.f32 %v246, %v4282
    %v4514 = vmul.f32 %v247, %v4286
    %v4515 = vmul.f32 %v248, %v4290
    %v4516 = vmul.f32 %v249, %v4294
    %v4517 = vmul.f32 %v250, %v4298
    %v4518 = vmul.f32 %v251, %v4302
    %v4519 = vmul.f32 %v252, %v4306
    %v4520 = vmul.f32 %v253, %v4310
    %v4521 = vmul.f32 %v254, %v4314
    %v4522 = vmul.f32 %v255, %v4318
    %v4523 = vmul.f32 %v256, %v4322
    %v4524 = vmul.f32 %v257, %v4326
    %v4525 = vmul.f32 %v258, %v4330
    %v4526 = vmul.f32 %v259, %v4334
    %v4527 = vmul.f32 %v260, %v4274
    %v4528 = vmul.f32 %v261, %v4278
    %v4529 = vmul.f32 %v262, %v4282
    %v4530 = vmul.f32 %v263, %v4286
    %v4531 = vmul.f32 %v264, %v4290
    %v4532 = vmul.f32 %v265, %v4294
    %v4533 = vmul.f32 %v266, %v4298
    %v4534 = vmul.f32 %v267, %v4302
    %v4535 = vmul.f32 %v268, %v4306
    %v4536 = vmul.f32 %v269, %v4310
    %v4537 = vmul.f32 %v270, %v4314
    %v4538 = vmul.f32 %v271, %v4318
    %v4539 = vmul.f32 %v272, %v4322
    %v4540 = vmul.f32 %v273, %v4326
    %v4541 = vmul.f32 %v274, %v4330
    %v4542 = vmul.f32 %v275, %v4334
    %v4543 = vmul.f32 %v276, %v4274
    %v4544 = vmul.f32 %v277, %v4278
    %v4545 = vmul.f32 %v278, %v4282
    %v4546 = vmul.f32 %v279, %v4286
    %v4547 = vmul.f32 %v280, %v4290
    %v4548 = vmul.f32 %v281, %v4294
    %v4549 = vmul.f32 %v282, %v4298
    %v4550 = vmul.f32 %v283, %v4302
    %v4551 = vmul.f32 %v284, %v4306
    %v4552 = vmul.f32 %v285, %v4310
    %v4553 = vmul.f32 %v286, %v4314
    %v4554 = vmul.f32 %v287, %v4318
    %v4555 = vmul.f32 %v288, %v4322
    %v4556 = vmul.f32 %v289, %v4326
    %v4557 = vmul.f32 %v290, %v4330
    %v4558 = vmul.f32 %v291, %v4334
    %v4559 = vmul.f32 %v292, %v4338
    %v4560 = vmul.f32 %v293, %v4342
    %v4561 = vmul.f32 %v294, %v4346
    %v4562 = vmul.f32 %v295, %v4350
    %v4563 = vmul.f32 %v296, %v4354
    %v4564 = vmul.f32 %v297, %v4358
    %v4565 = vmul.f32 %v298, %v4362
    %v4566 = vmul.f32 %v299, %v4366
    %v4567 = vmul.f32 %v300, %v4370
    %v4568 = vmul.f32 %v301, %v4374
    %v4569 = vmul.f32 %v302, %v4378
    %v4570 = vmul.f32 %v303, %v4382
    %v4571 = vmul.f32 %v304, %v4386
    %v4572 = vmul.f32 %v305, %v4390
    %v4573 = vmul.f32 %v306, %v4394
    %v4574 = vmul.f32 %v307, %v4398
    %v4575 = vmul.f32 %v308, %v4338
    %v4576 = vmul.f32 %v309, %v4342
    %v4577 = vmul.f32 %v310, %v4346
    %v4578 = vmul.f32 %v311, %v4350
    %v4579 = vmul.f32 %v312, %v4354
    %v4580 = vmul.f32 %v313, %v4358
    %v4581 = vmul.f32 %v314, %v4362
    %v4582 = vmul.f32 %v315, %v4366
    %v4583 = vmul.f32 %v316, %v4370
    %v4584 = vmul.f32 %v317, %v4374
    %v4585 = vmul.f32 %v318, %v4378
    %v4586 = vmul.f32 %v319, %v4382
    %v4587 = vmul.f32 %v320, %v4386
    %v4588 = vmul.f32 %v321, %v4390
    %v4589 = vmul.f32 %v322, %v4394
    %v4590 = vmul.f32 %v323, %v4398
    %v4591 = vmul.f32 %v324, %v4338
    %v4592 = vmul.f32 %v325, %v4342
    %v4593 = vmul.f32 %v326, %v4346
    %v4594 = vmul.f32 %v327, %v4350
    %v4595 = vmul.f32 %v328, %v4354
    %v4596 = vmul.f32 %v329, %v4358
    %v4597 = vmul.f32 %v330, %v4362
    %v4598 = vmul.f32 %v331, %v4366
    %v4599 = vmul.f32 %v332, %v4370
    %v4600 = vmul.f32 %v333, %v4374
    %v4601 = vmul.f32 %v334, %v4378
    %v4602 = vmul.f32 %v335, %v4382
    %v4603 = vmul.f32 %v336, %v4386
    %v4604 = vmul.f32 %v337, %v4390
    %v4605 = vmul.f32 %v338, %v4394
    %v4606 = vmul.f32 %v339, %v4398
    %v4607 = vmul.f32 %v340, %v4338
    %v4608 = vmul.f32 %v341, %v4342
    %v4609 = vmul.f32 %v342, %v4346
    %v4610 = vmul.f32 %v343, %v4350
    %v4611 = vmul.f32 %v344, %v4354
    %v4612 = vmul.f32 %v345, %v4358
    %v4613 = vmul.f32 %v346, %v4362
    %v4614 = vmul.f32 %v347, %v4366
    %v4615 = vmul.f32 %v348, %v4370
    %v4616 = vmul.f32 %v349, %v4374
    %v4617 = vmul.f32 %v350, %v4378
    %v4618 = vmul.f32 %v351, %v4382
    %v4619 = vmul.f32 %v352, %v4386
    %v4620 = vmul.f32 %v353, %v4390
    %v4621 = vmul.f32 %v354, %v4394
    %v4622 = vmul.f32 %v355, %v4398
    %v4623 = vmul.f32 %v356, %v4338
    %v4624 = vmul.f32 %v357, %v4342
    %v4625 = vmul.f32 %v358, %v4346
    %v4626 = vmul.f32 %v359, %v4350
    %v4627 = vmul.f32 %v360, %v4354
    %v4628 = vmul.f32 %v361, %v4358
    %v4629 = vmul.f32 %v362, %v4362
    %v4630 = vmul.f32 %v363, %v4366
    %v4631 = vmul.f32 %v364, %v4370
    %v4632 = vmul.f32 %v365, %v4374
    %v4633 = vmul.f32 %v366, %v4378
    %v4634 = vmul.f32 %v367, %v4382
    %v4635 = vmul.f32 %v368, %v4386
    %v4636 = vmul.f32 %v369, %v4390
    %v4637 = vmul.f32 %v370, %v4394
    %v4638 = vmul.f32 %v371, %v4398
    %v4639 = vmul.f32 %v372, %v4338
    %v4640 = vmul.f32 %v373, %v4342
    %v4641 = vmul.f32 %v374, %v4346
    %v4642 = vmul.f32 %v375, %v4350
    %v4643 = vmul.f32 %v376, %v4354
    %v4644 = vmul.f32 %v377, %v4358
    %v4645 = vmul.f32 %v378, %v4362
    %v4646 = vmul.f32 %v379, %v4366
    %v4647 = vmul.f32 %v380, %v4370
    %v4648 = vmul.f32 %v381, %v4374
    %v4649 = vmul.f32 %v382, %v4378
    %v4650 = vmul.f32 %v383, %v4382
    %v4651 = vmul.f32 %v384, %v4386
    %v4652 = vmul.f32 %v385, %v4390
    %v4653 = vmul.f32 %v386, %v4394
    %v4654 = vmul.f32 %v387, %v4398
    %v4655 = vmul.f32 %v388, %v4338
    %v4656 = vmul.f32 %v389, %v4342
    %v4657 = vmul.f32 %v390, %v4346
    %v4658 = vmul.f32 %v391, %v4350
    %v4659 = vmul.f32 %v392, %v4354
    %v4660 = vmul.f32 %v393, %v4358
    %v4661 = vmul.f32 %v394, %v4362
    %v4662 = vmul.f32 %v395, %v4366
    %v4663 = vmul.f32 %v396, %v4370
    %v4664 = vmul.f32 %v397, %v4374
    %v4665 = vmul.f32 %v398, %v4378
    %v4666 = vmul.f32 %v399, %v4382
    %v4667 = vmul.f32 %v400, %v4386
    %v4668 = vmul.f32 %v401, %v4390
    %v4669 = vmul.f32 %v402, %v4394
    %v4670 = vmul.f32 %v403, %v4398
    %v4671 = vmul.f32 %v404, %v4338
    %v4672 = vmul.f32 %v405, %v4342
    %v4673 = vmul.f32 %v406, %v4346
    %v4674 = vmul.f32 %v407, %v4350
    %v4675 = vmul.f32 %v408, %v4354
    %v4676 = vmul.f32 %v409, %v4358
    %v4677 = vmul.f32 %v410, %v4362
    %v4678 = vmul.f32 %v411, %v4366
    %v4679 = vmul.f32 %v412, %v4370
    %v4680 = vmul.f32 %v413, %v4374
    %v4681 = vmul.f32 %v414, %v4378
    %v4682 = vmul.f32 %v415, %v4382
    %v4683 = vmul.f32 %v416, %v4386
    %v4684 = vmul.f32 %v417, %v4390
    %v4685 = vmul.f32 %v418, %v4394
    %v4686 = vmul.f32 %v419, %v4398
    %v4687 = vmax.f32 %v4431, %v4432
    %v4688 = vmax.f32 %v4687, %v4433
    %v4689 = vmax.f32 %v4688, %v4434
    %v4690 = vmax.f32 %v4689, %v4435
    %v4691 = vmax.f32 %v4690, %v4436
    %v4692 = vmax.f32 %v4691, %v4437
    %v4693 = vmax.f32 %v4692, %v4438
    %v4694 = vmax.f32 %v4693, %v4439
    %v4695 = vmax.f32 %v4694, %v4440
    %v4696 = vmax.f32 %v4695, %v4441
    %v4697 = vmax.f32 %v4696, %v4442
    %v4698 = vmax.f32 %v4697, %v4443
    %v4699 = vmax.f32 %v4698, %v4444
    %v4700 = vmax.f32 %v4699, %v4445
    %v4701 = vmax.f32 %v4700, %v4446
    %4702 = vmax.xlane.f32.xlu0 %v4701
    %v4703 = vpop.xlane.xlu0 %4702
    %v4704 = vmax.f32 %v4447, %v4448
    %v4705 = vmax.f32 %v4704, %v4449
    %v4706 = vmax.f32 %v4705, %v4450
    %v4707 = vmax.f32 %v4706, %v4451
    %v4708 = vmax.f32 %v4707, %v4452
    %v4709 = vmax.f32 %v4708, %v4453
    %v4710 = vmax.f32 %v4709, %v4454
    %v4711 = vmax.f32 %v4710, %v4455
    %v4712 = vmax.f32 %v4711, %v4456
    %v4713 = vmax.f32 %v4712, %v4457
    %v4714 = vmax.f32 %v4713, %v4458
    %v4715 = vmax.f32 %v4714, %v4459
    %v4716 = vmax.f32 %v4715, %v4460
    %v4717 = vmax.f32 %v4716, %v4461
    %v4718 = vmax.f32 %v4717, %v4462
    %4719 = vmax.xlane.f32.xlu0 %v4718
    %v4720 = vpop.xlane.xlu0 %4719
    %v4721 = vmax.f32 %v4463, %v4464
    %v4722 = vmax.f32 %v4721, %v4465
    %v4723 = vmax.f32 %v4722, %v4466
    %v4724 = vmax.f32 %v4723, %v4467
    %v4725 = vmax.f32 %v4724, %v4468
    %v4726 = vmax.f32 %v4725, %v4469
    %v4727 = vmax.f32 %v4726, %v4470
    %v4728 = vmax.f32 %v4727, %v4471
    %v4729 = vmax.f32 %v4728, %v4472
    %v4730 = vmax.f32 %v4729, %v4473
    %v4731 = vmax.f32 %v4730, %v4474
    %v4732 = vmax.f32 %v4731, %v4475
    %v4733 = vmax.f32 %v4732, %v4476
    %v4734 = vmax.f32 %v4733, %v4477
    %v4735 = vmax.f32 %v4734, %v4478
    %4736 = vmax.xlane.f32.xlu0 %v4735
    %v4737 = vpop.xlane.xlu0 %4736
    %v4738 = vmax.f32 %v4479, %v4480
    %v4739 = vmax.f32 %v4738, %v4481
    %v4740 = vmax.f32 %v4739, %v4482
    %v4741 = vmax.f32 %v4740, %v4483
    %v4742 = vmax.f32 %v4741, %v4484
    %v4743 = vmax.f32 %v4742, %v4485
    %v4744 = vmax.f32 %v4743, %v4486
    %v4745 = vmax.f32 %v4744, %v4487
    %v4746 = vmax.f32 %v4745, %v4488
    %v4747 = vmax.f32 %v4746, %v4489
    %v4748 = vmax.f32 %v4747, %v4490
    %v4749 = vmax.f32 %v4748, %v4491
    %v4750 = vmax.f32 %v4749, %v4492
    %v4751 = vmax.f32 %v4750, %v4493
    %v4752 = vmax.f32 %v4751, %v4494
    %4753 = vmax.xlane.f32.xlu0 %v4752
    %v4754 = vpop.xlane.xlu0 %4753
    %v4755 = vmax.f32 %v4495, %v4496
    %v4756 = vmax.f32 %v4755, %v4497
    %v4757 = vmax.f32 %v4756, %v4498
    %v4758 = vmax.f32 %v4757, %v4499
    %v4759 = vmax.f32 %v4758, %v4500
    %v4760 = vmax.f32 %v4759, %v4501
    %v4761 = vmax.f32 %v4760, %v4502
    %v4762 = vmax.f32 %v4761, %v4503
    %v4763 = vmax.f32 %v4762, %v4504
    %v4764 = vmax.f32 %v4763, %v4505
    %v4765 = vmax.f32 %v4764, %v4506
    %v4766 = vmax.f32 %v4765, %v4507
    %v4767 = vmax.f32 %v4766, %v4508
    %v4768 = vmax.f32 %v4767, %v4509
    %v4769 = vmax.f32 %v4768, %v4510
    %4770 = vmax.xlane.f32.xlu0 %v4769
    %v4771 = vpop.xlane.xlu0 %4770
    %v4772 = vmax.f32 %v4511, %v4512
    %v4773 = vmax.f32 %v4772, %v4513
    %v4774 = vmax.f32 %v4773, %v4514
    %v4775 = vmax.f32 %v4774, %v4515
    %v4776 = vmax.f32 %v4775, %v4516
    %v4777 = vmax.f32 %v4776, %v4517
    %v4778 = vmax.f32 %v4777, %v4518
    %v4779 = vmax.f32 %v4778, %v4519
    %v4780 = vmax.f32 %v4779, %v4520
    %v4781 = vmax.f32 %v4780, %v4521
    %v4782 = vmax.f32 %v4781, %v4522
    %v4783 = vmax.f32 %v4782, %v4523
    %v4784 = vmax.f32 %v4783, %v4524
    %v4785 = vmax.f32 %v4784, %v4525
    %v4786 = vmax.f32 %v4785, %v4526
    %4787 = vmax.xlane.f32.xlu0 %v4786
    %v4788 = vpop.xlane.xlu0 %4787
    %v4789 = vmax.f32 %v4527, %v4528
    %v4790 = vmax.f32 %v4789, %v4529
    %v4791 = vmax.f32 %v4790, %v4530
    %v4792 = vmax.f32 %v4791, %v4531
    %v4793 = vmax.f32 %v4792, %v4532
    %v4794 = vmax.f32 %v4793, %v4533
    %v4795 = vmax.f32 %v4794, %v4534
    %v4796 = vmax.f32 %v4795, %v4535
    %v4797 = vmax.f32 %v4796, %v4536
    %v4798 = vmax.f32 %v4797, %v4537
    %v4799 = vmax.f32 %v4798, %v4538
    %v4800 = vmax.f32 %v4799, %v4539
    %v4801 = vmax.f32 %v4800, %v4540
    %v4802 = vmax.f32 %v4801, %v4541
    %v4803 = vmax.f32 %v4802, %v4542
    %4804 = vmax.xlane.f32.xlu0 %v4803
    %v4805 = vpop.xlane.xlu0 %4804
    %v4806 = vmax.f32 %v4543, %v4544
    %v4807 = vmax.f32 %v4806, %v4545
    %v4808 = vmax.f32 %v4807, %v4546
    %v4809 = vmax.f32 %v4808, %v4547
    %v4810 = vmax.f32 %v4809, %v4548
    %v4811 = vmax.f32 %v4810, %v4549
    %v4812 = vmax.f32 %v4811, %v4550
    %v4813 = vmax.f32 %v4812, %v4551
    %v4814 = vmax.f32 %v4813, %v4552
    %v4815 = vmax.f32 %v4814, %v4553
    %v4816 = vmax.f32 %v4815, %v4554
    %v4817 = vmax.f32 %v4816, %v4555
    %v4818 = vmax.f32 %v4817, %v4556
    %v4819 = vmax.f32 %v4818, %v4557
    %v4820 = vmax.f32 %v4819, %v4558
    %4821 = vmax.xlane.f32.xlu0 %v4820
    %v4822 = vpop.xlane.xlu0 %4821
    %v4823 = vmax.f32 %v4559, %v4560
    %v4824 = vmax.f32 %v4823, %v4561
    %v4825 = vmax.f32 %v4824, %v4562
    %v4826 = vmax.f32 %v4825, %v4563
    %v4827 = vmax.f32 %v4826, %v4564
    %v4828 = vmax.f32 %v4827, %v4565
    %v4829 = vmax.f32 %v4828, %v4566
    %v4830 = vmax.f32 %v4829, %v4567
    %v4831 = vmax.f32 %v4830, %v4568
    %v4832 = vmax.f32 %v4831, %v4569
    %v4833 = vmax.f32 %v4832, %v4570
    %v4834 = vmax.f32 %v4833, %v4571
    %v4835 = vmax.f32 %v4834, %v4572
    %v4836 = vmax.f32 %v4835, %v4573
    %v4837 = vmax.f32 %v4836, %v4574
    %4838 = vmax.xlane.f32.xlu0 %v4837
    %v4839 = vpop.xlane.xlu0 %4838
    %v4840 = vmax.f32 %v4575, %v4576
    %v4841 = vmax.f32 %v4840, %v4577
    %v4842 = vmax.f32 %v4841, %v4578
    %v4843 = vmax.f32 %v4842, %v4579
    %v4844 = vmax.f32 %v4843, %v4580
    %v4845 = vmax.f32 %v4844, %v4581
    %v4846 = vmax.f32 %v4845, %v4582
    %v4847 = vmax.f32 %v4846, %v4583
    %v4848 = vmax.f32 %v4847, %v4584
    %v4849 = vmax.f32 %v4848, %v4585
    %v4850 = vmax.f32 %v4849, %v4586
    %v4851 = vmax.f32 %v4850, %v4587
    %v4852 = vmax.f32 %v4851, %v4588
    %v4853 = vmax.f32 %v4852, %v4589
    %v4854 = vmax.f32 %v4853, %v4590
    %4855 = vmax.xlane.f32.xlu0 %v4854
    %v4856 = vpop.xlane.xlu0 %4855
    %v4857 = vmax.f32 %v4591, %v4592
    %v4858 = vmax.f32 %v4857, %v4593
    %v4859 = vmax.f32 %v4858, %v4594
    %v4860 = vmax.f32 %v4859, %v4595
    %v4861 = vmax.f32 %v4860, %v4596
    %v4862 = vmax.f32 %v4861, %v4597
    %v4863 = vmax.f32 %v4862, %v4598
    %v4864 = vmax.f32 %v4863, %v4599
    %v4865 = vmax.f32 %v4864, %v4600
    %v4866 = vmax.f32 %v4865, %v4601
    %v4867 = vmax.f32 %v4866, %v4602
    %v4868 = vmax.f32 %v4867, %v4603
    %v4869 = vmax.f32 %v4868, %v4604
    %v4870 = vmax.f32 %v4869, %v4605
    %v4871 = vmax.f32 %v4870, %v4606
    %4872 = vmax.xlane.f32.xlu0 %v4871
    %v4873 = vpop.xlane.xlu0 %4872
    %v4874 = vmax.f32 %v4607, %v4608
    %v4875 = vmax.f32 %v4874, %v4609
    %v4876 = vmax.f32 %v4875, %v4610
    %v4877 = vmax.f32 %v4876, %v4611
    %v4878 = vmax.f32 %v4877, %v4612
    %v4879 = vmax.f32 %v4878, %v4613
    %v4880 = vmax.f32 %v4879, %v4614
    %v4881 = vmax.f32 %v4880, %v4615
    %v4882 = vmax.f32 %v4881, %v4616
    %v4883 = vmax.f32 %v4882, %v4617
    %v4884 = vmax.f32 %v4883, %v4618
    %v4885 = vmax.f32 %v4884, %v4619
    %v4886 = vmax.f32 %v4885, %v4620
    %v4887 = vmax.f32 %v4886, %v4621
    %v4888 = vmax.f32 %v4887, %v4622
    %4889 = vmax.xlane.f32.xlu0 %v4888
    %v4890 = vpop.xlane.xlu0 %4889
    %v4891 = vmax.f32 %v4623, %v4624
    %v4892 = vmax.f32 %v4891, %v4625
    %v4893 = vmax.f32 %v4892, %v4626
    %v4894 = vmax.f32 %v4893, %v4627
    %v4895 = vmax.f32 %v4894, %v4628
    %v4896 = vmax.f32 %v4895, %v4629
    %v4897 = vmax.f32 %v4896, %v4630
    %v4898 = vmax.f32 %v4897, %v4631
    %v4899 = vmax.f32 %v4898, %v4632
    %v4900 = vmax.f32 %v4899, %v4633
    %v4901 = vmax.f32 %v4900, %v4634
    %v4902 = vmax.f32 %v4901, %v4635
    %v4903 = vmax.f32 %v4902, %v4636
    %v4904 = vmax.f32 %v4903, %v4637
    %v4905 = vmax.f32 %v4904, %v4638
    %4906 = vmax.xlane.f32.xlu0 %v4905
    %v4907 = vpop.xlane.xlu0 %4906
    %v4908 = vmax.f32 %v4639, %v4640
    %v4909 = vmax.f32 %v4908, %v4641
    %v4910 = vmax.f32 %v4909, %v4642
    %v4911 = vmax.f32 %v4910, %v4643
    %v4912 = vmax.f32 %v4911, %v4644
    %v4913 = vmax.f32 %v4912, %v4645
    %v4914 = vmax.f32 %v4913, %v4646
    %v4915 = vmax.f32 %v4914, %v4647
    %v4916 = vmax.f32 %v4915, %v4648
    %v4917 = vmax.f32 %v4916, %v4649
    %v4918 = vmax.f32 %v4917, %v4650
    %v4919 = vmax.f32 %v4918, %v4651
    %v4920 = vmax.f32 %v4919, %v4652
    %v4921 = vmax.f32 %v4920, %v4653
    %v4922 = vmax.f32 %v4921, %v4654
    %4923 = vmax.xlane.f32.xlu0 %v4922
    %v4924 = vpop.xlane.xlu0 %4923
    %v4925 = vmax.f32 %v4655, %v4656
    %v4926 = vmax.f32 %v4925, %v4657
    %v4927 = vmax.f32 %v4926, %v4658
    %v4928 = vmax.f32 %v4927, %v4659
    %v4929 = vmax.f32 %v4928, %v4660
    %v4930 = vmax.f32 %v4929, %v4661
    %v4931 = vmax.f32 %v4930, %v4662
    %v4932 = vmax.f32 %v4931, %v4663
    %v4933 = vmax.f32 %v4932, %v4664
    %v4934 = vmax.f32 %v4933, %v4665
    %v4935 = vmax.f32 %v4934, %v4666
    %v4936 = vmax.f32 %v4935, %v4667
    %v4937 = vmax.f32 %v4936, %v4668
    %v4938 = vmax.f32 %v4937, %v4669
    %v4939 = vmax.f32 %v4938, %v4670
    %4940 = vmax.xlane.f32.xlu0 %v4939
    %v4941 = vpop.xlane.xlu0 %4940
    %v4942 = vmax.f32 %v4671, %v4672
    %v4943 = vmax.f32 %v4942, %v4673
    %v4944 = vmax.f32 %v4943, %v4674
    %v4945 = vmax.f32 %v4944, %v4675
    %v4946 = vmax.f32 %v4945, %v4676
    %v4947 = vmax.f32 %v4946, %v4677
    %v4948 = vmax.f32 %v4947, %v4678
    %v4949 = vmax.f32 %v4948, %v4679
    %v4950 = vmax.f32 %v4949, %v4680
    %v4951 = vmax.f32 %v4950, %v4681
    %v4952 = vmax.f32 %v4951, %v4682
    %v4953 = vmax.f32 %v4952, %v4683
    %v4954 = vmax.f32 %v4953, %v4684
    %v4955 = vmax.f32 %v4954, %v4685
    %v4956 = vmax.f32 %v4955, %v4686
    %4957 = vmax.xlane.f32.xlu0 %v4956
    %v4958 = vpop.xlane.xlu0 %4957
    %v4975 = vlaneseq
    %v4976 = vand.u32 %v4975, 127
    %v4977 = vlaneseq
    %v4978 = vshrl.u32 %v4977, 7
    %v4979 = vsub.s32 %v4976, %v4978
    %v4980 = vrot.slane %v4703, %v4979
    %v4981 = vadd.s32 %v4976, 4294967288
    %v4982 = vlaneseq
    %v4983 = vshrl.u32 %v4982, 7
    %v4984 = vsub.s32 %v4981, %v4983
    %v4985 = vrot.slane %v4720, %v4984
    %vm4986 = vcmask 130112
    %v4987 = vsel %vm4986, %v4985, %v4980
    %v4988 = vadd.s32 %v4976, 4294967280
    %v4989 = vlaneseq
    %v4990 = vshrl.u32 %v4989, 7
    %v4991 = vsub.s32 %v4988, %v4990
    %v4992 = vrot.slane %v4737, %v4991
    %vm4993 = vcmask 195712
    %v4994 = vsel %vm4993, %v4992, %v4987
    %v4995 = vadd.s32 %v4976, 4294967272
    %v4996 = vlaneseq
    %v4997 = vshrl.u32 %v4996, 7
    %v4998 = vsub.s32 %v4995, %v4997
    %v4999 = vrot.slane %v4754, %v4998
    %vm5000 = vcmask 261312
    %v5001 = vsel %vm5000, %v4999, %v4994
    %v5002 = vadd.s32 %v4976, 4294967264
    %v5003 = vlaneseq
    %v5004 = vshrl.u32 %v5003, 7
    %v5005 = vsub.s32 %v5002, %v5004
    %v5006 = vrot.slane %v4771, %v5005
    %vm5007 = vcmask 326912
    %v5008 = vsel %vm5007, %v5006, %v5001
    %v5009 = vadd.s32 %v4976, 4294967256
    %v5010 = vlaneseq
    %v5011 = vshrl.u32 %v5010, 7
    %v5012 = vsub.s32 %v5009, %v5011
    %v5013 = vrot.slane %v4788, %v5012
    %vm5014 = vcmask 392512
    %v5015 = vsel %vm5014, %v5013, %v5008
    %v5016 = vadd.s32 %v4976, 4294967248
    %v5017 = vlaneseq
    %v5018 = vshrl.u32 %v5017, 7
    %v5019 = vsub.s32 %v5016, %v5018
    %v5020 = vrot.slane %v4805, %v5019
    %vm5021 = vcmask 458112
    %v5022 = vsel %vm5021, %v5020, %v5015
    %v5023 = vadd.s32 %v4976, 4294967240
    %v5024 = vlaneseq
    %v5025 = vshrl.u32 %v5024, 7
    %v5026 = vsub.s32 %v5023, %v5025
    %v5027 = vrot.slane %v4822, %v5026
    %vm5028 = vcmask 523712
    %v5029 = vsel %vm5028, %v5027, %v5022
    %v5030 = vlaneseq
    %v5031 = vshrl.u32 %v5030, 7
    %v5032 = vsub.s32 %v4976, %v5031
    %v5033 = vrot.slane %v4839, %v5032
    %v5034 = vlaneseq
    %v5035 = vshrl.u32 %v5034, 7
    %v5036 = vsub.s32 %v4981, %v5035
    %v5037 = vrot.slane %v4856, %v5036
    %v5038 = vsel %vm4986, %v5037, %v5033
    %v5039 = vlaneseq
    %v5040 = vshrl.u32 %v5039, 7
    %v5041 = vsub.s32 %v4988, %v5040
    %v5042 = vrot.slane %v4873, %v5041
    %v5043 = vsel %vm4993, %v5042, %v5038
    %v5044 = vlaneseq
    %v5045 = vshrl.u32 %v5044, 7
    %v5046 = vsub.s32 %v4995, %v5045
    %v5047 = vrot.slane %v4890, %v5046
    %v5048 = vsel %vm5000, %v5047, %v5043
    %v5049 = vlaneseq
    %v5050 = vshrl.u32 %v5049, 7
    %v5051 = vsub.s32 %v5002, %v5050
    %v5052 = vrot.slane %v4907, %v5051
    %v5053 = vsel %vm5007, %v5052, %v5048
    %v5054 = vlaneseq
    %v5055 = vshrl.u32 %v5054, 7
    %v5056 = vsub.s32 %v5009, %v5055
    %v5057 = vrot.slane %v4924, %v5056
    %v5058 = vsel %vm5014, %v5057, %v5053
    %v5059 = vlaneseq
    %v5060 = vshrl.u32 %v5059, 7
    %v5061 = vsub.s32 %v5016, %v5060
    %v5062 = vrot.slane %v4941, %v5061
    %v5063 = vsel %vm5021, %v5062, %v5058
    %v5064 = vlaneseq
    %v5065 = vshrl.u32 %v5064, 7
    %v5066 = vsub.s32 %v5023, %v5065
    %v5067 = vrot.slane %v4958, %v5066
    %v5068 = vsel %vm5028, %v5067, %v5063
    %v5069 = vsel %vm885, %v5068, %v5029
    %vm5071 = vcmask 517120
    %5072 = vst.msk [vmem:[#allocation3] sm:$0x3] %vm5071, %v5069
    %v5073 = vadd.f32 %v4431, %v4432
    %v5074 = vadd.f32 %v5073, %v4433
    %v5075 = vadd.f32 %v5074, %v4434
    %v5076 = vadd.f32 %v5075, %v4435
    %v5077 = vadd.f32 %v5076, %v4436
    %v5078 = vadd.f32 %v5077, %v4437
    %v5079 = vadd.f32 %v5078, %v4438
    %v5080 = vadd.f32 %v5079, %v4439
    %v5081 = vadd.f32 %v5080, %v4440
    %v5082 = vadd.f32 %v5081, %v4441
    %v5083 = vadd.f32 %v5082, %v4442
    %v5084 = vadd.f32 %v5083, %v4443
    %v5085 = vadd.f32 %v5084, %v4444
    %v5086 = vadd.f32 %v5085, %v4445
    %v5087 = vadd.f32 %v5086, %v4446
    %5088 = vadd.xlane.f32.xlu0 %v5087
    %v5089 = vpop.xlane.xlu0 %5088
    %v5090 = vadd.f32 %v4447, %v4448
    %v5091 = vadd.f32 %v5090, %v4449
    %v5092 = vadd.f32 %v5091, %v4450
    %v5093 = vadd.f32 %v5092, %v4451
    %v5094 = vadd.f32 %v5093, %v4452
    %v5095 = vadd.f32 %v5094, %v4453
    %v5096 = vadd.f32 %v5095, %v4454
    %v5097 = vadd.f32 %v5096, %v4455
    %v5098 = vadd.f32 %v5097, %v4456
    %v5099 = vadd.f32 %v5098, %v4457
    %v5100 = vadd.f32 %v5099, %v4458
    %v5101 = vadd.f32 %v5100, %v4459
    %v5102 = vadd.f32 %v5101, %v4460
    %v5103 = vadd.f32 %v5102, %v4461
    %v5104 = vadd.f32 %v5103, %v4462
    %5105 = vadd.xlane.f32.xlu0 %v5104
    %v5106 = vpop.xlane.xlu0 %5105
    %v5107 = vadd.f32 %v4463, %v4464
    %v5108 = vadd.f32 %v5107, %v4465
    %v5109 = vadd.f32 %v5108, %v4466
    %v5110 = vadd.f32 %v5109, %v4467
    %v5111 = vadd.f32 %v5110, %v4468
    %v5112 = vadd.f32 %v5111, %v4469
    %v5113 = vadd.f32 %v5112, %v4470
    %v5114 = vadd.f32 %v5113, %v4471
    %v5115 = vadd.f32 %v5114, %v4472
    %v5116 = vadd.f32 %v5115, %v4473
    %v5117 = vadd.f32 %v5116, %v4474
    %v5118 = vadd.f32 %v5117, %v4475
    %v5119 = vadd.f32 %v5118, %v4476
    %v5120 = vadd.f32 %v5119, %v4477
    %v5121 = vadd.f32 %v5120, %v4478
    %5122 = vadd.xlane.f32.xlu0 %v5121
    %v5123 = vpop.xlane.xlu0 %5122
    %v5124 = vadd.f32 %v4479, %v4480
    %v5125 = vadd.f32 %v5124, %v4481
    %v5126 = vadd.f32 %v5125, %v4482
    %v5127 = vadd.f32 %v5126, %v4483
    %v5128 = vadd.f32 %v5127, %v4484
    %v5129 = vadd.f32 %v5128, %v4485
    %v5130 = vadd.f32 %v5129, %v4486
    %v5131 = vadd.f32 %v5130, %v4487
    %v5132 = vadd.f32 %v5131, %v4488
    %v5133 = vadd.f32 %v5132, %v4489
    %v5134 = vadd.f32 %v5133, %v4490
    %v5135 = vadd.f32 %v5134, %v4491
    %v5136 = vadd.f32 %v5135, %v4492
    %v5137 = vadd.f32 %v5136, %v4493
    %v5138 = vadd.f32 %v5137, %v4494
    %5139 = vadd.xlane.f32.xlu0 %v5138
    %v5140 = vpop.xlane.xlu0 %5139
    %v5141 = vadd.f32 %v4495, %v4496
    %v5142 = vadd.f32 %v5141, %v4497
    %v5143 = vadd.f32 %v5142, %v4498
    %v5144 = vadd.f32 %v5143, %v4499
    %v5145 = vadd.f32 %v5144, %v4500
    %v5146 = vadd.f32 %v5145, %v4501
    %v5147 = vadd.f32 %v5146, %v4502
    %v5148 = vadd.f32 %v5147, %v4503
    %v5149 = vadd.f32 %v5148, %v4504
    %v5150 = vadd.f32 %v5149, %v4505
    %v5151 = vadd.f32 %v5150, %v4506
    %v5152 = vadd.f32 %v5151, %v4507
    %v5153 = vadd.f32 %v5152, %v4508
    %v5154 = vadd.f32 %v5153, %v4509
    %v5155 = vadd.f32 %v5154, %v4510
    %5156 = vadd.xlane.f32.xlu0 %v5155
    %v5157 = vpop.xlane.xlu0 %5156
    %v5158 = vadd.f32 %v4511, %v4512
    %v5159 = vadd.f32 %v5158, %v4513
    %v5160 = vadd.f32 %v5159, %v4514
    %v5161 = vadd.f32 %v5160, %v4515
    %v5162 = vadd.f32 %v5161, %v4516
    %v5163 = vadd.f32 %v5162, %v4517
    %v5164 = vadd.f32 %v5163, %v4518
    %v5165 = vadd.f32 %v5164, %v4519
    %v5166 = vadd.f32 %v5165, %v4520
    %v5167 = vadd.f32 %v5166, %v4521
    %v5168 = vadd.f32 %v5167, %v4522
    %v5169 = vadd.f32 %v5168, %v4523
    %v5170 = vadd.f32 %v5169, %v4524
    %v5171 = vadd.f32 %v5170, %v4525
    %v5172 = vadd.f32 %v5171, %v4526
    %5173 = vadd.xlane.f32.xlu0 %v5172
    %v5174 = vpop.xlane.xlu0 %5173
    %v5175 = vadd.f32 %v4527, %v4528
    %v5176 = vadd.f32 %v5175, %v4529
    %v5177 = vadd.f32 %v5176, %v4530
    %v5178 = vadd.f32 %v5177, %v4531
    %v5179 = vadd.f32 %v5178, %v4532
    %v5180 = vadd.f32 %v5179, %v4533
    %v5181 = vadd.f32 %v5180, %v4534
    %v5182 = vadd.f32 %v5181, %v4535
    %v5183 = vadd.f32 %v5182, %v4536
    %v5184 = vadd.f32 %v5183, %v4537
    %v5185 = vadd.f32 %v5184, %v4538
    %v5186 = vadd.f32 %v5185, %v4539
    %v5187 = vadd.f32 %v5186, %v4540
    %v5188 = vadd.f32 %v5187, %v4541
    %v5189 = vadd.f32 %v5188, %v4542
    %5190 = vadd.xlane.f32.xlu0 %v5189
    %v5191 = vpop.xlane.xlu0 %5190
    %v5192 = vadd.f32 %v4543, %v4544
    %v5193 = vadd.f32 %v5192, %v4545
    %v5194 = vadd.f32 %v5193, %v4546
    %v5195 = vadd.f32 %v5194, %v4547
    %v5196 = vadd.f32 %v5195, %v4548
    %v5197 = vadd.f32 %v5196, %v4549
    %v5198 = vadd.f32 %v5197, %v4550
    %v5199 = vadd.f32 %v5198, %v4551
    %v5200 = vadd.f32 %v5199, %v4552
    %v5201 = vadd.f32 %v5200, %v4553
    %v5202 = vadd.f32 %v5201, %v4554
    %v5203 = vadd.f32 %v5202, %v4555
    %v5204 = vadd.f32 %v5203, %v4556
    %v5205 = vadd.f32 %v5204, %v4557
    %v5206 = vadd.f32 %v5205, %v4558
    %5207 = vadd.xlane.f32.xlu0 %v5206
    %v5208 = vpop.xlane.xlu0 %5207
    %v5209 = vadd.f32 %v4559, %v4560
    %v5210 = vadd.f32 %v5209, %v4561
    %v5211 = vadd.f32 %v5210, %v4562
    %v5212 = vadd.f32 %v5211, %v4563
    %v5213 = vadd.f32 %v5212, %v4564
    %v5214 = vadd.f32 %v5213, %v4565
    %v5215 = vadd.f32 %v5214, %v4566
    %v5216 = vadd.f32 %v5215, %v4567
    %v5217 = vadd.f32 %v5216, %v4568
    %v5218 = vadd.f32 %v5217, %v4569
    %v5219 = vadd.f32 %v5218, %v4570
    %v5220 = vadd.f32 %v5219, %v4571
    %v5221 = vadd.f32 %v5220, %v4572
    %v5222 = vadd.f32 %v5221, %v4573
    %v5223 = vadd.f32 %v5222, %v4574
    %5224 = vadd.xlane.f32.xlu0 %v5223
    %v5225 = vpop.xlane.xlu0 %5224
    %v5226 = vadd.f32 %v4575, %v4576
    %v5227 = vadd.f32 %v5226, %v4577
    %v5228 = vadd.f32 %v5227, %v4578
    %v5229 = vadd.f32 %v5228, %v4579
    %v5230 = vadd.f32 %v5229, %v4580
    %v5231 = vadd.f32 %v5230, %v4581
    %v5232 = vadd.f32 %v5231, %v4582
    %v5233 = vadd.f32 %v5232, %v4583
    %v5234 = vadd.f32 %v5233, %v4584
    %v5235 = vadd.f32 %v5234, %v4585
    %v5236 = vadd.f32 %v5235, %v4586
    %v5237 = vadd.f32 %v5236, %v4587
    %v5238 = vadd.f32 %v5237, %v4588
    %v5239 = vadd.f32 %v5238, %v4589
    %v5240 = vadd.f32 %v5239, %v4590
    %5241 = vadd.xlane.f32.xlu0 %v5240
    %v5242 = vpop.xlane.xlu0 %5241
    %v5243 = vadd.f32 %v4591, %v4592
    %v5244 = vadd.f32 %v5243, %v4593
    %v5245 = vadd.f32 %v5244, %v4594
    %v5246 = vadd.f32 %v5245, %v4595
    %v5247 = vadd.f32 %v5246, %v4596
    %v5248 = vadd.f32 %v5247, %v4597
    %v5249 = vadd.f32 %v5248, %v4598
    %v5250 = vadd.f32 %v5249, %v4599
    %v5251 = vadd.f32 %v5250, %v4600
    %v5252 = vadd.f32 %v5251, %v4601
    %v5253 = vadd.f32 %v5252, %v4602
    %v5254 = vadd.f32 %v5253, %v4603
    %v5255 = vadd.f32 %v5254, %v4604
    %v5256 = vadd.f32 %v5255, %v4605
    %v5257 = vadd.f32 %v5256, %v4606
    %5258 = vadd.xlane.f32.xlu0 %v5257
    %v5259 = vpop.xlane.xlu0 %5258
    %v5260 = vadd.f32 %v4607, %v4608
    %v5261 = vadd.f32 %v5260, %v4609
    %v5262 = vadd.f32 %v5261, %v4610
    %v5263 = vadd.f32 %v5262, %v4611
    %v5264 = vadd.f32 %v5263, %v4612
    %v5265 = vadd.f32 %v5264, %v4613
    %v5266 = vadd.f32 %v5265, %v4614
    %v5267 = vadd.f32 %v5266, %v4615
    %v5268 = vadd.f32 %v5267, %v4616
    %v5269 = vadd.f32 %v5268, %v4617
    %v5270 = vadd.f32 %v5269, %v4618
    %v5271 = vadd.f32 %v5270, %v4619
    %v5272 = vadd.f32 %v5271, %v4620
    %v5273 = vadd.f32 %v5272, %v4621
    %v5274 = vadd.f32 %v5273, %v4622
    %5275 = vadd.xlane.f32.xlu0 %v5274
    %v5276 = vpop.xlane.xlu0 %5275
    %v5277 = vadd.f32 %v4623, %v4624
    %v5278 = vadd.f32 %v5277, %v4625
    %v5279 = vadd.f32 %v5278, %v4626
    %v5280 = vadd.f32 %v5279, %v4627
    %v5281 = vadd.f32 %v5280, %v4628
    %v5282 = vadd.f32 %v5281, %v4629
    %v5283 = vadd.f32 %v5282, %v4630
    %v5284 = vadd.f32 %v5283, %v4631
    %v5285 = vadd.f32 %v5284, %v4632
    %v5286 = vadd.f32 %v5285, %v4633
    %v5287 = vadd.f32 %v5286, %v4634
    %v5288 = vadd.f32 %v5287, %v4635
    %v5289 = vadd.f32 %v5288, %v4636
    %v5290 = vadd.f32 %v5289, %v4637
    %v5291 = vadd.f32 %v5290, %v4638
    %5292 = vadd.xlane.f32.xlu0 %v5291
    %v5293 = vpop.xlane.xlu0 %5292
    %v5294 = vadd.f32 %v4639, %v4640
    %v5295 = vadd.f32 %v5294, %v4641
    %v5296 = vadd.f32 %v5295, %v4642
    %v5297 = vadd.f32 %v5296, %v4643
    %v5298 = vadd.f32 %v5297, %v4644
    %v5299 = vadd.f32 %v5298, %v4645
    %v5300 = vadd.f32 %v5299, %v4646
    %v5301 = vadd.f32 %v5300, %v4647
    %v5302 = vadd.f32 %v5301, %v4648
    %v5303 = vadd.f32 %v5302, %v4649
    %v5304 = vadd.f32 %v5303, %v4650
    %v5305 = vadd.f32 %v5304, %v4651
    %v5306 = vadd.f32 %v5305, %v4652
    %v5307 = vadd.f32 %v5306, %v4653
    %v5308 = vadd.f32 %v5307, %v4654
    %5309 = vadd.xlane.f32.xlu0 %v5308
    %v5310 = vpop.xlane.xlu0 %5309
    %v5311 = vadd.f32 %v4655, %v4656
    %v5312 = vadd.f32 %v5311, %v4657
    %v5313 = vadd.f32 %v5312, %v4658
    %v5314 = vadd.f32 %v5313, %v4659
    %v5315 = vadd.f32 %v5314, %v4660
    %v5316 = vadd.f32 %v5315, %v4661
    %v5317 = vadd.f32 %v5316, %v4662
    %v5318 = vadd.f32 %v5317, %v4663
    %v5319 = vadd.f32 %v5318, %v4664
    %v5320 = vadd.f32 %v5319, %v4665
    %v5321 = vadd.f32 %v5320, %v4666
    %v5322 = vadd.f32 %v5321, %v4667
    %v5323 = vadd.f32 %v5322, %v4668
    %v5324 = vadd.f32 %v5323, %v4669
    %v5325 = vadd.f32 %v5324, %v4670
    %5326 = vadd.xlane.f32.xlu0 %v5325
    %v5327 = vpop.xlane.xlu0 %5326
    %v5328 = vadd.f32 %v4671, %v4672
    %v5329 = vadd.f32 %v5328, %v4673
    %v5330 = vadd.f32 %v5329, %v4674
    %v5331 = vadd.f32 %v5330, %v4675
    %v5332 = vadd.f32 %v5331, %v4676
    %v5333 = vadd.f32 %v5332, %v4677
    %v5334 = vadd.f32 %v5333, %v4678
    %v5335 = vadd.f32 %v5334, %v4679
    %v5336 = vadd.f32 %v5335, %v4680
    %v5337 = vadd.f32 %v5336, %v4681
    %v5338 = vadd.f32 %v5337, %v4682
    %v5339 = vadd.f32 %v5338, %v4683
    %v5340 = vadd.f32 %v5339, %v4684
    %v5341 = vadd.f32 %v5340, %v4685
    %v5342 = vadd.f32 %v5341, %v4686
    %5343 = vadd.xlane.f32.xlu0 %v5342
    %v5344 = vpop.xlane.xlu0 %5343
    %v5345 = vrcp.pop 2048.0
    %v5346 = vmul.f32 %v5089, %v5345
    %v5347 = vmul.f32 %v5106, %v5345
    %v5348 = vmul.f32 %v5123, %v5345
    %v5349 = vmul.f32 %v5140, %v5345
    %v5350 = vmul.f32 %v5157, %v5345
    %v5351 = vmul.f32 %v5174, %v5345
    %v5352 = vmul.f32 %v5191, %v5345
    %v5353 = vmul.f32 %v5208, %v5345
    %v5354 = vmul.f32 %v5225, %v5345
    %v5355 = vmul.f32 %v5242, %v5345
    %v5356 = vmul.f32 %v5259, %v5345
    %v5357 = vmul.f32 %v5276, %v5345
    %v5358 = vmul.f32 %v5293, %v5345
    %v5359 = vmul.f32 %v5310, %v5345
    %v5360 = vmul.f32 %v5327, %v5345
    %v5361 = vmul.f32 %v5344, %v5345
    %v5378 = vadd.s32 %v4976, 4294967232
    %v5379 = vlaneseq
    %v5380 = vshrl.u32 %v5379, 7
    %v5381 = vsub.s32 %v5378, %v5380
    %v5382 = vrot.slane %v5346, %v5381
    %v5383 = vadd.s32 %v4976, 4294967224
    %v5384 = vlaneseq
    %v5385 = vshrl.u32 %v5384, 7
    %v5386 = vsub.s32 %v5383, %v5385
    %v5387 = vrot.slane %v5347, %v5386
    %vm5388 = vcmask 654912
    %v5389 = vsel %vm5388, %v5387, %v5382
    %v5390 = vadd.s32 %v4976, 4294967216
    %v5391 = vlaneseq
    %v5392 = vshrl.u32 %v5391, 7
    %v5393 = vsub.s32 %v5390, %v5392
    %v5394 = vrot.slane %v5348, %v5393
    %vm5395 = vcmask 720512
    %v5396 = vsel %vm5395, %v5394, %v5389
    %v5397 = vadd.s32 %v4976, 4294967208
    %v5398 = vlaneseq
    %v5399 = vshrl.u32 %v5398, 7
    %v5400 = vsub.s32 %v5397, %v5399
    %v5401 = vrot.slane %v5349, %v5400
    %vm5402 = vcmask 786112
    %v5403 = vsel %vm5402, %v5401, %v5396
    %v5404 = vadd.s32 %v4976, 4294967200
    %v5405 = vlaneseq
    %v5406 = vshrl.u32 %v5405, 7
    %v5407 = vsub.s32 %v5404, %v5406
    %v5408 = vrot.slane %v5350, %v5407
    %vm5409 = vcmask 851712
    %v5410 = vsel %vm5409, %v5408, %v5403
    %v5411 = vadd.s32 %v4976, 4294967192
    %v5412 = vlaneseq
    %v5413 = vshrl.u32 %v5412, 7
    %v5414 = vsub.s32 %v5411, %v5413
    %v5415 = vrot.slane %v5351, %v5414
    %vm5416 = vcmask 917312
    %v5417 = vsel %vm5416, %v5415, %v5410
    %v5418 = vadd.s32 %v4976, 4294967184
    %v5419 = vlaneseq
    %v5420 = vshrl.u32 %v5419, 7
    %v5421 = vsub.s32 %v5418, %v5420
    %v5422 = vrot.slane %v5352, %v5421
    %vm5423 = vcmask 982912
    %v5424 = vsel %vm5423, %v5422, %v5417
    %v5425 = vadd.s32 %v4976, 4294967176
    %v5426 = vlaneseq
    %v5427 = vshrl.u32 %v5426, 7
    %v5428 = vsub.s32 %v5425, %v5427
    %v5429 = vrot.slane %v5353, %v5428
    %vm5430 = vcmask 1048512
    %v5431 = vsel %vm5430, %v5429, %v5424
    %v5432 = vlaneseq
    %v5433 = vshrl.u32 %v5432, 7
    %v5434 = vsub.s32 %v5378, %v5433
    %v5435 = vrot.slane %v5354, %v5434
    %v5436 = vlaneseq
    %v5437 = vshrl.u32 %v5436, 7
    %v5438 = vsub.s32 %v5383, %v5437
    %v5439 = vrot.slane %v5355, %v5438
    %v5440 = vsel %vm5388, %v5439, %v5435
    %v5441 = vlaneseq
    %v5442 = vshrl.u32 %v5441, 7
    %v5443 = vsub.s32 %v5390, %v5442
    %v5444 = vrot.slane %v5356, %v5443
    %v5445 = vsel %vm5395, %v5444, %v5440
    %v5446 = vlaneseq
    %v5447 = vshrl.u32 %v5446, 7
    %v5448 = vsub.s32 %v5397, %v5447
    %v5449 = vrot.slane %v5357, %v5448
    %v5450 = vsel %vm5402, %v5449, %v5445
    %v5451 = vlaneseq
    %v5452 = vshrl.u32 %v5451, 7
    %v5453 = vsub.s32 %v5404, %v5452
    %v5454 = vrot.slane %v5358, %v5453
    %v5455 = vsel %vm5409, %v5454, %v5450
    %v5456 = vlaneseq
    %v5457 = vshrl.u32 %v5456, 7
    %v5458 = vsub.s32 %v5411, %v5457
    %v5459 = vrot.slane %v5359, %v5458
    %v5460 = vsel %vm5416, %v5459, %v5455
    %v5461 = vlaneseq
    %v5462 = vshrl.u32 %v5461, 7
    %v5463 = vsub.s32 %v5418, %v5462
    %v5464 = vrot.slane %v5360, %v5463
    %v5465 = vsel %vm5423, %v5464, %v5460
    %v5466 = vlaneseq
    %v5467 = vshrl.u32 %v5466, 7
    %v5468 = vsub.s32 %v5425, %v5467
    %v5469 = vrot.slane %v5361, %v5468
    %v5470 = vsel %vm5430, %v5469, %v5465
    %v5471 = vsel %vm885, %v5470, %v5431
    %vm5473 = vcmask 1041920
    %5474 = vst.msk [vmem:[#allocation3] sm:$0x3] %vm5473, %v5471
    %v5475 = vld [vmem:[#allocation3] sm:$0x3]
    %v5476 = vld [vmem:[%s3] sm:$0xff]
    %v5477 = vld [vmem:[%s3 + $0x8] sm:$0xff]
    %v5478 = vld [vmem:[%s3 + $0x10] sm:$0xff]
    %v5479 = vld [vmem:[%s3 + $0x18] sm:$0xff]
    %v5480 = vld [vmem:[%s3 + $0x20] sm:$0xff]
    %v5481 = vld [vmem:[%s3 + $0x28] sm:$0xff]
    %v5482 = vld [vmem:[%s3 + $0x30] sm:$0xff]
    %v5483 = vld [vmem:[%s3 + $0x38] sm:$0xff]
    %v5484 = vld [vmem:[%s3 + $0x40] sm:$0xff]
    %v5485 = vld [vmem:[%s3 + $0x48] sm:$0xff]
    %v5486 = vld [vmem:[%s3 + $0x50] sm:$0xff]
    %v5487 = vld [vmem:[%s3 + $0x58] sm:$0xff]
    %v5488 = vld [vmem:[%s3 + $0x60] sm:$0xff]
    %v5489 = vld [vmem:[%s3 + $0x68] sm:$0xff]
    %v5490 = vld [vmem:[%s3 + $0x70] sm:$0xff]
    %v5491 = vld [vmem:[%s3 + $0x78] sm:$0xff]
    %v5492 = vld [vmem:[#allocation4] sm:$0x1]
    %v5494 = vlaneseq
    %v5495 = vshrl.u32 %v5494, 7
    %v5496 = vsub.s32 0, %v5495
    %v5497 = vrot.slane %v5492, %v5496
    %5498 = vset.pattern.permute.xlu0 0
    %5499 = vperm.xlu0 %5498, %v5497
    %v5500 = vpop.permute.xlu0 %5499
    %5502 = vmatprep.subr.mxu0 0.0
    %5503 = vmatpush1.msra.mxu0 %v5491
    %5504 = vmatprep.subr.mxu0 0.0
    %5505 = vmatpush1.msra.mxu0 %v5490
    %5506 = vmatprep.subr.mxu0 0.0
    %5507 = vmatpush1.msra.mxu0 %v5489
    %5508 = vmatprep.subr.mxu0 0.0
    %5509 = vmatpush1.msra.mxu0 %v5488
    %5510 = vmatprep.subr.mxu0 0.0
    %5511 = vmatpush1.msra.mxu0 %v5487
    %5512 = vmatprep.subr.mxu0 0.0
    %5513 = vmatpush1.msra.mxu0 %v5486
    %5514 = vmatprep.subr.mxu0 0.0
    %5515 = vmatpush1.msra.mxu0 %v5485
    %5516 = vmatprep.subr.mxu0 0.0
    %5517 = vmatpush1.msra.mxu0 %v5484
    %5518 = vmatprep.subr.mxu0 0.0
    %5519 = vmatpush1.msra.mxu0 %v5483
    %5520 = vmatprep.subr.mxu0 0.0
    %5521 = vmatpush1.msra.mxu0 %v5482
    %5522 = vmatprep.subr.mxu0 0.0
    %5523 = vmatpush1.msra.mxu0 %v5481
    %5524 = vmatprep.subr.mxu0 0.0
    %5525 = vmatpush1.msra.mxu0 %v5480
    %5526 = vmatprep.subr.mxu0 0.0
    %5527 = vmatpush1.msra.mxu0 %v5479
    %5528 = vmatprep.subr.mxu0 0.0
    %5529 = vmatpush1.msra.mxu0 %v5478
    %5530 = vmatprep.subr.mxu0 0.0
    %5531 = vmatpush1.msra.mxu0 %v5477
    %5532 = vmatprep.subr.mxu0 0.0
    %5533 = vmatpush1.msra.mxu0 %v5476
    %5534 = vmatprep.subr.mxu0 0.0
    %5535 = vmatpush2.msra.mxu0 0.0
    %5536 = vmatprep.subr.mxu0 0.0
    %5537 = vmatpush2.msra.mxu0 0.0
    %5538 = vmatprep.subr.mxu0 0.0
    %5539 = vmatpush2.msra.mxu0 0.0
    %5540 = vmatprep.subr.mxu0 0.0
    %5541 = vmatpush2.msra.mxu0 0.0
    %5542 = vmatprep.subr.mxu0 0.0
    %5543 = vmatpush2.msra.mxu0 0.0
    %5544 = vmatprep.subr.mxu0 0.0
    %5545 = vmatpush2.msra.mxu0 0.0
    %5546 = vmatprep.subr.mxu0 0.0
    %5547 = vmatpush2.msra.mxu0 0.0
    %5548 = vmatprep.subr.mxu0 0.0
    %5549 = vmatpush2.msra.mxu0 0.0
    %5550 = vmatprep.subr.mxu0 0.0
    %5551 = vmatpush2.msra.mxu0 0.0
    %5552 = vmatprep.subr.mxu0 0.0
    %5553 = vmatpush2.msra.mxu0 0.0
    %5554 = vmatprep.subr.mxu0 0.0
    %5555 = vmatpush2.msra.mxu0 0.0
    %5556 = vmatprep.subr.mxu0 0.0
    %5557 = vmatpush2.msra.mxu0 0.0
    %5558 = vmatprep.subr.mxu0 0.0
    %5559 = vmatpush2.msra.mxu0 0.0
    %5560 = vmatprep.subr.mxu0 0.0
    %5561 = vmatpush2.msra.mxu0 0.0
    %5562 = vmatprep.subr.mxu0 0.0
    %5563 = vmatpush2.msra.mxu0 0.0
    %5564 = vmatprep.subr.mxu0 0.0
    %5565 = vmatpush2.msra.mxu0 0.0
    %5566 = vmatprep.mubr.f32.mxu0 0.0
    %5567 = vmatmul.mubr.f32.gmra.mxu0 %v5475
    %v5568 = vpop.f32.mrf.mxu0
    %v5569 = vadd.f32 %v5500, %v5568
    %v5570 = vpop.f32.mrf.mxu0
    %5571 = vdwg.mxu0
    %v5572 = vxor.u32 %v5569, 2147483648
    %v5573 = vmul.f32 %v5572, 1.442695
    %v5574 = vpow.pop %v5573
    %v5575 = vadd.f32 %v5574, 1.0
    %v5576 = vrcp.pop %v5575
    %v5577 = vmul.f32 1.0, %v5576
    %v5578 = vlaneseq
    %v5579 = vshrl.u32 %v5578, 7
    %v5580 = vsub.s32 0, %v5579
    %v5581 = vrot.slane %v5577, %v5580
    %5583 = vbcast.lane.b32.xlu0 %v5581, 256
    %v5584 = vpop.permute.xlu0 %5583
    %s5586 = sor.u32 256, 8
    %5587 = vbcast.lane.b32.xlu0 %v5581, %s5586
    %v5588 = vpop.permute.xlu0 %5587
    %s5590 = sor.u32 256, 16
    %5591 = vbcast.lane.b32.xlu0 %v5581, %s5590
    %v5592 = vpop.permute.xlu0 %5591
    %s5594 = sor.u32 256, 24
    %5595 = vbcast.lane.b32.xlu0 %v5581, %s5594
    %v5596 = vpop.permute.xlu0 %5595
    %s5598 = sor.u32 256, 32
    %5599 = vbcast.lane.b32.xlu0 %v5581, %s5598
    %v5600 = vpop.permute.xlu0 %5599
    %s5602 = sor.u32 256, 40
    %5603 = vbcast.lane.b32.xlu0 %v5581, %s5602
    %v5604 = vpop.permute.xlu0 %5603
    %s5606 = sor.u32 256, 48
    %5607 = vbcast.lane.b32.xlu0 %v5581, %s5606
    %v5608 = vpop.permute.xlu0 %5607
    %s5610 = sor.u32 256, 56
    %5611 = vbcast.lane.b32.xlu0 %v5581, %s5610
    %v5612 = vpop.permute.xlu0 %5611
    %v5613 = vlaneseq
    %v5614 = vshrl.u32 %v5613, 7
    %v5615 = vsub.s32 1, %v5614
    %v5616 = vrot.slane %v5577, %v5615
    %5618 = vbcast.lane.b32.xlu0 %v5616, 256
    %v5619 = vpop.permute.xlu0 %5618
    %s5621 = sor.u32 256, 8
    %5622 = vbcast.lane.b32.xlu0 %v5616, %s5621
    %v5623 = vpop.permute.xlu0 %5622
    %s5625 = sor.u32 256, 16
    %5626 = vbcast.lane.b32.xlu0 %v5616, %s5625
    %v5627 = vpop.permute.xlu0 %5626
    %s5629 = sor.u32 256, 24
    %5630 = vbcast.lane.b32.xlu0 %v5616, %s5629
    %v5631 = vpop.permute.xlu0 %5630
    %s5633 = sor.u32 256, 32
    %5634 = vbcast.lane.b32.xlu0 %v5616, %s5633
    %v5635 = vpop.permute.xlu0 %5634
    %s5637 = sor.u32 256, 40
    %5638 = vbcast.lane.b32.xlu0 %v5616, %s5637
    %v5639 = vpop.permute.xlu0 %5638
    %s5641 = sor.u32 256, 48
    %5642 = vbcast.lane.b32.xlu0 %v5616, %s5641
    %v5643 = vpop.permute.xlu0 %5642
    %s5645 = sor.u32 256, 56
    %5646 = vbcast.lane.b32.xlu0 %v5616, %s5645
    %v5647 = vpop.permute.xlu0 %5646
    %v5648 = vmul.f32 %v4431, %v5584
    %v5649 = vmul.f32 %v4432, %v5584
    %v5650 = vmul.f32 %v4433, %v5584
    %v5651 = vmul.f32 %v4434, %v5584
    %v5652 = vmul.f32 %v4435, %v5584
    %v5653 = vmul.f32 %v4436, %v5584
    %v5654 = vmul.f32 %v4437, %v5584
    %v5655 = vmul.f32 %v4438, %v5584
    %v5656 = vmul.f32 %v4439, %v5584
    %v5657 = vmul.f32 %v4440, %v5584
    %v5658 = vmul.f32 %v4441, %v5584
    %v5659 = vmul.f32 %v4442, %v5584
    %v5660 = vmul.f32 %v4443, %v5584
    %v5661 = vmul.f32 %v4444, %v5584
    %v5662 = vmul.f32 %v4445, %v5584
    %v5663 = vmul.f32 %v4446, %v5584
    %v5664 = vmul.f32 %v4447, %v5588
    %v5665 = vmul.f32 %v4448, %v5588
    %v5666 = vmul.f32 %v4449, %v5588
    %v5667 = vmul.f32 %v4450, %v5588
    %v5668 = vmul.f32 %v4451, %v5588
    %v5669 = vmul.f32 %v4452, %v5588
    %v5670 = vmul.f32 %v4453, %v5588
    %v5671 = vmul.f32 %v4454, %v5588
    %v5672 = vmul.f32 %v4455, %v5588
    %v5673 = vmul.f32 %v4456, %v5588
    %v5674 = vmul.f32 %v4457, %v5588
    %v5675 = vmul.f32 %v4458, %v5588
    %v5676 = vmul.f32 %v4459, %v5588
    %v5677 = vmul.f32 %v4460, %v5588
    %v5678 = vmul.f32 %v4461, %v5588
    %v5679 = vmul.f32 %v4462, %v5588
    %v5680 = vmul.f32 %v4463, %v5592
    %v5681 = vmul.f32 %v4464, %v5592
    %v5682 = vmul.f32 %v4465, %v5592
    %v5683 = vmul.f32 %v4466, %v5592
    %v5684 = vmul.f32 %v4467, %v5592
    %v5685 = vmul.f32 %v4468, %v5592
    %v5686 = vmul.f32 %v4469, %v5592
    %v5687 = vmul.f32 %v4470, %v5592
    %v5688 = vmul.f32 %v4471, %v5592
    %v5689 = vmul.f32 %v4472, %v5592
    %v5690 = vmul.f32 %v4473, %v5592
    %v5691 = vmul.f32 %v4474, %v5592
    %v5692 = vmul.f32 %v4475, %v5592
    %v5693 = vmul.f32 %v4476, %v5592
    %v5694 = vmul.f32 %v4477, %v5592
    %v5695 = vmul.f32 %v4478, %v5592
    %v5696 = vmul.f32 %v4479, %v5596
    %v5697 = vmul.f32 %v4480, %v5596
    %v5698 = vmul.f32 %v4481, %v5596
    %v5699 = vmul.f32 %v4482, %v5596
    %v5700 = vmul.f32 %v4483, %v5596
    %v5701 = vmul.f32 %v4484, %v5596
    %v5702 = vmul.f32 %v4485, %v5596
    %v5703 = vmul.f32 %v4486, %v5596
    %v5704 = vmul.f32 %v4487, %v5596
    %v5705 = vmul.f32 %v4488, %v5596
    %v5706 = vmul.f32 %v4489, %v5596
    %v5707 = vmul.f32 %v4490, %v5596
    %v5708 = vmul.f32 %v4491, %v5596
    %v5709 = vmul.f32 %v4492, %v5596
    %v5710 = vmul.f32 %v4493, %v5596
    %v5711 = vmul.f32 %v4494, %v5596
    %v5712 = vmul.f32 %v4495, %v5600
    %v5713 = vmul.f32 %v4496, %v5600
    %v5714 = vmul.f32 %v4497, %v5600
    %v5715 = vmul.f32 %v4498, %v5600
    %v5716 = vmul.f32 %v4499, %v5600
    %v5717 = vmul.f32 %v4500, %v5600
    %v5718 = vmul.f32 %v4501, %v5600
    %v5719 = vmul.f32 %v4502, %v5600
    %v5720 = vmul.f32 %v4503, %v5600
    %v5721 = vmul.f32 %v4504, %v5600
    %v5722 = vmul.f32 %v4505, %v5600
    %v5723 = vmul.f32 %v4506, %v5600
    %v5724 = vmul.f32 %v4507, %v5600
    %v5725 = vmul.f32 %v4508, %v5600
    %v5726 = vmul.f32 %v4509, %v5600
    %v5727 = vmul.f32 %v4510, %v5600
    %v5728 = vmul.f32 %v4511, %v5604
    %v5729 = vmul.f32 %v4512, %v5604
    %v5730 = vmul.f32 %v4513, %v5604
    %v5731 = vmul.f32 %v4514, %v5604
    %v5732 = vmul.f32 %v4515, %v5604
    %v5733 = vmul.f32 %v4516, %v5604
    %v5734 = vmul.f32 %v4517, %v5604
    %v5735 = vmul.f32 %v4518, %v5604
    %v5736 = vmul.f32 %v4519, %v5604
    %v5737 = vmul.f32 %v4520, %v5604
    %v5738 = vmul.f32 %v4521, %v5604
    %v5739 = vmul.f32 %v4522, %v5604
    %v5740 = vmul.f32 %v4523, %v5604
    %v5741 = vmul.f32 %v4524, %v5604
    %v5742 = vmul.f32 %v4525, %v5604
    %v5743 = vmul.f32 %v4526, %v5604
    %v5744 = vmul.f32 %v4527, %v5608
    %v5745 = vmul.f32 %v4528, %v5608
    %v5746 = vmul.f32 %v4529, %v5608
    %v5747 = vmul.f32 %v4530, %v5608
    %v5748 = vmul.f32 %v4531, %v5608
    %v5749 = vmul.f32 %v4532, %v5608
    %v5750 = vmul.f32 %v4533, %v5608
    %v5751 = vmul.f32 %v4534, %v5608
    %v5752 = vmul.f32 %v4535, %v5608
    %v5753 = vmul.f32 %v4536, %v5608
    %v5754 = vmul.f32 %v4537, %v5608
    %v5755 = vmul.f32 %v4538, %v5608
    %v5756 = vmul.f32 %v4539, %v5608
    %v5757 = vmul.f32 %v4540, %v5608
    %v5758 = vmul.f32 %v4541, %v5608
    %v5759 = vmul.f32 %v4542, %v5608
    %v5760 = vmul.f32 %v4543, %v5612
    %v5761 = vmul.f32 %v4544, %v5612
    %v5762 = vmul.f32 %v4545, %v5612
    %v5763 = vmul.f32 %v4546, %v5612
    %v5764 = vmul.f32 %v4547, %v5612
    %v5765 = vmul.f32 %v4548, %v5612
    %v5766 = vmul.f32 %v4549, %v5612
    %v5767 = vmul.f32 %v4550, %v5612
    %v5768 = vmul.f32 %v4551, %v5612
    %v5769 = vmul.f32 %v4552, %v5612
    %v5770 = vmul.f32 %v4553, %v5612
    %v5771 = vmul.f32 %v4554, %v5612
    %v5772 = vmul.f32 %v4555, %v5612
    %v5773 = vmul.f32 %v4556, %v5612
    %v5774 = vmul.f32 %v4557, %v5612
    %v5775 = vmul.f32 %v4558, %v5612
    %v5776 = vmul.f32 %v4559, %v5619
    %v5777 = vmul.f32 %v4560, %v5619
    %v5778 = vmul.f32 %v4561, %v5619
    %v5779 = vmul.f32 %v4562, %v5619
    %v5780 = vmul.f32 %v4563, %v5619
    %v5781 = vmul.f32 %v4564, %v5619
    %v5782 = vmul.f32 %v4565, %v5619
    %v5783 = vmul.f32 %v4566, %v5619
    %v5784 = vmul.f32 %v4567, %v5619
    %v5785 = vmul.f32 %v4568, %v5619
    %v5786 = vmul.f32 %v4569, %v5619
    %v5787 = vmul.f32 %v4570, %v5619
    %v5788 = vmul.f32 %v4571, %v5619
    %v5789 = vmul.f32 %v4572, %v5619
    %v5790 = vmul.f32 %v4573, %v5619
    %v5791 = vmul.f32 %v4574, %v5619
    %v5792 = vmul.f32 %v4575, %v5623
    %v5793 = vmul.f32 %v4576, %v5623
    %v5794 = vmul.f32 %v4577, %v5623
    %v5795 = vmul.f32 %v4578, %v5623
    %v5796 = vmul.f32 %v4579, %v5623
    %v5797 = vmul.f32 %v4580, %v5623
    %v5798 = vmul.f32 %v4581, %v5623
    %v5799 = vmul.f32 %v4582, %v5623
    %v5800 = vmul.f32 %v4583, %v5623
    %v5801 = vmul.f32 %v4584, %v5623
    %v5802 = vmul.f32 %v4585, %v5623
    %v5803 = vmul.f32 %v4586, %v5623
    %v5804 = vmul.f32 %v4587, %v5623
    %v5805 = vmul.f32 %v4588, %v5623
    %v5806 = vmul.f32 %v4589, %v5623
    %v5807 = vmul.f32 %v4590, %v5623
    %v5808 = vmul.f32 %v4591, %v5627
    %v5809 = vmul.f32 %v4592, %v5627
    %v5810 = vmul.f32 %v4593, %v5627
    %v5811 = vmul.f32 %v4594, %v5627
    %v5812 = vmul.f32 %v4595, %v5627
    %v5813 = vmul.f32 %v4596, %v5627
    %v5814 = vmul.f32 %v4597, %v5627
    %v5815 = vmul.f32 %v4598, %v5627
    %v5816 = vmul.f32 %v4599, %v5627
    %v5817 = vmul.f32 %v4600, %v5627
    %v5818 = vmul.f32 %v4601, %v5627
    %v5819 = vmul.f32 %v4602, %v5627
    %v5820 = vmul.f32 %v4603, %v5627
    %v5821 = vmul.f32 %v4604, %v5627
    %v5822 = vmul.f32 %v4605, %v5627
    %v5823 = vmul.f32 %v4606, %v5627
    %v5824 = vmul.f32 %v4607, %v5631
    %v5825 = vmul.f32 %v4608, %v5631
    %v5826 = vmul.f32 %v4609, %v5631
    %v5827 = vmul.f32 %v4610, %v5631
    %v5828 = vmul.f32 %v4611, %v5631
    %v5829 = vmul.f32 %v4612, %v5631
    %v5830 = vmul.f32 %v4613, %v5631
    %v5831 = vmul.f32 %v4614, %v5631
    %v5832 = vmul.f32 %v4615, %v5631
    %v5833 = vmul.f32 %v4616, %v5631
    %v5834 = vmul.f32 %v4617, %v5631
    %v5835 = vmul.f32 %v4618, %v5631
    %v5836 = vmul.f32 %v4619, %v5631
    %v5837 = vmul.f32 %v4620, %v5631
    %v5838 = vmul.f32 %v4621, %v5631
    %v5839 = vmul.f32 %v4622, %v5631
    %v5840 = vmul.f32 %v4623, %v5635
    %v5841 = vmul.f32 %v4624, %v5635
    %v5842 = vmul.f32 %v4625, %v5635
    %v5843 = vmul.f32 %v4626, %v5635
    %v5844 = vmul.f32 %v4627, %v5635
    %v5845 = vmul.f32 %v4628, %v5635
    %v5846 = vmul.f32 %v4629, %v5635
    %v5847 = vmul.f32 %v4630, %v5635
    %v5848 = vmul.f32 %v4631, %v5635
    %v5849 = vmul.f32 %v4632, %v5635
    %v5850 = vmul.f32 %v4633, %v5635
    %v5851 = vmul.f32 %v4634, %v5635
    %v5852 = vmul.f32 %v4635, %v5635
    %v5853 = vmul.f32 %v4636, %v5635
    %v5854 = vmul.f32 %v4637, %v5635
    %v5855 = vmul.f32 %v4638, %v5635
    %v5856 = vmul.f32 %v4639, %v5639
    %v5857 = vmul.f32 %v4640, %v5639
    %v5858 = vmul.f32 %v4641, %v5639
    %v5859 = vmul.f32 %v4642, %v5639
    %v5860 = vmul.f32 %v4643, %v5639
    %v5861 = vmul.f32 %v4644, %v5639
    %v5862 = vmul.f32 %v4645, %v5639
    %v5863 = vmul.f32 %v4646, %v5639
    %v5864 = vmul.f32 %v4647, %v5639
    %v5865 = vmul.f32 %v4648, %v5639
    %v5866 = vmul.f32 %v4649, %v5639
    %v5867 = vmul.f32 %v4650, %v5639
    %v5868 = vmul.f32 %v4651, %v5639
    %v5869 = vmul.f32 %v4652, %v5639
    %v5870 = vmul.f32 %v4653, %v5639
    %v5871 = vmul.f32 %v4654, %v5639
    %v5872 = vmul.f32 %v4655, %v5643
    %v5873 = vmul.f32 %v4656, %v5643
    %v5874 = vmul.f32 %v4657, %v5643
    %v5875 = vmul.f32 %v4658, %v5643
    %v5876 = vmul.f32 %v4659, %v5643
    %v5877 = vmul.f32 %v4660, %v5643
    %v5878 = vmul.f32 %v4661, %v5643
    %v5879 = vmul.f32 %v4662, %v5643
    %v5880 = vmul.f32 %v4663, %v5643
    %v5881 = vmul.f32 %v4664, %v5643
    %v5882 = vmul.f32 %v4665, %v5643
    %v5883 = vmul.f32 %v4666, %v5643
    %v5884 = vmul.f32 %v4667, %v5643
    %v5885 = vmul.f32 %v4668, %v5643
    %v5886 = vmul.f32 %v4669, %v5643
    %v5887 = vmul.f32 %v4670, %v5643
    %v5888 = vmul.f32 %v4671, %v5647
    %v5889 = vmul.f32 %v4672, %v5647
    %v5890 = vmul.f32 %v4673, %v5647
    %v5891 = vmul.f32 %v4674, %v5647
    %v5892 = vmul.f32 %v4675, %v5647
    %v5893 = vmul.f32 %v4676, %v5647
    %v5894 = vmul.f32 %v4677, %v5647
    %v5895 = vmul.f32 %v4678, %v5647
    %v5896 = vmul.f32 %v4679, %v5647
    %v5897 = vmul.f32 %v4680, %v5647
    %v5898 = vmul.f32 %v4681, %v5647
    %v5899 = vmul.f32 %v4682, %v5647
    %v5900 = vmul.f32 %v4683, %v5647
    %v5901 = vmul.f32 %v4684, %v5647
    %v5902 = vmul.f32 %v4685, %v5647
    %v5903 = vmul.f32 %v4686, %v5647
    %v5904 = vadd.f32 %v5648, %v5664
    %v5905 = vadd.f32 %v5904, %v5680
    %v5906 = vadd.f32 %v5905, %v5696
    %v5907 = vadd.f32 %v5906, %v5712
    %v5908 = vadd.f32 %v5907, %v5728
    %v5909 = vadd.f32 %v5908, %v5744
    %v5910 = vadd.f32 %v5909, %v5760
    %v5911 = vrot.slane %v5910, 4
    %v5912 = vadd.f32 %v5910, %v5911
    %v5913 = vrot.slane %v5912, 2
    %v5914 = vadd.f32 %v5912, %v5913
    %v5915 = vrot.slane %v5914, 1
    %v5916 = vadd.f32 %v5914, %v5915
    %v5917 = vadd.f32 %v5649, %v5665
    %v5918 = vadd.f32 %v5917, %v5681
    %v5919 = vadd.f32 %v5918, %v5697
    %v5920 = vadd.f32 %v5919, %v5713
    %v5921 = vadd.f32 %v5920, %v5729
    %v5922 = vadd.f32 %v5921, %v5745
    %v5923 = vadd.f32 %v5922, %v5761
    %v5924 = vrot.slane %v5923, 4
    %v5925 = vadd.f32 %v5923, %v5924
    %v5926 = vrot.slane %v5925, 2
    %v5927 = vadd.f32 %v5925, %v5926
    %v5928 = vrot.slane %v5927, 1
    %v5929 = vadd.f32 %v5927, %v5928
    %v5930 = vadd.f32 %v5650, %v5666
    %v5931 = vadd.f32 %v5930, %v5682
    %v5932 = vadd.f32 %v5931, %v5698
    %v5933 = vadd.f32 %v5932, %v5714
    %v5934 = vadd.f32 %v5933, %v5730
    %v5935 = vadd.f32 %v5934, %v5746
    %v5936 = vadd.f32 %v5935, %v5762
    %v5937 = vrot.slane %v5936, 4
    %v5938 = vadd.f32 %v5936, %v5937
    %v5939 = vrot.slane %v5938, 2
    %v5940 = vadd.f32 %v5938, %v5939
    %v5941 = vrot.slane %v5940, 1
    %v5942 = vadd.f32 %v5940, %v5941
    %v5943 = vadd.f32 %v5651, %v5667
    %v5944 = vadd.f32 %v5943, %v5683
    %v5945 = vadd.f32 %v5944, %v5699
    %v5946 = vadd.f32 %v5945, %v5715
    %v5947 = vadd.f32 %v5946, %v5731
    %v5948 = vadd.f32 %v5947, %v5747
    %v5949 = vadd.f32 %v5948, %v5763
    %v5950 = vrot.slane %v5949, 4
    %v5951 = vadd.f32 %v5949, %v5950
    %v5952 = vrot.slane %v5951, 2
    %v5953 = vadd.f32 %v5951, %v5952
    %v5954 = vrot.slane %v5953, 1
    %v5955 = vadd.f32 %v5953, %v5954
    %v5956 = vadd.f32 %v5652, %v5668
    %v5957 = vadd.f32 %v5956, %v5684
    %v5958 = vadd.f32 %v5957, %v5700
    %v5959 = vadd.f32 %v5958, %v5716
    %v5960 = vadd.f32 %v5959, %v5732
    %v5961 = vadd.f32 %v5960, %v5748
    %v5962 = vadd.f32 %v5961, %v5764
    %v5963 = vrot.slane %v5962, 4
    %v5964 = vadd.f32 %v5962, %v5963
    %v5965 = vrot.slane %v5964, 2
    %v5966 = vadd.f32 %v5964, %v5965
    %v5967 = vrot.slane %v5966, 1
    %v5968 = vadd.f32 %v5966, %v5967
    %v5969 = vadd.f32 %v5653, %v5669
    %v5970 = vadd.f32 %v5969, %v5685
    %v5971 = vadd.f32 %v5970, %v5701
    %v5972 = vadd.f32 %v5971, %v5717
    %v5973 = vadd.f32 %v5972, %v5733
    %v5974 = vadd.f32 %v5973, %v5749
    %v5975 = vadd.f32 %v5974, %v5765
    %v5976 = vrot.slane %v5975, 4
    %v5977 = vadd.f32 %v5975, %v5976
    %v5978 = vrot.slane %v5977, 2
    %v5979 = vadd.f32 %v5977, %v5978
    %v5980 = vrot.slane %v5979, 1
    %v5981 = vadd.f32 %v5979, %v5980
    %v5982 = vadd.f32 %v5654, %v5670
    %v5983 = vadd.f32 %v5982, %v5686
    %v5984 = vadd.f32 %v5983, %v5702
    %v5985 = vadd.f32 %v5984, %v5718
    %v5986 = vadd.f32 %v5985, %v5734
    %v5987 = vadd.f32 %v5986, %v5750
    %v5988 = vadd.f32 %v5987, %v5766
    %v5989 = vrot.slane %v5988, 4
    %v5990 = vadd.f32 %v5988, %v5989
    %v5991 = vrot.slane %v5990, 2
    %v5992 = vadd.f32 %v5990, %v5991
    %v5993 = vrot.slane %v5992, 1
    %v5994 = vadd.f32 %v5992, %v5993
    %v5995 = vadd.f32 %v5655, %v5671
    %v5996 = vadd.f32 %v5995, %v5687
    %v5997 = vadd.f32 %v5996, %v5703
    %v5998 = vadd.f32 %v5997, %v5719
    %v5999 = vadd.f32 %v5998, %v5735
    %v6000 = vadd.f32 %v5999, %v5751
    %v6001 = vadd.f32 %v6000, %v5767
    %v6002 = vrot.slane %v6001, 4
    %v6003 = vadd.f32 %v6001, %v6002
    %v6004 = vrot.slane %v6003, 2
    %v6005 = vadd.f32 %v6003, %v6004
    %v6006 = vrot.slane %v6005, 1
    %v6007 = vadd.f32 %v6005, %v6006
    %v6008 = vadd.f32 %v5656, %v5672
    %v6009 = vadd.f32 %v6008, %v5688
    %v6010 = vadd.f32 %v6009, %v5704
    %v6011 = vadd.f32 %v6010, %v5720
    %v6012 = vadd.f32 %v6011, %v5736
    %v6013 = vadd.f32 %v6012, %v5752
    %v6014 = vadd.f32 %v6013, %v5768
    %v6015 = vrot.slane %v6014, 4
    %v6016 = vadd.f32 %v6014, %v6015
    %v6017 = vrot.slane %v6016, 2
    %v6018 = vadd.f32 %v6016, %v6017
    %v6019 = vrot.slane %v6018, 1
    %v6020 = vadd.f32 %v6018, %v6019
    %v6021 = vadd.f32 %v5657, %v5673
    %v6022 = vadd.f32 %v6021, %v5689
    %v6023 = vadd.f32 %v6022, %v5705
    %v6024 = vadd.f32 %v6023, %v5721
    %v6025 = vadd.f32 %v6024, %v5737
    %v6026 = vadd.f32 %v6025, %v5753
    %v6027 = vadd.f32 %v6026, %v5769
    %v6028 = vrot.slane %v6027, 4
    %v6029 = vadd.f32 %v6027, %v6028
    %v6030 = vrot.slane %v6029, 2
    %v6031 = vadd.f32 %v6029, %v6030
    %v6032 = vrot.slane %v6031, 1
    %v6033 = vadd.f32 %v6031, %v6032
    %v6034 = vadd.f32 %v5658, %v5674
    %v6035 = vadd.f32 %v6034, %v5690
    %v6036 = vadd.f32 %v6035, %v5706
    %v6037 = vadd.f32 %v6036, %v5722
    %v6038 = vadd.f32 %v6037, %v5738
    %v6039 = vadd.f32 %v6038, %v5754
    %v6040 = vadd.f32 %v6039, %v5770
    %v6041 = vrot.slane %v6040, 4
    %v6042 = vadd.f32 %v6040, %v6041
    %v6043 = vrot.slane %v6042, 2
    %v6044 = vadd.f32 %v6042, %v6043
    %v6045 = vrot.slane %v6044, 1
    %v6046 = vadd.f32 %v6044, %v6045
    %v6047 = vadd.f32 %v5659, %v5675
    %v6048 = vadd.f32 %v6047, %v5691
    %v6049 = vadd.f32 %v6048, %v5707
    %v6050 = vadd.f32 %v6049, %v5723
    %v6051 = vadd.f32 %v6050, %v5739
    %v6052 = vadd.f32 %v6051, %v5755
    %v6053 = vadd.f32 %v6052, %v5771
    %v6054 = vrot.slane %v6053, 4
    %v6055 = vadd.f32 %v6053, %v6054
    %v6056 = vrot.slane %v6055, 2
    %v6057 = vadd.f32 %v6055, %v6056
    %v6058 = vrot.slane %v6057, 1
    %v6059 = vadd.f32 %v6057, %v6058
    %v6060 = vadd.f32 %v5660, %v5676
    %v6061 = vadd.f32 %v6060, %v5692
    %v6062 = vadd.f32 %v6061, %v5708
    %v6063 = vadd.f32 %v6062, %v5724
    %v6064 = vadd.f32 %v6063, %v5740
    %v6065 = vadd.f32 %v6064, %v5756
    %v6066 = vadd.f32 %v6065, %v5772
    %v6067 = vrot.slane %v6066, 4
    %v6068 = vadd.f32 %v6066, %v6067
    %v6069 = vrot.slane %v6068, 2
    %v6070 = vadd.f32 %v6068, %v6069
    %v6071 = vrot.slane %v6070, 1
    %v6072 = vadd.f32 %v6070, %v6071
    %v6073 = vadd.f32 %v5661, %v5677
    %v6074 = vadd.f32 %v6073, %v5693
    %v6075 = vadd.f32 %v6074, %v5709
    %v6076 = vadd.f32 %v6075, %v5725
    %v6077 = vadd.f32 %v6076, %v5741
    %v6078 = vadd.f32 %v6077, %v5757
    %v6079 = vadd.f32 %v6078, %v5773
    %v6080 = vrot.slane %v6079, 4
    %v6081 = vadd.f32 %v6079, %v6080
    %v6082 = vrot.slane %v6081, 2
    %v6083 = vadd.f32 %v6081, %v6082
    %v6084 = vrot.slane %v6083, 1
    %v6085 = vadd.f32 %v6083, %v6084
    %v6086 = vadd.f32 %v5662, %v5678
    %v6087 = vadd.f32 %v6086, %v5694
    %v6088 = vadd.f32 %v6087, %v5710
    %v6089 = vadd.f32 %v6088, %v5726
    %v6090 = vadd.f32 %v6089, %v5742
    %v6091 = vadd.f32 %v6090, %v5758
    %v6092 = vadd.f32 %v6091, %v5774
    %v6093 = vrot.slane %v6092, 4
    %v6094 = vadd.f32 %v6092, %v6093
    %v6095 = vrot.slane %v6094, 2
    %v6096 = vadd.f32 %v6094, %v6095
    %v6097 = vrot.slane %v6096, 1
    %v6098 = vadd.f32 %v6096, %v6097
    %v6099 = vadd.f32 %v5663, %v5679
    %v6100 = vadd.f32 %v6099, %v5695
    %v6101 = vadd.f32 %v6100, %v5711
    %v6102 = vadd.f32 %v6101, %v5727
    %v6103 = vadd.f32 %v6102, %v5743
    %v6104 = vadd.f32 %v6103, %v5759
    %v6105 = vadd.f32 %v6104, %v5775
    %v6106 = vrot.slane %v6105, 4
    %v6107 = vadd.f32 %v6105, %v6106
    %v6108 = vrot.slane %v6107, 2
    %v6109 = vadd.f32 %v6107, %v6108
    %v6110 = vrot.slane %v6109, 1
    %v6111 = vadd.f32 %v6109, %v6110
    %v6112 = vadd.f32 %v5776, %v5792
    %v6113 = vadd.f32 %v6112, %v5808
    %v6114 = vadd.f32 %v6113, %v5824
    %v6115 = vadd.f32 %v6114, %v5840
    %v6116 = vadd.f32 %v6115, %v5856
    %v6117 = vadd.f32 %v6116, %v5872
    %v6118 = vadd.f32 %v6117, %v5888
    %v6119 = vrot.slane %v6118, 4
    %v6120 = vadd.f32 %v6118, %v6119
    %v6121 = vrot.slane %v6120, 2
    %v6122 = vadd.f32 %v6120, %v6121
    %v6123 = vrot.slane %v6122, 1
    %v6124 = vadd.f32 %v6122, %v6123
    %v6125 = vadd.f32 %v5777, %v5793
    %v6126 = vadd.f32 %v6125, %v5809
    %v6127 = vadd.f32 %v6126, %v5825
    %v6128 = vadd.f32 %v6127, %v5841
    %v6129 = vadd.f32 %v6128, %v5857
    %v6130 = vadd.f32 %v6129, %v5873
    %v6131 = vadd.f32 %v6130, %v5889
    %v6132 = vrot.slane %v6131, 4
    %v6133 = vadd.f32 %v6131, %v6132
    %v6134 = vrot.slane %v6133, 2
    %v6135 = vadd.f32 %v6133, %v6134
    %v6136 = vrot.slane %v6135, 1
    %v6137 = vadd.f32 %v6135, %v6136
    %v6138 = vadd.f32 %v5778, %v5794
    %v6139 = vadd.f32 %v6138, %v5810
    %v6140 = vadd.f32 %v6139, %v5826
    %v6141 = vadd.f32 %v6140, %v5842
    %v6142 = vadd.f32 %v6141, %v5858
    %v6143 = vadd.f32 %v6142, %v5874
    %v6144 = vadd.f32 %v6143, %v5890
    %v6145 = vrot.slane %v6144, 4
    %v6146 = vadd.f32 %v6144, %v6145
    %v6147 = vrot.slane %v6146, 2
    %v6148 = vadd.f32 %v6146, %v6147
    %v6149 = vrot.slane %v6148, 1
    %v6150 = vadd.f32 %v6148, %v6149
    %v6151 = vadd.f32 %v5779, %v5795
    %v6152 = vadd.f32 %v6151, %v5811
    %v6153 = vadd.f32 %v6152, %v5827
    %v6154 = vadd.f32 %v6153, %v5843
    %v6155 = vadd.f32 %v6154, %v5859
    %v6156 = vadd.f32 %v6155, %v5875
    %v6157 = vadd.f32 %v6156, %v5891
    %v6158 = vrot.slane %v6157, 4
    %v6159 = vadd.f32 %v6157, %v6158
    %v6160 = vrot.slane %v6159, 2
    %v6161 = vadd.f32 %v6159, %v6160
    %v6162 = vrot.slane %v6161, 1
    %v6163 = vadd.f32 %v6161, %v6162
    %v6164 = vadd.f32 %v5780, %v5796
    %v6165 = vadd.f32 %v6164, %v5812
    %v6166 = vadd.f32 %v6165, %v5828
    %v6167 = vadd.f32 %v6166, %v5844
    %v6168 = vadd.f32 %v6167, %v5860
    %v6169 = vadd.f32 %v6168, %v5876
    %v6170 = vadd.f32 %v6169, %v5892
    %v6171 = vrot.slane %v6170, 4
    %v6172 = vadd.f32 %v6170, %v6171
    %v6173 = vrot.slane %v6172, 2
    %v6174 = vadd.f32 %v6172, %v6173
    %v6175 = vrot.slane %v6174, 1
    %v6176 = vadd.f32 %v6174, %v6175
    %v6177 = vadd.f32 %v5781, %v5797
    %v6178 = vadd.f32 %v6177, %v5813
    %v6179 = vadd.f32 %v6178, %v5829
    %v6180 = vadd.f32 %v6179, %v5845
    %v6181 = vadd.f32 %v6180, %v5861
    %v6182 = vadd.f32 %v6181, %v5877
    %v6183 = vadd.f32 %v6182, %v5893
    %v6184 = vrot.slane %v6183, 4
    %v6185 = vadd.f32 %v6183, %v6184
    %v6186 = vrot.slane %v6185, 2
    %v6187 = vadd.f32 %v6185, %v6186
    %v6188 = vrot.slane %v6187, 1
    %v6189 = vadd.f32 %v6187, %v6188
    %v6190 = vadd.f32 %v5782, %v5798
    %v6191 = vadd.f32 %v6190, %v5814
    %v6192 = vadd.f32 %v6191, %v5830
    %v6193 = vadd.f32 %v6192, %v5846
    %v6194 = vadd.f32 %v6193, %v5862
    %v6195 = vadd.f32 %v6194, %v5878
    %v6196 = vadd.f32 %v6195, %v5894
    %v6197 = vrot.slane %v6196, 4
    %v6198 = vadd.f32 %v6196, %v6197
    %v6199 = vrot.slane %v6198, 2
    %v6200 = vadd.f32 %v6198, %v6199
    %v6201 = vrot.slane %v6200, 1
    %v6202 = vadd.f32 %v6200, %v6201
    %v6203 = vadd.f32 %v5783, %v5799
    %v6204 = vadd.f32 %v6203, %v5815
    %v6205 = vadd.f32 %v6204, %v5831
    %v6206 = vadd.f32 %v6205, %v5847
    %v6207 = vadd.f32 %v6206, %v5863
    %v6208 = vadd.f32 %v6207, %v5879
    %v6209 = vadd.f32 %v6208, %v5895
    %v6210 = vrot.slane %v6209, 4
    %v6211 = vadd.f32 %v6209, %v6210
    %v6212 = vrot.slane %v6211, 2
    %v6213 = vadd.f32 %v6211, %v6212
    %v6214 = vrot.slane %v6213, 1
    %v6215 = vadd.f32 %v6213, %v6214
    %v6216 = vadd.f32 %v5784, %v5800
    %v6217 = vadd.f32 %v6216, %v5816
    %v6218 = vadd.f32 %v6217, %v5832
    %v6219 = vadd.f32 %v6218, %v5848
    %v6220 = vadd.f32 %v6219, %v5864
    %v6221 = vadd.f32 %v6220, %v5880
    %v6222 = vadd.f32 %v6221, %v5896
    %v6223 = vrot.slane %v6222, 4
    %v6224 = vadd.f32 %v6222, %v6223
    %v6225 = vrot.slane %v6224, 2
    %v6226 = vadd.f32 %v6224, %v6225
    %v6227 = vrot.slane %v6226, 1
    %v6228 = vadd.f32 %v6226, %v6227
    %v6229 = vadd.f32 %v5785, %v5801
    %v6230 = vadd.f32 %v6229, %v5817
    %v6231 = vadd.f32 %v6230, %v5833
    %v6232 = vadd.f32 %v6231, %v5849
    %v6233 = vadd.f32 %v6232, %v5865
    %v6234 = vadd.f32 %v6233, %v5881
    %v6235 = vadd.f32 %v6234, %v5897
    %v6236 = vrot.slane %v6235, 4
    %v6237 = vadd.f32 %v6235, %v6236
    %v6238 = vrot.slane %v6237, 2
    %v6239 = vadd.f32 %v6237, %v6238
    %v6240 = vrot.slane %v6239, 1
    %v6241 = vadd.f32 %v6239, %v6240
    %v6242 = vadd.f32 %v5786, %v5802
    %v6243 = vadd.f32 %v6242, %v5818
    %v6244 = vadd.f32 %v6243, %v5834
    %v6245 = vadd.f32 %v6244, %v5850
    %v6246 = vadd.f32 %v6245, %v5866
    %v6247 = vadd.f32 %v6246, %v5882
    %v6248 = vadd.f32 %v6247, %v5898
    %v6249 = vrot.slane %v6248, 4
    %v6250 = vadd.f32 %v6248, %v6249
    %v6251 = vrot.slane %v6250, 2
    %v6252 = vadd.f32 %v6250, %v6251
    %v6253 = vrot.slane %v6252, 1
    %v6254 = vadd.f32 %v6252, %v6253
    %v6255 = vadd.f32 %v5787, %v5803
    %v6256 = vadd.f32 %v6255, %v5819
    %v6257 = vadd.f32 %v6256, %v5835
    %v6258 = vadd.f32 %v6257, %v5851
    %v6259 = vadd.f32 %v6258, %v5867
    %v6260 = vadd.f32 %v6259, %v5883
    %v6261 = vadd.f32 %v6260, %v5899
    %v6262 = vrot.slane %v6261, 4
    %v6263 = vadd.f32 %v6261, %v6262
    %v6264 = vrot.slane %v6263, 2
    %v6265 = vadd.f32 %v6263, %v6264
    %v6266 = vrot.slane %v6265, 1
    %v6267 = vadd.f32 %v6265, %v6266
    %v6268 = vadd.f32 %v5788, %v5804
    %v6269 = vadd.f32 %v6268, %v5820
    %v6270 = vadd.f32 %v6269, %v5836
    %v6271 = vadd.f32 %v6270, %v5852
    %v6272 = vadd.f32 %v6271, %v5868
    %v6273 = vadd.f32 %v6272, %v5884
    %v6274 = vadd.f32 %v6273, %v5900
    %v6275 = vrot.slane %v6274, 4
    %v6276 = vadd.f32 %v6274, %v6275
    %v6277 = vrot.slane %v6276, 2
    %v6278 = vadd.f32 %v6276, %v6277
    %v6279 = vrot.slane %v6278, 1
    %v6280 = vadd.f32 %v6278, %v6279
    %v6281 = vadd.f32 %v5789, %v5805
    %v6282 = vadd.f32 %v6281, %v5821
    %v6283 = vadd.f32 %v6282, %v5837
    %v6284 = vadd.f32 %v6283, %v5853
    %v6285 = vadd.f32 %v6284, %v5869
    %v6286 = vadd.f32 %v6285, %v5885
    %v6287 = vadd.f32 %v6286, %v5901
    %v6288 = vrot.slane %v6287, 4
    %v6289 = vadd.f32 %v6287, %v6288
    %v6290 = vrot.slane %v6289, 2
    %v6291 = vadd.f32 %v6289, %v6290
    %v6292 = vrot.slane %v6291, 1
    %v6293 = vadd.f32 %v6291, %v6292
    %v6294 = vadd.f32 %v5790, %v5806
    %v6295 = vadd.f32 %v6294, %v5822
    %v6296 = vadd.f32 %v6295, %v5838
    %v6297 = vadd.f32 %v6296, %v5854
    %v6298 = vadd.f32 %v6297, %v5870
    %v6299 = vadd.f32 %v6298, %v5886
    %v6300 = vadd.f32 %v6299, %v5902
    %v6301 = vrot.slane %v6300, 4
    %v6302 = vadd.f32 %v6300, %v6301
    %v6303 = vrot.slane %v6302, 2
    %v6304 = vadd.f32 %v6302, %v6303
    %v6305 = vrot.slane %v6304, 1
    %v6306 = vadd.f32 %v6304, %v6305
    %v6307 = vadd.f32 %v5791, %v5807
    %v6308 = vadd.f32 %v6307, %v5823
    %v6309 = vadd.f32 %v6308, %v5839
    %v6310 = vadd.f32 %v6309, %v5855
    %v6311 = vadd.f32 %v6310, %v5871
    %v6312 = vadd.f32 %v6311, %v5887
    %v6313 = vadd.f32 %v6312, %v5903
    %v6314 = vrot.slane %v6313, 4
    %v6315 = vadd.f32 %v6313, %v6314
    %v6316 = vrot.slane %v6315, 2
    %v6317 = vadd.f32 %v6315, %v6316
    %v6318 = vrot.slane %v6317, 1
    %v6319 = vadd.f32 %v6317, %v6318
    %v6320 = vmul.f32 %v5916, %v1342
    %v6321 = vmul.f32 %v5929, %v1342
    %v6322 = vmul.f32 %v5942, %v1342
    %v6323 = vmul.f32 %v5955, %v1342
    %v6324 = vmul.f32 %v5968, %v1342
    %v6325 = vmul.f32 %v5981, %v1342
    %v6326 = vmul.f32 %v5994, %v1342
    %v6327 = vmul.f32 %v6007, %v1342
    %v6328 = vmul.f32 %v6020, %v1342
    %v6329 = vmul.f32 %v6033, %v1342
    %v6330 = vmul.f32 %v6046, %v1342
    %v6331 = vmul.f32 %v6059, %v1342
    %v6332 = vmul.f32 %v6072, %v1342
    %v6333 = vmul.f32 %v6085, %v1342
    %v6334 = vmul.f32 %v6098, %v1342
    %v6335 = vmul.f32 %v6111, %v1342
    %v6336 = vmul.f32 %v6124, %v1342
    %v6337 = vmul.f32 %v6137, %v1342
    %v6338 = vmul.f32 %v6150, %v1342
    %v6339 = vmul.f32 %v6163, %v1342
    %v6340 = vmul.f32 %v6176, %v1342
    %v6341 = vmul.f32 %v6189, %v1342
    %v6342 = vmul.f32 %v6202, %v1342
    %v6343 = vmul.f32 %v6215, %v1342
    %v6344 = vmul.f32 %v6228, %v1342
    %v6345 = vmul.f32 %v6241, %v1342
    %v6346 = vmul.f32 %v6254, %v1342
    %v6347 = vmul.f32 %v6267, %v1342
    %v6348 = vmul.f32 %v6280, %v1342
    %v6349 = vmul.f32 %v6293, %v1342
    %v6350 = vmul.f32 %v6306, %v1342
    %v6351 = vmul.f32 %v6319, %v1342
    %v6352 = vadd.f32 %v6320, %v1343
    %v6353 = vadd.f32 %v6321, %v1344
    %v6354 = vadd.f32 %v6322, %v1345
    %v6355 = vadd.f32 %v6323, %v1346
    %v6356 = vadd.f32 %v6324, %v1347
    %v6357 = vadd.f32 %v6325, %v1348
    %v6358 = vadd.f32 %v6326, %v1349
    %v6359 = vadd.f32 %v6327, %v1350
    %v6360 = vadd.f32 %v6328, %v1351
    %v6361 = vadd.f32 %v6329, %v1352
    %v6362 = vadd.f32 %v6330, %v1353
    %v6363 = vadd.f32 %v6331, %v1354
    %v6364 = vadd.f32 %v6332, %v1355
    %v6365 = vadd.f32 %v6333, %v1356
    %v6366 = vadd.f32 %v6334, %v1357
    %v6367 = vadd.f32 %v6335, %v1358
    %v6368 = vadd.f32 %v6336, %v1359
    %v6369 = vadd.f32 %v6337, %v1360
    %v6370 = vadd.f32 %v6338, %v1361
    %v6371 = vadd.f32 %v6339, %v1362
    %v6372 = vadd.f32 %v6340, %v1363
    %v6373 = vadd.f32 %v6341, %v1364
    %v6374 = vadd.f32 %v6342, %v1365
    %v6375 = vadd.f32 %v6343, %v1366
    %v6376 = vadd.f32 %v6344, %v1367
    %v6377 = vadd.f32 %v6345, %v1368
    %v6378 = vadd.f32 %v6346, %v1369
    %v6379 = vadd.f32 %v6347, %v1370
    %v6380 = vadd.f32 %v6348, %v1371
    %v6381 = vadd.f32 %v6349, %v1372
    %v6382 = vadd.f32 %v6350, %v1373
    %v6383 = vadd.f32 %v6351, %v1374
    %v6384 = vpack.c.bf16 %v6352, %v6352
    %v6385 = vpack.c.bf16 %v6353, %v6353
    %v6386 = vpack.c.bf16 %v6354, %v6354
    %v6387 = vpack.c.bf16 %v6355, %v6355
    %v6388 = vpack.c.bf16 %v6356, %v6356
    %v6389 = vpack.c.bf16 %v6357, %v6357
    %v6390 = vpack.c.bf16 %v6358, %v6358
    %v6391 = vpack.c.bf16 %v6359, %v6359
    %v6392 = vpack.c.bf16 %v6360, %v6360
    %v6393 = vpack.c.bf16 %v6361, %v6361
    %v6394 = vpack.c.bf16 %v6362, %v6362
    %v6395 = vpack.c.bf16 %v6363, %v6363
    %v6396 = vpack.c.bf16 %v6364, %v6364
    %v6397 = vpack.c.bf16 %v6365, %v6365
    %v6398 = vpack.c.bf16 %v6366, %v6366
    %v6399 = vpack.c.bf16 %v6367, %v6367
    %v6400 = vpack.c.bf16 %v6368, %v6368
    %v6401 = vpack.c.bf16 %v6369, %v6369
    %v6402 = vpack.c.bf16 %v6370, %v6370
    %v6403 = vpack.c.bf16 %v6371, %v6371
    %v6404 = vpack.c.bf16 %v6372, %v6372
    %v6405 = vpack.c.bf16 %v6373, %v6373
    %v6406 = vpack.c.bf16 %v6374, %v6374
    %v6407 = vpack.c.bf16 %v6375, %v6375
    %v6408 = vpack.c.bf16 %v6376, %v6376
    %v6409 = vpack.c.bf16 %v6377, %v6377
    %v6410 = vpack.c.bf16 %v6378, %v6378
    %v6411 = vpack.c.bf16 %v6379, %v6379
    %v6412 = vpack.c.bf16 %v6380, %v6380
    %v6413 = vpack.c.bf16 %v6381, %v6381
    %v6414 = vpack.c.bf16 %v6382, %v6382
    %v6415 = vpack.c.bf16 %v6383, %v6383
    %v6416 = vld [vmem:[%s5] sm:$0xff]
    %v6417 = vld [vmem:[%s5 + $0x8] sm:$0xff]
    %v6418 = vld [vmem:[%s5 + $0x10] sm:$0xff]
    %v6419 = vld [vmem:[%s5 + $0x18] sm:$0xff]
    %v6420 = vld [vmem:[%s5 + $0x20] sm:$0xff]
    %v6421 = vld [vmem:[%s5 + $0x28] sm:$0xff]
    %v6422 = vld [vmem:[%s5 + $0x30] sm:$0xff]
    %v6423 = vld [vmem:[%s5 + $0x38] sm:$0xff]
    %v6424 = vld [vmem:[%s5 + $0x40] sm:$0xff]
    %v6425 = vld [vmem:[%s5 + $0x48] sm:$0xff]
    %v6426 = vld [vmem:[%s5 + $0x50] sm:$0xff]
    %v6427 = vld [vmem:[%s5 + $0x58] sm:$0xff]
    %v6428 = vld [vmem:[%s5 + $0x60] sm:$0xff]
    %v6429 = vld [vmem:[%s5 + $0x68] sm:$0xff]
    %v6430 = vld [vmem:[%s5 + $0x70] sm:$0xff]
    %v6431 = vld [vmem:[%s5 + $0x78] sm:$0xff]
    %v6432 = vld [vmem:[%s5 + $0x80] sm:$0xff]
    %v6433 = vld [vmem:[%s5 + $0x88] sm:$0xff]
    %v6434 = vld [vmem:[%s5 + $0x90] sm:$0xff]
    %v6435 = vld [vmem:[%s5 + $0x98] sm:$0xff]
    %v6436 = vld [vmem:[%s5 + $0xa0] sm:$0xff]
    %v6437 = vld [vmem:[%s5 + $0xa8] sm:$0xff]
    %v6438 = vld [vmem:[%s5 + $0xb0] sm:$0xff]
    %v6439 = vld [vmem:[%s5 + $0xb8] sm:$0xff]
    %v6440 = vld [vmem:[%s5 + $0xc0] sm:$0xff]
    %v6441 = vld [vmem:[%s5 + $0xc8] sm:$0xff]
    %v6442 = vld [vmem:[%s5 + $0xd0] sm:$0xff]
    %v6443 = vld [vmem:[%s5 + $0xd8] sm:$0xff]
    %v6444 = vld [vmem:[%s5 + $0xe0] sm:$0xff]
    %v6445 = vld [vmem:[%s5 + $0xe8] sm:$0xff]
    %v6446 = vld [vmem:[%s5 + $0xf0] sm:$0xff]
    %v6447 = vld [vmem:[%s5 + $0xf8] sm:$0xff]
    %v6448 = vld [vmem:[%s5 + $0x100] sm:$0xff]
    %v6449 = vld [vmem:[%s5 + $0x108] sm:$0xff]
    %v6450 = vld [vmem:[%s5 + $0x110] sm:$0xff]
    %v6451 = vld [vmem:[%s5 + $0x118] sm:$0xff]
    %v6452 = vld [vmem:[%s5 + $0x120] sm:$0xff]
    %v6453 = vld [vmem:[%s5 + $0x128] sm:$0xff]
    %v6454 = vld [vmem:[%s5 + $0x130] sm:$0xff]
    %v6455 = vld [vmem:[%s5 + $0x138] sm:$0xff]
    %v6456 = vld [vmem:[%s5 + $0x140] sm:$0xff]
    %v6457 = vld [vmem:[%s5 + $0x148] sm:$0xff]
    %v6458 = vld [vmem:[%s5 + $0x150] sm:$0xff]
    %v6459 = vld [vmem:[%s5 + $0x158] sm:$0xff]
    %v6460 = vld [vmem:[%s5 + $0x160] sm:$0xff]
    %v6461 = vld [vmem:[%s5 + $0x168] sm:$0xff]
    %v6462 = vld [vmem:[%s5 + $0x170] sm:$0xff]
    %v6463 = vld [vmem:[%s5 + $0x178] sm:$0xff]
    %v6464 = vld [vmem:[%s5 + $0x180] sm:$0xff]
    %v6465 = vld [vmem:[%s5 + $0x188] sm:$0xff]
    %v6466 = vld [vmem:[%s5 + $0x190] sm:$0xff]
    %v6467 = vld [vmem:[%s5 + $0x198] sm:$0xff]
    %v6468 = vld [vmem:[%s5 + $0x1a0] sm:$0xff]
    %v6469 = vld [vmem:[%s5 + $0x1a8] sm:$0xff]
    %v6470 = vld [vmem:[%s5 + $0x1b0] sm:$0xff]
    %v6471 = vld [vmem:[%s5 + $0x1b8] sm:$0xff]
    %v6472 = vld [vmem:[%s5 + $0x1c0] sm:$0xff]
    %v6473 = vld [vmem:[%s5 + $0x1c8] sm:$0xff]
    %v6474 = vld [vmem:[%s5 + $0x1d0] sm:$0xff]
    %v6475 = vld [vmem:[%s5 + $0x1d8] sm:$0xff]
    %v6476 = vld [vmem:[%s5 + $0x1e0] sm:$0xff]
    %v6477 = vld [vmem:[%s5 + $0x1e8] sm:$0xff]
    %v6478 = vld [vmem:[%s5 + $0x1f0] sm:$0xff]
    %v6479 = vld [vmem:[%s5 + $0x1f8] sm:$0xff]
    %v6480 = vld [vmem:[%s5 + $0x200] sm:$0xff]
    %v6481 = vld [vmem:[%s5 + $0x208] sm:$0xff]
    %v6482 = vld [vmem:[%s5 + $0x210] sm:$0xff]
    %v6483 = vld [vmem:[%s5 + $0x218] sm:$0xff]
    %v6484 = vld [vmem:[%s5 + $0x220] sm:$0xff]
    %v6485 = vld [vmem:[%s5 + $0x228] sm:$0xff]
    %v6486 = vld [vmem:[%s5 + $0x230] sm:$0xff]
    %v6487 = vld [vmem:[%s5 + $0x238] sm:$0xff]
    %v6488 = vld [vmem:[%s5 + $0x240] sm:$0xff]
    %v6489 = vld [vmem:[%s5 + $0x248] sm:$0xff]
    %v6490 = vld [vmem:[%s5 + $0x250] sm:$0xff]
    %v6491 = vld [vmem:[%s5 + $0x258] sm:$0xff]
    %v6492 = vld [vmem:[%s5 + $0x260] sm:$0xff]
    %v6493 = vld [vmem:[%s5 + $0x268] sm:$0xff]
    %v6494 = vld [vmem:[%s5 + $0x270] sm:$0xff]
    %v6495 = vld [vmem:[%s5 + $0x278] sm:$0xff]
    %v6496 = vld [vmem:[%s5 + $0x280] sm:$0xff]
    %v6497 = vld [vmem:[%s5 + $0x288] sm:$0xff]
    %v6498 = vld [vmem:[%s5 + $0x290] sm:$0xff]
    %v6499 = vld [vmem:[%s5 + $0x298] sm:$0xff]
    %v6500 = vld [vmem:[%s5 + $0x2a0] sm:$0xff]
    %v6501 = vld [vmem:[%s5 + $0x2a8] sm:$0xff]
    %v6502 = vld [vmem:[%s5 + $0x2b0] sm:$0xff]
    %v6503 = vld [vmem:[%s5 + $0x2b8] sm:$0xff]
    %v6504 = vld [vmem:[%s5 + $0x2c0] sm:$0xff]
    %v6505 = vld [vmem:[%s5 + $0x2c8] sm:$0xff]
    %v6506 = vld [vmem:[%s5 + $0x2d0] sm:$0xff]
    %v6507 = vld [vmem:[%s5 + $0x2d8] sm:$0xff]
    %v6508 = vld [vmem:[%s5 + $0x2e0] sm:$0xff]
    %v6509 = vld [vmem:[%s5 + $0x2e8] sm:$0xff]
    %v6510 = vld [vmem:[%s5 + $0x2f0] sm:$0xff]
    %v6511 = vld [vmem:[%s5 + $0x2f8] sm:$0xff]
    %v6512 = vld [vmem:[%s5 + $0x300] sm:$0xff]
    %v6513 = vld [vmem:[%s5 + $0x308] sm:$0xff]
    %v6514 = vld [vmem:[%s5 + $0x310] sm:$0xff]
    %v6515 = vld [vmem:[%s5 + $0x318] sm:$0xff]
    %v6516 = vld [vmem:[%s5 + $0x320] sm:$0xff]
    %v6517 = vld [vmem:[%s5 + $0x328] sm:$0xff]
    %v6518 = vld [vmem:[%s5 + $0x330] sm:$0xff]
    %v6519 = vld [vmem:[%s5 + $0x338] sm:$0xff]
    %v6520 = vld [vmem:[%s5 + $0x340] sm:$0xff]
    %v6521 = vld [vmem:[%s5 + $0x348] sm:$0xff]
    %v6522 = vld [vmem:[%s5 + $0x350] sm:$0xff]
    %v6523 = vld [vmem:[%s5 + $0x358] sm:$0xff]
    %v6524 = vld [vmem:[%s5 + $0x360] sm:$0xff]
    %v6525 = vld [vmem:[%s5 + $0x368] sm:$0xff]
    %v6526 = vld [vmem:[%s5 + $0x370] sm:$0xff]
    %v6527 = vld [vmem:[%s5 + $0x378] sm:$0xff]
    %v6528 = vld [vmem:[%s5 + $0x380] sm:$0xff]
    %v6529 = vld [vmem:[%s5 + $0x388] sm:$0xff]
    %v6530 = vld [vmem:[%s5 + $0x390] sm:$0xff]
    %v6531 = vld [vmem:[%s5 + $0x398] sm:$0xff]
    %v6532 = vld [vmem:[%s5 + $0x3a0] sm:$0xff]
    %v6533 = vld [vmem:[%s5 + $0x3a8] sm:$0xff]
    %v6534 = vld [vmem:[%s5 + $0x3b0] sm:$0xff]
    %v6535 = vld [vmem:[%s5 + $0x3b8] sm:$0xff]
    %v6536 = vld [vmem:[%s5 + $0x3c0] sm:$0xff]
    %v6537 = vld [vmem:[%s5 + $0x3c8] sm:$0xff]
    %v6538 = vld [vmem:[%s5 + $0x3d0] sm:$0xff]
    %v6539 = vld [vmem:[%s5 + $0x3d8] sm:$0xff]
    %v6540 = vld [vmem:[%s5 + $0x3e0] sm:$0xff]
    %v6541 = vld [vmem:[%s5 + $0x3e8] sm:$0xff]
    %v6542 = vld [vmem:[%s5 + $0x3f0] sm:$0xff]
    %v6543 = vld [vmem:[%s5 + $0x3f8] sm:$0xff]
    %v6544 = vld [vmem:[%s5 + $0x400] sm:$0xff]
    %v6545 = vld [vmem:[%s5 + $0x408] sm:$0xff]
    %v6546 = vld [vmem:[%s5 + $0x410] sm:$0xff]
    %v6547 = vld [vmem:[%s5 + $0x418] sm:$0xff]
    %v6548 = vld [vmem:[%s5 + $0x420] sm:$0xff]
    %v6549 = vld [vmem:[%s5 + $0x428] sm:$0xff]
    %v6550 = vld [vmem:[%s5 + $0x430] sm:$0xff]
    %v6551 = vld [vmem:[%s5 + $0x438] sm:$0xff]
    %v6552 = vld [vmem:[%s5 + $0x440] sm:$0xff]
    %v6553 = vld [vmem:[%s5 + $0x448] sm:$0xff]
    %v6554 = vld [vmem:[%s5 + $0x450] sm:$0xff]
    %v6555 = vld [vmem:[%s5 + $0x458] sm:$0xff]
    %v6556 = vld [vmem:[%s5 + $0x460] sm:$0xff]
    %v6557 = vld [vmem:[%s5 + $0x468] sm:$0xff]
    %v6558 = vld [vmem:[%s5 + $0x470] sm:$0xff]
    %v6559 = vld [vmem:[%s5 + $0x478] sm:$0xff]
    %v6560 = vld [vmem:[%s5 + $0x480] sm:$0xff]
    %v6561 = vld [vmem:[%s5 + $0x488] sm:$0xff]
    %v6562 = vld [vmem:[%s5 + $0x490] sm:$0xff]
    %v6563 = vld [vmem:[%s5 + $0x498] sm:$0xff]
    %v6564 = vld [vmem:[%s5 + $0x4a0] sm:$0xff]
    %v6565 = vld [vmem:[%s5 + $0x4a8] sm:$0xff]
    %v6566 = vld [vmem:[%s5 + $0x4b0] sm:$0xff]
    %v6567 = vld [vmem:[%s5 + $0x4b8] sm:$0xff]
    %v6568 = vld [vmem:[%s5 + $0x4c0] sm:$0xff]
    %v6569 = vld [vmem:[%s5 + $0x4c8] sm:$0xff]
    %v6570 = vld [vmem:[%s5 + $0x4d0] sm:$0xff]
    %v6571 = vld [vmem:[%s5 + $0x4d8] sm:$0xff]
    %v6572 = vld [vmem:[%s5 + $0x4e0] sm:$0xff]
    %v6573 = vld [vmem:[%s5 + $0x4e8] sm:$0xff]
    %v6574 = vld [vmem:[%s5 + $0x4f0] sm:$0xff]
    %v6575 = vld [vmem:[%s5 + $0x4f8] sm:$0xff]
    %v6576 = vld [vmem:[%s5 + $0x500] sm:$0xff]
    %v6577 = vld [vmem:[%s5 + $0x508] sm:$0xff]
    %v6578 = vld [vmem:[%s5 + $0x510] sm:$0xff]
    %v6579 = vld [vmem:[%s5 + $0x518] sm:$0xff]
    %v6580 = vld [vmem:[%s5 + $0x520] sm:$0xff]
    %v6581 = vld [vmem:[%s5 + $0x528] sm:$0xff]
    %v6582 = vld [vmem:[%s5 + $0x530] sm:$0xff]
    %v6583 = vld [vmem:[%s5 + $0x538] sm:$0xff]
    %v6584 = vld [vmem:[%s5 + $0x540] sm:$0xff]
    %v6585 = vld [vmem:[%s5 + $0x548] sm:$0xff]
    %v6586 = vld [vmem:[%s5 + $0x550] sm:$0xff]
    %v6587 = vld [vmem:[%s5 + $0x558] sm:$0xff]
    %v6588 = vld [vmem:[%s5 + $0x560] sm:$0xff]
    %v6589 = vld [vmem:[%s5 + $0x568] sm:$0xff]
    %v6590 = vld [vmem:[%s5 + $0x570] sm:$0xff]
    %v6591 = vld [vmem:[%s5 + $0x578] sm:$0xff]
    %v6592 = vld [vmem:[%s5 + $0x580] sm:$0xff]
    %v6593 = vld [vmem:[%s5 + $0x588] sm:$0xff]
    %v6594 = vld [vmem:[%s5 + $0x590] sm:$0xff]
    %v6595 = vld [vmem:[%s5 + $0x598] sm:$0xff]
    %v6596 = vld [vmem:[%s5 + $0x5a0] sm:$0xff]
    %v6597 = vld [vmem:[%s5 + $0x5a8] sm:$0xff]
    %v6598 = vld [vmem:[%s5 + $0x5b0] sm:$0xff]
    %v6599 = vld [vmem:[%s5 + $0x5b8] sm:$0xff]
    %v6600 = vld [vmem:[%s5 + $0x5c0] sm:$0xff]
    %v6601 = vld [vmem:[%s5 + $0x5c8] sm:$0xff]
    %v6602 = vld [vmem:[%s5 + $0x5d0] sm:$0xff]
    %v6603 = vld [vmem:[%s5 + $0x5d8] sm:$0xff]
    %v6604 = vld [vmem:[%s5 + $0x5e0] sm:$0xff]
    %v6605 = vld [vmem:[%s5 + $0x5e8] sm:$0xff]
    %v6606 = vld [vmem:[%s5 + $0x5f0] sm:$0xff]
    %v6607 = vld [vmem:[%s5 + $0x5f8] sm:$0xff]
    %v6608 = vld [vmem:[%s5 + $0x600] sm:$0xff]
    %v6609 = vld [vmem:[%s5 + $0x608] sm:$0xff]
    %v6610 = vld [vmem:[%s5 + $0x610] sm:$0xff]
    %v6611 = vld [vmem:[%s5 + $0x618] sm:$0xff]
    %v6612 = vld [vmem:[%s5 + $0x620] sm:$0xff]
    %v6613 = vld [vmem:[%s5 + $0x628] sm:$0xff]
    %v6614 = vld [vmem:[%s5 + $0x630] sm:$0xff]
    %v6615 = vld [vmem:[%s5 + $0x638] sm:$0xff]
    %v6616 = vld [vmem:[%s5 + $0x640] sm:$0xff]
    %v6617 = vld [vmem:[%s5 + $0x648] sm:$0xff]
    %v6618 = vld [vmem:[%s5 + $0x650] sm:$0xff]
    %v6619 = vld [vmem:[%s5 + $0x658] sm:$0xff]
    %v6620 = vld [vmem:[%s5 + $0x660] sm:$0xff]
    %v6621 = vld [vmem:[%s5 + $0x668] sm:$0xff]
    %v6622 = vld [vmem:[%s5 + $0x670] sm:$0xff]
    %v6623 = vld [vmem:[%s5 + $0x678] sm:$0xff]
    %v6624 = vld [vmem:[%s5 + $0x680] sm:$0xff]
    %v6625 = vld [vmem:[%s5 + $0x688] sm:$0xff]
    %v6626 = vld [vmem:[%s5 + $0x690] sm:$0xff]
    %v6627 = vld [vmem:[%s5 + $0x698] sm:$0xff]
    %v6628 = vld [vmem:[%s5 + $0x6a0] sm:$0xff]
    %v6629 = vld [vmem:[%s5 + $0x6a8] sm:$0xff]
    %v6630 = vld [vmem:[%s5 + $0x6b0] sm:$0xff]
    %v6631 = vld [vmem:[%s5 + $0x6b8] sm:$0xff]
    %v6632 = vld [vmem:[%s5 + $0x6c0] sm:$0xff]
    %v6633 = vld [vmem:[%s5 + $0x6c8] sm:$0xff]
    %v6634 = vld [vmem:[%s5 + $0x6d0] sm:$0xff]
    %v6635 = vld [vmem:[%s5 + $0x6d8] sm:$0xff]
    %v6636 = vld [vmem:[%s5 + $0x6e0] sm:$0xff]
    %v6637 = vld [vmem:[%s5 + $0x6e8] sm:$0xff]
    %v6638 = vld [vmem:[%s5 + $0x6f0] sm:$0xff]
    %v6639 = vld [vmem:[%s5 + $0x6f8] sm:$0xff]
    %v6640 = vld [vmem:[%s5 + $0x700] sm:$0xff]
    %v6641 = vld [vmem:[%s5 + $0x708] sm:$0xff]
    %v6642 = vld [vmem:[%s5 + $0x710] sm:$0xff]
    %v6643 = vld [vmem:[%s5 + $0x718] sm:$0xff]
    %v6644 = vld [vmem:[%s5 + $0x720] sm:$0xff]
    %v6645 = vld [vmem:[%s5 + $0x728] sm:$0xff]
    %v6646 = vld [vmem:[%s5 + $0x730] sm:$0xff]
    %v6647 = vld [vmem:[%s5 + $0x738] sm:$0xff]
    %v6648 = vld [vmem:[%s5 + $0x740] sm:$0xff]
    %v6649 = vld [vmem:[%s5 + $0x748] sm:$0xff]
    %v6650 = vld [vmem:[%s5 + $0x750] sm:$0xff]
    %v6651 = vld [vmem:[%s5 + $0x758] sm:$0xff]
    %v6652 = vld [vmem:[%s5 + $0x760] sm:$0xff]
    %v6653 = vld [vmem:[%s5 + $0x768] sm:$0xff]
    %v6654 = vld [vmem:[%s5 + $0x770] sm:$0xff]
    %v6655 = vld [vmem:[%s5 + $0x778] sm:$0xff]
    %v6656 = vld [vmem:[%s5 + $0x780] sm:$0xff]
    %v6657 = vld [vmem:[%s5 + $0x788] sm:$0xff]
    %v6658 = vld [vmem:[%s5 + $0x790] sm:$0xff]
    %v6659 = vld [vmem:[%s5 + $0x798] sm:$0xff]
    %v6660 = vld [vmem:[%s5 + $0x7a0] sm:$0xff]
    %v6661 = vld [vmem:[%s5 + $0x7a8] sm:$0xff]
    %v6662 = vld [vmem:[%s5 + $0x7b0] sm:$0xff]
    %v6663 = vld [vmem:[%s5 + $0x7b8] sm:$0xff]
    %v6664 = vld [vmem:[%s5 + $0x7c0] sm:$0xff]
    %v6665 = vld [vmem:[%s5 + $0x7c8] sm:$0xff]
    %v6666 = vld [vmem:[%s5 + $0x7d0] sm:$0xff]
    %v6667 = vld [vmem:[%s5 + $0x7d8] sm:$0xff]
    %v6668 = vld [vmem:[%s5 + $0x7e0] sm:$0xff]
    %v6669 = vld [vmem:[%s5 + $0x7e8] sm:$0xff]
    %v6670 = vld [vmem:[%s5 + $0x7f0] sm:$0xff]
    %v6671 = vld [vmem:[%s5 + $0x7f8] sm:$0xff]
    %v6672 = vld [vmem:[%s6] sm:$0x3]
    %v6674 = vlaneseq
    %v6675 = vshrl.u32 %v6674, 7
    %v6676 = vsub.s32 0, %v6675
    %v6677 = vrot.slane %v6672, %v6676
    %v6678 = vlaneseq
    %v6679 = vshrl.u32 %v6678, 7
    %v6680 = vsub.s32 1, %v6679
    %v6681 = vrot.slane %v6672, %v6680
    %v6716 = vunpack.c.l.b16 %v6384
    %v6717 = vunpack.c.l.b16 %v6385
    %v6718 = vunpack.c.l.b16 %v6386
    %v6719 = vunpack.c.l.b16 %v6387
    %v6720 = vunpack.c.l.b16 %v6388
    %v6721 = vunpack.c.l.b16 %v6389
    %v6722 = vunpack.c.l.b16 %v6390
    %v6723 = vunpack.c.l.b16 %v6391
    %v6724 = vunpack.c.l.b16 %v6392
    %v6725 = vunpack.c.l.b16 %v6393
    %v6726 = vunpack.c.l.b16 %v6394
    %v6727 = vunpack.c.l.b16 %v6395
    %v6728 = vunpack.c.l.b16 %v6396
    %v6729 = vunpack.c.l.b16 %v6397
    %v6730 = vunpack.c.l.b16 %v6398
    %v6731 = vunpack.c.l.b16 %v6399
    %v6732 = vunpack.c.l.b16 %v6400
    %v6733 = vunpack.c.l.b16 %v6401
    %v6734 = vunpack.c.l.b16 %v6402
    %v6735 = vunpack.c.l.b16 %v6403
    %v6736 = vunpack.c.l.b16 %v6404
    %v6737 = vunpack.c.l.b16 %v6405
    %v6738 = vunpack.c.l.b16 %v6406
    %v6739 = vunpack.c.l.b16 %v6407
    %v6740 = vunpack.c.l.b16 %v6408
    %v6741 = vunpack.c.l.b16 %v6409
    %v6742 = vunpack.c.l.b16 %v6410
    %v6743 = vunpack.c.l.b16 %v6411
    %v6744 = vunpack.c.l.b16 %v6412
    %v6745 = vunpack.c.l.b16 %v6413
    %v6746 = vunpack.c.l.b16 %v6414
    %v6747 = vunpack.c.l.b16 %v6415
    %v6748 = vsel %vm885, %v6732, %v6716
    %v6749 = vsel %vm885, %v6733, %v6717
    %v6750 = vsel %vm885, %v6734, %v6718
    %v6751 = vsel %vm885, %v6735, %v6719
    %v6752 = vsel %vm885, %v6736, %v6720
    %v6753 = vsel %vm885, %v6737, %v6721
    %v6754 = vsel %vm885, %v6738, %v6722
    %v6755 = vsel %vm885, %v6739, %v6723
    %v6756 = vsel %vm885, %v6740, %v6724
    %v6757 = vsel %vm885, %v6741, %v6725
    %v6758 = vsel %vm885, %v6742, %v6726
    %v6759 = vsel %vm885, %v6743, %v6727
    %v6760 = vsel %vm885, %v6744, %v6728
    %v6761 = vsel %vm885, %v6745, %v6729
    %v6762 = vsel %vm885, %v6746, %v6730
    %v6763 = vsel %vm885, %v6747, %v6731
    %v6764 = vpack.c.b16 %v6748, %v6748
    %v6765 = vpack.c.b16 %v6749, %v6749
    %v6766 = vpack.c.b16 %v6750, %v6750
    %v6767 = vpack.c.b16 %v6751, %v6751
    %v6768 = vpack.c.b16 %v6752, %v6752
    %v6769 = vpack.c.b16 %v6753, %v6753
    %v6770 = vpack.c.b16 %v6754, %v6754
    %v6771 = vpack.c.b16 %v6755, %v6755
    %v6772 = vpack.c.b16 %v6756, %v6756
    %v6773 = vpack.c.b16 %v6757, %v6757
    %v6774 = vpack.c.b16 %v6758, %v6758
    %v6775 = vpack.c.b16 %v6759, %v6759
    %v6776 = vpack.c.b16 %v6760, %v6760
    %v6777 = vpack.c.b16 %v6761, %v6761
    %v6778 = vpack.c.b16 %v6762, %v6762
    %v6779 = vpack.c.b16 %v6763, %v6763
    %v7052 = vunpack.c.l.b16 %v6416
    %v7053 = vunpack.c.h.b16 %v6416
    %v7054 = vunpack.c.l.b16 %v6417
    %v7055 = vunpack.c.h.b16 %v6417
    %v7056 = vunpack.c.l.b16 %v6418
    %v7057 = vunpack.c.h.b16 %v6418
    %v7058 = vunpack.c.l.b16 %v6419
    %v7059 = vunpack.c.h.b16 %v6419
    %v7060 = vunpack.c.l.b16 %v6420
    %v7061 = vunpack.c.h.b16 %v6420
    %v7062 = vunpack.c.l.b16 %v6421
    %v7063 = vunpack.c.h.b16 %v6421
    %v7064 = vunpack.c.l.b16 %v6422
    %v7065 = vunpack.c.h.b16 %v6422
    %v7066 = vunpack.c.l.b16 %v6423
    %v7067 = vunpack.c.h.b16 %v6423
    %v7068 = vunpack.c.l.b16 %v6424
    %v7069 = vunpack.c.h.b16 %v6424
    %v7070 = vunpack.c.l.b16 %v6425
    %v7071 = vunpack.c.h.b16 %v6425
    %v7072 = vunpack.c.l.b16 %v6426
    %v7073 = vunpack.c.h.b16 %v6426
    %v7074 = vunpack.c.l.b16 %v6427
    %v7075 = vunpack.c.h.b16 %v6427
    %v7076 = vunpack.c.l.b16 %v6428
    %v7077 = vunpack.c.h.b16 %v6428
    %v7078 = vunpack.c.l.b16 %v6429
    %v7079 = vunpack.c.h.b16 %v6429
    %v7080 = vunpack.c.l.b16 %v6430
    %v7081 = vunpack.c.h.b16 %v6430
    %v7082 = vunpack.c.l.b16 %v6431
    %v7083 = vunpack.c.h.b16 %v6431
    %v7084 = vunpack.c.l.b16 %v6432
    %v7085 = vunpack.c.h.b16 %v6432
    %v7086 = vunpack.c.l.b16 %v6433
    %v7087 = vunpack.c.h.b16 %v6433
    %v7088 = vunpack.c.l.b16 %v6434
    %v7089 = vunpack.c.h.b16 %v6434
    %v7090 = vunpack.c.l.b16 %v6435
    %v7091 = vunpack.c.h.b16 %v6435
    %v7092 = vunpack.c.l.b16 %v6436
    %v7093 = vunpack.c.h.b16 %v6436
    %v7094 = vunpack.c.l.b16 %v6437
    %v7095 = vunpack.c.h.b16 %v6437
    %v7096 = vunpack.c.l.b16 %v6438
    %v7097 = vunpack.c.h.b16 %v6438
    %v7098 = vunpack.c.l.b16 %v6439
    %v7099 = vunpack.c.h.b16 %v6439
    %v7100 = vunpack.c.l.b16 %v6440
    %v7101 = vunpack.c.h.b16 %v6440
    %v7102 = vunpack.c.l.b16 %v6441
    %v7103 = vunpack.c.h.b16 %v6441
    %v7104 = vunpack.c.l.b16 %v6442
    %v7105 = vunpack.c.h.b16 %v6442
    %v7106 = vunpack.c.l.b16 %v6443
    %v7107 = vunpack.c.h.b16 %v6443
    %v7108 = vunpack.c.l.b16 %v6444
    %v7109 = vunpack.c.h.b16 %v6444
    %v7110 = vunpack.c.l.b16 %v6445
    %v7111 = vunpack.c.h.b16 %v6445
    %v7112 = vunpack.c.l.b16 %v6446
    %v7113 = vunpack.c.h.b16 %v6446
    %v7114 = vunpack.c.l.b16 %v6447
    %v7115 = vunpack.c.h.b16 %v6447
    %v7116 = vunpack.c.l.b16 %v6448
    %v7117 = vunpack.c.h.b16 %v6448
    %v7118 = vunpack.c.l.b16 %v6449
    %v7119 = vunpack.c.h.b16 %v6449
    %v7120 = vunpack.c.l.b16 %v6450
    %v7121 = vunpack.c.h.b16 %v6450
    %v7122 = vunpack.c.l.b16 %v6451
    %v7123 = vunpack.c.h.b16 %v6451
    %v7124 = vunpack.c.l.b16 %v6452
    %v7125 = vunpack.c.h.b16 %v6452
    %v7126 = vunpack.c.l.b16 %v6453
    %v7127 = vunpack.c.h.b16 %v6453
    %v7128 = vunpack.c.l.b16 %v6454
    %v7129 = vunpack.c.h.b16 %v6454
    %v7130 = vunpack.c.l.b16 %v6455
    %v7131 = vunpack.c.h.b16 %v6455
    %v7132 = vunpack.c.l.b16 %v6456
    %v7133 = vunpack.c.h.b16 %v6456
    %v7134 = vunpack.c.l.b16 %v6457
    %v7135 = vunpack.c.h.b16 %v6457
    %v7136 = vunpack.c.l.b16 %v6458
    %v7137 = vunpack.c.h.b16 %v6458
    %v7138 = vunpack.c.l.b16 %v6459
    %v7139 = vunpack.c.h.b16 %v6459
    %v7140 = vunpack.c.l.b16 %v6460
    %v7141 = vunpack.c.h.b16 %v6460
    %v7142 = vunpack.c.l.b16 %v6461
    %v7143 = vunpack.c.h.b16 %v6461
    %v7144 = vunpack.c.l.b16 %v6462
    %v7145 = vunpack.c.h.b16 %v6462
    %v7146 = vunpack.c.l.b16 %v6463
    %v7147 = vunpack.c.h.b16 %v6463
    %v7148 = vunpack.c.l.b16 %v6464
    %v7149 = vunpack.c.h.b16 %v6464
    %v7150 = vunpack.c.l.b16 %v6465
    %v7151 = vunpack.c.h.b16 %v6465
    %v7152 = vunpack.c.l.b16 %v6466
    %v7153 = vunpack.c.h.b16 %v6466
    %v7154 = vunpack.c.l.b16 %v6467
    %v7155 = vunpack.c.h.b16 %v6467
    %v7156 = vunpack.c.l.b16 %v6468
    %v7157 = vunpack.c.h.b16 %v6468
    %v7158 = vunpack.c.l.b16 %v6469
    %v7159 = vunpack.c.h.b16 %v6469
    %v7160 = vunpack.c.l.b16 %v6470
    %v7161 = vunpack.c.h.b16 %v6470
    %v7162 = vunpack.c.l.b16 %v6471
    %v7163 = vunpack.c.h.b16 %v6471
    %v7164 = vunpack.c.l.b16 %v6472
    %v7165 = vunpack.c.h.b16 %v6472
    %v7166 = vunpack.c.l.b16 %v6473
    %v7167 = vunpack.c.h.b16 %v6473
    %v7168 = vunpack.c.l.b16 %v6474
    %v7169 = vunpack.c.h.b16 %v6474
    %v7170 = vunpack.c.l.b16 %v6475
    %v7171 = vunpack.c.h.b16 %v6475
    %v7172 = vunpack.c.l.b16 %v6476
    %v7173 = vunpack.c.h.b16 %v6476
    %v7174 = vunpack.c.l.b16 %v6477
    %v7175 = vunpack.c.h.b16 %v6477
    %v7176 = vunpack.c.l.b16 %v6478
    %v7177 = vunpack.c.h.b16 %v6478
    %v7178 = vunpack.c.l.b16 %v6479
    %v7179 = vunpack.c.h.b16 %v6479
    %v7180 = vunpack.c.l.b16 %v6480
    %v7181 = vunpack.c.h.b16 %v6480
    %v7182 = vunpack.c.l.b16 %v6481
    %v7183 = vunpack.c.h.b16 %v6481
    %v7184 = vunpack.c.l.b16 %v6482
    %v7185 = vunpack.c.h.b16 %v6482
    %v7186 = vunpack.c.l.b16 %v6483
    %v7187 = vunpack.c.h.b16 %v6483
    %v7188 = vunpack.c.l.b16 %v6484
    %v7189 = vunpack.c.h.b16 %v6484
    %v7190 = vunpack.c.l.b16 %v6485
    %v7191 = vunpack.c.h.b16 %v6485
    %v7192 = vunpack.c.l.b16 %v6486
    %v7193 = vunpack.c.h.b16 %v6486
    %v7194 = vunpack.c.l.b16 %v6487
    %v7195 = vunpack.c.h.b16 %v6487
    %v7196 = vunpack.c.l.b16 %v6488
    %v7197 = vunpack.c.h.b16 %v6488
    %v7198 = vunpack.c.l.b16 %v6489
    %v7199 = vunpack.c.h.b16 %v6489
    %v7200 = vunpack.c.l.b16 %v6490
    %v7201 = vunpack.c.h.b16 %v6490
    %v7202 = vunpack.c.l.b16 %v6491
    %v7203 = vunpack.c.h.b16 %v6491
    %v7204 = vunpack.c.l.b16 %v6492
    %v7205 = vunpack.c.h.b16 %v6492
    %v7206 = vunpack.c.l.b16 %v6493
    %v7207 = vunpack.c.h.b16 %v6493
    %v7208 = vunpack.c.l.b16 %v6494
    %v7209 = vunpack.c.h.b16 %v6494
    %v7210 = vunpack.c.l.b16 %v6495
    %v7211 = vunpack.c.h.b16 %v6495
    %v7212 = vunpack.c.l.b16 %v6496
    %v7213 = vunpack.c.h.b16 %v6496
    %v7214 = vunpack.c.l.b16 %v6497
    %v7215 = vunpack.c.h.b16 %v6497
    %v7216 = vunpack.c.l.b16 %v6498
    %v7217 = vunpack.c.h.b16 %v6498
    %v7218 = vunpack.c.l.b16 %v6499
    %v7219 = vunpack.c.h.b16 %v6499
    %v7220 = vunpack.c.l.b16 %v6500
    %v7221 = vunpack.c.h.b16 %v6500
    %v7222 = vunpack.c.l.b16 %v6501
    %v7223 = vunpack.c.h.b16 %v6501
    %v7224 = vunpack.c.l.b16 %v6502
    %v7225 = vunpack.c.h.b16 %v6502
    %v7226 = vunpack.c.l.b16 %v6503
    %v7227 = vunpack.c.h.b16 %v6503
    %v7228 = vunpack.c.l.b16 %v6504
    %v7229 = vunpack.c.h.b16 %v6504
    %v7230 = vunpack.c.l.b16 %v6505
    %v7231 = vunpack.c.h.b16 %v6505
    %v7232 = vunpack.c.l.b16 %v6506
    %v7233 = vunpack.c.h.b16 %v6506
    %v7234 = vunpack.c.l.b16 %v6507
    %v7235 = vunpack.c.h.b16 %v6507
    %v7236 = vunpack.c.l.b16 %v6508
    %v7237 = vunpack.c.h.b16 %v6508
    %v7238 = vunpack.c.l.b16 %v6509
    %v7239 = vunpack.c.h.b16 %v6509
    %v7240 = vunpack.c.l.b16 %v6510
    %v7241 = vunpack.c.h.b16 %v6510
    %v7242 = vunpack.c.l.b16 %v6511
    %v7243 = vunpack.c.h.b16 %v6511
    %v7244 = vunpack.c.l.b16 %v6512
    %v7245 = vunpack.c.h.b16 %v6512
    %v7246 = vunpack.c.l.b16 %v6513
    %v7247 = vunpack.c.h.b16 %v6513
    %v7248 = vunpack.c.l.b16 %v6514
    %v7249 = vunpack.c.h.b16 %v6514
    %v7250 = vunpack.c.l.b16 %v6515
    %v7251 = vunpack.c.h.b16 %v6515
    %v7252 = vunpack.c.l.b16 %v6516
    %v7253 = vunpack.c.h.b16 %v6516
    %v7254 = vunpack.c.l.b16 %v6517
    %v7255 = vunpack.c.h.b16 %v6517
    %v7256 = vunpack.c.l.b16 %v6518
    %v7257 = vunpack.c.h.b16 %v6518
    %v7258 = vunpack.c.l.b16 %v6519
    %v7259 = vunpack.c.h.b16 %v6519
    %v7260 = vunpack.c.l.b16 %v6520
    %v7261 = vunpack.c.h.b16 %v6520
    %v7262 = vunpack.c.l.b16 %v6521
    %v7263 = vunpack.c.h.b16 %v6521
    %v7264 = vunpack.c.l.b16 %v6522
    %v7265 = vunpack.c.h.b16 %v6522
    %v7266 = vunpack.c.l.b16 %v6523
    %v7267 = vunpack.c.h.b16 %v6523
    %v7268 = vunpack.c.l.b16 %v6524
    %v7269 = vunpack.c.h.b16 %v6524
    %v7270 = vunpack.c.l.b16 %v6525
    %v7271 = vunpack.c.h.b16 %v6525
    %v7272 = vunpack.c.l.b16 %v6526
    %v7273 = vunpack.c.h.b16 %v6526
    %v7274 = vunpack.c.l.b16 %v6527
    %v7275 = vunpack.c.h.b16 %v6527
    %v7276 = vunpack.c.l.b16 %v6528
    %v7277 = vunpack.c.h.b16 %v6528
    %v7278 = vunpack.c.l.b16 %v6529
    %v7279 = vunpack.c.h.b16 %v6529
    %v7280 = vunpack.c.l.b16 %v6530
    %v7281 = vunpack.c.h.b16 %v6530
    %v7282 = vunpack.c.l.b16 %v6531
    %v7283 = vunpack.c.h.b16 %v6531
    %v7284 = vunpack.c.l.b16 %v6532
    %v7285 = vunpack.c.h.b16 %v6532
    %v7286 = vunpack.c.l.b16 %v6533
    %v7287 = vunpack.c.h.b16 %v6533
    %v7288 = vunpack.c.l.b16 %v6534
    %v7289 = vunpack.c.h.b16 %v6534
    %v7290 = vunpack.c.l.b16 %v6535
    %v7291 = vunpack.c.h.b16 %v6535
    %v7292 = vunpack.c.l.b16 %v6536
    %v7293 = vunpack.c.h.b16 %v6536
    %v7294 = vunpack.c.l.b16 %v6537
    %v7295 = vunpack.c.h.b16 %v6537
    %v7296 = vunpack.c.l.b16 %v6538
    %v7297 = vunpack.c.h.b16 %v6538
    %v7298 = vunpack.c.l.b16 %v6539
    %v7299 = vunpack.c.h.b16 %v6539
    %v7300 = vunpack.c.l.b16 %v6540
    %v7301 = vunpack.c.h.b16 %v6540
    %v7302 = vunpack.c.l.b16 %v6541
    %v7303 = vunpack.c.h.b16 %v6541
    %v7304 = vunpack.c.l.b16 %v6542
    %v7305 = vunpack.c.h.b16 %v6542
    %v7306 = vunpack.c.l.b16 %v6543
    %v7307 = vunpack.c.h.b16 %v6543
    %v7308 = vunpack.c.l.b16 %v6544
    %v7309 = vunpack.c.h.b16 %v6544
    %v7310 = vunpack.c.l.b16 %v6545
    %v7311 = vunpack.c.h.b16 %v6545
    %v7312 = vunpack.c.l.b16 %v6546
    %v7313 = vunpack.c.h.b16 %v6546
    %v7314 = vunpack.c.l.b16 %v6547
    %v7315 = vunpack.c.h.b16 %v6547
    %v7316 = vunpack.c.l.b16 %v6548
    %v7317 = vunpack.c.h.b16 %v6548
    %v7318 = vunpack.c.l.b16 %v6549
    %v7319 = vunpack.c.h.b16 %v6549
    %v7320 = vunpack.c.l.b16 %v6550
    %v7321 = vunpack.c.h.b16 %v6550
    %v7322 = vunpack.c.l.b16 %v6551
    %v7323 = vunpack.c.h.b16 %v6551
    %v7324 = vunpack.c.l.b16 %v6552
    %v7325 = vunpack.c.h.b16 %v6552
    %v7326 = vunpack.c.l.b16 %v6553
    %v7327 = vunpack.c.h.b16 %v6553
    %v7328 = vunpack.c.l.b16 %v6554
    %v7329 = vunpack.c.h.b16 %v6554
    %v7330 = vunpack.c.l.b16 %v6555
    %v7331 = vunpack.c.h.b16 %v6555
    %v7332 = vunpack.c.l.b16 %v6556
    %v7333 = vunpack.c.h.b16 %v6556
    %v7334 = vunpack.c.l.b16 %v6557
    %v7335 = vunpack.c.h.b16 %v6557
    %v7336 = vunpack.c.l.b16 %v6558
    %v7337 = vunpack.c.h.b16 %v6558
    %v7338 = vunpack.c.l.b16 %v6559
    %v7339 = vunpack.c.h.b16 %v6559
    %v7340 = vunpack.c.l.b16 %v6560
    %v7341 = vunpack.c.h.b16 %v6560
    %v7342 = vunpack.c.l.b16 %v6561
    %v7343 = vunpack.c.h.b16 %v6561
    %v7344 = vunpack.c.l.b16 %v6562
    %v7345 = vunpack.c.h.b16 %v6562
    %v7346 = vunpack.c.l.b16 %v6563
    %v7347 = vunpack.c.h.b16 %v6563
    %v7348 = vunpack.c.l.b16 %v6564
    %v7349 = vunpack.c.h.b16 %v6564
    %v7350 = vunpack.c.l.b16 %v6565
    %v7351 = vunpack.c.h.b16 %v6565
    %v7352 = vunpack.c.l.b16 %v6566
    %v7353 = vunpack.c.h.b16 %v6566
    %v7354 = vunpack.c.l.b16 %v6567
    %v7355 = vunpack.c.h.b16 %v6567
    %v7356 = vunpack.c.l.b16 %v6568
    %v7357 = vunpack.c.h.b16 %v6568
    %v7358 = vunpack.c.l.b16 %v6569
    %v7359 = vunpack.c.h.b16 %v6569
    %v7360 = vunpack.c.l.b16 %v6570
    %v7361 = vunpack.c.h.b16 %v6570
    %v7362 = vunpack.c.l.b16 %v6571
    %v7363 = vunpack.c.h.b16 %v6571
    %v7364 = vunpack.c.l.b16 %v6572
    %v7365 = vunpack.c.h.b16 %v6572
    %v7366 = vunpack.c.l.b16 %v6573
    %v7367 = vunpack.c.h.b16 %v6573
    %v7368 = vunpack.c.l.b16 %v6574
    %v7369 = vunpack.c.h.b16 %v6574
    %v7370 = vunpack.c.l.b16 %v6575
    %v7371 = vunpack.c.h.b16 %v6575
    %v7372 = vunpack.c.l.b16 %v6576
    %v7373 = vunpack.c.h.b16 %v6576
    %v7374 = vunpack.c.l.b16 %v6577
    %v7375 = vunpack.c.h.b16 %v6577
    %v7376 = vunpack.c.l.b16 %v6578
    %v7377 = vunpack.c.h.b16 %v6578
    %v7378 = vunpack.c.l.b16 %v6579
    %v7379 = vunpack.c.h.b16 %v6579
    %v7380 = vunpack.c.l.b16 %v6580
    %v7381 = vunpack.c.h.b16 %v6580
    %v7382 = vunpack.c.l.b16 %v6581
    %v7383 = vunpack.c.h.b16 %v6581
    %v7384 = vunpack.c.l.b16 %v6582
    %v7385 = vunpack.c.h.b16 %v6582
    %v7386 = vunpack.c.l.b16 %v6583
    %v7387 = vunpack.c.h.b16 %v6583
    %v7388 = vunpack.c.l.b16 %v6584
    %v7389 = vunpack.c.h.b16 %v6584
    %v7390 = vunpack.c.l.b16 %v6585
    %v7391 = vunpack.c.h.b16 %v6585
    %v7392 = vunpack.c.l.b16 %v6586
    %v7393 = vunpack.c.h.b16 %v6586
    %v7394 = vunpack.c.l.b16 %v6587
    %v7395 = vunpack.c.h.b16 %v6587
    %v7396 = vunpack.c.l.b16 %v6588
    %v7397 = vunpack.c.h.b16 %v6588
    %v7398 = vunpack.c.l.b16 %v6589
    %v7399 = vunpack.c.h.b16 %v6589
    %v7400 = vunpack.c.l.b16 %v6590
    %v7401 = vunpack.c.h.b16 %v6590
    %v7402 = vunpack.c.l.b16 %v6591
    %v7403 = vunpack.c.h.b16 %v6591
    %v7404 = vunpack.c.l.b16 %v6592
    %v7405 = vunpack.c.h.b16 %v6592
    %v7406 = vunpack.c.l.b16 %v6593
    %v7407 = vunpack.c.h.b16 %v6593
    %v7408 = vunpack.c.l.b16 %v6594
    %v7409 = vunpack.c.h.b16 %v6594
    %v7410 = vunpack.c.l.b16 %v6595
    %v7411 = vunpack.c.h.b16 %v6595
    %v7412 = vunpack.c.l.b16 %v6596
    %v7413 = vunpack.c.h.b16 %v6596
    %v7414 = vunpack.c.l.b16 %v6597
    %v7415 = vunpack.c.h.b16 %v6597
    %v7416 = vunpack.c.l.b16 %v6598
    %v7417 = vunpack.c.h.b16 %v6598
    %v7418 = vunpack.c.l.b16 %v6599
    %v7419 = vunpack.c.h.b16 %v6599
    %v7420 = vunpack.c.l.b16 %v6600
    %v7421 = vunpack.c.h.b16 %v6600
    %v7422 = vunpack.c.l.b16 %v6601
    %v7423 = vunpack.c.h.b16 %v6601
    %v7424 = vunpack.c.l.b16 %v6602
    %v7425 = vunpack.c.h.b16 %v6602
    %v7426 = vunpack.c.l.b16 %v6603
    %v7427 = vunpack.c.h.b16 %v6603
    %v7428 = vunpack.c.l.b16 %v6604
    %v7429 = vunpack.c.h.b16 %v6604
    %v7430 = vunpack.c.l.b16 %v6605
    %v7431 = vunpack.c.h.b16 %v6605
    %v7432 = vunpack.c.l.b16 %v6606
    %v7433 = vunpack.c.h.b16 %v6606
    %v7434 = vunpack.c.l.b16 %v6607
    %v7435 = vunpack.c.h.b16 %v6607
    %v7436 = vunpack.c.l.b16 %v6608
    %v7437 = vunpack.c.h.b16 %v6608
    %v7438 = vunpack.c.l.b16 %v6609
    %v7439 = vunpack.c.h.b16 %v6609
    %v7440 = vunpack.c.l.b16 %v6610
    %v7441 = vunpack.c.h.b16 %v6610
    %v7442 = vunpack.c.l.b16 %v6611
    %v7443 = vunpack.c.h.b16 %v6611
    %v7444 = vunpack.c.l.b16 %v6612
    %v7445 = vunpack.c.h.b16 %v6612
    %v7446 = vunpack.c.l.b16 %v6613
    %v7447 = vunpack.c.h.b16 %v6613
    %v7448 = vunpack.c.l.b16 %v6614
    %v7449 = vunpack.c.h.b16 %v6614
    %v7450 = vunpack.c.l.b16 %v6615
    %v7451 = vunpack.c.h.b16 %v6615
    %v7452 = vunpack.c.l.b16 %v6616
    %v7453 = vunpack.c.h.b16 %v6616
    %v7454 = vunpack.c.l.b16 %v6617
    %v7455 = vunpack.c.h.b16 %v6617
    %v7456 = vunpack.c.l.b16 %v6618
    %v7457 = vunpack.c.h.b16 %v6618
    %v7458 = vunpack.c.l.b16 %v6619
    %v7459 = vunpack.c.h.b16 %v6619
    %v7460 = vunpack.c.l.b16 %v6620
    %v7461 = vunpack.c.h.b16 %v6620
    %v7462 = vunpack.c.l.b16 %v6621
    %v7463 = vunpack.c.h.b16 %v6621
    %v7464 = vunpack.c.l.b16 %v6622
    %v7465 = vunpack.c.h.b16 %v6622
    %v7466 = vunpack.c.l.b16 %v6623
    %v7467 = vunpack.c.h.b16 %v6623
    %v7468 = vunpack.c.l.b16 %v6624
    %v7469 = vunpack.c.h.b16 %v6624
    %v7470 = vunpack.c.l.b16 %v6625
    %v7471 = vunpack.c.h.b16 %v6625
    %v7472 = vunpack.c.l.b16 %v6626
    %v7473 = vunpack.c.h.b16 %v6626
    %v7474 = vunpack.c.l.b16 %v6627
    %v7475 = vunpack.c.h.b16 %v6627
    %v7476 = vunpack.c.l.b16 %v6628
    %v7477 = vunpack.c.h.b16 %v6628
    %v7478 = vunpack.c.l.b16 %v6629
    %v7479 = vunpack.c.h.b16 %v6629
    %v7480 = vunpack.c.l.b16 %v6630
    %v7481 = vunpack.c.h.b16 %v6630
    %v7482 = vunpack.c.l.b16 %v6631
    %v7483 = vunpack.c.h.b16 %v6631
    %v7484 = vunpack.c.l.b16 %v6632
    %v7485 = vunpack.c.h.b16 %v6632
    %v7486 = vunpack.c.l.b16 %v6633
    %v7487 = vunpack.c.h.b16 %v6633
    %v7488 = vunpack.c.l.b16 %v6634
    %v7489 = vunpack.c.h.b16 %v6634
    %v7490 = vunpack.c.l.b16 %v6635
    %v7491 = vunpack.c.h.b16 %v6635
    %v7492 = vunpack.c.l.b16 %v6636
    %v7493 = vunpack.c.h.b16 %v6636
    %v7494 = vunpack.c.l.b16 %v6637
    %v7495 = vunpack.c.h.b16 %v6637
    %v7496 = vunpack.c.l.b16 %v6638
    %v7497 = vunpack.c.h.b16 %v6638
    %v7498 = vunpack.c.l.b16 %v6639
    %v7499 = vunpack.c.h.b16 %v6639
    %v7500 = vunpack.c.l.b16 %v6640
    %v7501 = vunpack.c.h.b16 %v6640
    %v7502 = vunpack.c.l.b16 %v6641
    %v7503 = vunpack.c.h.b16 %v6641
    %v7504 = vunpack.c.l.b16 %v6642
    %v7505 = vunpack.c.h.b16 %v6642
    %v7506 = vunpack.c.l.b16 %v6643
    %v7507 = vunpack.c.h.b16 %v6643
    %v7508 = vunpack.c.l.b16 %v6644
    %v7509 = vunpack.c.h.b16 %v6644
    %v7510 = vunpack.c.l.b16 %v6645
    %v7511 = vunpack.c.h.b16 %v6645
    %v7512 = vunpack.c.l.b16 %v6646
    %v7513 = vunpack.c.h.b16 %v6646
    %v7514 = vunpack.c.l.b16 %v6647
    %v7515 = vunpack.c.h.b16 %v6647
    %v7516 = vunpack.c.l.b16 %v6648
    %v7517 = vunpack.c.h.b16 %v6648
    %v7518 = vunpack.c.l.b16 %v6649
    %v7519 = vunpack.c.h.b16 %v6649
    %v7520 = vunpack.c.l.b16 %v6650
    %v7521 = vunpack.c.h.b16 %v6650
    %v7522 = vunpack.c.l.b16 %v6651
    %v7523 = vunpack.c.h.b16 %v6651
    %v7524 = vunpack.c.l.b16 %v6652
    %v7525 = vunpack.c.h.b16 %v6652
    %v7526 = vunpack.c.l.b16 %v6653
    %v7527 = vunpack.c.h.b16 %v6653
    %v7528 = vunpack.c.l.b16 %v6654
    %v7529 = vunpack.c.h.b16 %v6654
    %v7530 = vunpack.c.l.b16 %v6655
    %v7531 = vunpack.c.h.b16 %v6655
    %v7532 = vunpack.c.l.b16 %v6656
    %v7533 = vunpack.c.h.b16 %v6656
    %v7534 = vunpack.c.l.b16 %v6657
    %v7535 = vunpack.c.h.b16 %v6657
    %v7536 = vunpack.c.l.b16 %v6658
    %v7537 = vunpack.c.h.b16 %v6658
    %v7538 = vunpack.c.l.b16 %v6659
    %v7539 = vunpack.c.h.b16 %v6659
    %v7540 = vunpack.c.l.b16 %v6660
    %v7541 = vunpack.c.h.b16 %v6660
    %v7542 = vunpack.c.l.b16 %v6661
    %v7543 = vunpack.c.h.b16 %v6661
    %v7544 = vunpack.c.l.b16 %v6662
    %v7545 = vunpack.c.h.b16 %v6662
    %v7546 = vunpack.c.l.b16 %v6663
    %v7547 = vunpack.c.h.b16 %v6663
    %v7548 = vunpack.c.l.b16 %v6664
    %v7549 = vunpack.c.h.b16 %v6664
    %v7550 = vunpack.c.l.b16 %v6665
    %v7551 = vunpack.c.h.b16 %v6665
    %v7552 = vunpack.c.l.b16 %v6666
    %v7553 = vunpack.c.h.b16 %v6666
    %v7554 = vunpack.c.l.b16 %v6667
    %v7555 = vunpack.c.h.b16 %v6667
    %v7556 = vunpack.c.l.b16 %v6668
    %v7557 = vunpack.c.h.b16 %v6668
    %v7558 = vunpack.c.l.b16 %v6669
    %v7559 = vunpack.c.h.b16 %v6669
    %v7560 = vunpack.c.l.b16 %v6670
    %v7561 = vunpack.c.h.b16 %v6670
    %v7562 = vunpack.c.l.b16 %v6671
    %v7563 = vunpack.c.h.b16 %v6671
    %v7564 = vpack.c.b16 %v7054, %v7052
    %v7565 = vpack.c.b16 %v7055, %v7053
    %v7566 = vpack.c.b16 %v7058, %v7056
    %v7567 = vpack.c.b16 %v7059, %v7057
    %v7568 = vpack.c.b16 %v7062, %v7060
    %v7569 = vpack.c.b16 %v7063, %v7061
    %v7570 = vpack.c.b16 %v7066, %v7064
    %v7571 = vpack.c.b16 %v7067, %v7065
    %v7572 = vpack.c.b16 %v7070, %v7068
    %v7573 = vpack.c.b16 %v7071, %v7069
    %v7574 = vpack.c.b16 %v7074, %v7072
    %v7575 = vpack.c.b16 %v7075, %v7073
    %v7576 = vpack.c.b16 %v7078, %v7076
    %v7577 = vpack.c.b16 %v7079, %v7077
    %v7578 = vpack.c.b16 %v7082, %v7080
    %v7579 = vpack.c.b16 %v7083, %v7081
    %v7580 = vpack.c.b16 %v7086, %v7084
    %v7581 = vpack.c.b16 %v7087, %v7085
    %v7582 = vpack.c.b16 %v7090, %v7088
    %v7583 = vpack.c.b16 %v7091, %v7089
    %v7584 = vpack.c.b16 %v7094, %v7092
    %v7585 = vpack.c.b16 %v7095, %v7093
    %v7586 = vpack.c.b16 %v7098, %v7096
    %v7587 = vpack.c.b16 %v7099, %v7097
    %v7588 = vpack.c.b16 %v7102, %v7100
    %v7589 = vpack.c.b16 %v7103, %v7101
    %v7590 = vpack.c.b16 %v7106, %v7104
    %v7591 = vpack.c.b16 %v7107, %v7105
    %v7592 = vpack.c.b16 %v7110, %v7108
    %v7593 = vpack.c.b16 %v7111, %v7109
    %v7594 = vpack.c.b16 %v7114, %v7112
    %v7595 = vpack.c.b16 %v7115, %v7113
    %v7596 = vpack.c.b16 %v7118, %v7116
    %v7597 = vpack.c.b16 %v7119, %v7117
    %v7598 = vpack.c.b16 %v7122, %v7120
    %v7599 = vpack.c.b16 %v7123, %v7121
    %v7600 = vpack.c.b16 %v7126, %v7124
    %v7601 = vpack.c.b16 %v7127, %v7125
    %v7602 = vpack.c.b16 %v7130, %v7128
    %v7603 = vpack.c.b16 %v7131, %v7129
    %v7604 = vpack.c.b16 %v7134, %v7132
    %v7605 = vpack.c.b16 %v7135, %v7133
    %v7606 = vpack.c.b16 %v7138, %v7136
    %v7607 = vpack.c.b16 %v7139, %v7137
    %v7608 = vpack.c.b16 %v7142, %v7140
    %v7609 = vpack.c.b16 %v7143, %v7141
    %v7610 = vpack.c.b16 %v7146, %v7144
    %v7611 = vpack.c.b16 %v7147, %v7145
    %v7612 = vpack.c.b16 %v7150, %v7148
    %v7613 = vpack.c.b16 %v7151, %v7149
    %v7614 = vpack.c.b16 %v7154, %v7152
    %v7615 = vpack.c.b16 %v7155, %v7153
    %v7616 = vpack.c.b16 %v7158, %v7156
    %v7617 = vpack.c.b16 %v7159, %v7157
    %v7618 = vpack.c.b16 %v7162, %v7160
    %v7619 = vpack.c.b16 %v7163, %v7161
    %v7620 = vpack.c.b16 %v7166, %v7164
    %v7621 = vpack.c.b16 %v7167, %v7165
    %v7622 = vpack.c.b16 %v7170, %v7168
    %v7623 = vpack.c.b16 %v7171, %v7169
    %v7624 = vpack.c.b16 %v7174, %v7172
    %v7625 = vpack.c.b16 %v7175, %v7173
    %v7626 = vpack.c.b16 %v7178, %v7176
    %v7627 = vpack.c.b16 %v7179, %v7177
    %v7628 = vpack.c.b16 %v7182, %v7180
    %v7629 = vpack.c.b16 %v7183, %v7181
    %v7630 = vpack.c.b16 %v7186, %v7184
    %v7631 = vpack.c.b16 %v7187, %v7185
    %v7632 = vpack.c.b16 %v7190, %v7188
    %v7633 = vpack.c.b16 %v7191, %v7189
    %v7634 = vpack.c.b16 %v7194, %v7192
    %v7635 = vpack.c.b16 %v7195, %v7193
    %v7636 = vpack.c.b16 %v7198, %v7196
    %v7637 = vpack.c.b16 %v7199, %v7197
    %v7638 = vpack.c.b16 %v7202, %v7200
    %v7639 = vpack.c.b16 %v7203, %v7201
    %v7640 = vpack.c.b16 %v7206, %v7204
    %v7641 = vpack.c.b16 %v7207, %v7205
    %v7642 = vpack.c.b16 %v7210, %v7208
    %v7643 = vpack.c.b16 %v7211, %v7209
    %v7644 = vpack.c.b16 %v7214, %v7212
    %v7645 = vpack.c.b16 %v7215, %v7213
    %v7646 = vpack.c.b16 %v7218, %v7216
    %v7647 = vpack.c.b16 %v7219, %v7217
    %v7648 = vpack.c.b16 %v7222, %v7220
    %v7649 = vpack.c.b16 %v7223, %v7221
    %v7650 = vpack.c.b16 %v7226, %v7224
    %v7651 = vpack.c.b16 %v7227, %v7225
    %v7652 = vpack.c.b16 %v7230, %v7228
    %v7653 = vpack.c.b16 %v7231, %v7229
    %v7654 = vpack.c.b16 %v7234, %v7232
    %v7655 = vpack.c.b16 %v7235, %v7233
    %v7656 = vpack.c.b16 %v7238, %v7236
    %v7657 = vpack.c.b16 %v7239, %v7237
    %v7658 = vpack.c.b16 %v7242, %v7240
    %v7659 = vpack.c.b16 %v7243, %v7241
    %v7660 = vpack.c.b16 %v7246, %v7244
    %v7661 = vpack.c.b16 %v7247, %v7245
    %v7662 = vpack.c.b16 %v7250, %v7248
    %v7663 = vpack.c.b16 %v7251, %v7249
    %v7664 = vpack.c.b16 %v7254, %v7252
    %v7665 = vpack.c.b16 %v7255, %v7253
    %v7666 = vpack.c.b16 %v7258, %v7256
    %v7667 = vpack.c.b16 %v7259, %v7257
    %v7668 = vpack.c.b16 %v7262, %v7260
    %v7669 = vpack.c.b16 %v7263, %v7261
    %v7670 = vpack.c.b16 %v7266, %v7264
    %v7671 = vpack.c.b16 %v7267, %v7265
    %v7672 = vpack.c.b16 %v7270, %v7268
    %v7673 = vpack.c.b16 %v7271, %v7269
    %v7674 = vpack.c.b16 %v7274, %v7272
    %v7675 = vpack.c.b16 %v7275, %v7273
    %v7676 = vpack.c.b16 %v7278, %v7276
    %v7677 = vpack.c.b16 %v7279, %v7277
    %v7678 = vpack.c.b16 %v7282, %v7280
    %v7679 = vpack.c.b16 %v7283, %v7281
    %v7680 = vpack.c.b16 %v7286, %v7284
    %v7681 = vpack.c.b16 %v7287, %v7285
    %v7682 = vpack.c.b16 %v7290, %v7288
    %v7683 = vpack.c.b16 %v7291, %v7289
    %v7684 = vpack.c.b16 %v7294, %v7292
    %v7685 = vpack.c.b16 %v7295, %v7293
    %v7686 = vpack.c.b16 %v7298, %v7296
    %v7687 = vpack.c.b16 %v7299, %v7297
    %v7688 = vpack.c.b16 %v7302, %v7300
    %v7689 = vpack.c.b16 %v7303, %v7301
    %v7690 = vpack.c.b16 %v7306, %v7304
    %v7691 = vpack.c.b16 %v7307, %v7305
    %v7692 = vpack.c.b16 %v7310, %v7308
    %v7693 = vpack.c.b16 %v7311, %v7309
    %v7694 = vpack.c.b16 %v7314, %v7312
    %v7695 = vpack.c.b16 %v7315, %v7313
    %v7696 = vpack.c.b16 %v7318, %v7316
    %v7697 = vpack.c.b16 %v7319, %v7317
    %v7698 = vpack.c.b16 %v7322, %v7320
    %v7699 = vpack.c.b16 %v7323, %v7321
    %v7700 = vpack.c.b16 %v7326, %v7324
    %v7701 = vpack.c.b16 %v7327, %v7325
    %v7702 = vpack.c.b16 %v7330, %v7328
    %v7703 = vpack.c.b16 %v7331, %v7329
    %v7704 = vpack.c.b16 %v7334, %v7332
    %v7705 = vpack.c.b16 %v7335, %v7333
    %v7706 = vpack.c.b16 %v7338, %v7336
    %v7707 = vpack.c.b16 %v7339, %v7337
    %v7708 = vpack.c.b16 %v7342, %v7340
    %v7709 = vpack.c.b16 %v7343, %v7341
    %v7710 = vpack.c.b16 %v7346, %v7344
    %v7711 = vpack.c.b16 %v7347, %v7345
    %v7712 = vpack.c.b16 %v7350, %v7348
    %v7713 = vpack.c.b16 %v7351, %v7349
    %v7714 = vpack.c.b16 %v7354, %v7352
    %v7715 = vpack.c.b16 %v7355, %v7353
    %v7716 = vpack.c.b16 %v7358, %v7356
    %v7717 = vpack.c.b16 %v7359, %v7357
    %v7718 = vpack.c.b16 %v7362, %v7360
    %v7719 = vpack.c.b16 %v7363, %v7361
    %v7720 = vpack.c.b16 %v7366, %v7364
    %v7721 = vpack.c.b16 %v7367, %v7365
    %v7722 = vpack.c.b16 %v7370, %v7368
    %v7723 = vpack.c.b16 %v7371, %v7369
    %v7724 = vpack.c.b16 %v7374, %v7372
    %v7725 = vpack.c.b16 %v7375, %v7373
    %v7726 = vpack.c.b16 %v7378, %v7376
    %v7727 = vpack.c.b16 %v7379, %v7377
    %v7728 = vpack.c.b16 %v7382, %v7380
    %v7729 = vpack.c.b16 %v7383, %v7381
    %v7730 = vpack.c.b16 %v7386, %v7384
    %v7731 = vpack.c.b16 %v7387, %v7385
    %v7732 = vpack.c.b16 %v7390, %v7388
    %v7733 = vpack.c.b16 %v7391, %v7389
    %v7734 = vpack.c.b16 %v7394, %v7392
    %v7735 = vpack.c.b16 %v7395, %v7393
    %v7736 = vpack.c.b16 %v7398, %v7396
    %v7737 = vpack.c.b16 %v7399, %v7397
    %v7738 = vpack.c.b16 %v7402, %v7400
    %v7739 = vpack.c.b16 %v7403, %v7401
    %v7740 = vpack.c.b16 %v7406, %v7404
    %v7741 = vpack.c.b16 %v7407, %v7405
    %v7742 = vpack.c.b16 %v7410, %v7408
    %v7743 = vpack.c.b16 %v7411, %v7409
    %v7744 = vpack.c.b16 %v7414, %v7412
    %v7745 = vpack.c.b16 %v7415, %v7413
    %v7746 = vpack.c.b16 %v7418, %v7416
    %v7747 = vpack.c.b16 %v7419, %v7417
    %v7748 = vpack.c.b16 %v7422, %v7420
    %v7749 = vpack.c.b16 %v7423, %v7421
    %v7750 = vpack.c.b16 %v7426, %v7424
    %v7751 = vpack.c.b16 %v7427, %v7425
    %v7752 = vpack.c.b16 %v7430, %v7428
    %v7753 = vpack.c.b16 %v7431, %v7429
    %v7754 = vpack.c.b16 %v7434, %v7432
    %v7755 = vpack.c.b16 %v7435, %v7433
    %v7756 = vpack.c.b16 %v7438, %v7436
    %v7757 = vpack.c.b16 %v7439, %v7437
    %v7758 = vpack.c.b16 %v7442, %v7440
    %v7759 = vpack.c.b16 %v7443, %v7441
    %v7760 = vpack.c.b16 %v7446, %v7444
    %v7761 = vpack.c.b16 %v7447, %v7445
    %v7762 = vpack.c.b16 %v7450, %v7448
    %v7763 = vpack.c.b16 %v7451, %v7449
    %v7764 = vpack.c.b16 %v7454, %v7452
    %v7765 = vpack.c.b16 %v7455, %v7453
    %v7766 = vpack.c.b16 %v7458, %v7456
    %v7767 = vpack.c.b16 %v7459, %v7457
    %v7768 = vpack.c.b16 %v7462, %v7460
    %v7769 = vpack.c.b16 %v7463, %v7461
    %v7770 = vpack.c.b16 %v7466, %v7464
    %v7771 = vpack.c.b16 %v7467, %v7465
    %v7772 = vpack.c.b16 %v7470, %v7468
    %v7773 = vpack.c.b16 %v7471, %v7469
    %v7774 = vpack.c.b16 %v7474, %v7472
    %v7775 = vpack.c.b16 %v7475, %v7473
    %v7776 = vpack.c.b16 %v7478, %v7476
    %v7777 = vpack.c.b16 %v7479, %v7477
    %v7778 = vpack.c.b16 %v7482, %v7480
    %v7779 = vpack.c.b16 %v7483, %v7481
    %v7780 = vpack.c.b16 %v7486, %v7484
    %v7781 = vpack.c.b16 %v7487, %v7485
    %v7782 = vpack.c.b16 %v7490, %v7488
    %v7783 = vpack.c.b16 %v7491, %v7489
    %v7784 = vpack.c.b16 %v7494, %v7492
    %v7785 = vpack.c.b16 %v7495, %v7493
    %v7786 = vpack.c.b16 %v7498, %v7496
    %v7787 = vpack.c.b16 %v7499, %v7497
    %v7788 = vpack.c.b16 %v7502, %v7500
    %v7789 = vpack.c.b16 %v7503, %v7501
    %v7790 = vpack.c.b16 %v7506, %v7504
    %v7791 = vpack.c.b16 %v7507, %v7505
    %v7792 = vpack.c.b16 %v7510, %v7508
    %v7793 = vpack.c.b16 %v7511, %v7509
    %v7794 = vpack.c.b16 %v7514, %v7512
    %v7795 = vpack.c.b16 %v7515, %v7513
    %v7796 = vpack.c.b16 %v7518, %v7516
    %v7797 = vpack.c.b16 %v7519, %v7517
    %v7798 = vpack.c.b16 %v7522, %v7520
    %v7799 = vpack.c.b16 %v7523, %v7521
    %v7800 = vpack.c.b16 %v7526, %v7524
    %v7801 = vpack.c.b16 %v7527, %v7525
    %v7802 = vpack.c.b16 %v7530, %v7528
    %v7803 = vpack.c.b16 %v7531, %v7529
    %v7804 = vpack.c.b16 %v7534, %v7532
    %v7805 = vpack.c.b16 %v7535, %v7533
    %v7806 = vpack.c.b16 %v7538, %v7536
    %v7807 = vpack.c.b16 %v7539, %v7537
    %v7808 = vpack.c.b16 %v7542, %v7540
    %v7809 = vpack.c.b16 %v7543, %v7541
    %v7810 = vpack.c.b16 %v7546, %v7544
    %v7811 = vpack.c.b16 %v7547, %v7545
    %v7812 = vpack.c.b16 %v7550, %v7548
    %v7813 = vpack.c.b16 %v7551, %v7549
    %v7814 = vpack.c.b16 %v7554, %v7552
    %v7815 = vpack.c.b16 %v7555, %v7553
    %v7816 = vpack.c.b16 %v7558, %v7556
    %v7817 = vpack.c.b16 %v7559, %v7557
    %v7818 = vpack.c.b16 %v7562, %v7560
    %v7819 = vpack.c.b16 %v7563, %v7561
    %8076 = vmatprep.subr.bf16.mxu0 %v7579
    %8077 = vmatpush1.bf16.msra.mxu0 %v7578
    %8078 = vmatprep.subr.bf16.mxu0 %v7577
    %8079 = vmatpush1.bf16.msra.mxu0 %v7576
    %8080 = vmatprep.subr.bf16.mxu0 %v7575
    %8081 = vmatpush1.bf16.msra.mxu0 %v7574
    %8082 = vmatprep.subr.bf16.mxu0 %v7573
    %8083 = vmatpush1.bf16.msra.mxu0 %v7572
    %8084 = vmatprep.subr.bf16.mxu0 %v7571
    %8085 = vmatpush1.bf16.msra.mxu0 %v7570
    %8086 = vmatprep.subr.bf16.mxu0 %v7569
    %8087 = vmatpush1.bf16.msra.mxu0 %v7568
    %8088 = vmatprep.subr.bf16.mxu0 %v7567
    %8089 = vmatpush1.bf16.msra.mxu0 %v7566
    %8090 = vmatprep.subr.bf16.mxu0 %v7565
    %8091 = vmatpush1.bf16.msra.mxu0 %v7564
    %8092 = vmatprep.subr.bf16.mxu0 %v7595
    %8093 = vmatpush2.bf16.msra.mxu0 %v7594
    %8094 = vmatprep.subr.bf16.mxu0 %v7593
    %8095 = vmatpush2.bf16.msra.mxu0 %v7592
    %8096 = vmatprep.subr.bf16.mxu0 %v7591
    %8097 = vmatpush2.bf16.msra.mxu0 %v7590
    %8098 = vmatprep.subr.bf16.mxu0 %v7589
    %8099 = vmatpush2.bf16.msra.mxu0 %v7588
    %8100 = vmatprep.subr.bf16.mxu0 %v7587
    %8101 = vmatpush2.bf16.msra.mxu0 %v7586
    %8102 = vmatprep.subr.bf16.mxu0 %v7585
    %8103 = vmatpush2.bf16.msra.mxu0 %v7584
    %8104 = vmatprep.subr.bf16.mxu0 %v7583
    %8105 = vmatpush2.bf16.msra.mxu0 %v7582
    %8106 = vmatprep.subr.bf16.mxu0 %v7581
    %8107 = vmatpush2.bf16.msra.mxu0 %v7580
    %8108 = vmatprep.mubr.bf16.mxu0 %v6765
    %8109 = vmatmul.mubr.bf16.gmra.mxu0 %v6764
    %v8110 = vpop.f32.mrf.mxu0
    %v8111 = vadd.f32 %v6677, %v8110
    %v8112 = vpop.f32.mrf.mxu0
    %v8113 = vadd.f32 %v6681, %v8112
    %v8114 = vpop.f32.mrf.mxu0
    %v8115 = vpop.f32.mrf.mxu0
    %8116 = vdwg.mxu0
    %8117 = vmatprep.subr.bf16.mxu0 %v7611
    %8118 = vmatpush1.bf16.msra.mxu0 %v7610
    %8119 = vmatprep.subr.bf16.mxu0 %v7609
    %8120 = vmatpush1.bf16.msra.mxu0 %v7608
    %8121 = vmatprep.subr.bf16.mxu0 %v7607
    %8122 = vmatpush1.bf16.msra.mxu0 %v7606
    %8123 = vmatprep.subr.bf16.mxu0 %v7605
    %8124 = vmatpush1.bf16.msra.mxu0 %v7604
    %8125 = vmatprep.subr.bf16.mxu0 %v7603
    %8126 = vmatpush1.bf16.msra.mxu0 %v7602
    %8127 = vmatprep.subr.bf16.mxu0 %v7601
    %8128 = vmatpush1.bf16.msra.mxu0 %v7600
    %8129 = vmatprep.subr.bf16.mxu0 %v7599
    %8130 = vmatpush1.bf16.msra.mxu0 %v7598
    %8131 = vmatprep.subr.bf16.mxu0 %v7597
    %8132 = vmatpush1.bf16.msra.mxu0 %v7596
    %8133 = vmatprep.subr.bf16.mxu0 %v7627
    %8134 = vmatpush2.bf16.msra.mxu0 %v7626
    %8135 = vmatprep.subr.bf16.mxu0 %v7625
    %8136 = vmatpush2.bf16.msra.mxu0 %v7624
    %8137 = vmatprep.subr.bf16.mxu0 %v7623
    %8138 = vmatpush2.bf16.msra.mxu0 %v7622
    %8139 = vmatprep.subr.bf16.mxu0 %v7621
    %8140 = vmatpush2.bf16.msra.mxu0 %v7620
    %8141 = vmatprep.subr.bf16.mxu0 %v7619
    %8142 = vmatpush2.bf16.msra.mxu0 %v7618
    %8143 = vmatprep.subr.bf16.mxu0 %v7617
    %8144 = vmatpush2.bf16.msra.mxu0 %v7616
    %8145 = vmatprep.subr.bf16.mxu0 %v7615
    %8146 = vmatpush2.bf16.msra.mxu0 %v7614
    %8147 = vmatprep.subr.bf16.mxu0 %v7613
    %8148 = vmatpush2.bf16.msra.mxu0 %v7612
    %8149 = vmatprep.mubr.bf16.mxu0 %v6767
    %8150 = vmatmul.mubr.bf16.gmra.mxu0 %v6766
    %v8151 = vpop.f32.mrf.mxu0
    %v8152 = vadd.f32 %v8111, %v8151
    %v8153 = vpop.f32.mrf.mxu0
    %v8154 = vadd.f32 %v8113, %v8153
    %v8155 = vpop.f32.mrf.mxu0
    %v8156 = vpop.f32.mrf.mxu0
    %8157 = vdwg.mxu0
    %8158 = vmatprep.subr.bf16.mxu0 %v7643
    %8159 = vmatpush1.bf16.msra.mxu0 %v7642
    %8160 = vmatprep.subr.bf16.mxu0 %v7641
    %8161 = vmatpush1.bf16.msra.mxu0 %v7640
    %8162 = vmatprep.subr.bf16.mxu0 %v7639
    %8163 = vmatpush1.bf16.msra.mxu0 %v7638
    %8164 = vmatprep.subr.bf16.mxu0 %v7637
    %8165 = vmatpush1.bf16.msra.mxu0 %v7636
    %8166 = vmatprep.subr.bf16.mxu0 %v7635
    %8167 = vmatpush1.bf16.msra.mxu0 %v7634
    %8168 = vmatprep.subr.bf16.mxu0 %v7633
    %8169 = vmatpush1.bf16.msra.mxu0 %v7632
    %8170 = vmatprep.subr.bf16.mxu0 %v7631
    %8171 = vmatpush1.bf16.msra.mxu0 %v7630
    %8172 = vmatprep.subr.bf16.mxu0 %v7629
    %8173 = vmatpush1.bf16.msra.mxu0 %v7628
    %8174 = vmatprep.subr.bf16.mxu0 %v7659
    %8175 = vmatpush2.bf16.msra.mxu0 %v7658
    %8176 = vmatprep.subr.bf16.mxu0 %v7657
    %8177 = vmatpush2.bf16.msra.mxu0 %v7656
    %8178 = vmatprep.subr.bf16.mxu0 %v7655
    %8179 = vmatpush2.bf16.msra.mxu0 %v7654
    %8180 = vmatprep.subr.bf16.mxu0 %v7653
    %8181 = vmatpush2.bf16.msra.mxu0 %v7652
    %8182 = vmatprep.subr.bf16.mxu0 %v7651
    %8183 = vmatpush2.bf16.msra.mxu0 %v7650
    %8184 = vmatprep.subr.bf16.mxu0 %v7649
    %8185 = vmatpush2.bf16.msra.mxu0 %v7648
    %8186 = vmatprep.subr.bf16.mxu0 %v7647
    %8187 = vmatpush2.bf16.msra.mxu0 %v7646
    %8188 = vmatprep.subr.bf16.mxu0 %v7645
    %8189 = vmatpush2.bf16.msra.mxu0 %v7644
    %8190 = vmatprep.mubr.bf16.mxu0 %v6769
    %8191 = vmatmul.mubr.bf16.gmra.mxu0 %v6768
    %v8192 = vpop.f32.mrf.mxu0
    %v8193 = vadd.f32 %v8152, %v8192
    %v8194 = vpop.f32.mrf.mxu0
    %v8195 = vadd.f32 %v8154, %v8194
    %v8196 = vpop.f32.mrf.mxu0
    %v8197 = vpop.f32.mrf.mxu0
    %8198 = vdwg.mxu0
    %8199 = vmatprep.subr.bf16.mxu0 %v7675
    %8200 = vmatpush1.bf16.msra.mxu0 %v7674
    %8201 = vmatprep.subr.bf16.mxu0 %v7673
    %8202 = vmatpush1.bf16.msra.mxu0 %v7672
    %8203 = vmatprep.subr.bf16.mxu0 %v7671
    %8204 = vmatpush1.bf16.msra.mxu0 %v7670
    %8205 = vmatprep.subr.bf16.mxu0 %v7669
    %8206 = vmatpush1.bf16.msra.mxu0 %v7668
    %8207 = vmatprep.subr.bf16.mxu0 %v7667
    %8208 = vmatpush1.bf16.msra.mxu0 %v7666
    %8209 = vmatprep.subr.bf16.mxu0 %v7665
    %8210 = vmatpush1.bf16.msra.mxu0 %v7664
    %8211 = vmatprep.subr.bf16.mxu0 %v7663
    %8212 = vmatpush1.bf16.msra.mxu0 %v7662
    %8213 = vmatprep.subr.bf16.mxu0 %v7661
    %8214 = vmatpush1.bf16.msra.mxu0 %v7660
    %8215 = vmatprep.subr.bf16.mxu0 %v7691
    %8216 = vmatpush2.bf16.msra.mxu0 %v7690
    %8217 = vmatprep.subr.bf16.mxu0 %v7689
    %8218 = vmatpush2.bf16.msra.mxu0 %v7688
    %8219 = vmatprep.subr.bf16.mxu0 %v7687
    %8220 = vmatpush2.bf16.msra.mxu0 %v7686
    %8221 = vmatprep.subr.bf16.mxu0 %v7685
    %8222 = vmatpush2.bf16.msra.mxu0 %v7684
    %8223 = vmatprep.subr.bf16.mxu0 %v7683
    %8224 = vmatpush2.bf16.msra.mxu0 %v7682
    %8225 = vmatprep.subr.bf16.mxu0 %v7681
    %8226 = vmatpush2.bf16.msra.mxu0 %v7680
    %8227 = vmatprep.subr.bf16.mxu0 %v7679
    %8228 = vmatpush2.bf16.msra.mxu0 %v7678
    %8229 = vmatprep.subr.bf16.mxu0 %v7677
    %8230 = vmatpush2.bf16.msra.mxu0 %v7676
    %8231 = vmatprep.mubr.bf16.mxu0 %v6771
    %8232 = vmatmul.mubr.bf16.gmra.mxu0 %v6770
    %v8233 = vpop.f32.mrf.mxu0
    %v8234 = vadd.f32 %v8193, %v8233
    %v8235 = vpop.f32.mrf.mxu0
    %v8236 = vadd.f32 %v8195, %v8235
    %v8237 = vpop.f32.mrf.mxu0
    %v8238 = vpop.f32.mrf.mxu0
    %8239 = vdwg.mxu0
    %8240 = vmatprep.subr.bf16.mxu0 %v7707
    %8241 = vmatpush1.bf16.msra.mxu0 %v7706
    %8242 = vmatprep.subr.bf16.mxu0 %v7705
    %8243 = vmatpush1.bf16.msra.mxu0 %v7704
    %8244 = vmatprep.subr.bf16.mxu0 %v7703
    %8245 = vmatpush1.bf16.msra.mxu0 %v7702
    %8246 = vmatprep.subr.bf16.mxu0 %v7701
    %8247 = vmatpush1.bf16.msra.mxu0 %v7700
    %8248 = vmatprep.subr.bf16.mxu0 %v7699
    %8249 = vmatpush1.bf16.msra.mxu0 %v7698
    %8250 = vmatprep.subr.bf16.mxu0 %v7697
    %8251 = vmatpush1.bf16.msra.mxu0 %v7696
    %8252 = vmatprep.subr.bf16.mxu0 %v7695
    %8253 = vmatpush1.bf16.msra.mxu0 %v7694
    %8254 = vmatprep.subr.bf16.mxu0 %v7693
    %8255 = vmatpush1.bf16.msra.mxu0 %v7692
    %8256 = vmatprep.subr.bf16.mxu0 %v7723
    %8257 = vmatpush2.bf16.msra.mxu0 %v7722
    %8258 = vmatprep.subr.bf16.mxu0 %v7721
    %8259 = vmatpush2.bf16.msra.mxu0 %v7720
    %8260 = vmatprep.subr.bf16.mxu0 %v7719
    %8261 = vmatpush2.bf16.msra.mxu0 %v7718
    %8262 = vmatprep.subr.bf16.mxu0 %v7717
    %8263 = vmatpush2.bf16.msra.mxu0 %v7716
    %8264 = vmatprep.subr.bf16.mxu0 %v7715
    %8265 = vmatpush2.bf16.msra.mxu0 %v7714
    %8266 = vmatprep.subr.bf16.mxu0 %v7713
    %8267 = vmatpush2.bf16.msra.mxu0 %v7712
    %8268 = vmatprep.subr.bf16.mxu0 %v7711
    %8269 = vmatpush2.bf16.msra.mxu0 %v7710
    %8270 = vmatprep.subr.bf16.mxu0 %v7709
    %8271 = vmatpush2.bf16.msra.mxu0 %v7708
    %8272 = vmatprep.mubr.bf16.mxu0 %v6773
    %8273 = vmatmul.mubr.bf16.gmra.mxu0 %v6772
    %v8274 = vpop.f32.mrf.mxu0
    %v8275 = vadd.f32 %v8234, %v8274
    %v8276 = vpop.f32.mrf.mxu0
    %v8277 = vadd.f32 %v8236, %v8276
    %v8278 = vpop.f32.mrf.mxu0
    %v8279 = vpop.f32.mrf.mxu0
    %8280 = vdwg.mxu0
    %8281 = vmatprep.subr.bf16.mxu0 %v7739
    %8282 = vmatpush1.bf16.msra.mxu0 %v7738
    %8283 = vmatprep.subr.bf16.mxu0 %v7737
    %8284 = vmatpush1.bf16.msra.mxu0 %v7736
    %8285 = vmatprep.subr.bf16.mxu0 %v7735
    %8286 = vmatpush1.bf16.msra.mxu0 %v7734
    %8287 = vmatprep.subr.bf16.mxu0 %v7733
    %8288 = vmatpush1.bf16.msra.mxu0 %v7732
    %8289 = vmatprep.subr.bf16.mxu0 %v7731
    %8290 = vmatpush1.bf16.msra.mxu0 %v7730
    %8291 = vmatprep.subr.bf16.mxu0 %v7729
    %8292 = vmatpush1.bf16.msra.mxu0 %v7728
    %8293 = vmatprep.subr.bf16.mxu0 %v7727
    %8294 = vmatpush1.bf16.msra.mxu0 %v7726
    %8295 = vmatprep.subr.bf16.mxu0 %v7725
    %8296 = vmatpush1.bf16.msra.mxu0 %v7724
    %8297 = vmatprep.subr.bf16.mxu0 %v7755
    %8298 = vmatpush2.bf16.msra.mxu0 %v7754
    %8299 = vmatprep.subr.bf16.mxu0 %v7753
    %8300 = vmatpush2.bf16.msra.mxu0 %v7752
    %8301 = vmatprep.subr.bf16.mxu0 %v7751
    %8302 = vmatpush2.bf16.msra.mxu0 %v7750
    %8303 = vmatprep.subr.bf16.mxu0 %v7749
    %8304 = vmatpush2.bf16.msra.mxu0 %v7748
    %8305 = vmatprep.subr.bf16.mxu0 %v7747
    %8306 = vmatpush2.bf16.msra.mxu0 %v7746
    %8307 = vmatprep.subr.bf16.mxu0 %v7745
    %8308 = vmatpush2.bf16.msra.mxu0 %v7744
    %8309 = vmatprep.subr.bf16.mxu0 %v7743
    %8310 = vmatpush2.bf16.msra.mxu0 %v7742
    %8311 = vmatprep.subr.bf16.mxu0 %v7741
    %8312 = vmatpush2.bf16.msra.mxu0 %v7740
    %8313 = vmatprep.mubr.bf16.mxu0 %v6775
    %8314 = vmatmul.mubr.bf16.gmra.mxu0 %v6774
    %v8315 = vpop.f32.mrf.mxu0
    %v8316 = vadd.f32 %v8275, %v8315
    %v8317 = vpop.f32.mrf.mxu0
    %v8318 = vadd.f32 %v8277, %v8317
    %v8319 = vpop.f32.mrf.mxu0
    %v8320 = vpop.f32.mrf.mxu0
    %8321 = vdwg.mxu0
    %8322 = vmatprep.subr.bf16.mxu0 %v7771
    %8323 = vmatpush1.bf16.msra.mxu0 %v7770
    %8324 = vmatprep.subr.bf16.mxu0 %v7769
    %8325 = vmatpush1.bf16.msra.mxu0 %v7768
    %8326 = vmatprep.subr.bf16.mxu0 %v7767
    %8327 = vmatpush1.bf16.msra.mxu0 %v7766
    %8328 = vmatprep.subr.bf16.mxu0 %v7765
    %8329 = vmatpush1.bf16.msra.mxu0 %v7764
    %8330 = vmatprep.subr.bf16.mxu0 %v7763
    %8331 = vmatpush1.bf16.msra.mxu0 %v7762
    %8332 = vmatprep.subr.bf16.mxu0 %v7761
    %8333 = vmatpush1.bf16.msra.mxu0 %v7760
    %8334 = vmatprep.subr.bf16.mxu0 %v7759
    %8335 = vmatpush1.bf16.msra.mxu0 %v7758
    %8336 = vmatprep.subr.bf16.mxu0 %v7757
    %8337 = vmatpush1.bf16.msra.mxu0 %v7756
    %8338 = vmatprep.subr.bf16.mxu0 %v7787
    %8339 = vmatpush2.bf16.msra.mxu0 %v7786
    %8340 = vmatprep.subr.bf16.mxu0 %v7785
    %8341 = vmatpush2.bf16.msra.mxu0 %v7784
    %8342 = vmatprep.subr.bf16.mxu0 %v7783
    %8343 = vmatpush2.bf16.msra.mxu0 %v7782
    %8344 = vmatprep.subr.bf16.mxu0 %v7781
    %8345 = vmatpush2.bf16.msra.mxu0 %v7780
    %8346 = vmatprep.subr.bf16.mxu0 %v7779
    %8347 = vmatpush2.bf16.msra.mxu0 %v7778
    %8348 = vmatprep.subr.bf16.mxu0 %v7777
    %8349 = vmatpush2.bf16.msra.mxu0 %v7776
    %8350 = vmatprep.subr.bf16.mxu0 %v7775
    %8351 = vmatpush2.bf16.msra.mxu0 %v7774
    %8352 = vmatprep.subr.bf16.mxu0 %v7773
    %8353 = vmatpush2.bf16.msra.mxu0 %v7772
    %8354 = vmatprep.mubr.bf16.mxu0 %v6777
    %8355 = vmatmul.mubr.bf16.gmra.mxu0 %v6776
    %v8356 = vpop.f32.mrf.mxu0
    %v8357 = vadd.f32 %v8316, %v8356
    %v8358 = vpop.f32.mrf.mxu0
    %v8359 = vadd.f32 %v8318, %v8358
    %v8360 = vpop.f32.mrf.mxu0
    %v8361 = vpop.f32.mrf.mxu0
    %8362 = vdwg.mxu0
    %8363 = vmatprep.subr.bf16.mxu0 %v7803
    %8364 = vmatpush1.bf16.msra.mxu0 %v7802
    %8365 = vmatprep.subr.bf16.mxu0 %v7801
    %8366 = vmatpush1.bf16.msra.mxu0 %v7800
    %8367 = vmatprep.subr.bf16.mxu0 %v7799
    %8368 = vmatpush1.bf16.msra.mxu0 %v7798
    %8369 = vmatprep.subr.bf16.mxu0 %v7797
    %8370 = vmatpush1.bf16.msra.mxu0 %v7796
    %8371 = vmatprep.subr.bf16.mxu0 %v7795
    %8372 = vmatpush1.bf16.msra.mxu0 %v7794
    %8373 = vmatprep.subr.bf16.mxu0 %v7793
    %8374 = vmatpush1.bf16.msra.mxu0 %v7792
    %8375 = vmatprep.subr.bf16.mxu0 %v7791
    %8376 = vmatpush1.bf16.msra.mxu0 %v7790
    %8377 = vmatprep.subr.bf16.mxu0 %v7789
    %8378 = vmatpush1.bf16.msra.mxu0 %v7788
    %8379 = vmatprep.subr.bf16.mxu0 %v7819
    %8380 = vmatpush2.bf16.msra.mxu0 %v7818
    %8381 = vmatprep.subr.bf16.mxu0 %v7817
    %8382 = vmatpush2.bf16.msra.mxu0 %v7816
    %8383 = vmatprep.subr.bf16.mxu0 %v7815
    %8384 = vmatpush2.bf16.msra.mxu0 %v7814
    %8385 = vmatprep.subr.bf16.mxu0 %v7813
    %8386 = vmatpush2.bf16.msra.mxu0 %v7812
    %8387 = vmatprep.subr.bf16.mxu0 %v7811
    %8388 = vmatpush2.bf16.msra.mxu0 %v7810
    %8389 = vmatprep.subr.bf16.mxu0 %v7809
    %8390 = vmatpush2.bf16.msra.mxu0 %v7808
    %8391 = vmatprep.subr.bf16.mxu0 %v7807
    %8392 = vmatpush2.bf16.msra.mxu0 %v7806
    %8393 = vmatprep.subr.bf16.mxu0 %v7805
    %8394 = vmatpush2.bf16.msra.mxu0 %v7804
    %8395 = vmatprep.mubr.bf16.mxu0 %v6779
    %8396 = vmatmul.mubr.bf16.gmra.mxu0 %v6778
    %v8397 = vpop.f32.mrf.mxu0
    %v8398 = vadd.f32 %v8357, %v8397
    %v8399 = vpop.f32.mrf.mxu0
    %v8400 = vadd.f32 %v8359, %v8399
    %v8401 = vpop.f32.mrf.mxu0
    %v8402 = vpop.f32.mrf.mxu0
    %8403 = vdwg.mxu0
    %v8404 = vmax.f32 %v8398, 0.0
    %v8405 = vmax.f32 %v8400, 0.0
    %v8406 = vpack.c.bf16 %v8404, %v8404
    %v8407 = vpack.c.bf16 %v8405, %v8405
    %v8408 = vld [vmem:[%s7] sm:$0xf]
    %v8409 = vld [vmem:[%s7 + $0x4] sm:$0xf]
    %v8410 = vld [vmem:[%s7 + $0x8] sm:$0xf]
    %v8411 = vld [vmem:[%s7 + $0xc] sm:$0xf]
    %v8412 = vld [vmem:[%s7 + $0x10] sm:$0xf]
    %v8413 = vld [vmem:[%s7 + $0x14] sm:$0xf]
    %v8414 = vld [vmem:[%s7 + $0x18] sm:$0xf]
    %v8415 = vld [vmem:[%s7 + $0x1c] sm:$0xf]
    %v8416 = vld [vmem:[%s7 + $0x20] sm:$0xf]
    %v8417 = vld [vmem:[%s7 + $0x24] sm:$0xf]
    %v8418 = vld [vmem:[%s7 + $0x28] sm:$0xf]
    %v8419 = vld [vmem:[%s7 + $0x2c] sm:$0xf]
    %v8420 = vld [vmem:[%s7 + $0x30] sm:$0xf]
    %v8421 = vld [vmem:[%s7 + $0x34] sm:$0xf]
    %v8422 = vld [vmem:[%s7 + $0x38] sm:$0xf]
    %v8423 = vld [vmem:[%s7 + $0x3c] sm:$0xf]
    %v8424 = vld [vmem:[%s7 + $0x40] sm:$0xf]
    %v8425 = vld [vmem:[%s7 + $0x44] sm:$0xf]
    %v8426 = vld [vmem:[%s7 + $0x48] sm:$0xf]
    %v8427 = vld [vmem:[%s7 + $0x4c] sm:$0xf]
    %v8428 = vld [vmem:[%s7 + $0x50] sm:$0xf]
    %v8429 = vld [vmem:[%s7 + $0x54] sm:$0xf]
    %v8430 = vld [vmem:[%s7 + $0x58] sm:$0xf]
    %v8431 = vld [vmem:[%s7 + $0x5c] sm:$0xf]
    %v8432 = vld [vmem:[%s7 + $0x60] sm:$0xf]
    %v8433 = vld [vmem:[%s7 + $0x64] sm:$0xf]
    %v8434 = vld [vmem:[%s7 + $0x68] sm:$0xf]
    %v8435 = vld [vmem:[%s7 + $0x6c] sm:$0xf]
    %v8436 = vld [vmem:[%s7 + $0x70] sm:$0xf]
    %v8437 = vld [vmem:[%s7 + $0x74] sm:$0xf]
    %v8438 = vld [vmem:[%s7 + $0x78] sm:$0xf]
    %v8439 = vld [vmem:[%s7 + $0x7c] sm:$0xf]
    %v8440 = vld [vmem:[%s8] sm:$0x1]
    %v8442 = vlaneseq
    %v8443 = vshrl.u32 %v8442, 7
    %v8444 = vsub.s32 0, %v8443
    %v8445 = vrot.slane %v8440, %v8444
    %v8479 = vunpack.c.l.b16 %v8408
    %v8480 = vunpack.c.l.b16 %v8409
    %v8481 = vunpack.c.l.b16 %v8410
    %v8482 = vunpack.c.l.b16 %v8411
    %v8483 = vunpack.c.l.b16 %v8412
    %v8484 = vunpack.c.l.b16 %v8413
    %v8485 = vunpack.c.l.b16 %v8414
    %v8486 = vunpack.c.l.b16 %v8415
    %v8487 = vunpack.c.l.b16 %v8416
    %v8488 = vunpack.c.l.b16 %v8417
    %v8489 = vunpack.c.l.b16 %v8418
    %v8490 = vunpack.c.l.b16 %v8419
    %v8491 = vunpack.c.l.b16 %v8420
    %v8492 = vunpack.c.l.b16 %v8421
    %v8493 = vunpack.c.l.b16 %v8422
    %v8494 = vunpack.c.l.b16 %v8423
    %v8495 = vunpack.c.l.b16 %v8424
    %v8496 = vunpack.c.l.b16 %v8425
    %v8497 = vunpack.c.l.b16 %v8426
    %v8498 = vunpack.c.l.b16 %v8427
    %v8499 = vunpack.c.l.b16 %v8428
    %v8500 = vunpack.c.l.b16 %v8429
    %v8501 = vunpack.c.l.b16 %v8430
    %v8502 = vunpack.c.l.b16 %v8431
    %v8503 = vunpack.c.l.b16 %v8432
    %v8504 = vunpack.c.l.b16 %v8433
    %v8505 = vunpack.c.l.b16 %v8434
    %v8506 = vunpack.c.l.b16 %v8435
    %v8507 = vunpack.c.l.b16 %v8436
    %v8508 = vunpack.c.l.b16 %v8437
    %v8509 = vunpack.c.l.b16 %v8438
    %v8510 = vunpack.c.l.b16 %v8439
    %v8511 = vpack.c.b16 %v8480, %v8479
    %v8512 = vpack.c.b16 %v8482, %v8481
    %v8513 = vpack.c.b16 %v8484, %v8483
    %v8514 = vpack.c.b16 %v8486, %v8485
    %v8515 = vpack.c.b16 %v8488, %v8487
    %v8516 = vpack.c.b16 %v8490, %v8489
    %v8517 = vpack.c.b16 %v8492, %v8491
    %v8518 = vpack.c.b16 %v8494, %v8493
    %v8519 = vpack.c.b16 %v8496, %v8495
    %v8520 = vpack.c.b16 %v8498, %v8497
    %v8521 = vpack.c.b16 %v8500, %v8499
    %v8522 = vpack.c.b16 %v8502, %v8501
    %v8523 = vpack.c.b16 %v8504, %v8503
    %v8524 = vpack.c.b16 %v8506, %v8505
    %v8525 = vpack.c.b16 %v8508, %v8507
    %v8526 = vpack.c.b16 %v8510, %v8509
    %8543 = vmatprep.subr.bf16.mxu0 0
    %8544 = vmatpush1.bf16.msra.mxu0 %v8518
    %8545 = vmatprep.subr.bf16.mxu0 0
    %8546 = vmatpush1.bf16.msra.mxu0 %v8517
    %8547 = vmatprep.subr.bf16.mxu0 0
    %8548 = vmatpush1.bf16.msra.mxu0 %v8516
    %8549 = vmatprep.subr.bf16.mxu0 0
    %8550 = vmatpush1.bf16.msra.mxu0 %v8515
    %8551 = vmatprep.subr.bf16.mxu0 0
    %8552 = vmatpush1.bf16.msra.mxu0 %v8514
    %8553 = vmatprep.subr.bf16.mxu0 0
    %8554 = vmatpush1.bf16.msra.mxu0 %v8513
    %8555 = vmatprep.subr.bf16.mxu0 0
    %8556 = vmatpush1.bf16.msra.mxu0 %v8512
    %8557 = vmatprep.subr.bf16.mxu0 0
    %8558 = vmatpush1.bf16.msra.mxu0 %v8511
    %8559 = vmatprep.subr.bf16.mxu0 0
    %8560 = vmatpush2.bf16.msra.mxu0 %v8526
    %8561 = vmatprep.subr.bf16.mxu0 0
    %8562 = vmatpush2.bf16.msra.mxu0 %v8525
    %8563 = vmatprep.subr.bf16.mxu0 0
    %8564 = vmatpush2.bf16.msra.mxu0 %v8524
    %8565 = vmatprep.subr.bf16.mxu0 0
    %8566 = vmatpush2.bf16.msra.mxu0 %v8523
    %8567 = vmatprep.subr.bf16.mxu0 0
    %8568 = vmatpush2.bf16.msra.mxu0 %v8522
    %8569 = vmatprep.subr.bf16.mxu0 0
    %8570 = vmatpush2.bf16.msra.mxu0 %v8521
    %8571 = vmatprep.subr.bf16.mxu0 0
    %8572 = vmatpush2.bf16.msra.mxu0 %v8520
    %8573 = vmatprep.subr.bf16.mxu0 0
    %8574 = vmatpush2.bf16.msra.mxu0 %v8519
    %8575 = vmatprep.mubr.bf16.mxu0 %v8407
    %8576 = vmatmul.mubr.bf16.gmra.mxu0 %v8406
    %v8577 = vpop.f32.mrf.mxu0
    %v8578 = vadd.f32 %v8445, %v8577
    %v8579 = vpop.f32.mrf.mxu0
    %v8580 = vpop.f32.mrf.mxu0
    %v8581 = vpop.f32.mrf.mxu0
    %8582 = vdwg.mxu0
    %8583 = vst [vmem:[#allocation5] sm:$0x3] %v8578
    // Predicated region
    $region38: #{cbam_model_head.1} parent=1 // pred_check
      _
    $region39: #{cbam_model_head.1} parent=1 // pred_check_branch
      %8585 = sbr.rel (0) target = $region41
    $region40: #{cbam_model_head.1} parent=1 // pred_region
      %s8587 = ssub.s32 32, 32
      %8588 = vsyncadd [#allocation6], %s8587
      %s8590 = sshll.u32 [#allocation5], 4
      %s8591 = int_to_ptr.vmem [resolvable:$true] %s8590
      %8593 = dma.vmem_to_hbm [thread:$0]  %s8591, 32, %s9, [#allocation6]
    $region41: #{cbam_model_head.1} parent=1 // pred_fallthru
      _
    // Predicated region
    $region42: #{cbam_model_head.1} parent=1 // pred_check
      _
    $region43: #{cbam_model_head.1} parent=1 // pred_check_branch
      %8595 = sbr.rel (0) target = $region45
    $region44: #{cbam_model_head.1} parent=1 // pred_region
      %8596 = dma.done [#allocation6], 32
    $region45: #{cbam_model_head.1} parent=1 // pred_fallthru
      _
    %8597 = vsyncpa [#allocation6], 1

</llo_original>
